<compile_context>
chip_gen: v5e
topology: v5e:2x2
jax: 0.10.0
libtpu: 0.0.40
codegen_flags: <defaults>
</compile_context>

<pallas_src>
import jax
import jax.numpy as jnp
from jax import lax
from jax.experimental import pallas as pl
from jax.experimental.pallas import tpu as pltpu

INPUT_SIZE = 50
HIDDEN = 128
NUM_LAYERS = 4
ACTION_SPACE = 2

_BS = 8              # padded per-shard batch rows (f32 sublane alignment)
_D_PAD = 64          # layer-0 feature dim zero-padded 50 -> 64 (bf16 sublane multiple)
_MAX_TIME_CHUNK = 256


def _pick_time_chunk(T, max_chunk=_MAX_TIME_CHUNK):
    """Largest chunk <= max_chunk that divides T (T itself if small)."""
    if T <= max_chunk:
        return T
    for c in range(max_chunk, 0, -1):
        if T % c == 0:
            return c
    return 1


def gru_student_kernel(x_ref, wih0_ref, wihr_ref, whh_ref, bcmb_ref, bhn_ref,
                       wfc_ref, bfc_ref, out_ref, h_ref, buf_ref, gx_ref):
    """One grid step == one (batch-shard, time-chunk).

    x_ref   : (TC*BS, Dp)   time-major layer-0 input chunk (row = t*BS + b), f32
    wih0_ref: (Dp, 3H)      layer-0 W_ih^T, bf16
    wihr_ref: (L-1, H, 3H)  layers>=1 W_ih^T, bf16
    whh_ref : (L, H, 3H)    W_hh^T, bf16
    bcmb_ref: (L, 1, 3H)    [b_ih_r+b_hh_r, b_ih_z+b_hh_z, b_ih_n], f32
    bhn_ref : (L, 1, H)     b_hh_n (added inside the r* term), f32
    wfc_ref : (H, A)        fc weight^T, f32
    bfc_ref : (1, A)        fc bias, f32
    out_ref : (BS, A)       output block (written on the last chunk only)
    h_ref   : (L, BS, H)    scratch: per-layer hidden state (persists across chunks)
    buf_ref : (TC*BS, H)    scratch: current layer's output over the chunk
    gx_ref  : (TC*BS, 3H)   scratch: batched input projection (+ folded biases)
    """
    c = pl.program_id(1)
    H = HIDDEN
    TCBS = buf_ref.shape[0]
    BS = h_ref.shape[1]
    TC = TCBS // BS
    unroll = True if TC <= 16 else 4

    @pl.when(c == 0)
    def _init():
        h_ref[...] = jnp.zeros_like(h_ref)

    def recurrence(layer):
        whh_l = whh_ref[layer]                                  # (H, 3H) bf16, hoisted
        bhn_b = jnp.broadcast_to(bhn_ref[layer], (BS, H))       # hoisted broadcast

        def step(t, h):
            row = pl.multiple_of(t * BS, BS)
            gx = gx_ref[pl.ds(row, BS), :]                      # (BS, 3H) f32
            gh = jnp.dot(h.astype(jnp.bfloat16), whh_l,
                         preferred_element_type=jnp.float32)    # (BS, 3H) f32
            # PyTorch gate order [r, z, n]; r/z biases already folded into gx.
            rz = jax.nn.sigmoid(gx[:, :2 * H] + gh[:, :2 * H])
            r = rz[:, :H]
            z = rz[:, H:]
            n = jnp.tanh(gx[:, 2 * H:] + r * (gh[:, 2 * H:] + bhn_b))
            h_new = (1.0 - z) * n + z * h
            buf_ref[pl.ds(row, BS), :] = h_new
            return h_new

        h_fin = lax.fori_loop(0, TC, step, h_ref[layer], unroll=unroll)
        h_ref[layer] = h_fin

    # Layer 0: chunk-wide input projection (M = TC*BS rows on the MXU).
    gx_ref[...] = (
        jnp.dot(x_ref[...].astype(jnp.bfloat16), wih0_ref[...],
                preferred_element_type=jnp.float32)
        + bcmb_ref[0])
    recurrence(0)

    # Layers 1..L-1: chunk-wide projection of the previous layer's output.
    for layer in range(1, NUM_LAYERS):
        gx_ref[...] = (
            jnp.dot(buf_ref[...].astype(jnp.bfloat16), wihr_ref[layer - 1],
                    preferred_element_type=jnp.float32)
            + bcmb_ref[layer])
        recurrence(layer)

    @pl.when(c == pl.num_programs(1) - 1)
    def _finalize():
        # fc on the top layer's final hidden state (== last-timestep output).
        h_top = h_ref[NUM_LAYERS - 1]
        out_ref[...] = (jnp.dot(h_top, wfc_ref[...],
                                preferred_element_type=jnp.float32)
                        + bfc_ref[...])


def init_params(key, input_size=INPUT_SIZE, hidden=HIDDEN,
                num_layers=NUM_LAYERS, action_space=ACTION_SPACE):
    """Deterministic init matching nn.GRU / nn.Linear shapes (U(-1/sqrt(H), 1/sqrt(H)))."""
    k = 1.0 / jnp.sqrt(jnp.float32(hidden))
    params = {}
    keys = jax.random.split(key, num_layers * 4 + 2)
    ki = 0
    for layer in range(num_layers):
        in_dim = input_size if layer == 0 else hidden
        params[f"w_ih_l{layer}"] = jax.random.uniform(
            keys[ki], (3 * hidden, in_dim), jnp.float32, -k, k); ki += 1
        params[f"w_hh_l{layer}"] = jax.random.uniform(
            keys[ki], (3 * hidden, hidden), jnp.float32, -k, k); ki += 1
        params[f"b_ih_l{layer}"] = jax.random.uniform(
            keys[ki], (3 * hidden,), jnp.float32, -k, k); ki += 1
        params[f"b_hh_l{layer}"] = jax.random.uniform(
            keys[ki], (3 * hidden,), jnp.float32, -k, k); ki += 1
    params["fc_w"] = jax.random.uniform(keys[ki], (action_space, hidden),
                                        jnp.float32, -k, k); ki += 1
    params["fc_b"] = jax.random.uniform(keys[ki], (action_space,),
                                        jnp.float32, -k, k)
    return params


def pack_params(params, input_size=INPUT_SIZE, hidden=HIDDEN,
                num_layers=NUM_LAYERS):
    """Pre-transpose weights, cast GRU weights to bf16, pad layer-0 input dim to
    _D_PAD, and pre-sum b_ih + b_hh for the r/z gates."""
    H = hidden
    w0 = jnp.pad(params["w_ih_l0"], ((0, 0), (0, _D_PAD - input_size)))  # (3H, Dp)
    wih0_t = w0.T.astype(jnp.bfloat16)                                   # (Dp, 3H)
    wihr_t = jnp.stack([params[f"w_ih_l{l}"].T
                        for l in range(1, num_layers)]).astype(jnp.bfloat16)  # (L-1,H,3H)
    whh_t = jnp.stack([params[f"w_hh_l{l}"].T
                       for l in range(num_layers)]).astype(jnp.bfloat16)       # (L,H,3H)
    bcmb, bhn = [], []
    for l in range(num_layers):
        bih = params[f"b_ih_l{l}"]
        bhh = params[f"b_hh_l{l}"]
        bcmb.append(jnp.concatenate([bih[:2 * H] + bhh[:2 * H], bih[2 * H:]])[None, :])
        bhn.append(bhh[2 * H:][None, :])
    return (wih0_t, wihr_t, whh_t,
            jnp.stack(bcmb),                 # (L, 1, 3H) f32
            jnp.stack(bhn),                  # (L, 1, H)  f32
            params["fc_w"].T,                # (H, A)     f32
            params["fc_b"][None, :])         # (1, A)     f32


@jax.jit
def student_forward(x, wih0_t, wihr_t, whh_t, bcmb, bhn, wfc_t, bfc):
    """x: (B, T, input_size) float32 -> (B, action_space) float32."""
    B, T, D = x.shape
    H = HIDDEN
    A = wfc_t.shape[1]
    Dp = wih0_t.shape[0]
    BS = _BS
    NS = pl.cdiv(B, BS)           # batch shards -> "parallel" grid axis (v7x megacore)
    Bp = NS * BS
    TC = _pick_time_chunk(T)
    NCH = T // TC

    # Pad batch to NS*BS rows and features to Dp; time-major per shard so rows
    # within a shard are ordered (t, b), matching the kernel's pl.ds(t*BS, BS).
    xp = jnp.zeros((Bp, T, Dp), jnp.float32).at[:B, :, :D].set(x.astype(jnp.float32))
    x_tm = (xp.reshape(NS, BS, T, Dp)
              .transpose(0, 2, 1, 3)
              .reshape(NS, T * BS, Dp))

    out = pl.pallas_call(
        gru_student_kernel,
        out_shape=jax.ShapeDtypeStruct((Bp, A), jnp.float32),
        grid_spec=pltpu.PrefetchScalarGridSpec(
            num_scalar_prefetch=0,
            grid=(NS, NCH),
            in_specs=[
                pl.BlockSpec((None, TC * BS, Dp), lambda s, c: (s, c, 0)),       # x chunk
                pl.BlockSpec((Dp, 3 * H), lambda s, c: (0, 0)),                  # W_ih^T l0
                pl.BlockSpec((NUM_LAYERS - 1, H, 3 * H), lambda s, c: (0, 0, 0)),  # W_ih^T l>=1
                pl.BlockSpec((NUM_LAYERS, H, 3 * H), lambda s, c: (0, 0, 0)),      # W_hh^T
                pl.BlockSpec((NUM_LAYERS, 1, 3 * H), lambda s, c: (0, 0, 0)),      # folded biases
                pl.BlockSpec((NUM_LAYERS, 1, H), lambda s, c: (0, 0, 0)),          # b_hh (n gate)
                pl.BlockSpec((H, A), lambda s, c: (0, 0)),                         # fc W^T
                pl.BlockSpec((1, A), lambda s, c: (0, 0)),                         # fc b
            ],
            out_specs=pl.BlockSpec((BS, A), lambda s, c: (s, 0)),
            scratch_shapes=[
                pltpu.VMEM((NUM_LAYERS, BS, H), jnp.float32),   # per-layer hidden state
                pltpu.VMEM((TC * BS, H), jnp.float32),          # layer output buffer
                pltpu.VMEM((TC * BS, 3 * H), jnp.float32),      # batched input projection
            ],
        ),
        compiler_params=pltpu.CompilerParams(
            dimension_semantics=("parallel", "arbitrary")),      # shards || , time sequential
    )(x_tm, wih0_t, wihr_t, whh_t, bcmb, bhn, wfc_t, bfc)
    return out[:B]


def student_forward_ref(x, params, *, emulate_bf16=True):
    """Pure-JAX reference of the PyTorch forward (eval mode).

    emulate_bf16=True mirrors the kernel's precision policy (bf16 matmul
    operands, f32 accumulation / gates / state) so the comparison isolates
    structural correctness of the kernel.
    """
    B, T, _ = x.shape
    H = HIDDEN

    def mm(a, w):
        if emulate_bf16:
            return jnp.dot(a.astype(jnp.bfloat16), w.T.astype(jnp.bfloat16),
                           preferred_element_type=jnp.float32)
        return a @ w.T

    layer_in = x.astype(jnp.float32)
    for layer in range(NUM_LAYERS):
        w_ih = params[f"w_ih_l{layer}"]
        w_hh = params[f"w_hh_l{layer}"]
        b_ih = params[f"b_ih_l{layer}"]
        b_hh = params[f"b_hh_l{layer}"]
        ht = jnp.zeros((B, H), jnp.float32)
        outs = []
        for t in range(T):
            gx = mm(layer_in[:, t, :], w_ih) + b_ih
            gh = mm(ht, w_hh) + b_hh
            r = jax.nn.sigmoid(gx[:, :H] + gh[:, :H])
            z = jax.nn.sigmoid(gx[:, H:2 * H] + gh[:, H:2 * H])
            n = jnp.tanh(gx[:, 2 * H:] + r * gh[:, 2 * H:])
            ht = (1.0 - z) * n + z * ht
            outs.append(ht)
        layer_in = jnp.stack(outs, axis=1)
    return layer_in[:, -1, :] @ params["fc_w"].T + params["fc_b"]


if __name__ == "__main__":
    key = jax.random.PRNGKey(0)
    pkey, xkey = jax.random.split(key)

    B, T, D = 2, 8, INPUT_SIZE
    x = jax.random.normal(xkey, (B, T, D), jnp.float32)

    params = init_params(pkey)
    packed = pack_params(params)

    out = jax.block_until_ready(student_forward(x, *packed))
    ref = student_forward_ref(x, params, emulate_bf16=True)

    assert out.shape == (B, ACTION_SPACE)
    assert jnp.allclose(out, ref, atol=1e-3, rtol=1e-3), (out, ref)
    print("KERNEL_OK")
</pallas_src>

<mosaic_0001>
module attributes {stable_mosaic.version = 11 : i64} {
  func.func @gru_student_kernel(%arg0: i32, %arg1: i32, %arg2: memref<1x64x64xf32, #tpu.memory_space<vmem>>, %arg3: memref<64x384xbf16, #tpu.memory_space<vmem>>, %arg4: memref<3x128x384xbf16, #tpu.memory_space<vmem>>, %arg5: memref<4x128x384xbf16, #tpu.memory_space<vmem>>, %arg6: memref<4x1x384xf32, #tpu.memory_space<vmem>>, %arg7: memref<4x1x128xf32, #tpu.memory_space<vmem>>, %arg8: memref<128x2xf32, #tpu.memory_space<vmem>>, %arg9: memref<1x2xf32, #tpu.memory_space<vmem>>, %arg10: memref<8x2xf32, #tpu.memory_space<vmem>>, %arg11: memref<4x8x128xf32, #tpu.memory_space<vmem>>, %arg12: memref<64x128xf32, #tpu.memory_space<vmem>>, %arg13: memref<64x384xf32, #tpu.memory_space<vmem>>) attributes {dimension_semantics = [#tpu.dimension_semantics<parallel>, #tpu.dimension_semantics<arbitrary>], iteration_bounds = array<i64: 1, 1>, scalar_prefetch = 0 : i64, scratch_operands = 3 : i64, tpu.core_type = #tpu.core_type<tc>, window_params = [{transform_indices = @transform_0, window_bounds = array<i64: 1, 64, 64>}, {pipeline_mode = #tpu.pipeline_mode<synchronous>, transform_indices = @transform_1, window_bounds = array<i64: 64, 384>}, {pipeline_mode = #tpu.pipeline_mode<synchronous>, transform_indices = @transform_2, window_bounds = array<i64: 3, 128, 384>}, {pipeline_mode = #tpu.pipeline_mode<synchronous>, transform_indices = @transform_3, window_bounds = array<i64: 4, 128, 384>}, {pipeline_mode = #tpu.pipeline_mode<synchronous>, transform_indices = @transform_4, window_bounds = array<i64: 4, 1, 384>}, {pipeline_mode = #tpu.pipeline_mode<synchronous>, transform_indices = @transform_5, window_bounds = array<i64: 4, 1, 128>}, {pipeline_mode = #tpu.pipeline_mode<synchronous>, transform_indices = @transform_6, window_bounds = array<i64: 128, 2>}, {pipeline_mode = #tpu.pipeline_mode<synchronous>, transform_indices = @transform_7, window_bounds = array<i64: 1, 2>}, {transform_indices = @transform_8, window_bounds = array<i64: 8, 2>}]} {
    %c0_i32 = arith.constant 0 : i32
    %0 = arith.cmpi eq, %arg1, %c0_i32 : i32
    %1 = arith.extui %0 : i1 to i32
    %c0_i32_0 = arith.constant 0 : i32
    %2 = arith.cmpi ne, %1, %c0_i32_0 : i32
    scf.if %2 {
      %cst_310 = arith.constant 0.000000e+00 : f32
      %1018 = vector.broadcast %cst_310 : f32 to vector<4x8x128xf32>
      %c0_311 = arith.constant 0 : index
      %c0_312 = arith.constant 0 : index
      %c0_313 = arith.constant 0 : index
      %1019 = vector.load %arg11[%c0_311, %c0_312, %c0_313] : memref<4x8x128xf32, #tpu.memory_space<vmem>>, vector<4x8x128xf32>
      tpu.vector_store %arg11[%c0_311, %c0_312, %c0_313], %1018 {strides = array<i32>} : memref<4x8x128xf32, #tpu.memory_space<vmem>>, vector<4x8x128xf32>,
    } else {
    }
    %c0 = arith.constant 0 : index
    %c0_1 = arith.constant 0 : index
    %c0_2 = arith.constant 0 : index
    %3 = vector.load %arg2[%c0, %c0_1, %c0_2] : memref<1x64x64xf32, #tpu.memory_space<vmem>>, vector<1x64x64xf32>
    %4 = vector.shape_cast %3 : vector<1x64x64xf32> to vector<64x64xf32>
    %5 = arith.truncf %4 : vector<64x64xf32> to vector<64x64xbf16>
    %c0_3 = arith.constant 0 : index
    %c0_4 = arith.constant 0 : index
    %6 = vector.load %arg3[%c0_3, %c0_4] : memref<64x384xbf16, #tpu.memory_space<vmem>>, vector<64x384xbf16>
    %cst = arith.constant dense<0.000000e+00> : vector<64x384xf32>
    %7 = tpu.matmul %5, %6, %cst {dimension_numbers = #tpu.dot_dimension_numbers<[1], [0], [0], [1], [0, 0, 1, 1], [], []>} : vector<64x64xbf16>, vector<64x384xbf16>, vector<64x384xf32> -> vector<64x384xf32>
    %c0_5 = arith.constant 0 : index
    %c0_6 = arith.constant 0 : index
    %c0_7 = arith.constant 0 : index
    %8 = vector.load %arg6[%c0_5, %c0_6, %c0_7] : memref<4x1x384xf32, #tpu.memory_space<vmem>>, vector<1x1x384xf32>
    %9 = vector.shape_cast %8 : vector<1x1x384xf32> to vector<1x384xf32>
    %10 = vector.broadcast %9 : vector<1x384xf32> to vector<64x384xf32>
    %11 = arith.addf %7, %10 : vector<64x384xf32>
    %c0_8 = arith.constant 0 : index
    %c0_9 = arith.constant 0 : index
    %12 = vector.load %arg13[%c0_8, %c0_9] : memref<64x384xf32, #tpu.memory_space<vmem>>, vector<64x384xf32>
    tpu.vector_store %arg13[%c0_8, %c0_9], %11 {strides = array<i32>} : memref<64x384xf32, #tpu.memory_space<vmem>>, vector<64x384xf32>,
    %c0_10 = arith.constant 0 : index
    %c0_11 = arith.constant 0 : index
    %c0_12 = arith.constant 0 : index
    %13 = vector.load %arg5[%c0_10, %c0_11, %c0_12] : memref<4x128x384xbf16, #tpu.memory_space<vmem>>, vector<1x128x384xbf16>
    %14 = vector.shape_cast %13 : vector<1x128x384xbf16> to vector<128x384xbf16>
    %c0_13 = arith.constant 0 : index
    %c0_14 = arith.constant 0 : index
    %c0_15 = arith.constant 0 : index
    %15 = vector.load %arg7[%c0_13, %c0_14, %c0_15] : memref<4x1x128xf32, #tpu.memory_space<vmem>>, vector<1x1x128xf32>
    %16 = vector.shape_cast %15 : vector<1x1x128xf32> to vector<1x128xf32>
    %17 = vector.shape_cast %16 : vector<1x128xf32> to vector<1x128xf32>
    %18 = vector.broadcast %17 : vector<1x128xf32> to vector<8x128xf32>
    %c0_16 = arith.constant 0 : index
    %c0_17 = arith.constant 0 : index
    %c0_18 = arith.constant 0 : index
    %19 = vector.load %arg11[%c0_16, %c0_17, %c0_18] : memref<4x8x128xf32, #tpu.memory_space<vmem>>, vector<1x8x128xf32>
    %20 = vector.shape_cast %19 : vector<1x8x128xf32> to vector<8x128xf32>
    %c0_i32_19 = arith.constant 0 : i32
    %c8_i32 = arith.constant 8 : i32
    %21 = arith.muli %c0_i32_19, %c8_i32 : i32
    %22 = tpu.assume_multiple %21, 8 : i32
    %23 = arith.index_cast %22 : i32 to index
    %c0_20 = arith.constant 0 : index
    %24 = vector.load %arg13[%23, %c0_20] : memref<64x384xf32, #tpu.memory_space<vmem>>, vector<8x384xf32>
    %25 = arith.truncf %20 : vector<8x128xf32> to vector<8x128xbf16>
    %cst_21 = arith.constant dense<0.000000e+00> : vector<8x384xf32>
    %26 = tpu.matmul %25, %14, %cst_21 {dimension_numbers = #tpu.dot_dimension_numbers<[1], [0], [0], [1], [0, 0, 1, 1], [], []>} : vector<8x128xbf16>, vector<128x384xbf16>, vector<8x384xf32> -> vector<8x384xf32>
    %27 = vector.extract_strided_slice %24 {offsets = [0, 0], sizes = [8, 256], strides = [1, 1]} : vector<8x384xf32> to vector<8x256xf32>
    %28 = vector.extract_strided_slice %26 {offsets = [0, 0], sizes = [8, 256], strides = [1, 1]} : vector<8x384xf32> to vector<8x256xf32>
    %29 = arith.addf %27, %28 : vector<8x256xf32>
    %30 = arith.negf %29 : vector<8x256xf32>
    %31 = math.exp %30 : vector<8x256xf32>
    %cst_22 = arith.constant 1.000000e+00 : f32
    %32 = vector.broadcast %cst_22 : f32 to vector<8x256xf32>
    %33 = arith.addf %32, %31 : vector<8x256xf32>
    %34 = arith.divf %32, %33 : vector<8x256xf32>
    %35 = vector.extract_strided_slice %34 {offsets = [0, 0], sizes = [8, 128], strides = [1, 1]} : vector<8x256xf32> to vector<8x128xf32>
    %36 = vector.extract_strided_slice %34 {offsets = [0, 128], sizes = [8, 128], strides = [1, 1]} : vector<8x256xf32> to vector<8x128xf32>
    %37 = vector.extract_strided_slice %24 {offsets = [0, 256], sizes = [8, 128], strides = [1, 1]} : vector<8x384xf32> to vector<8x128xf32>
    %38 = vector.extract_strided_slice %26 {offsets = [0, 256], sizes = [8, 128], strides = [1, 1]} : vector<8x384xf32> to vector<8x128xf32>
    %39 = arith.addf %38, %18 : vector<8x128xf32>
    %40 = arith.mulf %35, %39 : vector<8x128xf32>
    %41 = arith.addf %37, %40 : vector<8x128xf32>
    %42 = math.tanh %41 : vector<8x128xf32>
    %cst_23 = arith.constant 1.000000e+00 : f32
    %43 = vector.broadcast %cst_23 : f32 to vector<8x128xf32>
    %44 = arith.subf %43, %36 : vector<8x128xf32>
    %45 = arith.mulf %44, %42 : vector<8x128xf32>
    %46 = arith.mulf %36, %20 : vector<8x128xf32>
    %47 = arith.addf %45, %46 : vector<8x128xf32>
    %48 = arith.index_cast %22 : i32 to index
    %c0_24 = arith.constant 0 : index
    %49 = vector.load %arg12[%48, %c0_24] : memref<64x128xf32, #tpu.memory_space<vmem>>, vector<8x128xf32>
    tpu.vector_store %arg12[%48, %c0_24], %47 {strides = array<i32>} : memref<64x128xf32, #tpu.memory_space<vmem>>, vector<8x128xf32>,
    %c1_i32 = arith.constant 1 : i32
    %c8_i32_25 = arith.constant 8 : i32
    %50 = arith.muli %c1_i32, %c8_i32_25 : i32
    %51 = tpu.assume_multiple %50, 8 : i32
    %52 = arith.index_cast %51 : i32 to index
    %c0_26 = arith.constant 0 : index
    %53 = vector.load %arg13[%52, %c0_26] : memref<64x384xf32, #tpu.memory_space<vmem>>, vector<8x384xf32>
    %54 = arith.truncf %47 : vector<8x128xf32> to vector<8x128xbf16>
    %cst_27 = arith.constant dense<0.000000e+00> : vector<8x384xf32>
    %55 = tpu.matmul %54, %14, %cst_27 {dimension_numbers = #tpu.dot_dimension_numbers<[1], [0], [0], [1], [0, 0, 1, 1], [], []>} : vector<8x128xbf16>, vector<128x384xbf16>, vector<8x384xf32> -> vector<8x384xf32>
    %56 = vector.extract_strided_slice %53 {offsets = [0, 0], sizes = [8, 256], strides = [1, 1]} : vector<8x384xf32> to vector<8x256xf32>
    %57 = vector.extract_strided_slice %55 {offsets = [0, 0], sizes = [8, 256], strides = [1, 1]} : vector<8x384xf32> to vector<8x256xf32>
    %58 = arith.addf %56, %57 : vector<8x256xf32>
    %59 = arith.negf %58 : vector<8x256xf32>
    %60 = math.exp %59 : vector<8x256xf32>
    %cst_28 = arith.constant 1.000000e+00 : f32
    %61 = vector.broadcast %cst_28 : f32 to vector<8x256xf32>
    %62 = arith.addf %61, %60 : vector<8x256xf32>
    %63 = arith.divf %61, %62 : vector<8x256xf32>
    %64 = vector.extract_strided_slice %63 {offsets = [0, 0], sizes = [8, 128], strides = [1, 1]} : vector<8x256xf32> to vector<8x128xf32>
    %65 = vector.extract_strided_slice %63 {offsets = [0, 128], sizes = [8, 128], strides = [1, 1]} : vector<8x256xf32> to vector<8x128xf32>
    %66 = vector.extract_strided_slice %53 {offsets = [0, 256], sizes = [8, 128], strides = [1, 1]} : vector<8x384xf32> to vector<8x128xf32>
    %67 = vector.extract_strided_slice %55 {offsets = [0, 256], sizes = [8, 128], strides = [1, 1]} : vector<8x384xf32> to vector<8x128xf32>
    %68 = arith.addf %67, %18 : vector<8x128xf32>
    %69 = arith.mulf %64, %68 : vector<8x128xf32>
    %70 = arith.addf %66, %69 : vector<8x128xf32>
    %71 = math.tanh %70 : vector<8x128xf32>
    %cst_29 = arith.constant 1.000000e+00 : f32
    %72 = vector.broadcast %cst_29 : f32 to vector<8x128xf32>
    %73 = arith.subf %72, %65 : vector<8x128xf32>
    %74 = arith.mulf %73, %71 : vector<8x128xf32>
    %75 = arith.mulf %65, %47 : vector<8x128xf32>
    %76 = arith.addf %74, %75 : vector<8x128xf32>
    %77 = arith.index_cast %51 : i32 to index
    %c0_30 = arith.constant 0 : index
    %78 = vector.load %arg12[%77, %c0_30] : memref<64x128xf32, #tpu.memory_space<vmem>>, vector<8x128xf32>
    tpu.vector_store %arg12[%77, %c0_30], %76 {strides = array<i32>} : memref<64x128xf32, #tpu.memory_space<vmem>>, vector<8x128xf32>,
    %c2_i32 = arith.constant 2 : i32
    %c8_i32_31 = arith.constant 8 : i32
    %79 = arith.muli %c2_i32, %c8_i32_31 : i32
    %80 = tpu.assume_multiple %79, 8 : i32
    %81 = arith.index_cast %80 : i32 to index
    %c0_32 = arith.constant 0 : index
    %82 = vector.load %arg13[%81, %c0_32] : memref<64x384xf32, #tpu.memory_space<vmem>>, vector<8x384xf32>
    %83 = arith.truncf %76 : vector<8x128xf32> to vector<8x128xbf16>
    %cst_33 = arith.constant dense<0.000000e+00> : vector<8x384xf32>
    %84 = tpu.matmul %83, %14, %cst_33 {dimension_numbers = #tpu.dot_dimension_numbers<[1], [0], [0], [1], [0, 0, 1, 1], [], []>} : vector<8x128xbf16>, vector<128x384xbf16>, vector<8x384xf32> -> vector<8x384xf32>
    %85 = vector.extract_strided_slice %82 {offsets = [0, 0], sizes = [8, 256], strides = [1, 1]} : vector<8x384xf32> to vector<8x256xf32>
    %86 = vector.extract_strided_slice %84 {offsets = [0, 0], sizes = [8, 256], strides = [1, 1]} : vector<8x384xf32> to vector<8x256xf32>
    %87 = arith.addf %85, %86 : vector<8x256xf32>
    %88 = arith.negf %87 : vector<8x256xf32>
    %89 = math.exp %88 : vector<8x256xf32>
    %cst_34 = arith.constant 1.000000e+00 : f32
    %90 = vector.broadcast %cst_34 : f32 to vector<8x256xf32>
    %91 = arith.addf %90, %89 : vector<8x256xf32>
    %92 = arith.divf %90, %91 : vector<8x256xf32>
    %93 = vector.extract_strided_slice %92 {offsets = [0, 0], sizes = [8, 128], strides = [1, 1]} : vector<8x256xf32> to vector<8x128xf32>
    %94 = vector.extract_strided_slice %92 {offsets = [0, 128], sizes = [8, 128], strides = [1, 1]} : vector<8x256xf32> to vector<8x128xf32>
    %95 = vector.extract_strided_slice %82 {offsets = [0, 256], sizes = [8, 128], strides = [1, 1]} : vector<8x384xf32> to vector<8x128xf32>
    %96 = vector.extract_strided_slice %84 {offsets = [0, 256], sizes = [8, 128], strides = [1, 1]} : vector<8x384xf32> to vector<8x128xf32>
    %97 = arith.addf %96, %18 : vector<8x128xf32>
    %98 = arith.mulf %93, %97 : vector<8x128xf32>
    %99 = arith.addf %95, %98 : vector<8x128xf32>
    %100 = math.tanh %99 : vector<8x128xf32>
    %cst_35 = arith.constant 1.000000e+00 : f32
    %101 = vector.broadcast %cst_35 : f32 to vector<8x128xf32>
    %102 = arith.subf %101, %94 : vector<8x128xf32>
    %103 = arith.mulf %102, %100 : vector<8x128xf32>
    %104 = arith.mulf %94, %76 : vector<8x128xf32>
    %105 = arith.addf %103, %104 : vector<8x128xf32>
    %106 = arith.index_cast %80 : i32 to index
    %c0_36 = arith.constant 0 : index
    %107 = vector.load %arg12[%106, %c0_36] : memref<64x128xf32, #tpu.memory_space<vmem>>, vector<8x128xf32>
    tpu.vector_store %arg12[%106, %c0_36], %105 {strides = array<i32>} : memref<64x128xf32, #tpu.memory_space<vmem>>, vector<8x128xf32>,
    %c3_i32 = arith.constant 3 : i32
    %c8_i32_37 = arith.constant 8 : i32
    %108 = arith.muli %c3_i32, %c8_i32_37 : i32
    %109 = tpu.assume_multiple %108, 8 : i32
    %110 = arith.index_cast %109 : i32 to index
    %c0_38 = arith.constant 0 : index
    %111 = vector.load %arg13[%110, %c0_38] : memref<64x384xf32, #tpu.memory_space<vmem>>, vector<8x384xf32>
    %112 = arith.truncf %105 : vector<8x128xf32> to vector<8x128xbf16>
    %cst_39 = arith.constant dense<0.000000e+00> : vector<8x384xf32>
    %113 = tpu.matmul %112, %14, %cst_39 {dimension_numbers = #tpu.dot_dimension_numbers<[1], [0], [0], [1], [0, 0, 1, 1], [], []>} : vector<8x128xbf16>, vector<128x384xbf16>, vector<8x384xf32> -> vector<8x384xf32>
    %114 = vector.extract_strided_slice %111 {offsets = [0, 0], sizes = [8, 256], strides = [1, 1]} : vector<8x384xf32> to vector<8x256xf32>
    %115 = vector.extract_strided_slice %113 {offsets = [0, 0], sizes = [8, 256], strides = [1, 1]} : vector<8x384xf32> to vector<8x256xf32>
    %116 = arith.addf %114, %115 : vector<8x256xf32>
    %117 = arith.negf %116 : vector<8x256xf32>
    %118 = math.exp %117 : vector<8x256xf32>
    %cst_40 = arith.constant 1.000000e+00 : f32
    %119 = vector.broadcast %cst_40 : f32 to vector<8x256xf32>
    %120 = arith.addf %119, %118 : vector<8x256xf32>
    %121 = arith.divf %119, %120 : vector<8x256xf32>
    %122 = vector.extract_strided_slice %121 {offsets = [0, 0], sizes = [8, 128], strides = [1, 1]} : vector<8x256xf32> to vector<8x128xf32>
    %123 = vector.extract_strided_slice %121 {offsets = [0, 128], sizes = [8, 128], strides = [1, 1]} : vector<8x256xf32> to vector<8x128xf32>
    %124 = vector.extract_strided_slice %111 {offsets = [0, 256], sizes = [8, 128], strides = [1, 1]} : vector<8x384xf32> to vector<8x128xf32>
    %125 = vector.extract_strided_slice %113 {offsets = [0, 256], sizes = [8, 128], strides = [1, 1]} : vector<8x384xf32> to vector<8x128xf32>
    %126 = arith.addf %125, %18 : vector<8x128xf32>
    %127 = arith.mulf %122, %126 : vector<8x128xf32>
    %128 = arith.addf %124, %127 : vector<8x128xf32>
    %129 = math.tanh %128 : vector<8x128xf32>
    %cst_41 = arith.constant 1.000000e+00 : f32
    %130 = vector.broadcast %cst_41 : f32 to vector<8x128xf32>
    %131 = arith.subf %130, %123 : vector<8x128xf32>
    %132 = arith.mulf %131, %129 : vector<8x128xf32>
    %133 = arith.mulf %123, %105 : vector<8x128xf32>
    %134 = arith.addf %132, %133 : vector<8x128xf32>
    %135 = arith.index_cast %109 : i32 to index
    %c0_42 = arith.constant 0 : index
    %136 = vector.load %arg12[%135, %c0_42] : memref<64x128xf32, #tpu.memory_space<vmem>>, vector<8x128xf32>
    tpu.vector_store %arg12[%135, %c0_42], %134 {strides = array<i32>} : memref<64x128xf32, #tpu.memory_space<vmem>>, vector<8x128xf32>,
    %c4_i32 = arith.constant 4 : i32
    %c8_i32_43 = arith.constant 8 : i32
    %137 = arith.muli %c4_i32, %c8_i32_43 : i32
    %138 = tpu.assume_multiple %137, 8 : i32
    %139 = arith.index_cast %138 : i32 to index
    %c0_44 = arith.constant 0 : index
    %140 = vector.load %arg13[%139, %c0_44] : memref<64x384xf32, #tpu.memory_space<vmem>>, vector<8x384xf32>
    %141 = arith.truncf %134 : vector<8x128xf32> to vector<8x128xbf16>
    %cst_45 = arith.constant dense<0.000000e+00> : vector<8x384xf32>
    %142 = tpu.matmul %141, %14, %cst_45 {dimension_numbers = #tpu.dot_dimension_numbers<[1], [0], [0], [1], [0, 0, 1, 1], [], []>} : vector<8x128xbf16>, vector<128x384xbf16>, vector<8x384xf32> -> vector<8x384xf32>
    %143 = vector.extract_strided_slice %140 {offsets = [0, 0], sizes = [8, 256], strides = [1, 1]} : vector<8x384xf32> to vector<8x256xf32>
    %144 = vector.extract_strided_slice %142 {offsets = [0, 0], sizes = [8, 256], strides = [1, 1]} : vector<8x384xf32> to vector<8x256xf32>
    %145 = arith.addf %143, %144 : vector<8x256xf32>
    %146 = arith.negf %145 : vector<8x256xf32>
    %147 = math.exp %146 : vector<8x256xf32>
    %cst_46 = arith.constant 1.000000e+00 : f32
    %148 = vector.broadcast %cst_46 : f32 to vector<8x256xf32>
    %149 = arith.addf %148, %147 : vector<8x256xf32>
    %150 = arith.divf %148, %149 : vector<8x256xf32>
    %151 = vector.extract_strided_slice %150 {offsets = [0, 0], sizes = [8, 128], strides = [1, 1]} : vector<8x256xf32> to vector<8x128xf32>
    %152 = vector.extract_strided_slice %150 {offsets = [0, 128], sizes = [8, 128], strides = [1, 1]} : vector<8x256xf32> to vector<8x128xf32>
    %153 = vector.extract_strided_slice %140 {offsets = [0, 256], sizes = [8, 128], strides = [1, 1]} : vector<8x384xf32> to vector<8x128xf32>
    %154 = vector.extract_strided_slice %142 {offsets = [0, 256], sizes = [8, 128], strides = [1, 1]} : vector<8x384xf32> to vector<8x128xf32>
    %155 = arith.addf %154, %18 : vector<8x128xf32>
    %156 = arith.mulf %151, %155 : vector<8x128xf32>
    %157 = arith.addf %153, %156 : vector<8x128xf32>
    %158 = math.tanh %157 : vector<8x128xf32>
    %cst_47 = arith.constant 1.000000e+00 : f32
    %159 = vector.broadcast %cst_47 : f32 to vector<8x128xf32>
    %160 = arith.subf %159, %152 : vector<8x128xf32>
    %161 = arith.mulf %160, %158 : vector<8x128xf32>
    %162 = arith.mulf %152, %134 : vector<8x128xf32>
    %163 = arith.addf %161, %162 : vector<8x128xf32>
    %164 = arith.index_cast %138 : i32 to index
    %c0_48 = arith.constant 0 : index
    %165 = vector.load %arg12[%164, %c0_48] : memref<64x128xf32, #tpu.memory_space<vmem>>, vector<8x128xf32>
    tpu.vector_store %arg12[%164, %c0_48], %163 {strides = array<i32>} : memref<64x128xf32, #tpu.memory_space<vmem>>, vector<8x128xf32>,
    %c5_i32 = arith.constant 5 : i32
    %c8_i32_49 = arith.constant 8 : i32
    %166 = arith.muli %c5_i32, %c8_i32_49 : i32
    %167 = tpu.assume_multiple %166, 8 : i32
    %168 = arith.index_cast %167 : i32 to index
    %c0_50 = arith.constant 0 : index
    %169 = vector.load %arg13[%168, %c0_50] : memref<64x384xf32, #tpu.memory_space<vmem>>, vector<8x384xf32>
    %170 = arith.truncf %163 : vector<8x128xf32> to vector<8x128xbf16>
    %cst_51 = arith.constant dense<0.000000e+00> : vector<8x384xf32>
    %171 = tpu.matmul %170, %14, %cst_51 {dimension_numbers = #tpu.dot_dimension_numbers<[1], [0], [0], [1], [0, 0, 1, 1], [], []>} : vector<8x128xbf16>, vector<128x384xbf16>, vector<8x384xf32> -> vector<8x384xf32>
    %172 = vector.extract_strided_slice %169 {offsets = [0, 0], sizes = [8, 256], strides = [1, 1]} : vector<8x384xf32> to vector<8x256xf32>
    %173 = vector.extract_strided_slice %171 {offsets = [0, 0], sizes = [8, 256], strides = [1, 1]} : vector<8x384xf32> to vector<8x256xf32>
    %174 = arith.addf %172, %173 : vector<8x256xf32>
    %175 = arith.negf %174 : vector<8x256xf32>
    %176 = math.exp %175 : vector<8x256xf32>
    %cst_52 = arith.constant 1.000000e+00 : f32
    %177 = vector.broadcast %cst_52 : f32 to vector<8x256xf32>
    %178 = arith.addf %177, %176 : vector<8x256xf32>
    %179 = arith.divf %177, %178 : vector<8x256xf32>
    %180 = vector.extract_strided_slice %179 {offsets = [0, 0], sizes = [8, 128], strides = [1, 1]} : vector<8x256xf32> to vector<8x128xf32>
    %181 = vector.extract_strided_slice %179 {offsets = [0, 128], sizes = [8, 128], strides = [1, 1]} : vector<8x256xf32> to vector<8x128xf32>
    %182 = vector.extract_strided_slice %169 {offsets = [0, 256], sizes = [8, 128], strides = [1, 1]} : vector<8x384xf32> to vector<8x128xf32>
    %183 = vector.extract_strided_slice %171 {offsets = [0, 256], sizes = [8, 128], strides = [1, 1]} : vector<8x384xf32> to vector<8x128xf32>
    %184 = arith.addf %183, %18 : vector<8x128xf32>
    %185 = arith.mulf %180, %184 : vector<8x128xf32>
    %186 = arith.addf %182, %185 : vector<8x128xf32>
    %187 = math.tanh %186 : vector<8x128xf32>
    %cst_53 = arith.constant 1.000000e+00 : f32
    %188 = vector.broadcast %cst_53 : f32 to vector<8x128xf32>
    %189 = arith.subf %188, %181 : vector<8x128xf32>
    %190 = arith.mulf %189, %187 : vector<8x128xf32>
    %191 = arith.mulf %181, %163 : vector<8x128xf32>
    %192 = arith.addf %190, %191 : vector<8x128xf32>
    %193 = arith.index_cast %167 : i32 to index
    %c0_54 = arith.constant 0 : index
    %194 = vector.load %arg12[%193, %c0_54] : memref<64x128xf32, #tpu.memory_space<vmem>>, vector<8x128xf32>
    tpu.vector_store %arg12[%193, %c0_54], %192 {strides = array<i32>} : memref<64x128xf32, #tpu.memory_space<vmem>>, vector<8x128xf32>,
    %c6_i32 = arith.constant 6 : i32
    %c8_i32_55 = arith.constant 8 : i32
    %195 = arith.muli %c6_i32, %c8_i32_55 : i32
    %196 = tpu.assume_multiple %195, 8 : i32
    %197 = arith.index_cast %196 : i32 to index
    %c0_56 = arith.constant 0 : index
    %198 = vector.load %arg13[%197, %c0_56] : memref<64x384xf32, #tpu.memory_space<vmem>>, vector<8x384xf32>
    %199 = arith.truncf %192 : vector<8x128xf32> to vector<8x128xbf16>
    %cst_57 = arith.constant dense<0.000000e+00> : vector<8x384xf32>
    %200 = tpu.matmul %199, %14, %cst_57 {dimension_numbers = #tpu.dot_dimension_numbers<[1], [0], [0], [1], [0, 0, 1, 1], [], []>} : vector<8x128xbf16>, vector<128x384xbf16>, vector<8x384xf32> -> vector<8x384xf32>
    %201 = vector.extract_strided_slice %198 {offsets = [0, 0], sizes = [8, 256], strides = [1, 1]} : vector<8x384xf32> to vector<8x256xf32>
    %202 = vector.extract_strided_slice %200 {offsets = [0, 0], sizes = [8, 256], strides = [1, 1]} : vector<8x384xf32> to vector<8x256xf32>
    %203 = arith.addf %201, %202 : vector<8x256xf32>
    %204 = arith.negf %203 : vector<8x256xf32>
    %205 = math.exp %204 : vector<8x256xf32>
    %cst_58 = arith.constant 1.000000e+00 : f32
    %206 = vector.broadcast %cst_58 : f32 to vector<8x256xf32>
    %207 = arith.addf %206, %205 : vector<8x256xf32>
    %208 = arith.divf %206, %207 : vector<8x256xf32>
    %209 = vector.extract_strided_slice %208 {offsets = [0, 0], sizes = [8, 128], strides = [1, 1]} : vector<8x256xf32> to vector<8x128xf32>
    %210 = vector.extract_strided_slice %208 {offsets = [0, 128], sizes = [8, 128], strides = [1, 1]} : vector<8x256xf32> to vector<8x128xf32>
    %211 = vector.extract_strided_slice %198 {offsets = [0, 256], sizes = [8, 128], strides = [1, 1]} : vector<8x384xf32> to vector<8x128xf32>
    %212 = vector.extract_strided_slice %200 {offsets = [0, 256], sizes = [8, 128], strides = [1, 1]} : vector<8x384xf32> to vector<8x128xf32>
    %213 = arith.addf %212, %18 : vector<8x128xf32>
    %214 = arith.mulf %209, %213 : vector<8x128xf32>
    %215 = arith.addf %211, %214 : vector<8x128xf32>
    %216 = math.tanh %215 : vector<8x128xf32>
    %cst_59 = arith.constant 1.000000e+00 : f32
    %217 = vector.broadcast %cst_59 : f32 to vector<8x128xf32>
    %218 = arith.subf %217, %210 : vector<8x128xf32>
    %219 = arith.mulf %218, %216 : vector<8x128xf32>
    %220 = arith.mulf %210, %192 : vector<8x128xf32>
    %221 = arith.addf %219, %220 : vector<8x128xf32>
    %222 = arith.index_cast %196 : i32 to index
    %c0_60 = arith.constant 0 : index
    %223 = vector.load %arg12[%222, %c0_60] : memref<64x128xf32, #tpu.memory_space<vmem>>, vector<8x128xf32>
    tpu.vector_store %arg12[%222, %c0_60], %221 {strides = array<i32>} : memref<64x128xf32, #tpu.memory_space<vmem>>, vector<8x128xf32>,
    %c7_i32 = arith.constant 7 : i32
    %c8_i32_61 = arith.constant 8 : i32
    %224 = arith.muli %c7_i32, %c8_i32_61 : i32
    %225 = tpu.assume_multiple %224, 8 : i32
    %226 = arith.index_cast %225 : i32 to index
    %c0_62 = arith.constant 0 : index
    %227 = vector.load %arg13[%226, %c0_62] : memref<64x384xf32, #tpu.memory_space<vmem>>, vector<8x384xf32>
    %228 = arith.truncf %221 : vector<8x128xf32> to vector<8x128xbf16>
    %cst_63 = arith.constant dense<0.000000e+00> : vector<8x384xf32>
    %229 = tpu.matmul %228, %14, %cst_63 {dimension_numbers = #tpu.dot_dimension_numbers<[1], [0], [0], [1], [0, 0, 1, 1], [], []>} : vector<8x128xbf16>, vector<128x384xbf16>, vector<8x384xf32> -> vector<8x384xf32>
    %230 = vector.extract_strided_slice %227 {offsets = [0, 0], sizes = [8, 256], strides = [1, 1]} : vector<8x384xf32> to vector<8x256xf32>
    %231 = vector.extract_strided_slice %229 {offsets = [0, 0], sizes = [8, 256], strides = [1, 1]} : vector<8x384xf32> to vector<8x256xf32>
    %232 = arith.addf %230, %231 : vector<8x256xf32>
    %233 = arith.negf %232 : vector<8x256xf32>
    %234 = math.exp %233 : vector<8x256xf32>
    %cst_64 = arith.constant 1.000000e+00 : f32
    %235 = vector.broadcast %cst_64 : f32 to vector<8x256xf32>
    %236 = arith.addf %235, %234 : vector<8x256xf32>
    %237 = arith.divf %235, %236 : vector<8x256xf32>
    %238 = vector.extract_strided_slice %237 {offsets = [0, 0], sizes = [8, 128], strides = [1, 1]} : vector<8x256xf32> to vector<8x128xf32>
    %239 = vector.extract_strided_slice %237 {offsets = [0, 128], sizes = [8, 128], strides = [1, 1]} : vector<8x256xf32> to vector<8x128xf32>
    %240 = vector.extract_strided_slice %227 {offsets = [0, 256], sizes = [8, 128], strides = [1, 1]} : vector<8x384xf32> to vector<8x128xf32>
    %241 = vector.extract_strided_slice %229 {offsets = [0, 256], sizes = [8, 128], strides = [1, 1]} : vector<8x384xf32> to vector<8x128xf32>
    %242 = arith.addf %241, %18 : vector<8x128xf32>
    %243 = arith.mulf %238, %242 : vector<8x128xf32>
    %244 = arith.addf %240, %243 : vector<8x128xf32>
    %245 = math.tanh %244 : vector<8x128xf32>
    %cst_65 = arith.constant 1.000000e+00 : f32
    %246 = vector.broadcast %cst_65 : f32 to vector<8x128xf32>
    %247 = arith.subf %246, %239 : vector<8x128xf32>
    %248 = arith.mulf %247, %245 : vector<8x128xf32>
    %249 = arith.mulf %239, %221 : vector<8x128xf32>
    %250 = arith.addf %248, %249 : vector<8x128xf32>
    %251 = arith.index_cast %225 : i32 to index
    %c0_66 = arith.constant 0 : index
    %252 = vector.load %arg12[%251, %c0_66] : memref<64x128xf32, #tpu.memory_space<vmem>>, vector<8x128xf32>
    tpu.vector_store %arg12[%251, %c0_66], %250 {strides = array<i32>} : memref<64x128xf32, #tpu.memory_space<vmem>>, vector<8x128xf32>,
    %c8_i32_67 = arith.constant 8 : i32
    %c0_68 = arith.constant 0 : index
    %c0_69 = arith.constant 0 : index
    %c0_70 = arith.constant 0 : index
    %253 = vector.load %arg11[%c0_68, %c0_69, %c0_70] : memref<4x8x128xf32, #tpu.memory_space<vmem>>, vector<1x8x128xf32>
    %254 = vector.shape_cast %253 : vector<1x8x128xf32> to vector<8x128xf32>
    %255 = vector.shape_cast %250 : vector<8x128xf32> to vector<1x8x128xf32>
    tpu.vector_store %arg11[%c0_68, %c0_69, %c0_70], %255 {strides = array<i32>} : memref<4x8x128xf32, #tpu.memory_space<vmem>>, vector<1x8x128xf32>,
    %c0_71 = arith.constant 0 : index
    %c0_72 = arith.constant 0 : index
    %256 = vector.load %arg12[%c0_71, %c0_72] : memref<64x128xf32, #tpu.memory_space<vmem>>, vector<64x128xf32>
    %257 = arith.truncf %256 : vector<64x128xf32> to vector<64x128xbf16>
    %c0_73 = arith.constant 0 : index
    %c0_74 = arith.constant 0 : index
    %c0_75 = arith.constant 0 : index
    %258 = vector.load %arg4[%c0_73, %c0_74, %c0_75] : memref<3x128x384xbf16, #tpu.memory_space<vmem>>, vector<1x128x384xbf16>
    %259 = vector.shape_cast %258 : vector<1x128x384xbf16> to vector<128x384xbf16>
    %cst_76 = arith.constant dense<0.000000e+00> : vector<64x384xf32>
    %260 = tpu.matmul %257, %259, %cst_76 {dimension_numbers = #tpu.dot_dimension_numbers<[1], [0], [0], [1], [0, 0, 1, 1], [], []>} : vector<64x128xbf16>, vector<128x384xbf16>, vector<64x384xf32> -> vector<64x384xf32>
    %c1 = arith.constant 1 : index
    %c0_77 = arith.constant 0 : index
    %c0_78 = arith.constant 0 : index
    %261 = vector.load %arg6[%c1, %c0_77, %c0_78] : memref<4x1x384xf32, #tpu.memory_space<vmem>>, vector<1x1x384xf32>
    %262 = vector.shape_cast %261 : vector<1x1x384xf32> to vector<1x384xf32>
    %263 = vector.broadcast %262 : vector<1x384xf32> to vector<64x384xf32>
    %264 = arith.addf %260, %263 : vector<64x384xf32>
    %c0_79 = arith.constant 0 : index
    %c0_80 = arith.constant 0 : index
    %265 = vector.load %arg13[%c0_79, %c0_80] : memref<64x384xf32, #tpu.memory_space<vmem>>, vector<64x384xf32>
    tpu.vector_store %arg13[%c0_79, %c0_80], %264 {strides = array<i32>} : memref<64x384xf32, #tpu.memory_space<vmem>>, vector<64x384xf32>,
    %c1_81 = arith.constant 1 : index
    %c0_82 = arith.constant 0 : index
    %c0_83 = arith.constant 0 : index
    %266 = vector.load %arg5[%c1_81, %c0_82, %c0_83] : memref<4x128x384xbf16, #tpu.memory_space<vmem>>, vector<1x128x384xbf16>
    %267 = vector.shape_cast %266 : vector<1x128x384xbf16> to vector<128x384xbf16>
    %c1_84 = arith.constant 1 : index
    %c0_85 = arith.constant 0 : index
    %c0_86 = arith.constant 0 : index
    %268 = vector.load %arg7[%c1_84, %c0_85, %c0_86] : memref<4x1x128xf32, #tpu.memory_space<vmem>>, vector<1x1x128xf32>
    %269 = vector.shape_cast %268 : vector<1x1x128xf32> to vector<1x128xf32>
    %270 = vector.shape_cast %269 : vector<1x128xf32> to vector<1x128xf32>
    %271 = vector.broadcast %270 : vector<1x128xf32> to vector<8x128xf32>
    %c1_87 = arith.constant 1 : index
    %c0_88 = arith.constant 0 : index
    %c0_89 = arith.constant 0 : index
    %272 = vector.load %arg11[%c1_87, %c0_88, %c0_89] : memref<4x8x128xf32, #tpu.memory_space<vmem>>, vector<1x8x128xf32>
    %273 = vector.shape_cast %272 : vector<1x8x128xf32> to vector<8x128xf32>
    %c0_i32_90 = arith.constant 0 : i32
    %c8_i32_91 = arith.constant 8 : i32
    %274 = arith.muli %c0_i32_90, %c8_i32_91 : i32
    %275 = tpu.assume_multiple %274, 8 : i32
    %276 = arith.index_cast %275 : i32 to index
    %c0_92 = arith.constant 0 : index
    %277 = vector.load %arg13[%276, %c0_92] : memref<64x384xf32, #tpu.memory_space<vmem>>, vector<8x384xf32>
    %278 = arith.truncf %273 : vector<8x128xf32> to vector<8x128xbf16>
    %cst_93 = arith.constant dense<0.000000e+00> : vector<8x384xf32>
    %279 = tpu.matmul %278, %267, %cst_93 {dimension_numbers = #tpu.dot_dimension_numbers<[1], [0], [0], [1], [0, 0, 1, 1], [], []>} : vector<8x128xbf16>, vector<128x384xbf16>, vector<8x384xf32> -> vector<8x384xf32>
    %280 = vector.extract_strided_slice %277 {offsets = [0, 0], sizes = [8, 256], strides = [1, 1]} : vector<8x384xf32> to vector<8x256xf32>
    %281 = vector.extract_strided_slice %279 {offsets = [0, 0], sizes = [8, 256], strides = [1, 1]} : vector<8x384xf32> to vector<8x256xf32>
    %282 = arith.addf %280, %281 : vector<8x256xf32>
    %283 = arith.negf %282 : vector<8x256xf32>
    %284 = math.exp %283 : vector<8x256xf32>
    %cst_94 = arith.constant 1.000000e+00 : f32
    %285 = vector.broadcast %cst_94 : f32 to vector<8x256xf32>
    %286 = arith.addf %285, %284 : vector<8x256xf32>
    %287 = arith.divf %285, %286 : vector<8x256xf32>
    %288 = vector.extract_strided_slice %287 {offsets = [0, 0], sizes = [8, 128], strides = [1, 1]} : vector<8x256xf32> to vector<8x128xf32>
    %289 = vector.extract_strided_slice %287 {offsets = [0, 128], sizes = [8, 128], strides = [1, 1]} : vector<8x256xf32> to vector<8x128xf32>
    %290 = vector.extract_strided_slice %277 {offsets = [0, 256], sizes = [8, 128], strides = [1, 1]} : vector<8x384xf32> to vector<8x128xf32>
    %291 = vector.extract_strided_slice %279 {offsets = [0, 256], sizes = [8, 128], strides = [1, 1]} : vector<8x384xf32> to vector<8x128xf32>
    %292 = arith.addf %291, %271 : vector<8x128xf32>
    %293 = arith.mulf %288, %292 : vector<8x128xf32>
    %294 = arith.addf %290, %293 : vector<8x128xf32>
    %295 = math.tanh %294 : vector<8x128xf32>
    %cst_95 = arith.constant 1.000000e+00 : f32
    %296 = vector.broadcast %cst_95 : f32 to vector<8x128xf32>
    %297 = arith.subf %296, %289 : vector<8x128xf32>
    %298 = arith.mulf %297, %295 : vector<8x128xf32>
    %299 = arith.mulf %289, %273 : vector<8x128xf32>
    %300 = arith.addf %298, %299 : vector<8x128xf32>
    %301 = arith.index_cast %275 : i32 to index
    %c0_96 = arith.constant 0 : index
    %302 = vector.load %arg12[%301, %c0_96] : memref<64x128xf32, #tpu.memory_space<vmem>>, vector<8x128xf32>
    tpu.vector_store %arg12[%301, %c0_96], %300 {strides = array<i32>} : memref<64x128xf32, #tpu.memory_space<vmem>>, vector<8x128xf32>,
    %c1_i32_97 = arith.constant 1 : i32
    %c8_i32_98 = arith.constant 8 : i32
    %303 = arith.muli %c1_i32_97, %c8_i32_98 : i32
    %304 = tpu.assume_multiple %303, 8 : i32
    %305 = arith.index_cast %304 : i32 to index
    %c0_99 = arith.constant 0 : index
    %306 = vector.load %arg13[%305, %c0_99] : memref<64x384xf32, #tpu.memory_space<vmem>>, vector<8x384xf32>
    %307 = arith.truncf %300 : vector<8x128xf32> to vector<8x128xbf16>
    %cst_100 = arith.constant dense<0.000000e+00> : vector<8x384xf32>
    %308 = tpu.matmul %307, %267, %cst_100 {dimension_numbers = #tpu.dot_dimension_numbers<[1], [0], [0], [1], [0, 0, 1, 1], [], []>} : vector<8x128xbf16>, vector<128x384xbf16>, vector<8x384xf32> -> vector<8x384xf32>
    %309 = vector.extract_strided_slice %306 {offsets = [0, 0], sizes = [8, 256], strides = [1, 1]} : vector<8x384xf32> to vector<8x256xf32>
    %310 = vector.extract_strided_slice %308 {offsets = [0, 0], sizes = [8, 256], strides = [1, 1]} : vector<8x384xf32> to vector<8x256xf32>
    %311 = arith.addf %309, %310 : vector<8x256xf32>
    %312 = arith.negf %311 : vector<8x256xf32>
    %313 = math.exp %312 : vector<8x256xf32>
    %cst_101 = arith.constant 1.000000e+00 : f32
    %314 = vector.broadcast %cst_101 : f32 to vector<8x256xf32>
    %315 = arith.addf %314, %313 : vector<8x256xf32>
    %316 = arith.divf %314, %315 : vector<8x256xf32>
    %317 = vector.extract_strided_slice %316 {offsets = [0, 0], sizes = [8, 128], strides = [1, 1]} : vector<8x256xf32> to vector<8x128xf32>
    %318 = vector.extract_strided_slice %316 {offsets = [0, 128], sizes = [8, 128], strides = [1, 1]} : vector<8x256xf32> to vector<8x128xf32>
    %319 = vector.extract_strided_slice %306 {offsets = [0, 256], sizes = [8, 128], strides = [1, 1]} : vector<8x384xf32> to vector<8x128xf32>
    %320 = vector.extract_strided_slice %308 {offsets = [0, 256], sizes = [8, 128], strides = [1, 1]} : vector<8x384xf32> to vector<8x128xf32>
    %321 = arith.addf %320, %271 : vector<8x128xf32>
    %322 = arith.mulf %317, %321 : vector<8x128xf32>
    %323 = arith.addf %319, %322 : vector<8x128xf32>
    %324 = math.tanh %323 : vector<8x128xf32>
    %cst_102 = arith.constant 1.000000e+00 : f32
    %325 = vector.broadcast %cst_102 : f32 to vector<8x128xf32>
    %326 = arith.subf %325, %318 : vector<8x128xf32>
    %327 = arith.mulf %326, %324 : vector<8x128xf32>
    %328 = arith.mulf %318, %300 : vector<8x128xf32>
    %329 = arith.addf %327, %328 : vector<8x128xf32>
    %330 = arith.index_cast %304 : i32 to index
    %c0_103 = arith.constant 0 : index
    %331 = vector.load %arg12[%330, %c0_103] : memref<64x128xf32, #tpu.memory_space<vmem>>, vector<8x128xf32>
    tpu.vector_store %arg12[%330, %c0_103], %329 {strides = array<i32>} : memref<64x128xf32, #tpu.memory_space<vmem>>, vector<8x128xf32>,
    %c2_i32_104 = arith.constant 2 : i32
    %c8_i32_105 = arith.constant 8 : i32
    %332 = arith.muli %c2_i32_104, %c8_i32_105 : i32
    %333 = tpu.assume_multiple %332, 8 : i32
    %334 = arith.index_cast %333 : i32 to index
    %c0_106 = arith.constant 0 : index
    %335 = vector.load %arg13[%334, %c0_106] : memref<64x384xf32, #tpu.memory_space<vmem>>, vector<8x384xf32>
    %336 = arith.truncf %329 : vector<8x128xf32> to vector<8x128xbf16>
    %cst_107 = arith.constant dense<0.000000e+00> : vector<8x384xf32>
    %337 = tpu.matmul %336, %267, %cst_107 {dimension_numbers = #tpu.dot_dimension_numbers<[1], [0], [0], [1], [0, 0, 1, 1], [], []>} : vector<8x128xbf16>, vector<128x384xbf16>, vector<8x384xf32> -> vector<8x384xf32>
    %338 = vector.extract_strided_slice %335 {offsets = [0, 0], sizes = [8, 256], strides = [1, 1]} : vector<8x384xf32> to vector<8x256xf32>
    %339 = vector.extract_strided_slice %337 {offsets = [0, 0], sizes = [8, 256], strides = [1, 1]} : vector<8x384xf32> to vector<8x256xf32>
    %340 = arith.addf %338, %339 : vector<8x256xf32>
    %341 = arith.negf %340 : vector<8x256xf32>
    %342 = math.exp %341 : vector<8x256xf32>
    %cst_108 = arith.constant 1.000000e+00 : f32
    %343 = vector.broadcast %cst_108 : f32 to vector<8x256xf32>
    %344 = arith.addf %343, %342 : vector<8x256xf32>
    %345 = arith.divf %343, %344 : vector<8x256xf32>
    %346 = vector.extract_strided_slice %345 {offsets = [0, 0], sizes = [8, 128], strides = [1, 1]} : vector<8x256xf32> to vector<8x128xf32>
    %347 = vector.extract_strided_slice %345 {offsets = [0, 128], sizes = [8, 128], strides = [1, 1]} : vector<8x256xf32> to vector<8x128xf32>
    %348 = vector.extract_strided_slice %335 {offsets = [0, 256], sizes = [8, 128], strides = [1, 1]} : vector<8x384xf32> to vector<8x128xf32>
    %349 = vector.extract_strided_slice %337 {offsets = [0, 256], sizes = [8, 128], strides = [1, 1]} : vector<8x384xf32> to vector<8x128xf32>
    %350 = arith.addf %349, %271 : vector<8x128xf32>
    %351 = arith.mulf %346, %350 : vector<8x128xf32>
    %352 = arith.addf %348, %351 : vector<8x128xf32>
    %353 = math.tanh %352 : vector<8x128xf32>
    %cst_109 = arith.constant 1.000000e+00 : f32
    %354 = vector.broadcast %cst_109 : f32 to vector<8x128xf32>
    %355 = arith.subf %354, %347 : vector<8x128xf32>
    %356 = arith.mulf %355, %353 : vector<8x128xf32>
    %357 = arith.mulf %347, %329 : vector<8x128xf32>
    %358 = arith.addf %356, %357 : vector<8x128xf32>
    %359 = arith.index_cast %333 : i32 to index
    %c0_110 = arith.constant 0 : index
    %360 = vector.load %arg12[%359, %c0_110] : memref<64x128xf32, #tpu.memory_space<vmem>>, vector<8x128xf32>
    tpu.vector_store %arg12[%359, %c0_110], %358 {strides = array<i32>} : memref<64x128xf32, #tpu.memory_space<vmem>>, vector<8x128xf32>,
    %c3_i32_111 = arith.constant 3 : i32
    %c8_i32_112 = arith.constant 8 : i32
    %361 = arith.muli %c3_i32_111, %c8_i32_112 : i32
    %362 = tpu.assume_multiple %361, 8 : i32
    %363 = arith.index_cast %362 : i32 to index
    %c0_113 = arith.constant 0 : index
    %364 = vector.load %arg13[%363, %c0_113] : memref<64x384xf32, #tpu.memory_space<vmem>>, vector<8x384xf32>
    %365 = arith.truncf %358 : vector<8x128xf32> to vector<8x128xbf16>
    %cst_114 = arith.constant dense<0.000000e+00> : vector<8x384xf32>
    %366 = tpu.matmul %365, %267, %cst_114 {dimension_numbers = #tpu.dot_dimension_numbers<[1], [0], [0], [1], [0, 0, 1, 1], [], []>} : vector<8x128xbf16>, vector<128x384xbf16>, vector<8x384xf32> -> vector<8x384xf32>
    %367 = vector.extract_strided_slice %364 {offsets = [0, 0], sizes = [8, 256], strides = [1, 1]} : vector<8x384xf32> to vector<8x256xf32>
    %368 = vector.extract_strided_slice %366 {offsets = [0, 0], sizes = [8, 256], strides = [1, 1]} : vector<8x384xf32> to vector<8x256xf32>
    %369 = arith.addf %367, %368 : vector<8x256xf32>
    %370 = arith.negf %369 : vector<8x256xf32>
    %371 = math.exp %370 : vector<8x256xf32>
    %cst_115 = arith.constant 1.000000e+00 : f32
    %372 = vector.broadcast %cst_115 : f32 to vector<8x256xf32>
    %373 = arith.addf %372, %371 : vector<8x256xf32>
    %374 = arith.divf %372, %373 : vector<8x256xf32>
    %375 = vector.extract_strided_slice %374 {offsets = [0, 0], sizes = [8, 128], strides = [1, 1]} : vector<8x256xf32> to vector<8x128xf32>
    %376 = vector.extract_strided_slice %374 {offsets = [0, 128], sizes = [8, 128], strides = [1, 1]} : vector<8x256xf32> to vector<8x128xf32>
    %377 = vector.extract_strided_slice %364 {offsets = [0, 256], sizes = [8, 128], strides = [1, 1]} : vector<8x384xf32> to vector<8x128xf32>
    %378 = vector.extract_strided_slice %366 {offsets = [0, 256], sizes = [8, 128], strides = [1, 1]} : vector<8x384xf32> to vector<8x128xf32>
    %379 = arith.addf %378, %271 : vector<8x128xf32>
    %380 = arith.mulf %375, %379 : vector<8x128xf32>
    %381 = arith.addf %377, %380 : vector<8x128xf32>
    %382 = math.tanh %381 : vector<8x128xf32>
    %cst_116 = arith.constant 1.000000e+00 : f32
    %383 = vector.broadcast %cst_116 : f32 to vector<8x128xf32>
    %384 = arith.subf %383, %376 : vector<8x128xf32>
    %385 = arith.mulf %384, %382 : vector<8x128xf32>
    %386 = arith.mulf %376, %358 : vector<8x128xf32>
    %387 = arith.addf %385, %386 : vector<8x128xf32>
    %388 = arith.index_cast %362 : i32 to index
    %c0_117 = arith.constant 0 : index
    %389 = vector.load %arg12[%388, %c0_117] : memref<64x128xf32, #tpu.memory_space<vmem>>, vector<8x128xf32>
    tpu.vector_store %arg12[%388, %c0_117], %387 {strides = array<i32>} : memref<64x128xf32, #tpu.memory_space<vmem>>, vector<8x128xf32>,
    %c4_i32_118 = arith.constant 4 : i32
    %c8_i32_119 = arith.constant 8 : i32
    %390 = arith.muli %c4_i32_118, %c8_i32_119 : i32
    %391 = tpu.assume_multiple %390, 8 : i32
    %392 = arith.index_cast %391 : i32 to index
    %c0_120 = arith.constant 0 : index
    %393 = vector.load %arg13[%392, %c0_120] : memref<64x384xf32, #tpu.memory_space<vmem>>, vector<8x384xf32>
    %394 = arith.truncf %387 : vector<8x128xf32> to vector<8x128xbf16>
    %cst_121 = arith.constant dense<0.000000e+00> : vector<8x384xf32>
    %395 = tpu.matmul %394, %267, %cst_121 {dimension_numbers = #tpu.dot_dimension_numbers<[1], [0], [0], [1], [0, 0, 1, 1], [], []>} : vector<8x128xbf16>, vector<128x384xbf16>, vector<8x384xf32> -> vector<8x384xf32>
    %396 = vector.extract_strided_slice %393 {offsets = [0, 0], sizes = [8, 256], strides = [1, 1]} : vector<8x384xf32> to vector<8x256xf32>
    %397 = vector.extract_strided_slice %395 {offsets = [0, 0], sizes = [8, 256], strides = [1, 1]} : vector<8x384xf32> to vector<8x256xf32>
    %398 = arith.addf %396, %397 : vector<8x256xf32>
    %399 = arith.negf %398 : vector<8x256xf32>
    %400 = math.exp %399 : vector<8x256xf32>
    %cst_122 = arith.constant 1.000000e+00 : f32
    %401 = vector.broadcast %cst_122 : f32 to vector<8x256xf32>
    %402 = arith.addf %401, %400 : vector<8x256xf32>
    %403 = arith.divf %401, %402 : vector<8x256xf32>
    %404 = vector.extract_strided_slice %403 {offsets = [0, 0], sizes = [8, 128], strides = [1, 1]} : vector<8x256xf32> to vector<8x128xf32>
    %405 = vector.extract_strided_slice %403 {offsets = [0, 128], sizes = [8, 128], strides = [1, 1]} : vector<8x256xf32> to vector<8x128xf32>
    %406 = vector.extract_strided_slice %393 {offsets = [0, 256], sizes = [8, 128], strides = [1, 1]} : vector<8x384xf32> to vector<8x128xf32>
    %407 = vector.extract_strided_slice %395 {offsets = [0, 256], sizes = [8, 128], strides = [1, 1]} : vector<8x384xf32> to vector<8x128xf32>
    %408 = arith.addf %407, %271 : vector<8x128xf32>
    %409 = arith.mulf %404, %408 : vector<8x128xf32>
    %410 = arith.addf %406, %409 : vector<8x128xf32>
    %411 = math.tanh %410 : vector<8x128xf32>
    %cst_123 = arith.constant 1.000000e+00 : f32
    %412 = vector.broadcast %cst_123 : f32 to vector<8x128xf32>
    %413 = arith.subf %412, %405 : vector<8x128xf32>
    %414 = arith.mulf %413, %411 : vector<8x128xf32>
    %415 = arith.mulf %405, %387 : vector<8x128xf32>
    %416 = arith.addf %414, %415 : vector<8x128xf32>
    %417 = arith.index_cast %391 : i32 to index
    %c0_124 = arith.constant 0 : index
    %418 = vector.load %arg12[%417, %c0_124] : memref<64x128xf32, #tpu.memory_space<vmem>>, vector<8x128xf32>
    tpu.vector_store %arg12[%417, %c0_124], %416 {strides = array<i32>} : memref<64x128xf32, #tpu.memory_space<vmem>>, vector<8x128xf32>,
    %c5_i32_125 = arith.constant 5 : i32
    %c8_i32_126 = arith.constant 8 : i32
    %419 = arith.muli %c5_i32_125, %c8_i32_126 : i32
    %420 = tpu.assume_multiple %419, 8 : i32
    %421 = arith.index_cast %420 : i32 to index
    %c0_127 = arith.constant 0 : index
    %422 = vector.load %arg13[%421, %c0_127] : memref<64x384xf32, #tpu.memory_space<vmem>>, vector<8x384xf32>
    %423 = arith.truncf %416 : vector<8x128xf32> to vector<8x128xbf16>
    %cst_128 = arith.constant dense<0.000000e+00> : vector<8x384xf32>
    %424 = tpu.matmul %423, %267, %cst_128 {dimension_numbers = #tpu.dot_dimension_numbers<[1], [0], [0], [1], [0, 0, 1, 1], [], []>} : vector<8x128xbf16>, vector<128x384xbf16>, vector<8x384xf32> -> vector<8x384xf32>
    %425 = vector.extract_strided_slice %422 {offsets = [0, 0], sizes = [8, 256], strides = [1, 1]} : vector<8x384xf32> to vector<8x256xf32>
    %426 = vector.extract_strided_slice %424 {offsets = [0, 0], sizes = [8, 256], strides = [1, 1]} : vector<8x384xf32> to vector<8x256xf32>
    %427 = arith.addf %425, %426 : vector<8x256xf32>
    %428 = arith.negf %427 : vector<8x256xf32>
    %429 = math.exp %428 : vector<8x256xf32>
    %cst_129 = arith.constant 1.000000e+00 : f32
    %430 = vector.broadcast %cst_129 : f32 to vector<8x256xf32>
    %431 = arith.addf %430, %429 : vector<8x256xf32>
    %432 = arith.divf %430, %431 : vector<8x256xf32>
    %433 = vector.extract_strided_slice %432 {offsets = [0, 0], sizes = [8, 128], strides = [1, 1]} : vector<8x256xf32> to vector<8x128xf32>
    %434 = vector.extract_strided_slice %432 {offsets = [0, 128], sizes = [8, 128], strides = [1, 1]} : vector<8x256xf32> to vector<8x128xf32>
    %435 = vector.extract_strided_slice %422 {offsets = [0, 256], sizes = [8, 128], strides = [1, 1]} : vector<8x384xf32> to vector<8x128xf32>
    %436 = vector.extract_strided_slice %424 {offsets = [0, 256], sizes = [8, 128], strides = [1, 1]} : vector<8x384xf32> to vector<8x128xf32>
    %437 = arith.addf %436, %271 : vector<8x128xf32>
    %438 = arith.mulf %433, %437 : vector<8x128xf32>
    %439 = arith.addf %435, %438 : vector<8x128xf32>
    %440 = math.tanh %439 : vector<8x128xf32>
    %cst_130 = arith.constant 1.000000e+00 : f32
    %441 = vector.broadcast %cst_130 : f32 to vector<8x128xf32>
    %442 = arith.subf %441, %434 : vector<8x128xf32>
    %443 = arith.mulf %442, %440 : vector<8x128xf32>
    %444 = arith.mulf %434, %416 : vector<8x128xf32>
    %445 = arith.addf %443, %444 : vector<8x128xf32>
    %446 = arith.index_cast %420 : i32 to index
    %c0_131 = arith.constant 0 : index
    %447 = vector.load %arg12[%446, %c0_131] : memref<64x128xf32, #tpu.memory_space<vmem>>, vector<8x128xf32>
    tpu.vector_store %arg12[%446, %c0_131], %445 {strides = array<i32>} : memref<64x128xf32, #tpu.memory_space<vmem>>, vector<8x128xf32>,
    %c6_i32_132 = arith.constant 6 : i32
    %c8_i32_133 = arith.constant 8 : i32
    %448 = arith.muli %c6_i32_132, %c8_i32_133 : i32
    %449 = tpu.assume_multiple %448, 8 : i32
    %450 = arith.index_cast %449 : i32 to index
    %c0_134 = arith.constant 0 : index
    %451 = vector.load %arg13[%450, %c0_134] : memref<64x384xf32, #tpu.memory_space<vmem>>, vector<8x384xf32>
    %452 = arith.truncf %445 : vector<8x128xf32> to vector<8x128xbf16>
    %cst_135 = arith.constant dense<0.000000e+00> : vector<8x384xf32>
    %453 = tpu.matmul %452, %267, %cst_135 {dimension_numbers = #tpu.dot_dimension_numbers<[1], [0], [0], [1], [0, 0, 1, 1], [], []>} : vector<8x128xbf16>, vector<128x384xbf16>, vector<8x384xf32> -> vector<8x384xf32>
    %454 = vector.extract_strided_slice %451 {offsets = [0, 0], sizes = [8, 256], strides = [1, 1]} : vector<8x384xf32> to vector<8x256xf32>
    %455 = vector.extract_strided_slice %453 {offsets = [0, 0], sizes = [8, 256], strides = [1, 1]} : vector<8x384xf32> to vector<8x256xf32>
    %456 = arith.addf %454, %455 : vector<8x256xf32>
    %457 = arith.negf %456 : vector<8x256xf32>
    %458 = math.exp %457 : vector<8x256xf32>
    %cst_136 = arith.constant 1.000000e+00 : f32
    %459 = vector.broadcast %cst_136 : f32 to vector<8x256xf32>
    %460 = arith.addf %459, %458 : vector<8x256xf32>
    %461 = arith.divf %459, %460 : vector<8x256xf32>
    %462 = vector.extract_strided_slice %461 {offsets = [0, 0], sizes = [8, 128], strides = [1, 1]} : vector<8x256xf32> to vector<8x128xf32>
    %463 = vector.extract_strided_slice %461 {offsets = [0, 128], sizes = [8, 128], strides = [1, 1]} : vector<8x256xf32> to vector<8x128xf32>
    %464 = vector.extract_strided_slice %451 {offsets = [0, 256], sizes = [8, 128], strides = [1, 1]} : vector<8x384xf32> to vector<8x128xf32>
    %465 = vector.extract_strided_slice %453 {offsets = [0, 256], sizes = [8, 128], strides = [1, 1]} : vector<8x384xf32> to vector<8x128xf32>
    %466 = arith.addf %465, %271 : vector<8x128xf32>
    %467 = arith.mulf %462, %466 : vector<8x128xf32>
    %468 = arith.addf %464, %467 : vector<8x128xf32>
    %469 = math.tanh %468 : vector<8x128xf32>
    %cst_137 = arith.constant 1.000000e+00 : f32
    %470 = vector.broadcast %cst_137 : f32 to vector<8x128xf32>
    %471 = arith.subf %470, %463 : vector<8x128xf32>
    %472 = arith.mulf %471, %469 : vector<8x128xf32>
    %473 = arith.mulf %463, %445 : vector<8x128xf32>
    %474 = arith.addf %472, %473 : vector<8x128xf32>
    %475 = arith.index_cast %449 : i32 to index
    %c0_138 = arith.constant 0 : index
    %476 = vector.load %arg12[%475, %c0_138] : memref<64x128xf32, #tpu.memory_space<vmem>>, vector<8x128xf32>
    tpu.vector_store %arg12[%475, %c0_138], %474 {strides = array<i32>} : memref<64x128xf32, #tpu.memory_space<vmem>>, vector<8x128xf32>,
    %c7_i32_139 = arith.constant 7 : i32
    %c8_i32_140 = arith.constant 8 : i32
    %477 = arith.muli %c7_i32_139, %c8_i32_140 : i32
    %478 = tpu.assume_multiple %477, 8 : i32
    %479 = arith.index_cast %478 : i32 to index
    %c0_141 = arith.constant 0 : index
    %480 = vector.load %arg13[%479, %c0_141] : memref<64x384xf32, #tpu.memory_space<vmem>>, vector<8x384xf32>
    %481 = arith.truncf %474 : vector<8x128xf32> to vector<8x128xbf16>
    %cst_142 = arith.constant dense<0.000000e+00> : vector<8x384xf32>
    %482 = tpu.matmul %481, %267, %cst_142 {dimension_numbers = #tpu.dot_dimension_numbers<[1], [0], [0], [1], [0, 0, 1, 1], [], []>} : vector<8x128xbf16>, vector<128x384xbf16>, vector<8x384xf32> -> vector<8x384xf32>
    %483 = vector.extract_strided_slice %480 {offsets = [0, 0], sizes = [8, 256], strides = [1, 1]} : vector<8x384xf32> to vector<8x256xf32>
    %484 = vector.extract_strided_slice %482 {offsets = [0, 0], sizes = [8, 256], strides = [1, 1]} : vector<8x384xf32> to vector<8x256xf32>
    %485 = arith.addf %483, %484 : vector<8x256xf32>
    %486 = arith.negf %485 : vector<8x256xf32>
    %487 = math.exp %486 : vector<8x256xf32>
    %cst_143 = arith.constant 1.000000e+00 : f32
    %488 = vector.broadcast %cst_143 : f32 to vector<8x256xf32>
    %489 = arith.addf %488, %487 : vector<8x256xf32>
    %490 = arith.divf %488, %489 : vector<8x256xf32>
    %491 = vector.extract_strided_slice %490 {offsets = [0, 0], sizes = [8, 128], strides = [1, 1]} : vector<8x256xf32> to vector<8x128xf32>
    %492 = vector.extract_strided_slice %490 {offsets = [0, 128], sizes = [8, 128], strides = [1, 1]} : vector<8x256xf32> to vector<8x128xf32>
    %493 = vector.extract_strided_slice %480 {offsets = [0, 256], sizes = [8, 128], strides = [1, 1]} : vector<8x384xf32> to vector<8x128xf32>
    %494 = vector.extract_strided_slice %482 {offsets = [0, 256], sizes = [8, 128], strides = [1, 1]} : vector<8x384xf32> to vector<8x128xf32>
    %495 = arith.addf %494, %271 : vector<8x128xf32>
    %496 = arith.mulf %491, %495 : vector<8x128xf32>
    %497 = arith.addf %493, %496 : vector<8x128xf32>
    %498 = math.tanh %497 : vector<8x128xf32>
    %cst_144 = arith.constant 1.000000e+00 : f32
    %499 = vector.broadcast %cst_144 : f32 to vector<8x128xf32>
    %500 = arith.subf %499, %492 : vector<8x128xf32>
    %501 = arith.mulf %500, %498 : vector<8x128xf32>
    %502 = arith.mulf %492, %474 : vector<8x128xf32>
    %503 = arith.addf %501, %502 : vector<8x128xf32>
    %504 = arith.index_cast %478 : i32 to index
    %c0_145 = arith.constant 0 : index
    %505 = vector.load %arg12[%504, %c0_145] : memref<64x128xf32, #tpu.memory_space<vmem>>, vector<8x128xf32>
    tpu.vector_store %arg12[%504, %c0_145], %503 {strides = array<i32>} : memref<64x128xf32, #tpu.memory_space<vmem>>, vector<8x128xf32>,
    %c8_i32_146 = arith.constant 8 : i32
    %c1_147 = arith.constant 1 : index
    %c0_148 = arith.constant 0 : index
    %c0_149 = arith.constant 0 : index
    %506 = vector.load %arg11[%c1_147, %c0_148, %c0_149] : memref<4x8x128xf32, #tpu.memory_space<vmem>>, vector<1x8x128xf32>
    %507 = vector.shape_cast %506 : vector<1x8x128xf32> to vector<8x128xf32>
    %508 = vector.shape_cast %503 : vector<8x128xf32> to vector<1x8x128xf32>
    tpu.vector_store %arg11[%c1_147, %c0_148, %c0_149], %508 {strides = array<i32>} : memref<4x8x128xf32, #tpu.memory_space<vmem>>, vector<1x8x128xf32>,
    %c0_150 = arith.constant 0 : index
    %c0_151 = arith.constant 0 : index
    %509 = vector.load %arg12[%c0_150, %c0_151] : memref<64x128xf32, #tpu.memory_space<vmem>>, vector<64x128xf32>
    %510 = arith.truncf %509 : vector<64x128xf32> to vector<64x128xbf16>
    %c1_152 = arith.constant 1 : index
    %c0_153 = arith.constant 0 : index
    %c0_154 = arith.constant 0 : index
    %511 = vector.load %arg4[%c1_152, %c0_153, %c0_154] : memref<3x128x384xbf16, #tpu.memory_space<vmem>>, vector<1x128x384xbf16>
    %512 = vector.shape_cast %511 : vector<1x128x384xbf16> to vector<128x384xbf16>
    %cst_155 = arith.constant dense<0.000000e+00> : vector<64x384xf32>
    %513 = tpu.matmul %510, %512, %cst_155 {dimension_numbers = #tpu.dot_dimension_numbers<[1], [0], [0], [1], [0, 0, 1, 1], [], []>} : vector<64x128xbf16>, vector<128x384xbf16>, vector<64x384xf32> -> vector<64x384xf32>
    %c2 = arith.constant 2 : index
    %c0_156 = arith.constant 0 : index
    %c0_157 = arith.constant 0 : index
    %514 = vector.load %arg6[%c2, %c0_156, %c0_157] : memref<4x1x384xf32, #tpu.memory_space<vmem>>, vector<1x1x384xf32>
    %515 = vector.shape_cast %514 : vector<1x1x384xf32> to vector<1x384xf32>
    %516 = vector.broadcast %515 : vector<1x384xf32> to vector<64x384xf32>
    %517 = arith.addf %513, %516 : vector<64x384xf32>
    %c0_158 = arith.constant 0 : index
    %c0_159 = arith.constant 0 : index
    %518 = vector.load %arg13[%c0_158, %c0_159] : memref<64x384xf32, #tpu.memory_space<vmem>>, vector<64x384xf32>
    tpu.vector_store %arg13[%c0_158, %c0_159], %517 {strides = array<i32>} : memref<64x384xf32, #tpu.memory_space<vmem>>, vector<64x384xf32>,
    %c2_160 = arith.constant 2 : index
    %c0_161 = arith.constant 0 : index
    %c0_162 = arith.constant 0 : index
    %519 = vector.load %arg5[%c2_160, %c0_161, %c0_162] : memref<4x128x384xbf16, #tpu.memory_space<vmem>>, vector<1x128x384xbf16>
    %520 = vector.shape_cast %519 : vector<1x128x384xbf16> to vector<128x384xbf16>
    %c2_163 = arith.constant 2 : index
    %c0_164 = arith.constant 0 : index
    %c0_165 = arith.constant 0 : index
    %521 = vector.load %arg7[%c2_163, %c0_164, %c0_165] : memref<4x1x128xf32, #tpu.memory_space<vmem>>, vector<1x1x128xf32>
    %522 = vector.shape_cast %521 : vector<1x1x128xf32> to vector<1x128xf32>
    %523 = vector.shape_cast %522 : vector<1x128xf32> to vector<1x128xf32>
    %524 = vector.broadcast %523 : vector<1x128xf32> to vector<8x128xf32>
    %c2_166 = arith.constant 2 : index
    %c0_167 = arith.constant 0 : index
    %c0_168 = arith.constant 0 : index
    %525 = vector.load %arg11[%c2_166, %c0_167, %c0_168] : memref<4x8x128xf32, #tpu.memory_space<vmem>>, vector<1x8x128xf32>
    %526 = vector.shape_cast %525 : vector<1x8x128xf32> to vector<8x128xf32>
    %c0_i32_169 = arith.constant 0 : i32
    %c8_i32_170 = arith.constant 8 : i32
    %527 = arith.muli %c0_i32_169, %c8_i32_170 : i32
    %528 = tpu.assume_multiple %527, 8 : i32
    %529 = arith.index_cast %528 : i32 to index
    %c0_171 = arith.constant 0 : index
    %530 = vector.load %arg13[%529, %c0_171] : memref<64x384xf32, #tpu.memory_space<vmem>>, vector<8x384xf32>
    %531 = arith.truncf %526 : vector<8x128xf32> to vector<8x128xbf16>
    %cst_172 = arith.constant dense<0.000000e+00> : vector<8x384xf32>
    %532 = tpu.matmul %531, %520, %cst_172 {dimension_numbers = #tpu.dot_dimension_numbers<[1], [0], [0], [1], [0, 0, 1, 1], [], []>} : vector<8x128xbf16>, vector<128x384xbf16>, vector<8x384xf32> -> vector<8x384xf32>
    %533 = vector.extract_strided_slice %530 {offsets = [0, 0], sizes = [8, 256], strides = [1, 1]} : vector<8x384xf32> to vector<8x256xf32>
    %534 = vector.extract_strided_slice %532 {offsets = [0, 0], sizes = [8, 256], strides = [1, 1]} : vector<8x384xf32> to vector<8x256xf32>
    %535 = arith.addf %533, %534 : vector<8x256xf32>
    %536 = arith.negf %535 : vector<8x256xf32>
    %537 = math.exp %536 : vector<8x256xf32>
    %cst_173 = arith.constant 1.000000e+00 : f32
    %538 = vector.broadcast %cst_173 : f32 to vector<8x256xf32>
    %539 = arith.addf %538, %537 : vector<8x256xf32>
    %540 = arith.divf %538, %539 : vector<8x256xf32>
    %541 = vector.extract_strided_slice %540 {offsets = [0, 0], sizes = [8, 128], strides = [1, 1]} : vector<8x256xf32> to vector<8x128xf32>
    %542 = vector.extract_strided_slice %540 {offsets = [0, 128], sizes = [8, 128], strides = [1, 1]} : vector<8x256xf32> to vector<8x128xf32>
    %543 = vector.extract_strided_slice %530 {offsets = [0, 256], sizes = [8, 128], strides = [1, 1]} : vector<8x384xf32> to vector<8x128xf32>
    %544 = vector.extract_strided_slice %532 {offsets = [0, 256], sizes = [8, 128], strides = [1, 1]} : vector<8x384xf32> to vector<8x128xf32>
    %545 = arith.addf %544, %524 : vector<8x128xf32>
    %546 = arith.mulf %541, %545 : vector<8x128xf32>
    %547 = arith.addf %543, %546 : vector<8x128xf32>
    %548 = math.tanh %547 : vector<8x128xf32>
    %cst_174 = arith.constant 1.000000e+00 : f32
    %549 = vector.broadcast %cst_174 : f32 to vector<8x128xf32>
    %550 = arith.subf %549, %542 : vector<8x128xf32>
    %551 = arith.mulf %550, %548 : vector<8x128xf32>
    %552 = arith.mulf %542, %526 : vector<8x128xf32>
    %553 = arith.addf %551, %552 : vector<8x128xf32>
    %554 = arith.index_cast %528 : i32 to index
    %c0_175 = arith.constant 0 : index
    %555 = vector.load %arg12[%554, %c0_175] : memref<64x128xf32, #tpu.memory_space<vmem>>, vector<8x128xf32>
    tpu.vector_store %arg12[%554, %c0_175], %553 {strides = array<i32>} : memref<64x128xf32, #tpu.memory_space<vmem>>, vector<8x128xf32>,
    %c1_i32_176 = arith.constant 1 : i32
    %c8_i32_177 = arith.constant 8 : i32
    %556 = arith.muli %c1_i32_176, %c8_i32_177 : i32
    %557 = tpu.assume_multiple %556, 8 : i32
    %558 = arith.index_cast %557 : i32 to index
    %c0_178 = arith.constant 0 : index
    %559 = vector.load %arg13[%558, %c0_178] : memref<64x384xf32, #tpu.memory_space<vmem>>, vector<8x384xf32>
    %560 = arith.truncf %553 : vector<8x128xf32> to vector<8x128xbf16>
    %cst_179 = arith.constant dense<0.000000e+00> : vector<8x384xf32>
    %561 = tpu.matmul %560, %520, %cst_179 {dimension_numbers = #tpu.dot_dimension_numbers<[1], [0], [0], [1], [0, 0, 1, 1], [], []>} : vector<8x128xbf16>, vector<128x384xbf16>, vector<8x384xf32> -> vector<8x384xf32>
    %562 = vector.extract_strided_slice %559 {offsets = [0, 0], sizes = [8, 256], strides = [1, 1]} : vector<8x384xf32> to vector<8x256xf32>
    %563 = vector.extract_strided_slice %561 {offsets = [0, 0], sizes = [8, 256], strides = [1, 1]} : vector<8x384xf32> to vector<8x256xf32>
    %564 = arith.addf %562, %563 : vector<8x256xf32>
    %565 = arith.negf %564 : vector<8x256xf32>
    %566 = math.exp %565 : vector<8x256xf32>
    %cst_180 = arith.constant 1.000000e+00 : f32
    %567 = vector.broadcast %cst_180 : f32 to vector<8x256xf32>
    %568 = arith.addf %567, %566 : vector<8x256xf32>
    %569 = arith.divf %567, %568 : vector<8x256xf32>
    %570 = vector.extract_strided_slice %569 {offsets = [0, 0], sizes = [8, 128], strides = [1, 1]} : vector<8x256xf32> to vector<8x128xf32>
    %571 = vector.extract_strided_slice %569 {offsets = [0, 128], sizes = [8, 128], strides = [1, 1]} : vector<8x256xf32> to vector<8x128xf32>
    %572 = vector.extract_strided_slice %559 {offsets = [0, 256], sizes = [8, 128], strides = [1, 1]} : vector<8x384xf32> to vector<8x128xf32>
    %573 = vector.extract_strided_slice %561 {offsets = [0, 256], sizes = [8, 128], strides = [1, 1]} : vector<8x384xf32> to vector<8x128xf32>
    %574 = arith.addf %573, %524 : vector<8x128xf32>
    %575 = arith.mulf %570, %574 : vector<8x128xf32>
    %576 = arith.addf %572, %575 : vector<8x128xf32>
    %577 = math.tanh %576 : vector<8x128xf32>
    %cst_181 = arith.constant 1.000000e+00 : f32
    %578 = vector.broadcast %cst_181 : f32 to vector<8x128xf32>
    %579 = arith.subf %578, %571 : vector<8x128xf32>
    %580 = arith.mulf %579, %577 : vector<8x128xf32>
    %581 = arith.mulf %571, %553 : vector<8x128xf32>
    %582 = arith.addf %580, %581 : vector<8x128xf32>
    %583 = arith.index_cast %557 : i32 to index
    %c0_182 = arith.constant 0 : index
    %584 = vector.load %arg12[%583, %c0_182] : memref<64x128xf32, #tpu.memory_space<vmem>>, vector<8x128xf32>
    tpu.vector_store %arg12[%583, %c0_182], %582 {strides = array<i32>} : memref<64x128xf32, #tpu.memory_space<vmem>>, vector<8x128xf32>,
    %c2_i32_183 = arith.constant 2 : i32
    %c8_i32_184 = arith.constant 8 : i32
    %585 = arith.muli %c2_i32_183, %c8_i32_184 : i32
    %586 = tpu.assume_multiple %585, 8 : i32
    %587 = arith.index_cast %586 : i32 to index
    %c0_185 = arith.constant 0 : index
    %588 = vector.load %arg13[%587, %c0_185] : memref<64x384xf32, #tpu.memory_space<vmem>>, vector<8x384xf32>
    %589 = arith.truncf %582 : vector<8x128xf32> to vector<8x128xbf16>
    %cst_186 = arith.constant dense<0.000000e+00> : vector<8x384xf32>
    %590 = tpu.matmul %589, %520, %cst_186 {dimension_numbers = #tpu.dot_dimension_numbers<[1], [0], [0], [1], [0, 0, 1, 1], [], []>} : vector<8x128xbf16>, vector<128x384xbf16>, vector<8x384xf32> -> vector<8x384xf32>
    %591 = vector.extract_strided_slice %588 {offsets = [0, 0], sizes = [8, 256], strides = [1, 1]} : vector<8x384xf32> to vector<8x256xf32>
    %592 = vector.extract_strided_slice %590 {offsets = [0, 0], sizes = [8, 256], strides = [1, 1]} : vector<8x384xf32> to vector<8x256xf32>
    %593 = arith.addf %591, %592 : vector<8x256xf32>
    %594 = arith.negf %593 : vector<8x256xf32>
    %595 = math.exp %594 : vector<8x256xf32>
    %cst_187 = arith.constant 1.000000e+00 : f32
    %596 = vector.broadcast %cst_187 : f32 to vector<8x256xf32>
    %597 = arith.addf %596, %595 : vector<8x256xf32>
    %598 = arith.divf %596, %597 : vector<8x256xf32>
    %599 = vector.extract_strided_slice %598 {offsets = [0, 0], sizes = [8, 128], strides = [1, 1]} : vector<8x256xf32> to vector<8x128xf32>
    %600 = vector.extract_strided_slice %598 {offsets = [0, 128], sizes = [8, 128], strides = [1, 1]} : vector<8x256xf32> to vector<8x128xf32>
    %601 = vector.extract_strided_slice %588 {offsets = [0, 256], sizes = [8, 128], strides = [1, 1]} : vector<8x384xf32> to vector<8x128xf32>
    %602 = vector.extract_strided_slice %590 {offsets = [0, 256], sizes = [8, 128], strides = [1, 1]} : vector<8x384xf32> to vector<8x128xf32>
    %603 = arith.addf %602, %524 : vector<8x128xf32>
    %604 = arith.mulf %599, %603 : vector<8x128xf32>
    %605 = arith.addf %601, %604 : vector<8x128xf32>
    %606 = math.tanh %605 : vector<8x128xf32>
    %cst_188 = arith.constant 1.000000e+00 : f32
    %607 = vector.broadcast %cst_188 : f32 to vector<8x128xf32>
    %608 = arith.subf %607, %600 : vector<8x128xf32>
    %609 = arith.mulf %608, %606 : vector<8x128xf32>
    %610 = arith.mulf %600, %582 : vector<8x128xf32>
    %611 = arith.addf %609, %610 : vector<8x128xf32>
    %612 = arith.index_cast %586 : i32 to index
    %c0_189 = arith.constant 0 : index
    %613 = vector.load %arg12[%612, %c0_189] : memref<64x128xf32, #tpu.memory_space<vmem>>, vector<8x128xf32>
    tpu.vector_store %arg12[%612, %c0_189], %611 {strides = array<i32>} : memref<64x128xf32, #tpu.memory_space<vmem>>, vector<8x128xf32>,
    %c3_i32_190 = arith.constant 3 : i32
    %c8_i32_191 = arith.constant 8 : i32
    %614 = arith.muli %c3_i32_190, %c8_i32_191 : i32
    %615 = tpu.assume_multiple %614, 8 : i32
    %616 = arith.index_cast %615 : i32 to index
    %c0_192 = arith.constant 0 : index
    %617 = vector.load %arg13[%616, %c0_192] : memref<64x384xf32, #tpu.memory_space<vmem>>, vector<8x384xf32>
    %618 = arith.truncf %611 : vector<8x128xf32> to vector<8x128xbf16>
    %cst_193 = arith.constant dense<0.000000e+00> : vector<8x384xf32>
    %619 = tpu.matmul %618, %520, %cst_193 {dimension_numbers = #tpu.dot_dimension_numbers<[1], [0], [0], [1], [0, 0, 1, 1], [], []>} : vector<8x128xbf16>, vector<128x384xbf16>, vector<8x384xf32> -> vector<8x384xf32>
    %620 = vector.extract_strided_slice %617 {offsets = [0, 0], sizes = [8, 256], strides = [1, 1]} : vector<8x384xf32> to vector<8x256xf32>
    %621 = vector.extract_strided_slice %619 {offsets = [0, 0], sizes = [8, 256], strides = [1, 1]} : vector<8x384xf32> to vector<8x256xf32>
    %622 = arith.addf %620, %621 : vector<8x256xf32>
    %623 = arith.negf %622 : vector<8x256xf32>
    %624 = math.exp %623 : vector<8x256xf32>
    %cst_194 = arith.constant 1.000000e+00 : f32
    %625 = vector.broadcast %cst_194 : f32 to vector<8x256xf32>
    %626 = arith.addf %625, %624 : vector<8x256xf32>
    %627 = arith.divf %625, %626 : vector<8x256xf32>
    %628 = vector.extract_strided_slice %627 {offsets = [0, 0], sizes = [8, 128], strides = [1, 1]} : vector<8x256xf32> to vector<8x128xf32>
    %629 = vector.extract_strided_slice %627 {offsets = [0, 128], sizes = [8, 128], strides = [1, 1]} : vector<8x256xf32> to vector<8x128xf32>
    %630 = vector.extract_strided_slice %617 {offsets = [0, 256], sizes = [8, 128], strides = [1, 1]} : vector<8x384xf32> to vector<8x128xf32>
    %631 = vector.extract_strided_slice %619 {offsets = [0, 256], sizes = [8, 128], strides = [1, 1]} : vector<8x384xf32> to vector<8x128xf32>
    %632 = arith.addf %631, %524 : vector<8x128xf32>
    %633 = arith.mulf %628, %632 : vector<8x128xf32>
    %634 = arith.addf %630, %633 : vector<8x128xf32>
    %635 = math.tanh %634 : vector<8x128xf32>
    %cst_195 = arith.constant 1.000000e+00 : f32
    %636 = vector.broadcast %cst_195 : f32 to vector<8x128xf32>
    %637 = arith.subf %636, %629 : vector<8x128xf32>
    %638 = arith.mulf %637, %635 : vector<8x128xf32>
    %639 = arith.mulf %629, %611 : vector<8x128xf32>
    %640 = arith.addf %638, %639 : vector<8x128xf32>
    %641 = arith.index_cast %615 : i32 to index
    %c0_196 = arith.constant 0 : index
    %642 = vector.load %arg12[%641, %c0_196] : memref<64x128xf32, #tpu.memory_space<vmem>>, vector<8x128xf32>
    tpu.vector_store %arg12[%641, %c0_196], %640 {strides = array<i32>} : memref<64x128xf32, #tpu.memory_space<vmem>>, vector<8x128xf32>,
    %c4_i32_197 = arith.constant 4 : i32
    %c8_i32_198 = arith.constant 8 : i32
    %643 = arith.muli %c4_i32_197, %c8_i32_198 : i32
    %644 = tpu.assume_multiple %643, 8 : i32
    %645 = arith.index_cast %644 : i32 to index
    %c0_199 = arith.constant 0 : index
    %646 = vector.load %arg13[%645, %c0_199] : memref<64x384xf32, #tpu.memory_space<vmem>>, vector<8x384xf32>
    %647 = arith.truncf %640 : vector<8x128xf32> to vector<8x128xbf16>
    %cst_200 = arith.constant dense<0.000000e+00> : vector<8x384xf32>
    %648 = tpu.matmul %647, %520, %cst_200 {dimension_numbers = #tpu.dot_dimension_numbers<[1], [0], [0], [1], [0, 0, 1, 1], [], []>} : vector<8x128xbf16>, vector<128x384xbf16>, vector<8x384xf32> -> vector<8x384xf32>
    %649 = vector.extract_strided_slice %646 {offsets = [0, 0], sizes = [8, 256], strides = [1, 1]} : vector<8x384xf32> to vector<8x256xf32>
    %650 = vector.extract_strided_slice %648 {offsets = [0, 0], sizes = [8, 256], strides = [1, 1]} : vector<8x384xf32> to vector<8x256xf32>
    %651 = arith.addf %649, %650 : vector<8x256xf32>
    %652 = arith.negf %651 : vector<8x256xf32>
    %653 = math.exp %652 : vector<8x256xf32>
    %cst_201 = arith.constant 1.000000e+00 : f32
    %654 = vector.broadcast %cst_201 : f32 to vector<8x256xf32>
    %655 = arith.addf %654, %653 : vector<8x256xf32>
    %656 = arith.divf %654, %655 : vector<8x256xf32>
    %657 = vector.extract_strided_slice %656 {offsets = [0, 0], sizes = [8, 128], strides = [1, 1]} : vector<8x256xf32> to vector<8x128xf32>
    %658 = vector.extract_strided_slice %656 {offsets = [0, 128], sizes = [8, 128], strides = [1, 1]} : vector<8x256xf32> to vector<8x128xf32>
    %659 = vector.extract_strided_slice %646 {offsets = [0, 256], sizes = [8, 128], strides = [1, 1]} : vector<8x384xf32> to vector<8x128xf32>
    %660 = vector.extract_strided_slice %648 {offsets = [0, 256], sizes = [8, 128], strides = [1, 1]} : vector<8x384xf32> to vector<8x128xf32>
    %661 = arith.addf %660, %524 : vector<8x128xf32>
    %662 = arith.mulf %657, %661 : vector<8x128xf32>
    %663 = arith.addf %659, %662 : vector<8x128xf32>
    %664 = math.tanh %663 : vector<8x128xf32>
    %cst_202 = arith.constant 1.000000e+00 : f32
    %665 = vector.broadcast %cst_202 : f32 to vector<8x128xf32>
    %666 = arith.subf %665, %658 : vector<8x128xf32>
    %667 = arith.mulf %666, %664 : vector<8x128xf32>
    %668 = arith.mulf %658, %640 : vector<8x128xf32>
    %669 = arith.addf %667, %668 : vector<8x128xf32>
    %670 = arith.index_cast %644 : i32 to index
    %c0_203 = arith.constant 0 : index
    %671 = vector.load %arg12[%670, %c0_203] : memref<64x128xf32, #tpu.memory_space<vmem>>, vector<8x128xf32>
    tpu.vector_store %arg12[%670, %c0_203], %669 {strides = array<i32>} : memref<64x128xf32, #tpu.memory_space<vmem>>, vector<8x128xf32>,
    %c5_i32_204 = arith.constant 5 : i32
    %c8_i32_205 = arith.constant 8 : i32
    %672 = arith.muli %c5_i32_204, %c8_i32_205 : i32
    %673 = tpu.assume_multiple %672, 8 : i32
    %674 = arith.index_cast %673 : i32 to index
    %c0_206 = arith.constant 0 : index
    %675 = vector.load %arg13[%674, %c0_206] : memref<64x384xf32, #tpu.memory_space<vmem>>, vector<8x384xf32>
    %676 = arith.truncf %669 : vector<8x128xf32> to vector<8x128xbf16>
    %cst_207 = arith.constant dense<0.000000e+00> : vector<8x384xf32>
    %677 = tpu.matmul %676, %520, %cst_207 {dimension_numbers = #tpu.dot_dimension_numbers<[1], [0], [0], [1], [0, 0, 1, 1], [], []>} : vector<8x128xbf16>, vector<128x384xbf16>, vector<8x384xf32> -> vector<8x384xf32>
    %678 = vector.extract_strided_slice %675 {offsets = [0, 0], sizes = [8, 256], strides = [1, 1]} : vector<8x384xf32> to vector<8x256xf32>
    %679 = vector.extract_strided_slice %677 {offsets = [0, 0], sizes = [8, 256], strides = [1, 1]} : vector<8x384xf32> to vector<8x256xf32>
    %680 = arith.addf %678, %679 : vector<8x256xf32>
    %681 = arith.negf %680 : vector<8x256xf32>
    %682 = math.exp %681 : vector<8x256xf32>
    %cst_208 = arith.constant 1.000000e+00 : f32
    %683 = vector.broadcast %cst_208 : f32 to vector<8x256xf32>
    %684 = arith.addf %683, %682 : vector<8x256xf32>
    %685 = arith.divf %683, %684 : vector<8x256xf32>
    %686 = vector.extract_strided_slice %685 {offsets = [0, 0], sizes = [8, 128], strides = [1, 1]} : vector<8x256xf32> to vector<8x128xf32>
    %687 = vector.extract_strided_slice %685 {offsets = [0, 128], sizes = [8, 128], strides = [1, 1]} : vector<8x256xf32> to vector<8x128xf32>
    %688 = vector.extract_strided_slice %675 {offsets = [0, 256], sizes = [8, 128], strides = [1, 1]} : vector<8x384xf32> to vector<8x128xf32>
    %689 = vector.extract_strided_slice %677 {offsets = [0, 256], sizes = [8, 128], strides = [1, 1]} : vector<8x384xf32> to vector<8x128xf32>
    %690 = arith.addf %689, %524 : vector<8x128xf32>
    %691 = arith.mulf %686, %690 : vector<8x128xf32>
    %692 = arith.addf %688, %691 : vector<8x128xf32>
    %693 = math.tanh %692 : vector<8x128xf32>
    %cst_209 = arith.constant 1.000000e+00 : f32
    %694 = vector.broadcast %cst_209 : f32 to vector<8x128xf32>
    %695 = arith.subf %694, %687 : vector<8x128xf32>
    %696 = arith.mulf %695, %693 : vector<8x128xf32>
    %697 = arith.mulf %687, %669 : vector<8x128xf32>
    %698 = arith.addf %696, %697 : vector<8x128xf32>
    %699 = arith.index_cast %673 : i32 to index
    %c0_210 = arith.constant 0 : index
    %700 = vector.load %arg12[%699, %c0_210] : memref<64x128xf32, #tpu.memory_space<vmem>>, vector<8x128xf32>
    tpu.vector_store %arg12[%699, %c0_210], %698 {strides = array<i32>} : memref<64x128xf32, #tpu.memory_space<vmem>>, vector<8x128xf32>,
    %c6_i32_211 = arith.constant 6 : i32
    %c8_i32_212 = arith.constant 8 : i32
    %701 = arith.muli %c6_i32_211, %c8_i32_212 : i32
    %702 = tpu.assume_multiple %701, 8 : i32
    %703 = arith.index_cast %702 : i32 to index
    %c0_213 = arith.constant 0 : index
    %704 = vector.load %arg13[%703, %c0_213] : memref<64x384xf32, #tpu.memory_space<vmem>>, vector<8x384xf32>
    %705 = arith.truncf %698 : vector<8x128xf32> to vector<8x128xbf16>
    %cst_214 = arith.constant dense<0.000000e+00> : vector<8x384xf32>
    %706 = tpu.matmul %705, %520, %cst_214 {dimension_numbers = #tpu.dot_dimension_numbers<[1], [0], [0], [1], [0, 0, 1, 1], [], []>} : vector<8x128xbf16>, vector<128x384xbf16>, vector<8x384xf32> -> vector<8x384xf32>
    %707 = vector.extract_strided_slice %704 {offsets = [0, 0], sizes = [8, 256], strides = [1, 1]} : vector<8x384xf32> to vector<8x256xf32>
    %708 = vector.extract_strided_slice %706 {offsets = [0, 0], sizes = [8, 256], strides = [1, 1]} : vector<8x384xf32> to vector<8x256xf32>
    %709 = arith.addf %707, %708 : vector<8x256xf32>
    %710 = arith.negf %709 : vector<8x256xf32>
    %711 = math.exp %710 : vector<8x256xf32>
    %cst_215 = arith.constant 1.000000e+00 : f32
    %712 = vector.broadcast %cst_215 : f32 to vector<8x256xf32>
    %713 = arith.addf %712, %711 : vector<8x256xf32>
    %714 = arith.divf %712, %713 : vector<8x256xf32>
    %715 = vector.extract_strided_slice %714 {offsets = [0, 0], sizes = [8, 128], strides = [1, 1]} : vector<8x256xf32> to vector<8x128xf32>
    %716 = vector.extract_strided_slice %714 {offsets = [0, 128], sizes = [8, 128], strides = [1, 1]} : vector<8x256xf32> to vector<8x128xf32>
    %717 = vector.extract_strided_slice %704 {offsets = [0, 256], sizes = [8, 128], strides = [1, 1]} : vector<8x384xf32> to vector<8x128xf32>
    %718 = vector.extract_strided_slice %706 {offsets = [0, 256], sizes = [8, 128], strides = [1, 1]} : vector<8x384xf32> to vector<8x128xf32>
    %719 = arith.addf %718, %524 : vector<8x128xf32>
    %720 = arith.mulf %715, %719 : vector<8x128xf32>
    %721 = arith.addf %717, %720 : vector<8x128xf32>
    %722 = math.tanh %721 : vector<8x128xf32>
    %cst_216 = arith.constant 1.000000e+00 : f32
    %723 = vector.broadcast %cst_216 : f32 to vector<8x128xf32>
    %724 = arith.subf %723, %716 : vector<8x128xf32>
    %725 = arith.mulf %724, %722 : vector<8x128xf32>
    %726 = arith.mulf %716, %698 : vector<8x128xf32>
    %727 = arith.addf %725, %726 : vector<8x128xf32>
    %728 = arith.index_cast %702 : i32 to index
    %c0_217 = arith.constant 0 : index
    %729 = vector.load %arg12[%728, %c0_217] : memref<64x128xf32, #tpu.memory_space<vmem>>, vector<8x128xf32>
    tpu.vector_store %arg12[%728, %c0_217], %727 {strides = array<i32>} : memref<64x128xf32, #tpu.memory_space<vmem>>, vector<8x128xf32>,
    %c7_i32_218 = arith.constant 7 : i32
    %c8_i32_219 = arith.constant 8 : i32
    %730 = arith.muli %c7_i32_218, %c8_i32_219 : i32
    %731 = tpu.assume_multiple %730, 8 : i32
    %732 = arith.index_cast %731 : i32 to index
    %c0_220 = arith.constant 0 : index
    %733 = vector.load %arg13[%732, %c0_220] : memref<64x384xf32, #tpu.memory_space<vmem>>, vector<8x384xf32>
    %734 = arith.truncf %727 : vector<8x128xf32> to vector<8x128xbf16>
    %cst_221 = arith.constant dense<0.000000e+00> : vector<8x384xf32>
    %735 = tpu.matmul %734, %520, %cst_221 {dimension_numbers = #tpu.dot_dimension_numbers<[1], [0], [0], [1], [0, 0, 1, 1], [], []>} : vector<8x128xbf16>, vector<128x384xbf16>, vector<8x384xf32> -> vector<8x384xf32>
    %736 = vector.extract_strided_slice %733 {offsets = [0, 0], sizes = [8, 256], strides = [1, 1]} : vector<8x384xf32> to vector<8x256xf32>
    %737 = vector.extract_strided_slice %735 {offsets = [0, 0], sizes = [8, 256], strides = [1, 1]} : vector<8x384xf32> to vector<8x256xf32>
    %738 = arith.addf %736, %737 : vector<8x256xf32>
    %739 = arith.negf %738 : vector<8x256xf32>
    %740 = math.exp %739 : vector<8x256xf32>
    %cst_222 = arith.constant 1.000000e+00 : f32
    %741 = vector.broadcast %cst_222 : f32 to vector<8x256xf32>
    %742 = arith.addf %741, %740 : vector<8x256xf32>
    %743 = arith.divf %741, %742 : vector<8x256xf32>
    %744 = vector.extract_strided_slice %743 {offsets = [0, 0], sizes = [8, 128], strides = [1, 1]} : vector<8x256xf32> to vector<8x128xf32>
    %745 = vector.extract_strided_slice %743 {offsets = [0, 128], sizes = [8, 128], strides = [1, 1]} : vector<8x256xf32> to vector<8x128xf32>
    %746 = vector.extract_strided_slice %733 {offsets = [0, 256], sizes = [8, 128], strides = [1, 1]} : vector<8x384xf32> to vector<8x128xf32>
    %747 = vector.extract_strided_slice %735 {offsets = [0, 256], sizes = [8, 128], strides = [1, 1]} : vector<8x384xf32> to vector<8x128xf32>
    %748 = arith.addf %747, %524 : vector<8x128xf32>
    %749 = arith.mulf %744, %748 : vector<8x128xf32>
    %750 = arith.addf %746, %749 : vector<8x128xf32>
    %751 = math.tanh %750 : vector<8x128xf32>
    %cst_223 = arith.constant 1.000000e+00 : f32
    %752 = vector.broadcast %cst_223 : f32 to vector<8x128xf32>
    %753 = arith.subf %752, %745 : vector<8x128xf32>
    %754 = arith.mulf %753, %751 : vector<8x128xf32>
    %755 = arith.mulf %745, %727 : vector<8x128xf32>
    %756 = arith.addf %754, %755 : vector<8x128xf32>
    %757 = arith.index_cast %731 : i32 to index
    %c0_224 = arith.constant 0 : index
    %758 = vector.load %arg12[%757, %c0_224] : memref<64x128xf32, #tpu.memory_space<vmem>>, vector<8x128xf32>
    tpu.vector_store %arg12[%757, %c0_224], %756 {strides = array<i32>} : memref<64x128xf32, #tpu.memory_space<vmem>>, vector<8x128xf32>,
    %c8_i32_225 = arith.constant 8 : i32
    %c2_226 = arith.constant 2 : index
    %c0_227 = arith.constant 0 : index
    %c0_228 = arith.constant 0 : index
    %759 = vector.load %arg11[%c2_226, %c0_227, %c0_228] : memref<4x8x128xf32, #tpu.memory_space<vmem>>, vector<1x8x128xf32>
    %760 = vector.shape_cast %759 : vector<1x8x128xf32> to vector<8x128xf32>
    %761 = vector.shape_cast %756 : vector<8x128xf32> to vector<1x8x128xf32>
    tpu.vector_store %arg11[%c2_226, %c0_227, %c0_228], %761 {strides = array<i32>} : memref<4x8x128xf32, #tpu.memory_space<vmem>>, vector<1x8x128xf32>,
    %c0_229 = arith.constant 0 : index
    %c0_230 = arith.constant 0 : index
    %762 = vector.load %arg12[%c0_229, %c0_230] : memref<64x128xf32, #tpu.memory_space<vmem>>, vector<64x128xf32>
    %763 = arith.truncf %762 : vector<64x128xf32> to vector<64x128xbf16>
    %c2_231 = arith.constant 2 : index
    %c0_232 = arith.constant 0 : index
    %c0_233 = arith.constant 0 : index
    %764 = vector.load %arg4[%c2_231, %c0_232, %c0_233] : memref<3x128x384xbf16, #tpu.memory_space<vmem>>, vector<1x128x384xbf16>
    %765 = vector.shape_cast %764 : vector<1x128x384xbf16> to vector<128x384xbf16>
    %cst_234 = arith.constant dense<0.000000e+00> : vector<64x384xf32>
    %766 = tpu.matmul %763, %765, %cst_234 {dimension_numbers = #tpu.dot_dimension_numbers<[1], [0], [0], [1], [0, 0, 1, 1], [], []>} : vector<64x128xbf16>, vector<128x384xbf16>, vector<64x384xf32> -> vector<64x384xf32>
    %c3 = arith.constant 3 : index
    %c0_235 = arith.constant 0 : index
    %c0_236 = arith.constant 0 : index
    %767 = vector.load %arg6[%c3, %c0_235, %c0_236] : memref<4x1x384xf32, #tpu.memory_space<vmem>>, vector<1x1x384xf32>
    %768 = vector.shape_cast %767 : vector<1x1x384xf32> to vector<1x384xf32>
    %769 = vector.broadcast %768 : vector<1x384xf32> to vector<64x384xf32>
    %770 = arith.addf %766, %769 : vector<64x384xf32>
    %c0_237 = arith.constant 0 : index
    %c0_238 = arith.constant 0 : index
    %771 = vector.load %arg13[%c0_237, %c0_238] : memref<64x384xf32, #tpu.memory_space<vmem>>, vector<64x384xf32>
    tpu.vector_store %arg13[%c0_237, %c0_238], %770 {strides = array<i32>} : memref<64x384xf32, #tpu.memory_space<vmem>>, vector<64x384xf32>,
    %c3_239 = arith.constant 3 : index
    %c0_240 = arith.constant 0 : index
    %c0_241 = arith.constant 0 : index
    %772 = vector.load %arg5[%c3_239, %c0_240, %c0_241] : memref<4x128x384xbf16, #tpu.memory_space<vmem>>, vector<1x128x384xbf16>
    %773 = vector.shape_cast %772 : vector<1x128x384xbf16> to vector<128x384xbf16>
    %c3_242 = arith.constant 3 : index
    %c0_243 = arith.constant 0 : index
    %c0_244 = arith.constant 0 : index
    %774 = vector.load %arg7[%c3_242, %c0_243, %c0_244] : memref<4x1x128xf32, #tpu.memory_space<vmem>>, vector<1x1x128xf32>
    %775 = vector.shape_cast %774 : vector<1x1x128xf32> to vector<1x128xf32>
    %776 = vector.shape_cast %775 : vector<1x128xf32> to vector<1x128xf32>
    %777 = vector.broadcast %776 : vector<1x128xf32> to vector<8x128xf32>
    %c3_245 = arith.constant 3 : index
    %c0_246 = arith.constant 0 : index
    %c0_247 = arith.constant 0 : index
    %778 = vector.load %arg11[%c3_245, %c0_246, %c0_247] : memref<4x8x128xf32, #tpu.memory_space<vmem>>, vector<1x8x128xf32>
    %779 = vector.shape_cast %778 : vector<1x8x128xf32> to vector<8x128xf32>
    %c0_i32_248 = arith.constant 0 : i32
    %c8_i32_249 = arith.constant 8 : i32
    %780 = arith.muli %c0_i32_248, %c8_i32_249 : i32
    %781 = tpu.assume_multiple %780, 8 : i32
    %782 = arith.index_cast %781 : i32 to index
    %c0_250 = arith.constant 0 : index
    %783 = vector.load %arg13[%782, %c0_250] : memref<64x384xf32, #tpu.memory_space<vmem>>, vector<8x384xf32>
    %784 = arith.truncf %779 : vector<8x128xf32> to vector<8x128xbf16>
    %cst_251 = arith.constant dense<0.000000e+00> : vector<8x384xf32>
    %785 = tpu.matmul %784, %773, %cst_251 {dimension_numbers = #tpu.dot_dimension_numbers<[1], [0], [0], [1], [0, 0, 1, 1], [], []>} : vector<8x128xbf16>, vector<128x384xbf16>, vector<8x384xf32> -> vector<8x384xf32>
    %786 = vector.extract_strided_slice %783 {offsets = [0, 0], sizes = [8, 256], strides = [1, 1]} : vector<8x384xf32> to vector<8x256xf32>
    %787 = vector.extract_strided_slice %785 {offsets = [0, 0], sizes = [8, 256], strides = [1, 1]} : vector<8x384xf32> to vector<8x256xf32>
    %788 = arith.addf %786, %787 : vector<8x256xf32>
    %789 = arith.negf %788 : vector<8x256xf32>
    %790 = math.exp %789 : vector<8x256xf32>
    %cst_252 = arith.constant 1.000000e+00 : f32
    %791 = vector.broadcast %cst_252 : f32 to vector<8x256xf32>
    %792 = arith.addf %791, %790 : vector<8x256xf32>
    %793 = arith.divf %791, %792 : vector<8x256xf32>
    %794 = vector.extract_strided_slice %793 {offsets = [0, 0], sizes = [8, 128], strides = [1, 1]} : vector<8x256xf32> to vector<8x128xf32>
    %795 = vector.extract_strided_slice %793 {offsets = [0, 128], sizes = [8, 128], strides = [1, 1]} : vector<8x256xf32> to vector<8x128xf32>
    %796 = vector.extract_strided_slice %783 {offsets = [0, 256], sizes = [8, 128], strides = [1, 1]} : vector<8x384xf32> to vector<8x128xf32>
    %797 = vector.extract_strided_slice %785 {offsets = [0, 256], sizes = [8, 128], strides = [1, 1]} : vector<8x384xf32> to vector<8x128xf32>
    %798 = arith.addf %797, %777 : vector<8x128xf32>
    %799 = arith.mulf %794, %798 : vector<8x128xf32>
    %800 = arith.addf %796, %799 : vector<8x128xf32>
    %801 = math.tanh %800 : vector<8x128xf32>
    %cst_253 = arith.constant 1.000000e+00 : f32
    %802 = vector.broadcast %cst_253 : f32 to vector<8x128xf32>
    %803 = arith.subf %802, %795 : vector<8x128xf32>
    %804 = arith.mulf %803, %801 : vector<8x128xf32>
    %805 = arith.mulf %795, %779 : vector<8x128xf32>
    %806 = arith.addf %804, %805 : vector<8x128xf32>
    %807 = arith.index_cast %781 : i32 to index
    %c0_254 = arith.constant 0 : index
    %808 = vector.load %arg12[%807, %c0_254] : memref<64x128xf32, #tpu.memory_space<vmem>>, vector<8x128xf32>
    tpu.vector_store %arg12[%807, %c0_254], %806 {strides = array<i32>} : memref<64x128xf32, #tpu.memory_space<vmem>>, vector<8x128xf32>,
    %c1_i32_255 = arith.constant 1 : i32
    %c8_i32_256 = arith.constant 8 : i32
    %809 = arith.muli %c1_i32_255, %c8_i32_256 : i32
    %810 = tpu.assume_multiple %809, 8 : i32
    %811 = arith.index_cast %810 : i32 to index
    %c0_257 = arith.constant 0 : index
    %812 = vector.load %arg13[%811, %c0_257] : memref<64x384xf32, #tpu.memory_space<vmem>>, vector<8x384xf32>
    %813 = arith.truncf %806 : vector<8x128xf32> to vector<8x128xbf16>
    %cst_258 = arith.constant dense<0.000000e+00> : vector<8x384xf32>
    %814 = tpu.matmul %813, %773, %cst_258 {dimension_numbers = #tpu.dot_dimension_numbers<[1], [0], [0], [1], [0, 0, 1, 1], [], []>} : vector<8x128xbf16>, vector<128x384xbf16>, vector<8x384xf32> -> vector<8x384xf32>
    %815 = vector.extract_strided_slice %812 {offsets = [0, 0], sizes = [8, 256], strides = [1, 1]} : vector<8x384xf32> to vector<8x256xf32>
    %816 = vector.extract_strided_slice %814 {offsets = [0, 0], sizes = [8, 256], strides = [1, 1]} : vector<8x384xf32> to vector<8x256xf32>
    %817 = arith.addf %815, %816 : vector<8x256xf32>
    %818 = arith.negf %817 : vector<8x256xf32>
    %819 = math.exp %818 : vector<8x256xf32>
    %cst_259 = arith.constant 1.000000e+00 : f32
    %820 = vector.broadcast %cst_259 : f32 to vector<8x256xf32>
    %821 = arith.addf %820, %819 : vector<8x256xf32>
    %822 = arith.divf %820, %821 : vector<8x256xf32>
    %823 = vector.extract_strided_slice %822 {offsets = [0, 0], sizes = [8, 128], strides = [1, 1]} : vector<8x256xf32> to vector<8x128xf32>
    %824 = vector.extract_strided_slice %822 {offsets = [0, 128], sizes = [8, 128], strides = [1, 1]} : vector<8x256xf32> to vector<8x128xf32>
    %825 = vector.extract_strided_slice %812 {offsets = [0, 256], sizes = [8, 128], strides = [1, 1]} : vector<8x384xf32> to vector<8x128xf32>
    %826 = vector.extract_strided_slice %814 {offsets = [0, 256], sizes = [8, 128], strides = [1, 1]} : vector<8x384xf32> to vector<8x128xf32>
    %827 = arith.addf %826, %777 : vector<8x128xf32>
    %828 = arith.mulf %823, %827 : vector<8x128xf32>
    %829 = arith.addf %825, %828 : vector<8x128xf32>
    %830 = math.tanh %829 : vector<8x128xf32>
    %cst_260 = arith.constant 1.000000e+00 : f32
    %831 = vector.broadcast %cst_260 : f32 to vector<8x128xf32>
    %832 = arith.subf %831, %824 : vector<8x128xf32>
    %833 = arith.mulf %832, %830 : vector<8x128xf32>
    %834 = arith.mulf %824, %806 : vector<8x128xf32>
    %835 = arith.addf %833, %834 : vector<8x128xf32>
    %836 = arith.index_cast %810 : i32 to index
    %c0_261 = arith.constant 0 : index
    %837 = vector.load %arg12[%836, %c0_261] : memref<64x128xf32, #tpu.memory_space<vmem>>, vector<8x128xf32>
    tpu.vector_store %arg12[%836, %c0_261], %835 {strides = array<i32>} : memref<64x128xf32, #tpu.memory_space<vmem>>, vector<8x128xf32>,
    %c2_i32_262 = arith.constant 2 : i32
    %c8_i32_263 = arith.constant 8 : i32
    %838 = arith.muli %c2_i32_262, %c8_i32_263 : i32
    %839 = tpu.assume_multiple %838, 8 : i32
    %840 = arith.index_cast %839 : i32 to index
    %c0_264 = arith.constant 0 : index
    %841 = vector.load %arg13[%840, %c0_264] : memref<64x384xf32, #tpu.memory_space<vmem>>, vector<8x384xf32>
    %842 = arith.truncf %835 : vector<8x128xf32> to vector<8x128xbf16>
    %cst_265 = arith.constant dense<0.000000e+00> : vector<8x384xf32>
    %843 = tpu.matmul %842, %773, %cst_265 {dimension_numbers = #tpu.dot_dimension_numbers<[1], [0], [0], [1], [0, 0, 1, 1], [], []>} : vector<8x128xbf16>, vector<128x384xbf16>, vector<8x384xf32> -> vector<8x384xf32>
    %844 = vector.extract_strided_slice %841 {offsets = [0, 0], sizes = [8, 256], strides = [1, 1]} : vector<8x384xf32> to vector<8x256xf32>
    %845 = vector.extract_strided_slice %843 {offsets = [0, 0], sizes = [8, 256], strides = [1, 1]} : vector<8x384xf32> to vector<8x256xf32>
    %846 = arith.addf %844, %845 : vector<8x256xf32>
    %847 = arith.negf %846 : vector<8x256xf32>
    %848 = math.exp %847 : vector<8x256xf32>
    %cst_266 = arith.constant 1.000000e+00 : f32
    %849 = vector.broadcast %cst_266 : f32 to vector<8x256xf32>
    %850 = arith.addf %849, %848 : vector<8x256xf32>
    %851 = arith.divf %849, %850 : vector<8x256xf32>
    %852 = vector.extract_strided_slice %851 {offsets = [0, 0], sizes = [8, 128], strides = [1, 1]} : vector<8x256xf32> to vector<8x128xf32>
    %853 = vector.extract_strided_slice %851 {offsets = [0, 128], sizes = [8, 128], strides = [1, 1]} : vector<8x256xf32> to vector<8x128xf32>
    %854 = vector.extract_strided_slice %841 {offsets = [0, 256], sizes = [8, 128], strides = [1, 1]} : vector<8x384xf32> to vector<8x128xf32>
    %855 = vector.extract_strided_slice %843 {offsets = [0, 256], sizes = [8, 128], strides = [1, 1]} : vector<8x384xf32> to vector<8x128xf32>
    %856 = arith.addf %855, %777 : vector<8x128xf32>
    %857 = arith.mulf %852, %856 : vector<8x128xf32>
    %858 = arith.addf %854, %857 : vector<8x128xf32>
    %859 = math.tanh %858 : vector<8x128xf32>
    %cst_267 = arith.constant 1.000000e+00 : f32
    %860 = vector.broadcast %cst_267 : f32 to vector<8x128xf32>
    %861 = arith.subf %860, %853 : vector<8x128xf32>
    %862 = arith.mulf %861, %859 : vector<8x128xf32>
    %863 = arith.mulf %853, %835 : vector<8x128xf32>
    %864 = arith.addf %862, %863 : vector<8x128xf32>
    %865 = arith.index_cast %839 : i32 to index
    %c0_268 = arith.constant 0 : index
    %866 = vector.load %arg12[%865, %c0_268] : memref<64x128xf32, #tpu.memory_space<vmem>>, vector<8x128xf32>
    tpu.vector_store %arg12[%865, %c0_268], %864 {strides = array<i32>} : memref<64x128xf32, #tpu.memory_space<vmem>>, vector<8x128xf32>,
    %c3_i32_269 = arith.constant 3 : i32
    %c8_i32_270 = arith.constant 8 : i32
    %867 = arith.muli %c3_i32_269, %c8_i32_270 : i32
    %868 = tpu.assume_multiple %867, 8 : i32
    %869 = arith.index_cast %868 : i32 to index
    %c0_271 = arith.constant 0 : index
    %870 = vector.load %arg13[%869, %c0_271] : memref<64x384xf32, #tpu.memory_space<vmem>>, vector<8x384xf32>
    %871 = arith.truncf %864 : vector<8x128xf32> to vector<8x128xbf16>
    %cst_272 = arith.constant dense<0.000000e+00> : vector<8x384xf32>
    %872 = tpu.matmul %871, %773, %cst_272 {dimension_numbers = #tpu.dot_dimension_numbers<[1], [0], [0], [1], [0, 0, 1, 1], [], []>} : vector<8x128xbf16>, vector<128x384xbf16>, vector<8x384xf32> -> vector<8x384xf32>
    %873 = vector.extract_strided_slice %870 {offsets = [0, 0], sizes = [8, 256], strides = [1, 1]} : vector<8x384xf32> to vector<8x256xf32>
    %874 = vector.extract_strided_slice %872 {offsets = [0, 0], sizes = [8, 256], strides = [1, 1]} : vector<8x384xf32> to vector<8x256xf32>
    %875 = arith.addf %873, %874 : vector<8x256xf32>
    %876 = arith.negf %875 : vector<8x256xf32>
    %877 = math.exp %876 : vector<8x256xf32>
    %cst_273 = arith.constant 1.000000e+00 : f32
    %878 = vector.broadcast %cst_273 : f32 to vector<8x256xf32>
    %879 = arith.addf %878, %877 : vector<8x256xf32>
    %880 = arith.divf %878, %879 : vector<8x256xf32>
    %881 = vector.extract_strided_slice %880 {offsets = [0, 0], sizes = [8, 128], strides = [1, 1]} : vector<8x256xf32> to vector<8x128xf32>
    %882 = vector.extract_strided_slice %880 {offsets = [0, 128], sizes = [8, 128], strides = [1, 1]} : vector<8x256xf32> to vector<8x128xf32>
    %883 = vector.extract_strided_slice %870 {offsets = [0, 256], sizes = [8, 128], strides = [1, 1]} : vector<8x384xf32> to vector<8x128xf32>
    %884 = vector.extract_strided_slice %872 {offsets = [0, 256], sizes = [8, 128], strides = [1, 1]} : vector<8x384xf32> to vector<8x128xf32>
    %885 = arith.addf %884, %777 : vector<8x128xf32>
    %886 = arith.mulf %881, %885 : vector<8x128xf32>
    %887 = arith.addf %883, %886 : vector<8x128xf32>
    %888 = math.tanh %887 : vector<8x128xf32>
    %cst_274 = arith.constant 1.000000e+00 : f32
    %889 = vector.broadcast %cst_274 : f32 to vector<8x128xf32>
    %890 = arith.subf %889, %882 : vector<8x128xf32>
    %891 = arith.mulf %890, %888 : vector<8x128xf32>
    %892 = arith.mulf %882, %864 : vector<8x128xf32>
    %893 = arith.addf %891, %892 : vector<8x128xf32>
    %894 = arith.index_cast %868 : i32 to index
    %c0_275 = arith.constant 0 : index
    %895 = vector.load %arg12[%894, %c0_275] : memref<64x128xf32, #tpu.memory_space<vmem>>, vector<8x128xf32>
    tpu.vector_store %arg12[%894, %c0_275], %893 {strides = array<i32>} : memref<64x128xf32, #tpu.memory_space<vmem>>, vector<8x128xf32>,
    %c4_i32_276 = arith.constant 4 : i32
    %c8_i32_277 = arith.constant 8 : i32
    %896 = arith.muli %c4_i32_276, %c8_i32_277 : i32
    %897 = tpu.assume_multiple %896, 8 : i32
    %898 = arith.index_cast %897 : i32 to index
    %c0_278 = arith.constant 0 : index
    %899 = vector.load %arg13[%898, %c0_278] : memref<64x384xf32, #tpu.memory_space<vmem>>, vector<8x384xf32>
    %900 = arith.truncf %893 : vector<8x128xf32> to vector<8x128xbf16>
    %cst_279 = arith.constant dense<0.000000e+00> : vector<8x384xf32>
    %901 = tpu.matmul %900, %773, %cst_279 {dimension_numbers = #tpu.dot_dimension_numbers<[1], [0], [0], [1], [0, 0, 1, 1], [], []>} : vector<8x128xbf16>, vector<128x384xbf16>, vector<8x384xf32> -> vector<8x384xf32>
    %902 = vector.extract_strided_slice %899 {offsets = [0, 0], sizes = [8, 256], strides = [1, 1]} : vector<8x384xf32> to vector<8x256xf32>
    %903 = vector.extract_strided_slice %901 {offsets = [0, 0], sizes = [8, 256], strides = [1, 1]} : vector<8x384xf32> to vector<8x256xf32>
    %904 = arith.addf %902, %903 : vector<8x256xf32>
    %905 = arith.negf %904 : vector<8x256xf32>
    %906 = math.exp %905 : vector<8x256xf32>
    %cst_280 = arith.constant 1.000000e+00 : f32
    %907 = vector.broadcast %cst_280 : f32 to vector<8x256xf32>
    %908 = arith.addf %907, %906 : vector<8x256xf32>
    %909 = arith.divf %907, %908 : vector<8x256xf32>
    %910 = vector.extract_strided_slice %909 {offsets = [0, 0], sizes = [8, 128], strides = [1, 1]} : vector<8x256xf32> to vector<8x128xf32>
    %911 = vector.extract_strided_slice %909 {offsets = [0, 128], sizes = [8, 128], strides = [1, 1]} : vector<8x256xf32> to vector<8x128xf32>
    %912 = vector.extract_strided_slice %899 {offsets = [0, 256], sizes = [8, 128], strides = [1, 1]} : vector<8x384xf32> to vector<8x128xf32>
    %913 = vector.extract_strided_slice %901 {offsets = [0, 256], sizes = [8, 128], strides = [1, 1]} : vector<8x384xf32> to vector<8x128xf32>
    %914 = arith.addf %913, %777 : vector<8x128xf32>
    %915 = arith.mulf %910, %914 : vector<8x128xf32>
    %916 = arith.addf %912, %915 : vector<8x128xf32>
    %917 = math.tanh %916 : vector<8x128xf32>
    %cst_281 = arith.constant 1.000000e+00 : f32
    %918 = vector.broadcast %cst_281 : f32 to vector<8x128xf32>
    %919 = arith.subf %918, %911 : vector<8x128xf32>
    %920 = arith.mulf %919, %917 : vector<8x128xf32>
    %921 = arith.mulf %911, %893 : vector<8x128xf32>
    %922 = arith.addf %920, %921 : vector<8x128xf32>
    %923 = arith.index_cast %897 : i32 to index
    %c0_282 = arith.constant 0 : index
    %924 = vector.load %arg12[%923, %c0_282] : memref<64x128xf32, #tpu.memory_space<vmem>>, vector<8x128xf32>
    tpu.vector_store %arg12[%923, %c0_282], %922 {strides = array<i32>} : memref<64x128xf32, #tpu.memory_space<vmem>>, vector<8x128xf32>,
    %c5_i32_283 = arith.constant 5 : i32
    %c8_i32_284 = arith.constant 8 : i32
    %925 = arith.muli %c5_i32_283, %c8_i32_284 : i32
    %926 = tpu.assume_multiple %925, 8 : i32
    %927 = arith.index_cast %926 : i32 to index
    %c0_285 = arith.constant 0 : index
    %928 = vector.load %arg13[%927, %c0_285] : memref<64x384xf32, #tpu.memory_space<vmem>>, vector<8x384xf32>
    %929 = arith.truncf %922 : vector<8x128xf32> to vector<8x128xbf16>
    %cst_286 = arith.constant dense<0.000000e+00> : vector<8x384xf32>
    %930 = tpu.matmul %929, %773, %cst_286 {dimension_numbers = #tpu.dot_dimension_numbers<[1], [0], [0], [1], [0, 0, 1, 1], [], []>} : vector<8x128xbf16>, vector<128x384xbf16>, vector<8x384xf32> -> vector<8x384xf32>
    %931 = vector.extract_strided_slice %928 {offsets = [0, 0], sizes = [8, 256], strides = [1, 1]} : vector<8x384xf32> to vector<8x256xf32>
    %932 = vector.extract_strided_slice %930 {offsets = [0, 0], sizes = [8, 256], strides = [1, 1]} : vector<8x384xf32> to vector<8x256xf32>
    %933 = arith.addf %931, %932 : vector<8x256xf32>
    %934 = arith.negf %933 : vector<8x256xf32>
    %935 = math.exp %934 : vector<8x256xf32>
    %cst_287 = arith.constant 1.000000e+00 : f32
    %936 = vector.broadcast %cst_287 : f32 to vector<8x256xf32>
    %937 = arith.addf %936, %935 : vector<8x256xf32>
    %938 = arith.divf %936, %937 : vector<8x256xf32>
    %939 = vector.extract_strided_slice %938 {offsets = [0, 0], sizes = [8, 128], strides = [1, 1]} : vector<8x256xf32> to vector<8x128xf32>
    %940 = vector.extract_strided_slice %938 {offsets = [0, 128], sizes = [8, 128], strides = [1, 1]} : vector<8x256xf32> to vector<8x128xf32>
    %941 = vector.extract_strided_slice %928 {offsets = [0, 256], sizes = [8, 128], strides = [1, 1]} : vector<8x384xf32> to vector<8x128xf32>
    %942 = vector.extract_strided_slice %930 {offsets = [0, 256], sizes = [8, 128], strides = [1, 1]} : vector<8x384xf32> to vector<8x128xf32>
    %943 = arith.addf %942, %777 : vector<8x128xf32>
    %944 = arith.mulf %939, %943 : vector<8x128xf32>
    %945 = arith.addf %941, %944 : vector<8x128xf32>
    %946 = math.tanh %945 : vector<8x128xf32>
    %cst_288 = arith.constant 1.000000e+00 : f32
    %947 = vector.broadcast %cst_288 : f32 to vector<8x128xf32>
    %948 = arith.subf %947, %940 : vector<8x128xf32>
    %949 = arith.mulf %948, %946 : vector<8x128xf32>
    %950 = arith.mulf %940, %922 : vector<8x128xf32>
    %951 = arith.addf %949, %950 : vector<8x128xf32>
    %952 = arith.index_cast %926 : i32 to index
    %c0_289 = arith.constant 0 : index
    %953 = vector.load %arg12[%952, %c0_289] : memref<64x128xf32, #tpu.memory_space<vmem>>, vector<8x128xf32>
    tpu.vector_store %arg12[%952, %c0_289], %951 {strides = array<i32>} : memref<64x128xf32, #tpu.memory_space<vmem>>, vector<8x128xf32>,
    %c6_i32_290 = arith.constant 6 : i32
    %c8_i32_291 = arith.constant 8 : i32
    %954 = arith.muli %c6_i32_290, %c8_i32_291 : i32
    %955 = tpu.assume_multiple %954, 8 : i32
    %956 = arith.index_cast %955 : i32 to index
    %c0_292 = arith.constant 0 : index
    %957 = vector.load %arg13[%956, %c0_292] : memref<64x384xf32, #tpu.memory_space<vmem>>, vector<8x384xf32>
    %958 = arith.truncf %951 : vector<8x128xf32> to vector<8x128xbf16>
    %cst_293 = arith.constant dense<0.000000e+00> : vector<8x384xf32>
    %959 = tpu.matmul %958, %773, %cst_293 {dimension_numbers = #tpu.dot_dimension_numbers<[1], [0], [0], [1], [0, 0, 1, 1], [], []>} : vector<8x128xbf16>, vector<128x384xbf16>, vector<8x384xf32> -> vector<8x384xf32>
    %960 = vector.extract_strided_slice %957 {offsets = [0, 0], sizes = [8, 256], strides = [1, 1]} : vector<8x384xf32> to vector<8x256xf32>
    %961 = vector.extract_strided_slice %959 {offsets = [0, 0], sizes = [8, 256], strides = [1, 1]} : vector<8x384xf32> to vector<8x256xf32>
    %962 = arith.addf %960, %961 : vector<8x256xf32>
    %963 = arith.negf %962 : vector<8x256xf32>
    %964 = math.exp %963 : vector<8x256xf32>
    %cst_294 = arith.constant 1.000000e+00 : f32
    %965 = vector.broadcast %cst_294 : f32 to vector<8x256xf32>
    %966 = arith.addf %965, %964 : vector<8x256xf32>
    %967 = arith.divf %965, %966 : vector<8x256xf32>
    %968 = vector.extract_strided_slice %967 {offsets = [0, 0], sizes = [8, 128], strides = [1, 1]} : vector<8x256xf32> to vector<8x128xf32>
    %969 = vector.extract_strided_slice %967 {offsets = [0, 128], sizes = [8, 128], strides = [1, 1]} : vector<8x256xf32> to vector<8x128xf32>
    %970 = vector.extract_strided_slice %957 {offsets = [0, 256], sizes = [8, 128], strides = [1, 1]} : vector<8x384xf32> to vector<8x128xf32>
    %971 = vector.extract_strided_slice %959 {offsets = [0, 256], sizes = [8, 128], strides = [1, 1]} : vector<8x384xf32> to vector<8x128xf32>
    %972 = arith.addf %971, %777 : vector<8x128xf32>
    %973 = arith.mulf %968, %972 : vector<8x128xf32>
    %974 = arith.addf %970, %973 : vector<8x128xf32>
    %975 = math.tanh %974 : vector<8x128xf32>
    %cst_295 = arith.constant 1.000000e+00 : f32
    %976 = vector.broadcast %cst_295 : f32 to vector<8x128xf32>
    %977 = arith.subf %976, %969 : vector<8x128xf32>
    %978 = arith.mulf %977, %975 : vector<8x128xf32>
    %979 = arith.mulf %969, %951 : vector<8x128xf32>
    %980 = arith.addf %978, %979 : vector<8x128xf32>
    %981 = arith.index_cast %955 : i32 to index
    %c0_296 = arith.constant 0 : index
    %982 = vector.load %arg12[%981, %c0_296] : memref<64x128xf32, #tpu.memory_space<vmem>>, vector<8x128xf32>
    tpu.vector_store %arg12[%981, %c0_296], %980 {strides = array<i32>} : memref<64x128xf32, #tpu.memory_space<vmem>>, vector<8x128xf32>,
    %c7_i32_297 = arith.constant 7 : i32
    %c8_i32_298 = arith.constant 8 : i32
    %983 = arith.muli %c7_i32_297, %c8_i32_298 : i32
    %984 = tpu.assume_multiple %983, 8 : i32
    %985 = arith.index_cast %984 : i32 to index
    %c0_299 = arith.constant 0 : index
    %986 = vector.load %arg13[%985, %c0_299] : memref<64x384xf32, #tpu.memory_space<vmem>>, vector<8x384xf32>
    %987 = arith.truncf %980 : vector<8x128xf32> to vector<8x128xbf16>
    %cst_300 = arith.constant dense<0.000000e+00> : vector<8x384xf32>
    %988 = tpu.matmul %987, %773, %cst_300 {dimension_numbers = #tpu.dot_dimension_numbers<[1], [0], [0], [1], [0, 0, 1, 1], [], []>} : vector<8x128xbf16>, vector<128x384xbf16>, vector<8x384xf32> -> vector<8x384xf32>
    %989 = vector.extract_strided_slice %986 {offsets = [0, 0], sizes = [8, 256], strides = [1, 1]} : vector<8x384xf32> to vector<8x256xf32>
    %990 = vector.extract_strided_slice %988 {offsets = [0, 0], sizes = [8, 256], strides = [1, 1]} : vector<8x384xf32> to vector<8x256xf32>
    %991 = arith.addf %989, %990 : vector<8x256xf32>
    %992 = arith.negf %991 : vector<8x256xf32>
    %993 = math.exp %992 : vector<8x256xf32>
    %cst_301 = arith.constant 1.000000e+00 : f32
    %994 = vector.broadcast %cst_301 : f32 to vector<8x256xf32>
    %995 = arith.addf %994, %993 : vector<8x256xf32>
    %996 = arith.divf %994, %995 : vector<8x256xf32>
    %997 = vector.extract_strided_slice %996 {offsets = [0, 0], sizes = [8, 128], strides = [1, 1]} : vector<8x256xf32> to vector<8x128xf32>
    %998 = vector.extract_strided_slice %996 {offsets = [0, 128], sizes = [8, 128], strides = [1, 1]} : vector<8x256xf32> to vector<8x128xf32>
    %999 = vector.extract_strided_slice %986 {offsets = [0, 256], sizes = [8, 128], strides = [1, 1]} : vector<8x384xf32> to vector<8x128xf32>
    %1000 = vector.extract_strided_slice %988 {offsets = [0, 256], sizes = [8, 128], strides = [1, 1]} : vector<8x384xf32> to vector<8x128xf32>
    %1001 = arith.addf %1000, %777 : vector<8x128xf32>
    %1002 = arith.mulf %997, %1001 : vector<8x128xf32>
    %1003 = arith.addf %999, %1002 : vector<8x128xf32>
    %1004 = math.tanh %1003 : vector<8x128xf32>
    %cst_302 = arith.constant 1.000000e+00 : f32
    %1005 = vector.broadcast %cst_302 : f32 to vector<8x128xf32>
    %1006 = arith.subf %1005, %998 : vector<8x128xf32>
    %1007 = arith.mulf %1006, %1004 : vector<8x128xf32>
    %1008 = arith.mulf %998, %980 : vector<8x128xf32>
    %1009 = arith.addf %1007, %1008 : vector<8x128xf32>
    %1010 = arith.index_cast %984 : i32 to index
    %c0_303 = arith.constant 0 : index
    %1011 = vector.load %arg12[%1010, %c0_303] : memref<64x128xf32, #tpu.memory_space<vmem>>, vector<8x128xf32>
    tpu.vector_store %arg12[%1010, %c0_303], %1009 {strides = array<i32>} : memref<64x128xf32, #tpu.memory_space<vmem>>, vector<8x128xf32>,
    %c8_i32_304 = arith.constant 8 : i32
    %c3_305 = arith.constant 3 : index
    %c0_306 = arith.constant 0 : index
    %c0_307 = arith.constant 0 : index
    %1012 = vector.load %arg11[%c3_305, %c0_306, %c0_307] : memref<4x8x128xf32, #tpu.memory_space<vmem>>, vector<1x8x128xf32>
    %1013 = vector.shape_cast %1012 : vector<1x8x128xf32> to vector<8x128xf32>
    %1014 = vector.shape_cast %1009 : vector<8x128xf32> to vector<1x8x128xf32>
    tpu.vector_store %arg11[%c3_305, %c0_306, %c0_307], %1014 {strides = array<i32>} : memref<4x8x128xf32, #tpu.memory_space<vmem>>, vector<1x8x128xf32>,
    %c0_i32_308 = arith.constant 0 : i32
    %1015 = arith.cmpi eq, %arg1, %c0_i32_308 : i32
    %1016 = arith.extui %1015 : i1 to i32
    %c0_i32_309 = arith.constant 0 : i32
    %1017 = arith.cmpi ne, %1016, %c0_i32_309 : i32
    scf.if %1017 {
      %c3_310 = arith.constant 3 : index
      %c0_311 = arith.constant 0 : index
      %c0_312 = arith.constant 0 : index
      %1018 = vector.load %arg11[%c3_310, %c0_311, %c0_312] : memref<4x8x128xf32, #tpu.memory_space<vmem>>, vector<1x8x128xf32>
      %1019 = vector.shape_cast %1018 : vector<1x8x128xf32> to vector<8x128xf32>
      %c0_313 = arith.constant 0 : index
      %c0_314 = arith.constant 0 : index
      %1020 = vector.load %arg8[%c0_313, %c0_314] : memref<128x2xf32, #tpu.memory_space<vmem>>, vector<128x2xf32>
      %cst_315 = arith.constant dense<0.000000e+00> : vector<8x2xf32>
      %1021 = tpu.matmul %1019, %1020, %cst_315 {dimension_numbers = #tpu.dot_dimension_numbers<[1], [0], [0], [1], [0, 0, 1, 1], [], []>} : vector<8x128xf32>, vector<128x2xf32>, vector<8x2xf32> -> vector<8x2xf32>
      %c0_316 = arith.constant 0 : index
      %c0_317 = arith.constant 0 : index
      %1022 = vector.load %arg9[%c0_316, %c0_317] : memref<1x2xf32, #tpu.memory_space<vmem>>, vector<1x2xf32>
      %1023 = vector.broadcast %1022 : vector<1x2xf32> to vector<8x2xf32>
      %1024 = arith.addf %1021, %1023 : vector<8x2xf32>
      %c0_318 = arith.constant 0 : index
      %c0_319 = arith.constant 0 : index
      %1025 = vector.load %arg10[%c0_318, %c0_319] : memref<8x2xf32, #tpu.memory_space<vmem>>, vector<8x2xf32>
      tpu.vector_store %arg10[%c0_318, %c0_319], %1024 {strides = array<i32>} : memref<8x2xf32, #tpu.memory_space<vmem>>, vector<8x2xf32>,
    } else {
    }
    return
  }
  func.func @transform_0(%arg0: i32, %arg1: i32) -> (i32, i32, i32) {
    %c0_i32 = arith.constant 0 : i32
    %c0_i32_0 = arith.constant 0 : i32
    return %arg0, %arg1, %c0_i32 : i32, i32, i32
  }
  func.func @transform_1(%arg0: i32, %arg1: i32) -> (i32, i32) {
    %c0_i32 = arith.constant 0 : i32
    %c0_i32_0 = arith.constant 0 : i32
    %c0_i32_1 = arith.constant 0 : i32
    return %c0_i32, %c0_i32_0 : i32, i32
  }
  func.func @transform_2(%arg0: i32, %arg1: i32) -> (i32, i32, i32) {
    %c0_i32 = arith.constant 0 : i32
    %c0_i32_0 = arith.constant 0 : i32
    %c0_i32_1 = arith.constant 0 : i32
    %c0_i32_2 = arith.constant 0 : i32
    return %c0_i32, %c0_i32_0, %c0_i32_1 : i32, i32, i32
  }
  func.func @transform_3(%arg0: i32, %arg1: i32) -> (i32, i32, i32) {
    %c0_i32 = arith.constant 0 : i32
    %c0_i32_0 = arith.constant 0 : i32
    %c0_i32_1 = arith.constant 0 : i32
    %c0_i32_2 = arith.constant 0 : i32
    return %c0_i32, %c0_i32_0, %c0_i32_1 : i32, i32, i32
  }
  func.func @transform_4(%arg0: i32, %arg1: i32) -> (i32, i32, i32) {
    %c0_i32 = arith.constant 0 : i32
    %c0_i32_0 = arith.constant 0 : i32
    %c0_i32_1 = arith.constant 0 : i32
    %c0_i32_2 = arith.constant 0 : i32
    return %c0_i32, %c0_i32_0, %c0_i32_1 : i32, i32, i32
  }
  func.func @transform_5(%arg0: i32, %arg1: i32) -> (i32, i32, i32) {
    %c0_i32 = arith.constant 0 : i32
    %c0_i32_0 = arith.constant 0 : i32
    %c0_i32_1 = arith.constant 0 : i32
    %c0_i32_2 = arith.constant 0 : i32
    return %c0_i32, %c0_i32_0, %c0_i32_1 : i32, i32, i32
  }
  func.func @transform_6(%arg0: i32, %arg1: i32) -> (i32, i32) {
    %c0_i32 = arith.constant 0 : i32
    %c0_i32_0 = arith.constant 0 : i32
    %c0_i32_1 = arith.constant 0 : i32
    return %c0_i32, %c0_i32_0 : i32, i32
  }
  func.func @transform_7(%arg0: i32, %arg1: i32) -> (i32, i32) {
    %c0_i32 = arith.constant 0 : i32
    %c0_i32_0 = arith.constant 0 : i32
    %c0_i32_1 = arith.constant 0 : i32
    return %c0_i32, %c0_i32_0 : i32, i32
  }
  func.func @transform_8(%arg0: i32, %arg1: i32) -> (i32, i32) {
    %c0_i32 = arith.constant 0 : i32
    %c0_i32_0 = arith.constant 0 : i32
    return %arg0, %c0_i32 : i32, i32
  }
}

</mosaic_0001>

<llo_original>
// kernel: student_forward.1
$region0: #{student_forward.1}
  #allocation0 [shape = 'u32[]', space=smem, size = 0x4, offset = 0x4, fixed_abs, tag = 'smem constant byte address 0x4 - core index']
  #allocation1 [shape = 'u32[72,128]{1,0:T(1,128)}', space=vmem, size = 0x9000, scoped, tag = 'internal scratch']
  #allocation2 [shape = 'f32[4,8,128]{2,1,0:T(8,128)}', space=vmem, size = 0x4000, scoped, tag = 'scratch operand']
  #allocation3 [shape = 'f32[64,128]{1,0:T(8,128)}', space=vmem, size = 0x8000, scoped, tag = 'scratch operand']
  #allocation4 [shape = 'f32[64,384]{1,0:T(8,128)}', space=vmem, size = 0x18000, scoped, tag = 'scratch operand']
  %s0 = inlined_call_operand.vmem [shape: f32[1,64,64], index: 0, kind: input, shape index: {}]
  %s1 = inlined_call_operand.vmem [shape: bf16[64,384], index: 1, kind: input, shape index: {}]
  %s2 = inlined_call_operand.hbm [shape: bf16[3,128,384], index: 2, kind: input, shape index: {}]
  %s3 = inlined_call_operand.hbm [shape: bf16[4,128,384], index: 3, kind: input, shape index: {}]
  %s4 = inlined_call_operand.vmem [shape: f32[4,1,384], index: 4, kind: input, shape index: {}]
  %s5 = inlined_call_operand.vmem [shape: f32[4,1,128], index: 5, kind: input, shape index: {}]
  %s6 = inlined_call_operand.vmem [shape: f32[128,2], index: 6, kind: input, shape index: {}]
  %s7 = inlined_call_operand.vmem [shape: f32[1,2], index: 7, kind: input, shape index: {}]
  %s8 = inlined_call_operand.vmem [shape: f32[8,2], index: 8, kind: output, shape index: {}]
  %s9 = sld [smem:[#allocation0]]
  $region58: #{student_forward.1} parent=0
    _
  %s11 = ssub.s32 1, %s9
  %s12 = scalar_select 0, %s11, %s9
  $region1: #{student_forward.1} parent=0
    #allocation5 [shape = 'u8[294912]{0}', space=vmem, size = 0x48000, scoped, tag = 'input window, operand 2, single buffered']
    #allocation6 [shape = 's32[1]{0}', space=sflag, size = 0x4, scoped, tag = 'scoped memory for student_forward.1']
    #allocation7 [shape = 'u8[393216]{0}', space=vmem, size = 0x60000, scoped, tag = 'input window, operand 3, single buffered']
    #allocation8 [shape = 's32[1]{0}', space=sflag, size = 0x4, scoped, tag = 'scoped memory for student_forward.1']
    %13 = vsyncpa [#allocation6], 0
    %14 = vsyncpa [#allocation8], 0
    // Predicated region
    $region2: #{student_forward.1} parent=1 // pred_check
      _
    $region3: #{student_forward.1} parent=1 // pred_check_branch
      %16 = sbr.rel (0) target = $region5
    $region4: #{student_forward.1} parent=1 // pred_region
      _
    $region5: #{student_forward.1} parent=1 // pred_fallthru
      _
    // Predicated region
    $region6: #{student_forward.1} parent=1 // pred_check
      _
    $region7: #{student_forward.1} parent=1 // pred_check_branch
      %18 = sbr.rel (0) target = $region9
    $region8: #{student_forward.1} parent=1 // pred_region
      _
    $region9: #{student_forward.1} parent=1 // pred_fallthru
      _
    // Predicated region
    $region10: #{student_forward.1} parent=1 // pred_check
      _
    $region11: #{student_forward.1} parent=1 // pred_check_branch
      %20 = sbr.rel (0) target = $region13
    $region12: #{student_forward.1} parent=1 // pred_region
      %22 = vsyncadd [#allocation6], 0
      %s23 = sshll.u32 %s2, 4
      %s24 = int_to_ptr.hbm [resolvable:$true] %s23
      %s25 = sshll.u32 [#allocation5], 4
      %s26 = int_to_ptr.vmem [resolvable:$true] %s25
      %31 = dma.hbm_to_vmem [thread:$0]  %s24, 9216, %s26, [#allocation6], 192, 192, 12
    $region13: #{student_forward.1} parent=1 // pred_fallthru
      _
    // Predicated region
    $region14: #{student_forward.1} parent=1 // pred_check
      _
    $region15: #{student_forward.1} parent=1 // pred_check_branch
      %33 = sbr.rel (0) target = $region17
    $region16: #{student_forward.1} parent=1 // pred_region
      %35 = vsyncadd [#allocation8], 0
      %s36 = sshll.u32 %s3, 4
      %s37 = int_to_ptr.hbm [resolvable:$true] %s36
      %s38 = sshll.u32 [#allocation7], 4
      %s39 = int_to_ptr.vmem [resolvable:$true] %s38
      %44 = dma.hbm_to_vmem [thread:$0]  %s37, 12288, %s39, [#allocation8], 192, 192, 12
    $region17: #{student_forward.1} parent=1 // pred_fallthru
      _
    // Predicated region
    $region18: #{student_forward.1} parent=1 // pred_check
      _
    $region19: #{student_forward.1} parent=1 // pred_check_branch
      %46 = sbr.rel (0) target = $region21
    $region20: #{student_forward.1} parent=1 // pred_region
      _
    $region21: #{student_forward.1} parent=1 // pred_fallthru
      _
    // Predicated region
    $region22: #{student_forward.1} parent=1 // pred_check
      _
    $region23: #{student_forward.1} parent=1 // pred_check_branch
      %48 = sbr.rel (0) target = $region25
    $region24: #{student_forward.1} parent=1 // pred_region
      _
    $region25: #{student_forward.1} parent=1 // pred_fallthru
      _
    // Predicated region
    $region26: #{student_forward.1} parent=1 // pred_check
      _
    $region27: #{student_forward.1} parent=1 // pred_check_branch
      %50 = sbr.rel (0) target = $region29
    $region28: #{student_forward.1} parent=1 // pred_region
      _
    $region29: #{student_forward.1} parent=1 // pred_fallthru
      _
    // Predicated region
    $region30: #{student_forward.1} parent=1 // pred_check
      _
    $region31: #{student_forward.1} parent=1 // pred_check_branch
      %52 = sbr.rel (0) target = $region33
    $region32: #{student_forward.1} parent=1 // pred_region
      _
    $region33: #{student_forward.1} parent=1 // pred_fallthru
      _
    // Predicated region
    $region34: #{student_forward.1} parent=1 // pred_check
      _
    $region35: #{student_forward.1} parent=1 // pred_check_branch
      %54 = sbr.rel (0) target = $region37
    $region36: #{student_forward.1} parent=1 // pred_region
      %56 = dma.done [#allocation6], 9216
    $region37: #{student_forward.1} parent=1 // pred_fallthru
      _
    // Predicated region
    $region38: #{student_forward.1} parent=1 // pred_check
      _
    $region39: #{student_forward.1} parent=1 // pred_check_branch
      %58 = sbr.rel (0) target = $region41
    $region40: #{student_forward.1} parent=1 // pred_region
      %60 = dma.done [#allocation8], 12288
    $region41: #{student_forward.1} parent=1 // pred_fallthru
      _
    %p62 = scmp.eq.s32.totalorder 0, 0
    // Predicated region
    $region42: #{student_forward.1} parent=1 // pred_check
      %p63 = pneg %p62
    $region43: #{student_forward.1} parent=1 // pred_check_branch
      %65 = sbr.rel (%p63) target = $region45
    $region44: #{student_forward.1} parent=1 // pred_region
      %66 = vst [vmem:[#allocation2] sm:$0xff] 0.0
      %67 = vst [vmem:[#allocation2 + $0x8] sm:$0xff] 0.0
      %68 = vst [vmem:[#allocation2 + $0x10] sm:$0xff] 0.0
      %69 = vst [vmem:[#allocation2 + $0x18] sm:$0xff] 0.0
    $region45: #{student_forward.1} parent=1 // pred_fallthru
      _
    %v70 = vld [vmem:[%s0] sm:$0xff]
    %v71 = vld [vmem:[%s0 + $0x8] sm:$0xff]
    %v72 = vld [vmem:[%s0 + $0x10] sm:$0xff]
    %v73 = vld [vmem:[%s0 + $0x18] sm:$0xff]
    %v74 = vld [vmem:[%s0 + $0x20] sm:$0xff]
    %v75 = vld [vmem:[%s0 + $0x28] sm:$0xff]
    %v76 = vld [vmem:[%s0 + $0x30] sm:$0xff]
    %v77 = vld [vmem:[%s0 + $0x38] sm:$0xff]
    %v78 = vpack.c.bf16 %v71, %v70
    %v79 = vpack.c.bf16 %v73, %v72
    %v80 = vpack.c.bf16 %v75, %v74
    %v81 = vpack.c.bf16 %v77, %v76
    %v82 = vld [vmem:[%s1] sm:$0xff]
    %v83 = vld [vmem:[%s1 + $0x8] sm:$0xf]
    %v84 = vld [vmem:[%s1 + $0xc] sm:$0xff]
    %v85 = vld [vmem:[%s1 + $0x14] sm:$0xf]
    %v86 = vld [vmem:[%s1 + $0x18] sm:$0xff]
    %v87 = vld [vmem:[%s1 + $0x20] sm:$0xf]
    %v88 = vld [vmem:[%s1 + $0x24] sm:$0xff]
    %v89 = vld [vmem:[%s1 + $0x2c] sm:$0xf]
    %v90 = vld [vmem:[%s1 + $0x30] sm:$0xff]
    %v91 = vld [vmem:[%s1 + $0x38] sm:$0xf]
    %v92 = vld [vmem:[%s1 + $0x3c] sm:$0xff]
    %v93 = vld [vmem:[%s1 + $0x44] sm:$0xf]
    %v94 = vld [vmem:[%s1 + $0x48] sm:$0xff]
    %v95 = vld [vmem:[%s1 + $0x50] sm:$0xf]
    %v96 = vld [vmem:[%s1 + $0x54] sm:$0xff]
    %v97 = vld [vmem:[%s1 + $0x5c] sm:$0xf]
    %v98 = vld [vmem:[%s4] sm:$0x7]
    %v100 = vperm.slane %v98, 0
    %v101 = vperm.slane %v98, 1
    %v102 = vperm.slane %v98, 2
    %v122 = vunpack.c.l.b16 %v82
    %v123 = vunpack.c.h.b16 %v82
    %v124 = vunpack.c.l.b16 %v83
    %v125 = vunpack.c.l.b16 %v84
    %v126 = vunpack.c.h.b16 %v84
    %v127 = vunpack.c.l.b16 %v85
    %v128 = vunpack.c.l.b16 %v86
    %v129 = vunpack.c.h.b16 %v86
    %v130 = vunpack.c.l.b16 %v87
    %v131 = vunpack.c.l.b16 %v88
    %v132 = vunpack.c.h.b16 %v88
    %v133 = vunpack.c.l.b16 %v89
    %v134 = vunpack.c.l.b16 %v90
    %v135 = vunpack.c.h.b16 %v90
    %v136 = vunpack.c.l.b16 %v91
    %v137 = vunpack.c.l.b16 %v92
    %v138 = vunpack.c.h.b16 %v92
    %v139 = vunpack.c.l.b16 %v93
    %v140 = vunpack.c.l.b16 %v94
    %v141 = vunpack.c.h.b16 %v94
    %v142 = vunpack.c.l.b16 %v95
    %v143 = vunpack.c.l.b16 %v96
    %v144 = vunpack.c.h.b16 %v96
    %v145 = vunpack.c.l.b16 %v97
    %v146 = vpack.c.b16 %v125, %v122
    %v147 = vpack.c.b16 %v126, %v123
    %v148 = vpack.c.b16 %v127, %v124
    %v149 = vpack.c.b16 %v131, %v128
    %v150 = vpack.c.b16 %v132, %v129
    %v151 = vpack.c.b16 %v133, %v130
    %v152 = vpack.c.b16 %v137, %v134
    %v153 = vpack.c.b16 %v138, %v135
    %v154 = vpack.c.b16 %v139, %v136
    %v155 = vpack.c.b16 %v143, %v140
    %v156 = vpack.c.b16 %v144, %v141
    %v157 = vpack.c.b16 %v145, %v142
    %vm170 = vcmask 523264
    %v172 = vsel %vm170, %v78, 0
    %v175 = vsel %vm170, %v79, 0
    %v178 = vsel %vm170, %v80, 0
    %v181 = vsel %vm170, %v81, 0
    %183 = vmatpush.bf16.msra.mxu0 0
    %184 = vmatpush.bf16.msra.mxu0 0
    %185 = vmatpush.bf16.msra.mxu0 0
    %186 = vmatpush.bf16.msra.mxu0 0
    %187 = vmatpush.bf16.msra.mxu0 %v155
    %188 = vmatpush.bf16.msra.mxu0 %v152
    %189 = vmatpush.bf16.msra.mxu0 %v149
    %190 = vmatpush.bf16.msra.mxu0 %v146
    %191 = vmatmul.bf16.gmra.mxu0 %v172
    %v192 = vpop.f32.mrf.mxu0
    %v193 = vadd.f32 %v100, %v192
    %v194 = vpop.f32.mrf.mxu0
    %v195 = vadd.f32 %v100, %v194
    %196 = vmatmul.bf16.gmra.mxu0 %v175
    %v197 = vpop.f32.mrf.mxu0
    %v198 = vadd.f32 %v100, %v197
    %v199 = vpop.f32.mrf.mxu0
    %v200 = vadd.f32 %v100, %v199
    %201 = vmatmul.bf16.gmra.mxu0 %v178
    %v202 = vpop.f32.mrf.mxu0
    %v203 = vadd.f32 %v100, %v202
    %v204 = vpop.f32.mrf.mxu0
    %v205 = vadd.f32 %v100, %v204
    %206 = vmatmul.bf16.gmra.mxu0 %v181
    %v207 = vpop.f32.mrf.mxu0
    %v208 = vadd.f32 %v100, %v207
    %v209 = vpop.f32.mrf.mxu0
    %v210 = vadd.f32 %v100, %v209
    %211 = vdwg.mxu0
    %212 = vmatpush.bf16.msra.mxu0 0
    %213 = vmatpush.bf16.msra.mxu0 0
    %214 = vmatpush.bf16.msra.mxu0 0
    %215 = vmatpush.bf16.msra.mxu0 0
    %216 = vmatpush.bf16.msra.mxu0 %v156
    %217 = vmatpush.bf16.msra.mxu0 %v153
    %218 = vmatpush.bf16.msra.mxu0 %v150
    %219 = vmatpush.bf16.msra.mxu0 %v147
    %220 = vmatmul.bf16.gmra.mxu0 %v172
    %v221 = vpop.f32.mrf.mxu0
    %v222 = vadd.f32 %v101, %v221
    %v223 = vpop.f32.mrf.mxu0
    %v224 = vadd.f32 %v101, %v223
    %225 = vmatmul.bf16.gmra.mxu0 %v175
    %v226 = vpop.f32.mrf.mxu0
    %v227 = vadd.f32 %v101, %v226
    %v228 = vpop.f32.mrf.mxu0
    %v229 = vadd.f32 %v101, %v228
    %230 = vmatmul.bf16.gmra.mxu0 %v178
    %v231 = vpop.f32.mrf.mxu0
    %v232 = vadd.f32 %v101, %v231
    %v233 = vpop.f32.mrf.mxu0
    %v234 = vadd.f32 %v101, %v233
    %235 = vmatmul.bf16.gmra.mxu0 %v181
    %v236 = vpop.f32.mrf.mxu0
    %v237 = vadd.f32 %v101, %v236
    %v238 = vpop.f32.mrf.mxu0
    %v239 = vadd.f32 %v101, %v238
    %240 = vdwg.mxu0
    %241 = vmatpush.bf16.msra.mxu0 0
    %242 = vmatpush.bf16.msra.mxu0 0
    %243 = vmatpush.bf16.msra.mxu0 0
    %244 = vmatpush.bf16.msra.mxu0 0
    %245 = vmatpush.bf16.msra.mxu0 %v157
    %246 = vmatpush.bf16.msra.mxu0 %v154
    %247 = vmatpush.bf16.msra.mxu0 %v151
    %248 = vmatpush.bf16.msra.mxu0 %v148
    %249 = vmatmul.bf16.gmra.mxu0 %v172
    %v250 = vpop.f32.mrf.mxu0
    %v251 = vadd.f32 %v102, %v250
    %v252 = vpop.f32.mrf.mxu0
    %v253 = vadd.f32 %v102, %v252
    %254 = vmatmul.bf16.gmra.mxu0 %v175
    %v255 = vpop.f32.mrf.mxu0
    %v256 = vadd.f32 %v102, %v255
    %v257 = vpop.f32.mrf.mxu0
    %v258 = vadd.f32 %v102, %v257
    %259 = vmatmul.bf16.gmra.mxu0 %v178
    %v260 = vpop.f32.mrf.mxu0
    %v261 = vadd.f32 %v102, %v260
    %v262 = vpop.f32.mrf.mxu0
    %v263 = vadd.f32 %v102, %v262
    %264 = vmatmul.bf16.gmra.mxu0 %v181
    %v265 = vpop.f32.mrf.mxu0
    %v266 = vadd.f32 %v102, %v265
    %v267 = vpop.f32.mrf.mxu0
    %v268 = vadd.f32 %v102, %v267
    %269 = vdwg.mxu0
    %270 = vst [vmem:[#allocation4] sm:$0xff] %v193
    %271 = vst [vmem:[#allocation4 + $0x8] sm:$0xff] %v222
    %272 = vst [vmem:[#allocation4 + $0x10] sm:$0xff] %v251
    %273 = vst [vmem:[#allocation4 + $0x18] sm:$0xff] %v195
    %274 = vst [vmem:[#allocation4 + $0x20] sm:$0xff] %v224
    %275 = vst [vmem:[#allocation4 + $0x28] sm:$0xff] %v253
    %276 = vst [vmem:[#allocation4 + $0x30] sm:$0xff] %v198
    %277 = vst [vmem:[#allocation4 + $0x38] sm:$0xff] %v227
    %278 = vst [vmem:[#allocation4 + $0x40] sm:$0xff] %v256
    %279 = vst [vmem:[#allocation4 + $0x48] sm:$0xff] %v200
    %280 = vst [vmem:[#allocation4 + $0x50] sm:$0xff] %v229
    %281 = vst [vmem:[#allocation4 + $0x58] sm:$0xff] %v258
    %282 = vst [vmem:[#allocation4 + $0x60] sm:$0xff] %v203
    %283 = vst [vmem:[#allocation4 + $0x68] sm:$0xff] %v232
    %284 = vst [vmem:[#allocation4 + $0x70] sm:$0xff] %v261
    %285 = vst [vmem:[#allocation4 + $0x78] sm:$0xff] %v205
    %286 = vst [vmem:[#allocation4 + $0x80] sm:$0xff] %v234
    %287 = vst [vmem:[#allocation4 + $0x88] sm:$0xff] %v263
    %288 = vst [vmem:[#allocation4 + $0x90] sm:$0xff] %v208
    %289 = vst [vmem:[#allocation4 + $0x98] sm:$0xff] %v237
    %290 = vst [vmem:[#allocation4 + $0xa0] sm:$0xff] %v266
    %291 = vst [vmem:[#allocation4 + $0xa8] sm:$0xff] %v210
    %292 = vst [vmem:[#allocation4 + $0xb0] sm:$0xff] %v239
    %293 = vst [vmem:[#allocation4 + $0xb8] sm:$0xff] %v268
    %v294 = vld [vmem:[#allocation7] sm:$0xff]
    %v295 = vld [vmem:[#allocation7 + $0x8] sm:$0xf]
    %v296 = vld [vmem:[#allocation7 + $0xc] sm:$0xff]
    %v297 = vld [vmem:[#allocation7 + $0x14] sm:$0xf]
    %v298 = vld [vmem:[#allocation7 + $0x18] sm:$0xff]
    %v299 = vld [vmem:[#allocation7 + $0x20] sm:$0xf]
    %v300 = vld [vmem:[#allocation7 + $0x24] sm:$0xff]
    %v301 = vld [vmem:[#allocation7 + $0x2c] sm:$0xf]
    %v302 = vld [vmem:[#allocation7 + $0x30] sm:$0xff]
    %v303 = vld [vmem:[#allocation7 + $0x38] sm:$0xf]
    %v304 = vld [vmem:[#allocation7 + $0x3c] sm:$0xff]
    %v305 = vld [vmem:[#allocation7 + $0x44] sm:$0xf]
    %v306 = vld [vmem:[#allocation7 + $0x48] sm:$0xff]
    %v307 = vld [vmem:[#allocation7 + $0x50] sm:$0xf]
    %v308 = vld [vmem:[#allocation7 + $0x54] sm:$0xff]
    %v309 = vld [vmem:[#allocation7 + $0x5c] sm:$0xf]
    %v310 = vld [vmem:[#allocation7 + $0x60] sm:$0xff]
    %v311 = vld [vmem:[#allocation7 + $0x68] sm:$0xf]
    %v312 = vld [vmem:[#allocation7 + $0x6c] sm:$0xff]
    %v313 = vld [vmem:[#allocation7 + $0x74] sm:$0xf]
    %v314 = vld [vmem:[#allocation7 + $0x78] sm:$0xff]
    %v315 = vld [vmem:[#allocation7 + $0x80] sm:$0xf]
    %v316 = vld [vmem:[#allocation7 + $0x84] sm:$0xff]
    %v317 = vld [vmem:[#allocation7 + $0x8c] sm:$0xf]
    %v318 = vld [vmem:[#allocation7 + $0x90] sm:$0xff]
    %v319 = vld [vmem:[#allocation7 + $0x98] sm:$0xf]
    %v320 = vld [vmem:[#allocation7 + $0x9c] sm:$0xff]
    %v321 = vld [vmem:[#allocation7 + $0xa4] sm:$0xf]
    %v322 = vld [vmem:[#allocation7 + $0xa8] sm:$0xff]
    %v323 = vld [vmem:[#allocation7 + $0xb0] sm:$0xf]
    %v324 = vld [vmem:[#allocation7 + $0xb4] sm:$0xff]
    %v325 = vld [vmem:[#allocation7 + $0xbc] sm:$0xf]
    %v326 = vld [vmem:[%s5] sm:$0x1]
    %v328 = vperm.slane %v326, 0
    %v330 = vld [vmem:[#allocation2] sm:$0xff]
    %s331 = smul.u32 0, 3
    %s332 = smul.addr %s331, 8
    %s333 = scalar_lea.vmem [#allocation4], %s332
    %v334 = vld [vmem:[%s333] sm:$0xff]
    %v335 = vld [vmem:[%s333 + $0x8] sm:$0xff]
    %v336 = vld [vmem:[%s333 + $0x10] sm:$0xff]
    %v337 = vpack.c.bf16 %v330, %v330
    %v370 = vunpack.c.l.b16 %v294
    %v371 = vunpack.c.h.b16 %v294
    %v372 = vunpack.c.l.b16 %v295
    %v373 = vunpack.c.l.b16 %v296
    %v374 = vunpack.c.h.b16 %v296
    %v375 = vunpack.c.l.b16 %v297
    %v376 = vunpack.c.l.b16 %v298
    %v377 = vunpack.c.h.b16 %v298
    %v378 = vunpack.c.l.b16 %v299
    %v379 = vunpack.c.l.b16 %v300
    %v380 = vunpack.c.h.b16 %v300
    %v381 = vunpack.c.l.b16 %v301
    %v382 = vunpack.c.l.b16 %v302
    %v383 = vunpack.c.h.b16 %v302
    %v384 = vunpack.c.l.b16 %v303
    %v385 = vunpack.c.l.b16 %v304
    %v386 = vunpack.c.h.b16 %v304
    %v387 = vunpack.c.l.b16 %v305
    %v388 = vunpack.c.l.b16 %v306
    %v389 = vunpack.c.h.b16 %v306
    %v390 = vunpack.c.l.b16 %v307
    %v391 = vunpack.c.l.b16 %v308
    %v392 = vunpack.c.h.b16 %v308
    %v393 = vunpack.c.l.b16 %v309
    %v394 = vunpack.c.l.b16 %v310
    %v395 = vunpack.c.h.b16 %v310
    %v396 = vunpack.c.l.b16 %v311
    %v397 = vunpack.c.l.b16 %v312
    %v398 = vunpack.c.h.b16 %v312
    %v399 = vunpack.c.l.b16 %v313
    %v400 = vunpack.c.l.b16 %v314
    %v401 = vunpack.c.h.b16 %v314
    %v402 = vunpack.c.l.b16 %v315
    %v403 = vunpack.c.l.b16 %v316
    %v404 = vunpack.c.h.b16 %v316
    %v405 = vunpack.c.l.b16 %v317
    %v406 = vunpack.c.l.b16 %v318
    %v407 = vunpack.c.h.b16 %v318
    %v408 = vunpack.c.l.b16 %v319
    %v409 = vunpack.c.l.b16 %v320
    %v410 = vunpack.c.h.b16 %v320
    %v411 = vunpack.c.l.b16 %v321
    %v412 = vunpack.c.l.b16 %v322
    %v413 = vunpack.c.h.b16 %v322
    %v414 = vunpack.c.l.b16 %v323
    %v415 = vunpack.c.l.b16 %v324
    %v416 = vunpack.c.h.b16 %v324
    %v417 = vunpack.c.l.b16 %v325
    %v418 = vpack.c.b16 %v373, %v370
    %v419 = vpack.c.b16 %v374, %v371
    %v420 = vpack.c.b16 %v375, %v372
    %v421 = vpack.c.b16 %v379, %v376
    %v422 = vpack.c.b16 %v380, %v377
    %v423 = vpack.c.b16 %v381, %v378
    %v424 = vpack.c.b16 %v385, %v382
    %v425 = vpack.c.b16 %v386, %v383
    %v426 = vpack.c.b16 %v387, %v384
    %v427 = vpack.c.b16 %v391, %v388
    %v428 = vpack.c.b16 %v392, %v389
    %v429 = vpack.c.b16 %v393, %v390
    %v430 = vpack.c.b16 %v397, %v394
    %v431 = vpack.c.b16 %v398, %v395
    %v432 = vpack.c.b16 %v399, %v396
    %v433 = vpack.c.b16 %v403, %v400
    %v434 = vpack.c.b16 %v404, %v401
    %v435 = vpack.c.b16 %v405, %v402
    %v436 = vpack.c.b16 %v409, %v406
    %v437 = vpack.c.b16 %v410, %v407
    %v438 = vpack.c.b16 %v411, %v408
    %v439 = vpack.c.b16 %v415, %v412
    %v440 = vpack.c.b16 %v416, %v413
    %v441 = vpack.c.b16 %v417, %v414
    %466 = vmatpush.bf16.msra.mxu0 %v439
    %467 = vmatpush.bf16.msra.mxu0 %v436
    %468 = vmatpush.bf16.msra.mxu0 %v433
    %469 = vmatpush.bf16.msra.mxu0 %v430
    %470 = vmatpush.bf16.msra.mxu0 %v427
    %471 = vmatpush.bf16.msra.mxu0 %v424
    %472 = vmatpush.bf16.msra.mxu0 %v421
    %473 = vmatpush.bf16.msra.mxu0 %v418
    %474 = vmatmul.bf16.gmra.mxu0 %v337
    %v475 = vpop.f32.mrf.mxu0
    %v476 = vadd.f32 0.0, %v475
    %v477 = vpop.f32.mrf.mxu0
    %478 = vdwg.mxu0
    %479 = vmatpush.bf16.msra.mxu0 %v440
    %480 = vmatpush.bf16.msra.mxu0 %v437
    %481 = vmatpush.bf16.msra.mxu0 %v434
    %482 = vmatpush.bf16.msra.mxu0 %v431
    %483 = vmatpush.bf16.msra.mxu0 %v428
    %484 = vmatpush.bf16.msra.mxu0 %v425
    %485 = vmatpush.bf16.msra.mxu0 %v422
    %486 = vmatpush.bf16.msra.mxu0 %v419
    %487 = vmatmul.bf16.gmra.mxu0 %v337
    %v488 = vpop.f32.mrf.mxu0
    %v489 = vadd.f32 0.0, %v488
    %v490 = vpop.f32.mrf.mxu0
    %491 = vdwg.mxu0
    %492 = vmatpush.bf16.msra.mxu0 %v441
    %493 = vmatpush.bf16.msra.mxu0 %v438
    %494 = vmatpush.bf16.msra.mxu0 %v435
    %495 = vmatpush.bf16.msra.mxu0 %v432
    %496 = vmatpush.bf16.msra.mxu0 %v429
    %497 = vmatpush.bf16.msra.mxu0 %v426
    %498 = vmatpush.bf16.msra.mxu0 %v423
    %499 = vmatpush.bf16.msra.mxu0 %v420
    %500 = vmatmul.bf16.gmra.mxu0 %v337
    %v501 = vpop.f32.mrf.mxu0
    %v502 = vadd.f32 0.0, %v501
    %v503 = vpop.f32.mrf.mxu0
    %504 = vdwg.mxu0
    %v505 = vadd.f32 %v334, %v476
    %v506 = vadd.f32 %v335, %v489
    %v507 = vxor.u32 %v505, 2147483648
    %v508 = vxor.u32 %v506, 2147483648
    %v509 = vmul.f32 %v507, 1.442695
    %v510 = vpow.pop %v509
    %v511 = vmul.f32 %v508, 1.442695
    %v512 = vpow.pop %v511
    %v513 = vadd.f32 %v510, 1.0
    %v514 = vadd.f32 %v512, 1.0
    %v515 = vrcp.pop %v513
    %v516 = vmul.f32 %v513, %v515
    %v517 = vsub.f32 1.0, %v516
    %v518 = vmul.f32 %v515, %v517
    %v519 = vadd.f32 %v515, %v518
    %vm520 = vweird.f32 %v513
    %vm521 = vweird.f32 %v515
    %vm522 = vmor %vm520, %vm521
    %v523 = vsel %vm522, %v515, %v519
    %v524 = vand.u32 2147483647, %v513
    %vm525 = vcmp.eq.f32.partialorder %v524, 8.507059e+37
    %v526 = vand.u32 %v513, 2147483648
    %v527 = vor.u32 1.1754944e-38, %v526
    %v528 = vsel %vm525, %v527, %v523
    %v529 = vmul.f32 1.0, %v528
    %v530 = vrcp.pop %v514
    %v531 = vmul.f32 %v514, %v530
    %v532 = vsub.f32 1.0, %v531
    %v533 = vmul.f32 %v530, %v532
    %v534 = vadd.f32 %v530, %v533
    %vm535 = vweird.f32 %v514
    %vm536 = vweird.f32 %v530
    %vm537 = vmor %vm535, %vm536
    %v538 = vsel %vm537, %v530, %v534
    %v539 = vand.u32 2147483647, %v514
    %vm540 = vcmp.eq.f32.partialorder %v539, 8.507059e+37
    %v541 = vand.u32 %v514, 2147483648
    %v542 = vor.u32 1.1754944e-38, %v541
    %v543 = vsel %vm540, %v542, %v538
    %v544 = vmul.f32 1.0, %v543
    %v545 = vadd.f32 %v502, %v328
    %v546 = vmul.f32 %v529, %v545
    %v547 = vadd.f32 %v336, %v546
    %v548 = vtanh.pop %v547
    %v549 = vsub.f32 1.0, %v544
    %v550 = vmul.f32 %v549, %v548
    %v551 = vmul.f32 %v544, %v330
    %v552 = vadd.f32 %v550, %v551
    %553 = vst [vmem:[#allocation3] sm:$0xff] %v552
    %s554 = smul.u32 1, 3
    %s555 = smul.addr %s554, 8
    %s556 = scalar_lea.vmem [#allocation4], %s555
    %v557 = vld [vmem:[%s556] sm:$0xff]
    %v558 = vld [vmem:[%s556 + $0x8] sm:$0xff]
    %v559 = vld [vmem:[%s556 + $0x10] sm:$0xff]
    %v560 = vpack.c.bf16 %v552, %v552
    %561 = vmatpush.bf16.msra.mxu0 %v439
    %562 = vmatpush.bf16.msra.mxu0 %v436
    %563 = vmatpush.bf16.msra.mxu0 %v433
    %564 = vmatpush.bf16.msra.mxu0 %v430
    %565 = vmatpush.bf16.msra.mxu0 %v427
    %566 = vmatpush.bf16.msra.mxu0 %v424
    %567 = vmatpush.bf16.msra.mxu0 %v421
    %568 = vmatpush.bf16.msra.mxu0 %v418
    %569 = vmatmul.bf16.gmra.mxu0 %v560
    %v570 = vpop.f32.mrf.mxu0
    %v571 = vadd.f32 0.0, %v570
    %v572 = vpop.f32.mrf.mxu0
    %573 = vdwg.mxu0
    %574 = vmatpush.bf16.msra.mxu0 %v440
    %575 = vmatpush.bf16.msra.mxu0 %v437
    %576 = vmatpush.bf16.msra.mxu0 %v434
    %577 = vmatpush.bf16.msra.mxu0 %v431
    %578 = vmatpush.bf16.msra.mxu0 %v428
    %579 = vmatpush.bf16.msra.mxu0 %v425
    %580 = vmatpush.bf16.msra.mxu0 %v422
    %581 = vmatpush.bf16.msra.mxu0 %v419
    %582 = vmatmul.bf16.gmra.mxu0 %v560
    %v583 = vpop.f32.mrf.mxu0
    %v584 = vadd.f32 0.0, %v583
    %v585 = vpop.f32.mrf.mxu0
    %586 = vdwg.mxu0
    %587 = vmatpush.bf16.msra.mxu0 %v441
    %588 = vmatpush.bf16.msra.mxu0 %v438
    %589 = vmatpush.bf16.msra.mxu0 %v435
    %590 = vmatpush.bf16.msra.mxu0 %v432
    %591 = vmatpush.bf16.msra.mxu0 %v429
    %592 = vmatpush.bf16.msra.mxu0 %v426
    %593 = vmatpush.bf16.msra.mxu0 %v423
    %594 = vmatpush.bf16.msra.mxu0 %v420
    %595 = vmatmul.bf16.gmra.mxu0 %v560
    %v596 = vpop.f32.mrf.mxu0
    %v597 = vadd.f32 0.0, %v596
    %v598 = vpop.f32.mrf.mxu0
    %599 = vdwg.mxu0
    %v600 = vadd.f32 %v557, %v571
    %v601 = vadd.f32 %v558, %v584
    %v602 = vxor.u32 %v600, 2147483648
    %v603 = vxor.u32 %v601, 2147483648
    %v604 = vmul.f32 %v602, 1.442695
    %v605 = vpow.pop %v604
    %v606 = vmul.f32 %v603, 1.442695
    %v607 = vpow.pop %v606
    %v608 = vadd.f32 %v605, 1.0
    %v609 = vadd.f32 %v607, 1.0
    %v610 = vrcp.pop %v608
    %v611 = vmul.f32 %v608, %v610
    %v612 = vsub.f32 1.0, %v611
    %v613 = vmul.f32 %v610, %v612
    %v614 = vadd.f32 %v610, %v613
    %vm615 = vweird.f32 %v608
    %vm616 = vweird.f32 %v610
    %vm617 = vmor %vm615, %vm616
    %v618 = vsel %vm617, %v610, %v614
    %v619 = vand.u32 2147483647, %v608
    %vm620 = vcmp.eq.f32.partialorder %v619, 8.507059e+37
    %v621 = vand.u32 %v608, 2147483648
    %v622 = vor.u32 1.1754944e-38, %v621
    %v623 = vsel %vm620, %v622, %v618
    %v624 = vmul.f32 1.0, %v623
    %v625 = vrcp.pop %v609
    %v626 = vmul.f32 %v609, %v625
    %v627 = vsub.f32 1.0, %v626
    %v628 = vmul.f32 %v625, %v627
    %v629 = vadd.f32 %v625, %v628
    %vm630 = vweird.f32 %v609
    %vm631 = vweird.f32 %v625
    %vm632 = vmor %vm630, %vm631
    %v633 = vsel %vm632, %v625, %v629
    %v634 = vand.u32 2147483647, %v609
    %vm635 = vcmp.eq.f32.partialorder %v634, 8.507059e+37
    %v636 = vand.u32 %v609, 2147483648
    %v637 = vor.u32 1.1754944e-38, %v636
    %v638 = vsel %vm635, %v637, %v633
    %v639 = vmul.f32 1.0, %v638
    %v640 = vadd.f32 %v597, %v328
    %v641 = vmul.f32 %v624, %v640
    %v642 = vadd.f32 %v559, %v641
    %v643 = vtanh.pop %v642
    %v644 = vsub.f32 1.0, %v639
    %v645 = vmul.f32 %v644, %v643
    %v646 = vmul.f32 %v639, %v552
    %v647 = vadd.f32 %v645, %v646
    %s648 = scalar_lea.vmem [#allocation3], 8
    %649 = vst [vmem:[%s648] sm:$0xff] %v647
    %s650 = smul.u32 2, 3
    %s651 = smul.addr %s650, 8
    %s652 = scalar_lea.vmem [#allocation4], %s651
    %v653 = vld [vmem:[%s652] sm:$0xff]
    %v654 = vld [vmem:[%s652 + $0x8] sm:$0xff]
    %v655 = vld [vmem:[%s652 + $0x10] sm:$0xff]
    %v656 = vpack.c.bf16 %v647, %v647
    %657 = vmatpush.bf16.msra.mxu0 %v439
    %658 = vmatpush.bf16.msra.mxu0 %v436
    %659 = vmatpush.bf16.msra.mxu0 %v433
    %660 = vmatpush.bf16.msra.mxu0 %v430
    %661 = vmatpush.bf16.msra.mxu0 %v427
    %662 = vmatpush.bf16.msra.mxu0 %v424
    %663 = vmatpush.bf16.msra.mxu0 %v421
    %664 = vmatpush.bf16.msra.mxu0 %v418
    %665 = vmatmul.bf16.gmra.mxu0 %v656
    %v666 = vpop.f32.mrf.mxu0
    %v667 = vadd.f32 0.0, %v666
    %v668 = vpop.f32.mrf.mxu0
    %669 = vdwg.mxu0
    %670 = vmatpush.bf16.msra.mxu0 %v440
    %671 = vmatpush.bf16.msra.mxu0 %v437
    %672 = vmatpush.bf16.msra.mxu0 %v434
    %673 = vmatpush.bf16.msra.mxu0 %v431
    %674 = vmatpush.bf16.msra.mxu0 %v428
    %675 = vmatpush.bf16.msra.mxu0 %v425
    %676 = vmatpush.bf16.msra.mxu0 %v422
    %677 = vmatpush.bf16.msra.mxu0 %v419
    %678 = vmatmul.bf16.gmra.mxu0 %v656
    %v679 = vpop.f32.mrf.mxu0
    %v680 = vadd.f32 0.0, %v679
    %v681 = vpop.f32.mrf.mxu0
    %682 = vdwg.mxu0
    %683 = vmatpush.bf16.msra.mxu0 %v441
    %684 = vmatpush.bf16.msra.mxu0 %v438
    %685 = vmatpush.bf16.msra.mxu0 %v435
    %686 = vmatpush.bf16.msra.mxu0 %v432
    %687 = vmatpush.bf16.msra.mxu0 %v429
    %688 = vmatpush.bf16.msra.mxu0 %v426
    %689 = vmatpush.bf16.msra.mxu0 %v423
    %690 = vmatpush.bf16.msra.mxu0 %v420
    %691 = vmatmul.bf16.gmra.mxu0 %v656
    %v692 = vpop.f32.mrf.mxu0
    %v693 = vadd.f32 0.0, %v692
    %v694 = vpop.f32.mrf.mxu0
    %695 = vdwg.mxu0
    %v696 = vadd.f32 %v653, %v667
    %v697 = vadd.f32 %v654, %v680
    %v698 = vxor.u32 %v696, 2147483648
    %v699 = vxor.u32 %v697, 2147483648
    %v700 = vmul.f32 %v698, 1.442695
    %v701 = vpow.pop %v700
    %v702 = vmul.f32 %v699, 1.442695
    %v703 = vpow.pop %v702
    %v704 = vadd.f32 %v701, 1.0
    %v705 = vadd.f32 %v703, 1.0
    %v706 = vrcp.pop %v704
    %v707 = vmul.f32 %v704, %v706
    %v708 = vsub.f32 1.0, %v707
    %v709 = vmul.f32 %v706, %v708
    %v710 = vadd.f32 %v706, %v709
    %vm711 = vweird.f32 %v704
    %vm712 = vweird.f32 %v706
    %vm713 = vmor %vm711, %vm712
    %v714 = vsel %vm713, %v706, %v710
    %v715 = vand.u32 2147483647, %v704
    %vm716 = vcmp.eq.f32.partialorder %v715, 8.507059e+37
    %v717 = vand.u32 %v704, 2147483648
    %v718 = vor.u32 1.1754944e-38, %v717
    %v719 = vsel %vm716, %v718, %v714
    %v720 = vmul.f32 1.0, %v719
    %v721 = vrcp.pop %v705
    %v722 = vmul.f32 %v705, %v721
    %v723 = vsub.f32 1.0, %v722
    %v724 = vmul.f32 %v721, %v723
    %v725 = vadd.f32 %v721, %v724
    %vm726 = vweird.f32 %v705
    %vm727 = vweird.f32 %v721
    %vm728 = vmor %vm726, %vm727
    %v729 = vsel %vm728, %v721, %v725
    %v730 = vand.u32 2147483647, %v705
    %vm731 = vcmp.eq.f32.partialorder %v730, 8.507059e+37
    %v732 = vand.u32 %v705, 2147483648
    %v733 = vor.u32 1.1754944e-38, %v732
    %v734 = vsel %vm731, %v733, %v729
    %v735 = vmul.f32 1.0, %v734
    %v736 = vadd.f32 %v693, %v328
    %v737 = vmul.f32 %v720, %v736
    %v738 = vadd.f32 %v655, %v737
    %v739 = vtanh.pop %v738
    %v740 = vsub.f32 1.0, %v735
    %v741 = vmul.f32 %v740, %v739
    %v742 = vmul.f32 %v735, %v647
    %v743 = vadd.f32 %v741, %v742
    %s744 = scalar_lea.vmem [#allocation3], 16
    %745 = vst [vmem:[%s744] sm:$0xff] %v743
    %s746 = smul.u32 3, 3
    %s747 = smul.addr %s746, 8
    %s748 = scalar_lea.vmem [#allocation4], %s747
    %v749 = vld [vmem:[%s748] sm:$0xff]
    %v750 = vld [vmem:[%s748 + $0x8] sm:$0xff]
    %v751 = vld [vmem:[%s748 + $0x10] sm:$0xff]
    %v752 = vpack.c.bf16 %v743, %v743
    %753 = vmatpush.bf16.msra.mxu0 %v439
    %754 = vmatpush.bf16.msra.mxu0 %v436
    %755 = vmatpush.bf16.msra.mxu0 %v433
    %756 = vmatpush.bf16.msra.mxu0 %v430
    %757 = vmatpush.bf16.msra.mxu0 %v427
    %758 = vmatpush.bf16.msra.mxu0 %v424
    %759 = vmatpush.bf16.msra.mxu0 %v421
    %760 = vmatpush.bf16.msra.mxu0 %v418
    %761 = vmatmul.bf16.gmra.mxu0 %v752
    %v762 = vpop.f32.mrf.mxu0
    %v763 = vadd.f32 0.0, %v762
    %v764 = vpop.f32.mrf.mxu0
    %765 = vdwg.mxu0
    %766 = vmatpush.bf16.msra.mxu0 %v440
    %767 = vmatpush.bf16.msra.mxu0 %v437
    %768 = vmatpush.bf16.msra.mxu0 %v434
    %769 = vmatpush.bf16.msra.mxu0 %v431
    %770 = vmatpush.bf16.msra.mxu0 %v428
    %771 = vmatpush.bf16.msra.mxu0 %v425
    %772 = vmatpush.bf16.msra.mxu0 %v422
    %773 = vmatpush.bf16.msra.mxu0 %v419
    %774 = vmatmul.bf16.gmra.mxu0 %v752
    %v775 = vpop.f32.mrf.mxu0
    %v776 = vadd.f32 0.0, %v775
    %v777 = vpop.f32.mrf.mxu0
    %778 = vdwg.mxu0
    %779 = vmatpush.bf16.msra.mxu0 %v441
    %780 = vmatpush.bf16.msra.mxu0 %v438
    %781 = vmatpush.bf16.msra.mxu0 %v435
    %782 = vmatpush.bf16.msra.mxu0 %v432
    %783 = vmatpush.bf16.msra.mxu0 %v429
    %784 = vmatpush.bf16.msra.mxu0 %v426
    %785 = vmatpush.bf16.msra.mxu0 %v423
    %786 = vmatpush.bf16.msra.mxu0 %v420
    %787 = vmatmul.bf16.gmra.mxu0 %v752
    %v788 = vpop.f32.mrf.mxu0
    %v789 = vadd.f32 0.0, %v788
    %v790 = vpop.f32.mrf.mxu0
    %791 = vdwg.mxu0
    %v792 = vadd.f32 %v749, %v763
    %v793 = vadd.f32 %v750, %v776
    %v794 = vxor.u32 %v792, 2147483648
    %v795 = vxor.u32 %v793, 2147483648
    %v796 = vmul.f32 %v794, 1.442695
    %v797 = vpow.pop %v796
    %v798 = vmul.f32 %v795, 1.442695
    %v799 = vpow.pop %v798
    %v800 = vadd.f32 %v797, 1.0
    %v801 = vadd.f32 %v799, 1.0
    %v802 = vrcp.pop %v800
    %v803 = vmul.f32 %v800, %v802
    %v804 = vsub.f32 1.0, %v803
    %v805 = vmul.f32 %v802, %v804
    %v806 = vadd.f32 %v802, %v805
    %vm807 = vweird.f32 %v800
    %vm808 = vweird.f32 %v802
    %vm809 = vmor %vm807, %vm808
    %v810 = vsel %vm809, %v802, %v806
    %v811 = vand.u32 2147483647, %v800
    %vm812 = vcmp.eq.f32.partialorder %v811, 8.507059e+37
    %v813 = vand.u32 %v800, 2147483648
    %v814 = vor.u32 1.1754944e-38, %v813
    %v815 = vsel %vm812, %v814, %v810
    %v816 = vmul.f32 1.0, %v815
    %v817 = vrcp.pop %v801
    %v818 = vmul.f32 %v801, %v817
    %v819 = vsub.f32 1.0, %v818
    %v820 = vmul.f32 %v817, %v819
    %v821 = vadd.f32 %v817, %v820
    %vm822 = vweird.f32 %v801
    %vm823 = vweird.f32 %v817
    %vm824 = vmor %vm822, %vm823
    %v825 = vsel %vm824, %v817, %v821
    %v826 = vand.u32 2147483647, %v801
    %vm827 = vcmp.eq.f32.partialorder %v826, 8.507059e+37
    %v828 = vand.u32 %v801, 2147483648
    %v829 = vor.u32 1.1754944e-38, %v828
    %v830 = vsel %vm827, %v829, %v825
    %v831 = vmul.f32 1.0, %v830
    %v832 = vadd.f32 %v789, %v328
    %v833 = vmul.f32 %v816, %v832
    %v834 = vadd.f32 %v751, %v833
    %v835 = vtanh.pop %v834
    %v836 = vsub.f32 1.0, %v831
    %v837 = vmul.f32 %v836, %v835
    %v838 = vmul.f32 %v831, %v743
    %v839 = vadd.f32 %v837, %v838
    %s840 = scalar_lea.vmem [#allocation3], 24
    %841 = vst [vmem:[%s840] sm:$0xff] %v839
    %s842 = smul.u32 4, 3
    %s843 = smul.addr %s842, 8
    %s844 = scalar_lea.vmem [#allocation4], %s843
    %v845 = vld [vmem:[%s844] sm:$0xff]
    %v846 = vld [vmem:[%s844 + $0x8] sm:$0xff]
    %v847 = vld [vmem:[%s844 + $0x10] sm:$0xff]
    %v848 = vpack.c.bf16 %v839, %v839
    %849 = vmatpush.bf16.msra.mxu0 %v439
    %850 = vmatpush.bf16.msra.mxu0 %v436
    %851 = vmatpush.bf16.msra.mxu0 %v433
    %852 = vmatpush.bf16.msra.mxu0 %v430
    %853 = vmatpush.bf16.msra.mxu0 %v427
    %854 = vmatpush.bf16.msra.mxu0 %v424
    %855 = vmatpush.bf16.msra.mxu0 %v421
    %856 = vmatpush.bf16.msra.mxu0 %v418
    %857 = vmatmul.bf16.gmra.mxu0 %v848
    %v858 = vpop.f32.mrf.mxu0
    %v859 = vadd.f32 0.0, %v858
    %v860 = vpop.f32.mrf.mxu0
    %861 = vdwg.mxu0
    %862 = vmatpush.bf16.msra.mxu0 %v440
    %863 = vmatpush.bf16.msra.mxu0 %v437
    %864 = vmatpush.bf16.msra.mxu0 %v434
    %865 = vmatpush.bf16.msra.mxu0 %v431
    %866 = vmatpush.bf16.msra.mxu0 %v428
    %867 = vmatpush.bf16.msra.mxu0 %v425
    %868 = vmatpush.bf16.msra.mxu0 %v422
    %869 = vmatpush.bf16.msra.mxu0 %v419
    %870 = vmatmul.bf16.gmra.mxu0 %v848
    %v871 = vpop.f32.mrf.mxu0
    %v872 = vadd.f32 0.0, %v871
    %v873 = vpop.f32.mrf.mxu0
    %874 = vdwg.mxu0
    %875 = vmatpush.bf16.msra.mxu0 %v441
    %876 = vmatpush.bf16.msra.mxu0 %v438
    %877 = vmatpush.bf16.msra.mxu0 %v435
    %878 = vmatpush.bf16.msra.mxu0 %v432
    %879 = vmatpush.bf16.msra.mxu0 %v429
    %880 = vmatpush.bf16.msra.mxu0 %v426
    %881 = vmatpush.bf16.msra.mxu0 %v423
    %882 = vmatpush.bf16.msra.mxu0 %v420
    %883 = vmatmul.bf16.gmra.mxu0 %v848
    %v884 = vpop.f32.mrf.mxu0
    %v885 = vadd.f32 0.0, %v884
    %v886 = vpop.f32.mrf.mxu0
    %887 = vdwg.mxu0
    %v888 = vadd.f32 %v845, %v859
    %v889 = vadd.f32 %v846, %v872
    %v890 = vxor.u32 %v888, 2147483648
    %v891 = vxor.u32 %v889, 2147483648
    %v892 = vmul.f32 %v890, 1.442695
    %v893 = vpow.pop %v892
    %v894 = vmul.f32 %v891, 1.442695
    %v895 = vpow.pop %v894
    %v896 = vadd.f32 %v893, 1.0
    %v897 = vadd.f32 %v895, 1.0
    %v898 = vrcp.pop %v896
    %v899 = vmul.f32 %v896, %v898
    %v900 = vsub.f32 1.0, %v899
    %v901 = vmul.f32 %v898, %v900
    %v902 = vadd.f32 %v898, %v901
    %vm903 = vweird.f32 %v896
    %vm904 = vweird.f32 %v898
    %vm905 = vmor %vm903, %vm904
    %v906 = vsel %vm905, %v898, %v902
    %v907 = vand.u32 2147483647, %v896
    %vm908 = vcmp.eq.f32.partialorder %v907, 8.507059e+37
    %v909 = vand.u32 %v896, 2147483648
    %v910 = vor.u32 1.1754944e-38, %v909
    %v911 = vsel %vm908, %v910, %v906
    %v912 = vmul.f32 1.0, %v911
    %v913 = vrcp.pop %v897
    %v914 = vmul.f32 %v897, %v913
    %v915 = vsub.f32 1.0, %v914
    %v916 = vmul.f32 %v913, %v915
    %v917 = vadd.f32 %v913, %v916
    %vm918 = vweird.f32 %v897
    %vm919 = vweird.f32 %v913
    %vm920 = vmor %vm918, %vm919
    %v921 = vsel %vm920, %v913, %v917
    %v922 = vand.u32 2147483647, %v897
    %vm923 = vcmp.eq.f32.partialorder %v922, 8.507059e+37
    %v924 = vand.u32 %v897, 2147483648
    %v925 = vor.u32 1.1754944e-38, %v924
    %v926 = vsel %vm923, %v925, %v921
    %v927 = vmul.f32 1.0, %v926
    %v928 = vadd.f32 %v885, %v328
    %v929 = vmul.f32 %v912, %v928
    %v930 = vadd.f32 %v847, %v929
    %v931 = vtanh.pop %v930
    %v932 = vsub.f32 1.0, %v927
    %v933 = vmul.f32 %v932, %v931
    %v934 = vmul.f32 %v927, %v839
    %v935 = vadd.f32 %v933, %v934
    %s936 = scalar_lea.vmem [#allocation3], 32
    %937 = vst [vmem:[%s936] sm:$0xff] %v935
    %s938 = smul.u32 5, 3
    %s939 = smul.addr %s938, 8
    %s940 = scalar_lea.vmem [#allocation4], %s939
    %v941 = vld [vmem:[%s940] sm:$0xff]
    %v942 = vld [vmem:[%s940 + $0x8] sm:$0xff]
    %v943 = vld [vmem:[%s940 + $0x10] sm:$0xff]
    %v944 = vpack.c.bf16 %v935, %v935
    %945 = vmatpush.bf16.msra.mxu0 %v439
    %946 = vmatpush.bf16.msra.mxu0 %v436
    %947 = vmatpush.bf16.msra.mxu0 %v433
    %948 = vmatpush.bf16.msra.mxu0 %v430
    %949 = vmatpush.bf16.msra.mxu0 %v427
    %950 = vmatpush.bf16.msra.mxu0 %v424
    %951 = vmatpush.bf16.msra.mxu0 %v421
    %952 = vmatpush.bf16.msra.mxu0 %v418
    %953 = vmatmul.bf16.gmra.mxu0 %v944
    %v954 = vpop.f32.mrf.mxu0
    %v955 = vadd.f32 0.0, %v954
    %v956 = vpop.f32.mrf.mxu0
    %957 = vdwg.mxu0
    %958 = vmatpush.bf16.msra.mxu0 %v440
    %959 = vmatpush.bf16.msra.mxu0 %v437
    %960 = vmatpush.bf16.msra.mxu0 %v434
    %961 = vmatpush.bf16.msra.mxu0 %v431
    %962 = vmatpush.bf16.msra.mxu0 %v428
    %963 = vmatpush.bf16.msra.mxu0 %v425
    %964 = vmatpush.bf16.msra.mxu0 %v422
    %965 = vmatpush.bf16.msra.mxu0 %v419
    %966 = vmatmul.bf16.gmra.mxu0 %v944
    %v967 = vpop.f32.mrf.mxu0
    %v968 = vadd.f32 0.0, %v967
    %v969 = vpop.f32.mrf.mxu0
    %970 = vdwg.mxu0
    %971 = vmatpush.bf16.msra.mxu0 %v441
    %972 = vmatpush.bf16.msra.mxu0 %v438
    %973 = vmatpush.bf16.msra.mxu0 %v435
    %974 = vmatpush.bf16.msra.mxu0 %v432
    %975 = vmatpush.bf16.msra.mxu0 %v429
    %976 = vmatpush.bf16.msra.mxu0 %v426
    %977 = vmatpush.bf16.msra.mxu0 %v423
    %978 = vmatpush.bf16.msra.mxu0 %v420
    %979 = vmatmul.bf16.gmra.mxu0 %v944
    %v980 = vpop.f32.mrf.mxu0
    %v981 = vadd.f32 0.0, %v980
    %v982 = vpop.f32.mrf.mxu0
    %983 = vdwg.mxu0
    %v984 = vadd.f32 %v941, %v955
    %v985 = vadd.f32 %v942, %v968
    %v986 = vxor.u32 %v984, 2147483648
    %v987 = vxor.u32 %v985, 2147483648
    %v988 = vmul.f32 %v986, 1.442695
    %v989 = vpow.pop %v988
    %v990 = vmul.f32 %v987, 1.442695
    %v991 = vpow.pop %v990
    %v992 = vadd.f32 %v989, 1.0
    %v993 = vadd.f32 %v991, 1.0
    %v994 = vrcp.pop %v992
    %v995 = vmul.f32 %v992, %v994
    %v996 = vsub.f32 1.0, %v995
    %v997 = vmul.f32 %v994, %v996
    %v998 = vadd.f32 %v994, %v997
    %vm999 = vweird.f32 %v992
    %vm1000 = vweird.f32 %v994
    %vm1001 = vmor %vm999, %vm1000
    %v1002 = vsel %vm1001, %v994, %v998
    %v1003 = vand.u32 2147483647, %v992
    %vm1004 = vcmp.eq.f32.partialorder %v1003, 8.507059e+37
    %v1005 = vand.u32 %v992, 2147483648
    %v1006 = vor.u32 1.1754944e-38, %v1005
    %v1007 = vsel %vm1004, %v1006, %v1002
    %v1008 = vmul.f32 1.0, %v1007
    %v1009 = vrcp.pop %v993
    %v1010 = vmul.f32 %v993, %v1009
    %v1011 = vsub.f32 1.0, %v1010
    %v1012 = vmul.f32 %v1009, %v1011
    %v1013 = vadd.f32 %v1009, %v1012
    %vm1014 = vweird.f32 %v993
    %vm1015 = vweird.f32 %v1009
    %vm1016 = vmor %vm1014, %vm1015
    %v1017 = vsel %vm1016, %v1009, %v1013
    %v1018 = vand.u32 2147483647, %v993
    %vm1019 = vcmp.eq.f32.partialorder %v1018, 8.507059e+37
    %v1020 = vand.u32 %v993, 2147483648
    %v1021 = vor.u32 1.1754944e-38, %v1020
    %v1022 = vsel %vm1019, %v1021, %v1017
    %v1023 = vmul.f32 1.0, %v1022
    %v1024 = vadd.f32 %v981, %v328
    %v1025 = vmul.f32 %v1008, %v1024
    %v1026 = vadd.f32 %v943, %v1025
    %v1027 = vtanh.pop %v1026
    %v1028 = vsub.f32 1.0, %v1023
    %v1029 = vmul.f32 %v1028, %v1027
    %v1030 = vmul.f32 %v1023, %v935
    %v1031 = vadd.f32 %v1029, %v1030
    %s1032 = scalar_lea.vmem [#allocation3], 40
    %1033 = vst [vmem:[%s1032] sm:$0xff] %v1031
    %s1034 = smul.u32 6, 3
    %s1035 = smul.addr %s1034, 8
    %s1036 = scalar_lea.vmem [#allocation4], %s1035
    %v1037 = vld [vmem:[%s1036] sm:$0xff]
    %v1038 = vld [vmem:[%s1036 + $0x8] sm:$0xff]
    %v1039 = vld [vmem:[%s1036 + $0x10] sm:$0xff]
    %v1040 = vpack.c.bf16 %v1031, %v1031
    %1041 = vmatpush.bf16.msra.mxu0 %v439
    %1042 = vmatpush.bf16.msra.mxu0 %v436
    %1043 = vmatpush.bf16.msra.mxu0 %v433
    %1044 = vmatpush.bf16.msra.mxu0 %v430
    %1045 = vmatpush.bf16.msra.mxu0 %v427
    %1046 = vmatpush.bf16.msra.mxu0 %v424
    %1047 = vmatpush.bf16.msra.mxu0 %v421
    %1048 = vmatpush.bf16.msra.mxu0 %v418
    %1049 = vmatmul.bf16.gmra.mxu0 %v1040
    %v1050 = vpop.f32.mrf.mxu0
    %v1051 = vadd.f32 0.0, %v1050
    %v1052 = vpop.f32.mrf.mxu0
    %1053 = vdwg.mxu0
    %1054 = vmatpush.bf16.msra.mxu0 %v440
    %1055 = vmatpush.bf16.msra.mxu0 %v437
    %1056 = vmatpush.bf16.msra.mxu0 %v434
    %1057 = vmatpush.bf16.msra.mxu0 %v431
    %1058 = vmatpush.bf16.msra.mxu0 %v428
    %1059 = vmatpush.bf16.msra.mxu0 %v425
    %1060 = vmatpush.bf16.msra.mxu0 %v422
    %1061 = vmatpush.bf16.msra.mxu0 %v419
    %1062 = vmatmul.bf16.gmra.mxu0 %v1040
    %v1063 = vpop.f32.mrf.mxu0
    %v1064 = vadd.f32 0.0, %v1063
    %v1065 = vpop.f32.mrf.mxu0
    %1066 = vdwg.mxu0
    %1067 = vmatpush.bf16.msra.mxu0 %v441
    %1068 = vmatpush.bf16.msra.mxu0 %v438
    %1069 = vmatpush.bf16.msra.mxu0 %v435
    %1070 = vmatpush.bf16.msra.mxu0 %v432
    %1071 = vmatpush.bf16.msra.mxu0 %v429
    %1072 = vmatpush.bf16.msra.mxu0 %v426
    %1073 = vmatpush.bf16.msra.mxu0 %v423
    %1074 = vmatpush.bf16.msra.mxu0 %v420
    %1075 = vmatmul.bf16.gmra.mxu0 %v1040
    %v1076 = vpop.f32.mrf.mxu0
    %v1077 = vadd.f32 0.0, %v1076
    %v1078 = vpop.f32.mrf.mxu0
    %1079 = vdwg.mxu0
    %v1080 = vadd.f32 %v1037, %v1051
    %v1081 = vadd.f32 %v1038, %v1064
    %v1082 = vxor.u32 %v1080, 2147483648
    %v1083 = vxor.u32 %v1081, 2147483648
    %v1084 = vmul.f32 %v1082, 1.442695
    %v1085 = vpow.pop %v1084
    %v1086 = vmul.f32 %v1083, 1.442695
    %v1087 = vpow.pop %v1086
    %v1088 = vadd.f32 %v1085, 1.0
    %v1089 = vadd.f32 %v1087, 1.0
    %v1090 = vrcp.pop %v1088
    %v1091 = vmul.f32 %v1088, %v1090
    %v1092 = vsub.f32 1.0, %v1091
    %v1093 = vmul.f32 %v1090, %v1092
    %v1094 = vadd.f32 %v1090, %v1093
    %vm1095 = vweird.f32 %v1088
    %vm1096 = vweird.f32 %v1090
    %vm1097 = vmor %vm1095, %vm1096
    %v1098 = vsel %vm1097, %v1090, %v1094
    %v1099 = vand.u32 2147483647, %v1088
    %vm1100 = vcmp.eq.f32.partialorder %v1099, 8.507059e+37
    %v1101 = vand.u32 %v1088, 2147483648
    %v1102 = vor.u32 1.1754944e-38, %v1101
    %v1103 = vsel %vm1100, %v1102, %v1098
    %v1104 = vmul.f32 1.0, %v1103
    %v1105 = vrcp.pop %v1089
    %v1106 = vmul.f32 %v1089, %v1105
    %v1107 = vsub.f32 1.0, %v1106
    %v1108 = vmul.f32 %v1105, %v1107
    %v1109 = vadd.f32 %v1105, %v1108
    %vm1110 = vweird.f32 %v1089
    %vm1111 = vweird.f32 %v1105
    %vm1112 = vmor %vm1110, %vm1111
    %v1113 = vsel %vm1112, %v1105, %v1109
    %v1114 = vand.u32 2147483647, %v1089
    %vm1115 = vcmp.eq.f32.partialorder %v1114, 8.507059e+37
    %v1116 = vand.u32 %v1089, 2147483648
    %v1117 = vor.u32 1.1754944e-38, %v1116
    %v1118 = vsel %vm1115, %v1117, %v1113
    %v1119 = vmul.f32 1.0, %v1118
    %v1120 = vadd.f32 %v1077, %v328
    %v1121 = vmul.f32 %v1104, %v1120
    %v1122 = vadd.f32 %v1039, %v1121
    %v1123 = vtanh.pop %v1122
    %v1124 = vsub.f32 1.0, %v1119
    %v1125 = vmul.f32 %v1124, %v1123
    %v1126 = vmul.f32 %v1119, %v1031
    %v1127 = vadd.f32 %v1125, %v1126
    %s1128 = scalar_lea.vmem [#allocation3], 48
    %1129 = vst [vmem:[%s1128] sm:$0xff] %v1127
    %s1130 = smul.u32 7, 3
    %s1131 = smul.addr %s1130, 8
    %s1132 = scalar_lea.vmem [#allocation4], %s1131
    %v1133 = vld [vmem:[%s1132] sm:$0xff]
    %v1134 = vld [vmem:[%s1132 + $0x8] sm:$0xff]
    %v1135 = vld [vmem:[%s1132 + $0x10] sm:$0xff]
    %v1136 = vpack.c.bf16 %v1127, %v1127
    %1137 = vmatpush.bf16.msra.mxu0 %v439
    %1138 = vmatpush.bf16.msra.mxu0 %v436
    %1139 = vmatpush.bf16.msra.mxu0 %v433
    %1140 = vmatpush.bf16.msra.mxu0 %v430
    %1141 = vmatpush.bf16.msra.mxu0 %v427
    %1142 = vmatpush.bf16.msra.mxu0 %v424
    %1143 = vmatpush.bf16.msra.mxu0 %v421
    %1144 = vmatpush.bf16.msra.mxu0 %v418
    %1145 = vmatmul.bf16.gmra.mxu0 %v1136
    %v1146 = vpop.f32.mrf.mxu0
    %v1147 = vadd.f32 0.0, %v1146
    %v1148 = vpop.f32.mrf.mxu0
    %1149 = vdwg.mxu0
    %1150 = vmatpush.bf16.msra.mxu0 %v440
    %1151 = vmatpush.bf16.msra.mxu0 %v437
    %1152 = vmatpush.bf16.msra.mxu0 %v434
    %1153 = vmatpush.bf16.msra.mxu0 %v431
    %1154 = vmatpush.bf16.msra.mxu0 %v428
    %1155 = vmatpush.bf16.msra.mxu0 %v425
    %1156 = vmatpush.bf16.msra.mxu0 %v422
    %1157 = vmatpush.bf16.msra.mxu0 %v419
    %1158 = vmatmul.bf16.gmra.mxu0 %v1136
    %v1159 = vpop.f32.mrf.mxu0
    %v1160 = vadd.f32 0.0, %v1159
    %v1161 = vpop.f32.mrf.mxu0
    %1162 = vdwg.mxu0
    %1163 = vmatpush.bf16.msra.mxu0 %v441
    %1164 = vmatpush.bf16.msra.mxu0 %v438
    %1165 = vmatpush.bf16.msra.mxu0 %v435
    %1166 = vmatpush.bf16.msra.mxu0 %v432
    %1167 = vmatpush.bf16.msra.mxu0 %v429
    %1168 = vmatpush.bf16.msra.mxu0 %v426
    %1169 = vmatpush.bf16.msra.mxu0 %v423
    %1170 = vmatpush.bf16.msra.mxu0 %v420
    %1171 = vmatmul.bf16.gmra.mxu0 %v1136
    %v1172 = vpop.f32.mrf.mxu0
    %v1173 = vadd.f32 0.0, %v1172
    %v1174 = vpop.f32.mrf.mxu0
    %1175 = vdwg.mxu0
    %v1176 = vadd.f32 %v1133, %v1147
    %v1177 = vadd.f32 %v1134, %v1160
    %v1178 = vxor.u32 %v1176, 2147483648
    %v1179 = vxor.u32 %v1177, 2147483648
    %v1180 = vmul.f32 %v1178, 1.442695
    %v1181 = vpow.pop %v1180
    %v1182 = vmul.f32 %v1179, 1.442695
    %v1183 = vpow.pop %v1182
    %v1184 = vadd.f32 %v1181, 1.0
    %v1185 = vadd.f32 %v1183, 1.0
    %v1186 = vrcp.pop %v1184
    %v1187 = vmul.f32 %v1184, %v1186
    %v1188 = vsub.f32 1.0, %v1187
    %v1189 = vmul.f32 %v1186, %v1188
    %v1190 = vadd.f32 %v1186, %v1189
    %vm1191 = vweird.f32 %v1184
    %vm1192 = vweird.f32 %v1186
    %vm1193 = vmor %vm1191, %vm1192
    %v1194 = vsel %vm1193, %v1186, %v1190
    %v1195 = vand.u32 2147483647, %v1184
    %vm1196 = vcmp.eq.f32.partialorder %v1195, 8.507059e+37
    %v1197 = vand.u32 %v1184, 2147483648
    %v1198 = vor.u32 1.1754944e-38, %v1197
    %v1199 = vsel %vm1196, %v1198, %v1194
    %v1200 = vmul.f32 1.0, %v1199
    %v1201 = vrcp.pop %v1185
    %v1202 = vmul.f32 %v1185, %v1201
    %v1203 = vsub.f32 1.0, %v1202
    %v1204 = vmul.f32 %v1201, %v1203
    %v1205 = vadd.f32 %v1201, %v1204
    %vm1206 = vweird.f32 %v1185
    %vm1207 = vweird.f32 %v1201
    %vm1208 = vmor %vm1206, %vm1207
    %v1209 = vsel %vm1208, %v1201, %v1205
    %v1210 = vand.u32 2147483647, %v1185
    %vm1211 = vcmp.eq.f32.partialorder %v1210, 8.507059e+37
    %v1212 = vand.u32 %v1185, 2147483648
    %v1213 = vor.u32 1.1754944e-38, %v1212
    %v1214 = vsel %vm1211, %v1213, %v1209
    %v1215 = vmul.f32 1.0, %v1214
    %v1216 = vadd.f32 %v1173, %v328
    %v1217 = vmul.f32 %v1200, %v1216
    %v1218 = vadd.f32 %v1135, %v1217
    %v1219 = vtanh.pop %v1218
    %v1220 = vsub.f32 1.0, %v1215
    %v1221 = vmul.f32 %v1220, %v1219
    %v1222 = vmul.f32 %v1215, %v1127
    %v1223 = vadd.f32 %v1221, %v1222
    %s1224 = scalar_lea.vmem [#allocation3], 56
    %1225 = vst [vmem:[%s1224] sm:$0xff] %v1223
    %1226 = vst [vmem:[#allocation2] sm:$0xff] %v1223
    %v1227 = vld [vmem:[#allocation3] sm:$0xff]
    %v1228 = vld [vmem:[#allocation3 + $0x8] sm:$0xff]
    %v1229 = vld [vmem:[#allocation3 + $0x10] sm:$0xff]
    %v1230 = vld [vmem:[#allocation3 + $0x18] sm:$0xff]
    %v1231 = vld [vmem:[#allocation3 + $0x20] sm:$0xff]
    %v1232 = vld [vmem:[#allocation3 + $0x28] sm:$0xff]
    %v1233 = vld [vmem:[#allocation3 + $0x30] sm:$0xff]
    %v1234 = vld [vmem:[#allocation3 + $0x38] sm:$0xff]
    %v1235 = vpack.c.bf16 %v1228, %v1227
    %v1236 = vpack.c.bf16 %v1230, %v1229
    %v1237 = vpack.c.bf16 %v1232, %v1231
    %v1238 = vpack.c.bf16 %v1234, %v1233
    %v1239 = vld [vmem:[#allocation5] sm:$0xff]
    %v1240 = vld [vmem:[#allocation5 + $0x8] sm:$0xf]
    %v1241 = vld [vmem:[#allocation5 + $0xc] sm:$0xff]
    %v1242 = vld [vmem:[#allocation5 + $0x14] sm:$0xf]
    %v1243 = vld [vmem:[#allocation5 + $0x18] sm:$0xff]
    %v1244 = vld [vmem:[#allocation5 + $0x20] sm:$0xf]
    %v1245 = vld [vmem:[#allocation5 + $0x24] sm:$0xff]
    %v1246 = vld [vmem:[#allocation5 + $0x2c] sm:$0xf]
    %v1247 = vld [vmem:[#allocation5 + $0x30] sm:$0xff]
    %v1248 = vld [vmem:[#allocation5 + $0x38] sm:$0xf]
    %v1249 = vld [vmem:[#allocation5 + $0x3c] sm:$0xff]
    %v1250 = vld [vmem:[#allocation5 + $0x44] sm:$0xf]
    %v1251 = vld [vmem:[#allocation5 + $0x48] sm:$0xff]
    %v1252 = vld [vmem:[#allocation5 + $0x50] sm:$0xf]
    %v1253 = vld [vmem:[#allocation5 + $0x54] sm:$0xff]
    %v1254 = vld [vmem:[#allocation5 + $0x5c] sm:$0xf]
    %v1255 = vld [vmem:[#allocation5 + $0x60] sm:$0xff]
    %v1256 = vld [vmem:[#allocation5 + $0x68] sm:$0xf]
    %v1257 = vld [vmem:[#allocation5 + $0x6c] sm:$0xff]
    %v1258 = vld [vmem:[#allocation5 + $0x74] sm:$0xf]
    %v1259 = vld [vmem:[#allocation5 + $0x78] sm:$0xff]
    %v1260 = vld [vmem:[#allocation5 + $0x80] sm:$0xf]
    %v1261 = vld [vmem:[#allocation5 + $0x84] sm:$0xff]
    %v1262 = vld [vmem:[#allocation5 + $0x8c] sm:$0xf]
    %v1263 = vld [vmem:[#allocation5 + $0x90] sm:$0xff]
    %v1264 = vld [vmem:[#allocation5 + $0x98] sm:$0xf]
    %v1265 = vld [vmem:[#allocation5 + $0x9c] sm:$0xff]
    %v1266 = vld [vmem:[#allocation5 + $0xa4] sm:$0xf]
    %v1267 = vld [vmem:[#allocation5 + $0xa8] sm:$0xff]
    %v1268 = vld [vmem:[#allocation5 + $0xb0] sm:$0xf]
    %v1269 = vld [vmem:[#allocation5 + $0xb4] sm:$0xff]
    %v1270 = vld [vmem:[#allocation5 + $0xbc] sm:$0xf]
    %s1271 = scalar_lea.vmem %s4, 3
    %v1272 = vld [vmem:[%s1271] sm:$0x7]
    %v1274 = vperm.slane %v1272, 0
    %v1275 = vperm.slane %v1272, 1
    %v1276 = vperm.slane %v1272, 2
    %v1312 = vunpack.c.l.b16 %v1239
    %v1313 = vunpack.c.h.b16 %v1239
    %v1314 = vunpack.c.l.b16 %v1240
    %v1315 = vunpack.c.l.b16 %v1241
    %v1316 = vunpack.c.h.b16 %v1241
    %v1317 = vunpack.c.l.b16 %v1242
    %v1318 = vunpack.c.l.b16 %v1243
    %v1319 = vunpack.c.h.b16 %v1243
    %v1320 = vunpack.c.l.b16 %v1244
    %v1321 = vunpack.c.l.b16 %v1245
    %v1322 = vunpack.c.h.b16 %v1245
    %v1323 = vunpack.c.l.b16 %v1246
    %v1324 = vunpack.c.l.b16 %v1247
    %v1325 = vunpack.c.h.b16 %v1247
    %v1326 = vunpack.c.l.b16 %v1248
    %v1327 = vunpack.c.l.b16 %v1249
    %v1328 = vunpack.c.h.b16 %v1249
    %v1329 = vunpack.c.l.b16 %v1250
    %v1330 = vunpack.c.l.b16 %v1251
    %v1331 = vunpack.c.h.b16 %v1251
    %v1332 = vunpack.c.l.b16 %v1252
    %v1333 = vunpack.c.l.b16 %v1253
    %v1334 = vunpack.c.h.b16 %v1253
    %v1335 = vunpack.c.l.b16 %v1254
    %v1336 = vunpack.c.l.b16 %v1255
    %v1337 = vunpack.c.h.b16 %v1255
    %v1338 = vunpack.c.l.b16 %v1256
    %v1339 = vunpack.c.l.b16 %v1257
    %v1340 = vunpack.c.h.b16 %v1257
    %v1341 = vunpack.c.l.b16 %v1258
    %v1342 = vunpack.c.l.b16 %v1259
    %v1343 = vunpack.c.h.b16 %v1259
    %v1344 = vunpack.c.l.b16 %v1260
    %v1345 = vunpack.c.l.b16 %v1261
    %v1346 = vunpack.c.h.b16 %v1261
    %v1347 = vunpack.c.l.b16 %v1262
    %v1348 = vunpack.c.l.b16 %v1263
    %v1349 = vunpack.c.h.b16 %v1263
    %v1350 = vunpack.c.l.b16 %v1264
    %v1351 = vunpack.c.l.b16 %v1265
    %v1352 = vunpack.c.h.b16 %v1265
    %v1353 = vunpack.c.l.b16 %v1266
    %v1354 = vunpack.c.l.b16 %v1267
    %v1355 = vunpack.c.h.b16 %v1267
    %v1356 = vunpack.c.l.b16 %v1268
    %v1357 = vunpack.c.l.b16 %v1269
    %v1358 = vunpack.c.h.b16 %v1269
    %v1359 = vunpack.c.l.b16 %v1270
    %v1360 = vpack.c.b16 %v1315, %v1312
    %v1361 = vpack.c.b16 %v1316, %v1313
    %v1362 = vpack.c.b16 %v1317, %v1314
    %v1363 = vpack.c.b16 %v1321, %v1318
    %v1364 = vpack.c.b16 %v1322, %v1319
    %v1365 = vpack.c.b16 %v1323, %v1320
    %v1366 = vpack.c.b16 %v1327, %v1324
    %v1367 = vpack.c.b16 %v1328, %v1325
    %v1368 = vpack.c.b16 %v1329, %v1326
    %v1369 = vpack.c.b16 %v1333, %v1330
    %v1370 = vpack.c.b16 %v1334, %v1331
    %v1371 = vpack.c.b16 %v1335, %v1332
    %v1372 = vpack.c.b16 %v1339, %v1336
    %v1373 = vpack.c.b16 %v1340, %v1337
    %v1374 = vpack.c.b16 %v1341, %v1338
    %v1375 = vpack.c.b16 %v1345, %v1342
    %v1376 = vpack.c.b16 %v1346, %v1343
    %v1377 = vpack.c.b16 %v1347, %v1344
    %v1378 = vpack.c.b16 %v1351, %v1348
    %v1379 = vpack.c.b16 %v1352, %v1349
    %v1380 = vpack.c.b16 %v1353, %v1350
    %v1381 = vpack.c.b16 %v1357, %v1354
    %v1382 = vpack.c.b16 %v1358, %v1355
    %v1383 = vpack.c.b16 %v1359, %v1356
    %1408 = vmatpush.bf16.msra.mxu0 %v1381
    %1409 = vmatpush.bf16.msra.mxu0 %v1378
    %1410 = vmatpush.bf16.msra.mxu0 %v1375
    %1411 = vmatpush.bf16.msra.mxu0 %v1372
    %1412 = vmatpush.bf16.msra.mxu0 %v1369
    %1413 = vmatpush.bf16.msra.mxu0 %v1366
    %1414 = vmatpush.bf16.msra.mxu0 %v1363
    %1415 = vmatpush.bf16.msra.mxu0 %v1360
    %1416 = vmatmul.bf16.gmra.mxu0 %v1235
    %v1417 = vpop.f32.mrf.mxu0
    %v1418 = vadd.f32 %v1274, %v1417
    %v1419 = vpop.f32.mrf.mxu0
    %v1420 = vadd.f32 %v1274, %v1419
    %1421 = vmatmul.bf16.gmra.mxu0 %v1236
    %v1422 = vpop.f32.mrf.mxu0
    %v1423 = vadd.f32 %v1274, %v1422
    %v1424 = vpop.f32.mrf.mxu0
    %v1425 = vadd.f32 %v1274, %v1424
    %1426 = vmatmul.bf16.gmra.mxu0 %v1237
    %v1427 = vpop.f32.mrf.mxu0
    %v1428 = vadd.f32 %v1274, %v1427
    %v1429 = vpop.f32.mrf.mxu0
    %v1430 = vadd.f32 %v1274, %v1429
    %1431 = vmatmul.bf16.gmra.mxu0 %v1238
    %v1432 = vpop.f32.mrf.mxu0
    %v1433 = vadd.f32 %v1274, %v1432
    %v1434 = vpop.f32.mrf.mxu0
    %v1435 = vadd.f32 %v1274, %v1434
    %1436 = vdwg.mxu0
    %1437 = vmatpush.bf16.msra.mxu0 %v1382
    %1438 = vmatpush.bf16.msra.mxu0 %v1379
    %1439 = vmatpush.bf16.msra.mxu0 %v1376
    %1440 = vmatpush.bf16.msra.mxu0 %v1373
    %1441 = vmatpush.bf16.msra.mxu0 %v1370
    %1442 = vmatpush.bf16.msra.mxu0 %v1367
    %1443 = vmatpush.bf16.msra.mxu0 %v1364
    %1444 = vmatpush.bf16.msra.mxu0 %v1361
    %1445 = vmatmul.bf16.gmra.mxu0 %v1235
    %v1446 = vpop.f32.mrf.mxu0
    %v1447 = vadd.f32 %v1275, %v1446
    %v1448 = vpop.f32.mrf.mxu0
    %v1449 = vadd.f32 %v1275, %v1448
    %1450 = vmatmul.bf16.gmra.mxu0 %v1236
    %v1451 = vpop.f32.mrf.mxu0
    %v1452 = vadd.f32 %v1275, %v1451
    %v1453 = vpop.f32.mrf.mxu0
    %v1454 = vadd.f32 %v1275, %v1453
    %1455 = vmatmul.bf16.gmra.mxu0 %v1237
    %v1456 = vpop.f32.mrf.mxu0
    %v1457 = vadd.f32 %v1275, %v1456
    %v1458 = vpop.f32.mrf.mxu0
    %v1459 = vadd.f32 %v1275, %v1458
    %1460 = vmatmul.bf16.gmra.mxu0 %v1238
    %v1461 = vpop.f32.mrf.mxu0
    %v1462 = vadd.f32 %v1275, %v1461
    %v1463 = vpop.f32.mrf.mxu0
    %v1464 = vadd.f32 %v1275, %v1463
    %1465 = vdwg.mxu0
    %1466 = vmatpush.bf16.msra.mxu0 %v1383
    %1467 = vmatpush.bf16.msra.mxu0 %v1380
    %1468 = vmatpush.bf16.msra.mxu0 %v1377
    %1469 = vmatpush.bf16.msra.mxu0 %v1374
    %1470 = vmatpush.bf16.msra.mxu0 %v1371
    %1471 = vmatpush.bf16.msra.mxu0 %v1368
    %1472 = vmatpush.bf16.msra.mxu0 %v1365
    %1473 = vmatpush.bf16.msra.mxu0 %v1362
    %1474 = vmatmul.bf16.gmra.mxu0 %v1235
    %v1475 = vpop.f32.mrf.mxu0
    %v1476 = vadd.f32 %v1276, %v1475
    %v1477 = vpop.f32.mrf.mxu0
    %v1478 = vadd.f32 %v1276, %v1477
    %1479 = vmatmul.bf16.gmra.mxu0 %v1236
    %v1480 = vpop.f32.mrf.mxu0
    %v1481 = vadd.f32 %v1276, %v1480
    %v1482 = vpop.f32.mrf.mxu0
    %v1483 = vadd.f32 %v1276, %v1482
    %1484 = vmatmul.bf16.gmra.mxu0 %v1237
    %v1485 = vpop.f32.mrf.mxu0
    %v1486 = vadd.f32 %v1276, %v1485
    %v1487 = vpop.f32.mrf.mxu0
    %v1488 = vadd.f32 %v1276, %v1487
    %1489 = vmatmul.bf16.gmra.mxu0 %v1238
    %v1490 = vpop.f32.mrf.mxu0
    %v1491 = vadd.f32 %v1276, %v1490
    %v1492 = vpop.f32.mrf.mxu0
    %v1493 = vadd.f32 %v1276, %v1492
    %1494 = vdwg.mxu0
    %1495 = vst [vmem:[#allocation4] sm:$0xff] %v1418
    %1496 = vst [vmem:[#allocation4 + $0x8] sm:$0xff] %v1447
    %1497 = vst [vmem:[#allocation4 + $0x10] sm:$0xff] %v1476
    %1498 = vst [vmem:[#allocation4 + $0x18] sm:$0xff] %v1420
    %1499 = vst [vmem:[#allocation4 + $0x20] sm:$0xff] %v1449
    %1500 = vst [vmem:[#allocation4 + $0x28] sm:$0xff] %v1478
    %1501 = vst [vmem:[#allocation4 + $0x30] sm:$0xff] %v1423
    %1502 = vst [vmem:[#allocation4 + $0x38] sm:$0xff] %v1452
    %1503 = vst [vmem:[#allocation4 + $0x40] sm:$0xff] %v1481
    %1504 = vst [vmem:[#allocation4 + $0x48] sm:$0xff] %v1425
    %1505 = vst [vmem:[#allocation4 + $0x50] sm:$0xff] %v1454
    %1506 = vst [vmem:[#allocation4 + $0x58] sm:$0xff] %v1483
    %1507 = vst [vmem:[#allocation4 + $0x60] sm:$0xff] %v1428
    %1508 = vst [vmem:[#allocation4 + $0x68] sm:$0xff] %v1457
    %1509 = vst [vmem:[#allocation4 + $0x70] sm:$0xff] %v1486
    %1510 = vst [vmem:[#allocation4 + $0x78] sm:$0xff] %v1430
    %1511 = vst [vmem:[#allocation4 + $0x80] sm:$0xff] %v1459
    %1512 = vst [vmem:[#allocation4 + $0x88] sm:$0xff] %v1488
    %1513 = vst [vmem:[#allocation4 + $0x90] sm:$0xff] %v1433
    %1514 = vst [vmem:[#allocation4 + $0x98] sm:$0xff] %v1462
    %1515 = vst [vmem:[#allocation4 + $0xa0] sm:$0xff] %v1491
    %1516 = vst [vmem:[#allocation4 + $0xa8] sm:$0xff] %v1435
    %1517 = vst [vmem:[#allocation4 + $0xb0] sm:$0xff] %v1464
    %1518 = vst [vmem:[#allocation4 + $0xb8] sm:$0xff] %v1493
    %s1519 = scalar_lea.vmem [#allocation7], 192
    %v1520 = vld [vmem:[%s1519] sm:$0xff]
    %v1521 = vld [vmem:[%s1519 + $0x8] sm:$0xf]
    %v1522 = vld [vmem:[%s1519 + $0xc] sm:$0xff]
    %v1523 = vld [vmem:[%s1519 + $0x14] sm:$0xf]
    %v1524 = vld [vmem:[%s1519 + $0x18] sm:$0xff]
    %v1525 = vld [vmem:[%s1519 + $0x20] sm:$0xf]
    %v1526 = vld [vmem:[%s1519 + $0x24] sm:$0xff]
    %v1527 = vld [vmem:[%s1519 + $0x2c] sm:$0xf]
    %v1528 = vld [vmem:[%s1519 + $0x30] sm:$0xff]
    %v1529 = vld [vmem:[%s1519 + $0x38] sm:$0xf]
    %v1530 = vld [vmem:[%s1519 + $0x3c] sm:$0xff]
    %v1531 = vld [vmem:[%s1519 + $0x44] sm:$0xf]
    %v1532 = vld [vmem:[%s1519 + $0x48] sm:$0xff]
    %v1533 = vld [vmem:[%s1519 + $0x50] sm:$0xf]
    %v1534 = vld [vmem:[%s1519 + $0x54] sm:$0xff]
    %v1535 = vld [vmem:[%s1519 + $0x5c] sm:$0xf]
    %v1536 = vld [vmem:[%s1519 + $0x60] sm:$0xff]
    %v1537 = vld [vmem:[%s1519 + $0x68] sm:$0xf]
    %v1538 = vld [vmem:[%s1519 + $0x6c] sm:$0xff]
    %v1539 = vld [vmem:[%s1519 + $0x74] sm:$0xf]
    %v1540 = vld [vmem:[%s1519 + $0x78] sm:$0xff]
    %v1541 = vld [vmem:[%s1519 + $0x80] sm:$0xf]
    %v1542 = vld [vmem:[%s1519 + $0x84] sm:$0xff]
    %v1543 = vld [vmem:[%s1519 + $0x8c] sm:$0xf]
    %v1544 = vld [vmem:[%s1519 + $0x90] sm:$0xff]
    %v1545 = vld [vmem:[%s1519 + $0x98] sm:$0xf]
    %v1546 = vld [vmem:[%s1519 + $0x9c] sm:$0xff]
    %v1547 = vld [vmem:[%s1519 + $0xa4] sm:$0xf]
    %v1548 = vld [vmem:[%s1519 + $0xa8] sm:$0xff]
    %v1549 = vld [vmem:[%s1519 + $0xb0] sm:$0xf]
    %v1550 = vld [vmem:[%s1519 + $0xb4] sm:$0xff]
    %v1551 = vld [vmem:[%s1519 + $0xbc] sm:$0xf]
    %s1552 = scalar_lea.vmem %s5, 1
    %v1553 = vld [vmem:[%s1552] sm:$0x1]
    %v1555 = vperm.slane %v1553, 0
    %s1557 = scalar_lea.vmem [#allocation2], 8
    %v1558 = vld [vmem:[%s1557] sm:$0xff]
    %v1559 = vld [vmem:[%s333] sm:$0xff]
    %v1560 = vld [vmem:[%s333 + $0x8] sm:$0xff]
    %v1561 = vld [vmem:[%s333 + $0x10] sm:$0xff]
    %v1562 = vpack.c.bf16 %v1558, %v1558
    %v1595 = vunpack.c.l.b16 %v1520
    %v1596 = vunpack.c.h.b16 %v1520
    %v1597 = vunpack.c.l.b16 %v1521
    %v1598 = vunpack.c.l.b16 %v1522
    %v1599 = vunpack.c.h.b16 %v1522
    %v1600 = vunpack.c.l.b16 %v1523
    %v1601 = vunpack.c.l.b16 %v1524
    %v1602 = vunpack.c.h.b16 %v1524
    %v1603 = vunpack.c.l.b16 %v1525
    %v1604 = vunpack.c.l.b16 %v1526
    %v1605 = vunpack.c.h.b16 %v1526
    %v1606 = vunpack.c.l.b16 %v1527
    %v1607 = vunpack.c.l.b16 %v1528
    %v1608 = vunpack.c.h.b16 %v1528
    %v1609 = vunpack.c.l.b16 %v1529
    %v1610 = vunpack.c.l.b16 %v1530
    %v1611 = vunpack.c.h.b16 %v1530
    %v1612 = vunpack.c.l.b16 %v1531
    %v1613 = vunpack.c.l.b16 %v1532
    %v1614 = vunpack.c.h.b16 %v1532
    %v1615 = vunpack.c.l.b16 %v1533
    %v1616 = vunpack.c.l.b16 %v1534
    %v1617 = vunpack.c.h.b16 %v1534
    %v1618 = vunpack.c.l.b16 %v1535
    %v1619 = vunpack.c.l.b16 %v1536
    %v1620 = vunpack.c.h.b16 %v1536
    %v1621 = vunpack.c.l.b16 %v1537
    %v1622 = vunpack.c.l.b16 %v1538
    %v1623 = vunpack.c.h.b16 %v1538
    %v1624 = vunpack.c.l.b16 %v1539
    %v1625 = vunpack.c.l.b16 %v1540
    %v1626 = vunpack.c.h.b16 %v1540
    %v1627 = vunpack.c.l.b16 %v1541
    %v1628 = vunpack.c.l.b16 %v1542
    %v1629 = vunpack.c.h.b16 %v1542
    %v1630 = vunpack.c.l.b16 %v1543
    %v1631 = vunpack.c.l.b16 %v1544
    %v1632 = vunpack.c.h.b16 %v1544
    %v1633 = vunpack.c.l.b16 %v1545
    %v1634 = vunpack.c.l.b16 %v1546
    %v1635 = vunpack.c.h.b16 %v1546
    %v1636 = vunpack.c.l.b16 %v1547
    %v1637 = vunpack.c.l.b16 %v1548
    %v1638 = vunpack.c.h.b16 %v1548
    %v1639 = vunpack.c.l.b16 %v1549
    %v1640 = vunpack.c.l.b16 %v1550
    %v1641 = vunpack.c.h.b16 %v1550
    %v1642 = vunpack.c.l.b16 %v1551
    %v1643 = vpack.c.b16 %v1598, %v1595
    %v1644 = vpack.c.b16 %v1599, %v1596
    %v1645 = vpack.c.b16 %v1600, %v1597
    %v1646 = vpack.c.b16 %v1604, %v1601
    %v1647 = vpack.c.b16 %v1605, %v1602
    %v1648 = vpack.c.b16 %v1606, %v1603
    %v1649 = vpack.c.b16 %v1610, %v1607
    %v1650 = vpack.c.b16 %v1611, %v1608
    %v1651 = vpack.c.b16 %v1612, %v1609
    %v1652 = vpack.c.b16 %v1616, %v1613
    %v1653 = vpack.c.b16 %v1617, %v1614
    %v1654 = vpack.c.b16 %v1618, %v1615
    %v1655 = vpack.c.b16 %v1622, %v1619
    %v1656 = vpack.c.b16 %v1623, %v1620
    %v1657 = vpack.c.b16 %v1624, %v1621
    %v1658 = vpack.c.b16 %v1628, %v1625
    %v1659 = vpack.c.b16 %v1629, %v1626
    %v1660 = vpack.c.b16 %v1630, %v1627
    %v1661 = vpack.c.b16 %v1634, %v1631
    %v1662 = vpack.c.b16 %v1635, %v1632
    %v1663 = vpack.c.b16 %v1636, %v1633
    %v1664 = vpack.c.b16 %v1640, %v1637
    %v1665 = vpack.c.b16 %v1641, %v1638
    %v1666 = vpack.c.b16 %v1642, %v1639
    %1691 = vmatpush.bf16.msra.mxu0 %v1664
    %1692 = vmatpush.bf16.msra.mxu0 %v1661
    %1693 = vmatpush.bf16.msra.mxu0 %v1658
    %1694 = vmatpush.bf16.msra.mxu0 %v1655
    %1695 = vmatpush.bf16.msra.mxu0 %v1652
    %1696 = vmatpush.bf16.msra.mxu0 %v1649
    %1697 = vmatpush.bf16.msra.mxu0 %v1646
    %1698 = vmatpush.bf16.msra.mxu0 %v1643
    %1699 = vmatmul.bf16.gmra.mxu0 %v1562
    %v1700 = vpop.f32.mrf.mxu0
    %v1701 = vadd.f32 0.0, %v1700
    %v1702 = vpop.f32.mrf.mxu0
    %1703 = vdwg.mxu0
    %1704 = vmatpush.bf16.msra.mxu0 %v1665
    %1705 = vmatpush.bf16.msra.mxu0 %v1662
    %1706 = vmatpush.bf16.msra.mxu0 %v1659
    %1707 = vmatpush.bf16.msra.mxu0 %v1656
    %1708 = vmatpush.bf16.msra.mxu0 %v1653
    %1709 = vmatpush.bf16.msra.mxu0 %v1650
    %1710 = vmatpush.bf16.msra.mxu0 %v1647
    %1711 = vmatpush.bf16.msra.mxu0 %v1644
    %1712 = vmatmul.bf16.gmra.mxu0 %v1562
    %v1713 = vpop.f32.mrf.mxu0
    %v1714 = vadd.f32 0.0, %v1713
    %v1715 = vpop.f32.mrf.mxu0
    %1716 = vdwg.mxu0
    %1717 = vmatpush.bf16.msra.mxu0 %v1666
    %1718 = vmatpush.bf16.msra.mxu0 %v1663
    %1719 = vmatpush.bf16.msra.mxu0 %v1660
    %1720 = vmatpush.bf16.msra.mxu0 %v1657
    %1721 = vmatpush.bf16.msra.mxu0 %v1654
    %1722 = vmatpush.bf16.msra.mxu0 %v1651
    %1723 = vmatpush.bf16.msra.mxu0 %v1648
    %1724 = vmatpush.bf16.msra.mxu0 %v1645
    %1725 = vmatmul.bf16.gmra.mxu0 %v1562
    %v1726 = vpop.f32.mrf.mxu0
    %v1727 = vadd.f32 0.0, %v1726
    %v1728 = vpop.f32.mrf.mxu0
    %1729 = vdwg.mxu0
    %v1730 = vadd.f32 %v1559, %v1701
    %v1731 = vadd.f32 %v1560, %v1714
    %v1732 = vxor.u32 %v1730, 2147483648
    %v1733 = vxor.u32 %v1731, 2147483648
    %v1734 = vmul.f32 %v1732, 1.442695
    %v1735 = vpow.pop %v1734
    %v1736 = vmul.f32 %v1733, 1.442695
    %v1737 = vpow.pop %v1736
    %v1738 = vadd.f32 %v1735, 1.0
    %v1739 = vadd.f32 %v1737, 1.0
    %v1740 = vrcp.pop %v1738
    %v1741 = vmul.f32 %v1738, %v1740
    %v1742 = vsub.f32 1.0, %v1741
    %v1743 = vmul.f32 %v1740, %v1742
    %v1744 = vadd.f32 %v1740, %v1743
    %vm1745 = vweird.f32 %v1738
    %vm1746 = vweird.f32 %v1740
    %vm1747 = vmor %vm1745, %vm1746
    %v1748 = vsel %vm1747, %v1740, %v1744
    %v1749 = vand.u32 2147483647, %v1738
    %vm1750 = vcmp.eq.f32.partialorder %v1749, 8.507059e+37
    %v1751 = vand.u32 %v1738, 2147483648
    %v1752 = vor.u32 1.1754944e-38, %v1751
    %v1753 = vsel %vm1750, %v1752, %v1748
    %v1754 = vmul.f32 1.0, %v1753
    %v1755 = vrcp.pop %v1739
    %v1756 = vmul.f32 %v1739, %v1755
    %v1757 = vsub.f32 1.0, %v1756
    %v1758 = vmul.f32 %v1755, %v1757
    %v1759 = vadd.f32 %v1755, %v1758
    %vm1760 = vweird.f32 %v1739
    %vm1761 = vweird.f32 %v1755
    %vm1762 = vmor %vm1760, %vm1761
    %v1763 = vsel %vm1762, %v1755, %v1759
    %v1764 = vand.u32 2147483647, %v1739
    %vm1765 = vcmp.eq.f32.partialorder %v1764, 8.507059e+37
    %v1766 = vand.u32 %v1739, 2147483648
    %v1767 = vor.u32 1.1754944e-38, %v1766
    %v1768 = vsel %vm1765, %v1767, %v1763
    %v1769 = vmul.f32 1.0, %v1768
    %v1770 = vadd.f32 %v1727, %v1555
    %v1771 = vmul.f32 %v1754, %v1770
    %v1772 = vadd.f32 %v1561, %v1771
    %v1773 = vtanh.pop %v1772
    %v1774 = vsub.f32 1.0, %v1769
    %v1775 = vmul.f32 %v1774, %v1773
    %v1776 = vmul.f32 %v1769, %v1558
    %v1777 = vadd.f32 %v1775, %v1776
    %1778 = vst [vmem:[#allocation3] sm:$0xff] %v1777
    %v1779 = vld [vmem:[%s556] sm:$0xff]
    %v1780 = vld [vmem:[%s556 + $0x8] sm:$0xff]
    %v1781 = vld [vmem:[%s556 + $0x10] sm:$0xff]
    %v1782 = vpack.c.bf16 %v1777, %v1777
    %1783 = vmatpush.bf16.msra.mxu0 %v1664
    %1784 = vmatpush.bf16.msra.mxu0 %v1661
    %1785 = vmatpush.bf16.msra.mxu0 %v1658
    %1786 = vmatpush.bf16.msra.mxu0 %v1655
    %1787 = vmatpush.bf16.msra.mxu0 %v1652
    %1788 = vmatpush.bf16.msra.mxu0 %v1649
    %1789 = vmatpush.bf16.msra.mxu0 %v1646
    %1790 = vmatpush.bf16.msra.mxu0 %v1643
    %1791 = vmatmul.bf16.gmra.mxu0 %v1782
    %v1792 = vpop.f32.mrf.mxu0
    %v1793 = vadd.f32 0.0, %v1792
    %v1794 = vpop.f32.mrf.mxu0
    %1795 = vdwg.mxu0
    %1796 = vmatpush.bf16.msra.mxu0 %v1665
    %1797 = vmatpush.bf16.msra.mxu0 %v1662
    %1798 = vmatpush.bf16.msra.mxu0 %v1659
    %1799 = vmatpush.bf16.msra.mxu0 %v1656
    %1800 = vmatpush.bf16.msra.mxu0 %v1653
    %1801 = vmatpush.bf16.msra.mxu0 %v1650
    %1802 = vmatpush.bf16.msra.mxu0 %v1647
    %1803 = vmatpush.bf16.msra.mxu0 %v1644
    %1804 = vmatmul.bf16.gmra.mxu0 %v1782
    %v1805 = vpop.f32.mrf.mxu0
    %v1806 = vadd.f32 0.0, %v1805
    %v1807 = vpop.f32.mrf.mxu0
    %1808 = vdwg.mxu0
    %1809 = vmatpush.bf16.msra.mxu0 %v1666
    %1810 = vmatpush.bf16.msra.mxu0 %v1663
    %1811 = vmatpush.bf16.msra.mxu0 %v1660
    %1812 = vmatpush.bf16.msra.mxu0 %v1657
    %1813 = vmatpush.bf16.msra.mxu0 %v1654
    %1814 = vmatpush.bf16.msra.mxu0 %v1651
    %1815 = vmatpush.bf16.msra.mxu0 %v1648
    %1816 = vmatpush.bf16.msra.mxu0 %v1645
    %1817 = vmatmul.bf16.gmra.mxu0 %v1782
    %v1818 = vpop.f32.mrf.mxu0
    %v1819 = vadd.f32 0.0, %v1818
    %v1820 = vpop.f32.mrf.mxu0
    %1821 = vdwg.mxu0
    %v1822 = vadd.f32 %v1779, %v1793
    %v1823 = vadd.f32 %v1780, %v1806
    %v1824 = vxor.u32 %v1822, 2147483648
    %v1825 = vxor.u32 %v1823, 2147483648
    %v1826 = vmul.f32 %v1824, 1.442695
    %v1827 = vpow.pop %v1826
    %v1828 = vmul.f32 %v1825, 1.442695
    %v1829 = vpow.pop %v1828
    %v1830 = vadd.f32 %v1827, 1.0
    %v1831 = vadd.f32 %v1829, 1.0
    %v1832 = vrcp.pop %v1830
    %v1833 = vmul.f32 %v1830, %v1832
    %v1834 = vsub.f32 1.0, %v1833
    %v1835 = vmul.f32 %v1832, %v1834
    %v1836 = vadd.f32 %v1832, %v1835
    %vm1837 = vweird.f32 %v1830
    %vm1838 = vweird.f32 %v1832
    %vm1839 = vmor %vm1837, %vm1838
    %v1840 = vsel %vm1839, %v1832, %v1836
    %v1841 = vand.u32 2147483647, %v1830
    %vm1842 = vcmp.eq.f32.partialorder %v1841, 8.507059e+37
    %v1843 = vand.u32 %v1830, 2147483648
    %v1844 = vor.u32 1.1754944e-38, %v1843
    %v1845 = vsel %vm1842, %v1844, %v1840
    %v1846 = vmul.f32 1.0, %v1845
    %v1847 = vrcp.pop %v1831
    %v1848 = vmul.f32 %v1831, %v1847
    %v1849 = vsub.f32 1.0, %v1848
    %v1850 = vmul.f32 %v1847, %v1849
    %v1851 = vadd.f32 %v1847, %v1850
    %vm1852 = vweird.f32 %v1831
    %vm1853 = vweird.f32 %v1847
    %vm1854 = vmor %vm1852, %vm1853
    %v1855 = vsel %vm1854, %v1847, %v1851
    %v1856 = vand.u32 2147483647, %v1831
    %vm1857 = vcmp.eq.f32.partialorder %v1856, 8.507059e+37
    %v1858 = vand.u32 %v1831, 2147483648
    %v1859 = vor.u32 1.1754944e-38, %v1858
    %v1860 = vsel %vm1857, %v1859, %v1855
    %v1861 = vmul.f32 1.0, %v1860
    %v1862 = vadd.f32 %v1819, %v1555
    %v1863 = vmul.f32 %v1846, %v1862
    %v1864 = vadd.f32 %v1781, %v1863
    %v1865 = vtanh.pop %v1864
    %v1866 = vsub.f32 1.0, %v1861
    %v1867 = vmul.f32 %v1866, %v1865
    %v1868 = vmul.f32 %v1861, %v1777
    %v1869 = vadd.f32 %v1867, %v1868
    %1870 = vst [vmem:[%s648] sm:$0xff] %v1869
    %v1871 = vld [vmem:[%s652] sm:$0xff]
    %v1872 = vld [vmem:[%s652 + $0x8] sm:$0xff]
    %v1873 = vld [vmem:[%s652 + $0x10] sm:$0xff]
    %v1874 = vpack.c.bf16 %v1869, %v1869
    %1875 = vmatpush.bf16.msra.mxu0 %v1664
    %1876 = vmatpush.bf16.msra.mxu0 %v1661
    %1877 = vmatpush.bf16.msra.mxu0 %v1658
    %1878 = vmatpush.bf16.msra.mxu0 %v1655
    %1879 = vmatpush.bf16.msra.mxu0 %v1652
    %1880 = vmatpush.bf16.msra.mxu0 %v1649
    %1881 = vmatpush.bf16.msra.mxu0 %v1646
    %1882 = vmatpush.bf16.msra.mxu0 %v1643
    %1883 = vmatmul.bf16.gmra.mxu0 %v1874
    %v1884 = vpop.f32.mrf.mxu0
    %v1885 = vadd.f32 0.0, %v1884
    %v1886 = vpop.f32.mrf.mxu0
    %1887 = vdwg.mxu0
    %1888 = vmatpush.bf16.msra.mxu0 %v1665
    %1889 = vmatpush.bf16.msra.mxu0 %v1662
    %1890 = vmatpush.bf16.msra.mxu0 %v1659
    %1891 = vmatpush.bf16.msra.mxu0 %v1656
    %1892 = vmatpush.bf16.msra.mxu0 %v1653
    %1893 = vmatpush.bf16.msra.mxu0 %v1650
    %1894 = vmatpush.bf16.msra.mxu0 %v1647
    %1895 = vmatpush.bf16.msra.mxu0 %v1644
    %1896 = vmatmul.bf16.gmra.mxu0 %v1874
    %v1897 = vpop.f32.mrf.mxu0
    %v1898 = vadd.f32 0.0, %v1897
    %v1899 = vpop.f32.mrf.mxu0
    %1900 = vdwg.mxu0
    %1901 = vmatpush.bf16.msra.mxu0 %v1666
    %1902 = vmatpush.bf16.msra.mxu0 %v1663
    %1903 = vmatpush.bf16.msra.mxu0 %v1660
    %1904 = vmatpush.bf16.msra.mxu0 %v1657
    %1905 = vmatpush.bf16.msra.mxu0 %v1654
    %1906 = vmatpush.bf16.msra.mxu0 %v1651
    %1907 = vmatpush.bf16.msra.mxu0 %v1648
    %1908 = vmatpush.bf16.msra.mxu0 %v1645
    %1909 = vmatmul.bf16.gmra.mxu0 %v1874
    %v1910 = vpop.f32.mrf.mxu0
    %v1911 = vadd.f32 0.0, %v1910
    %v1912 = vpop.f32.mrf.mxu0
    %1913 = vdwg.mxu0
    %v1914 = vadd.f32 %v1871, %v1885
    %v1915 = vadd.f32 %v1872, %v1898
    %v1916 = vxor.u32 %v1914, 2147483648
    %v1917 = vxor.u32 %v1915, 2147483648
    %v1918 = vmul.f32 %v1916, 1.442695
    %v1919 = vpow.pop %v1918
    %v1920 = vmul.f32 %v1917, 1.442695
    %v1921 = vpow.pop %v1920
    %v1922 = vadd.f32 %v1919, 1.0
    %v1923 = vadd.f32 %v1921, 1.0
    %v1924 = vrcp.pop %v1922
    %v1925 = vmul.f32 %v1922, %v1924
    %v1926 = vsub.f32 1.0, %v1925
    %v1927 = vmul.f32 %v1924, %v1926
    %v1928 = vadd.f32 %v1924, %v1927
    %vm1929 = vweird.f32 %v1922
    %vm1930 = vweird.f32 %v1924
    %vm1931 = vmor %vm1929, %vm1930
    %v1932 = vsel %vm1931, %v1924, %v1928
    %v1933 = vand.u32 2147483647, %v1922
    %vm1934 = vcmp.eq.f32.partialorder %v1933, 8.507059e+37
    %v1935 = vand.u32 %v1922, 2147483648
    %v1936 = vor.u32 1.1754944e-38, %v1935
    %v1937 = vsel %vm1934, %v1936, %v1932
    %v1938 = vmul.f32 1.0, %v1937
    %v1939 = vrcp.pop %v1923
    %v1940 = vmul.f32 %v1923, %v1939
    %v1941 = vsub.f32 1.0, %v1940
    %v1942 = vmul.f32 %v1939, %v1941
    %v1943 = vadd.f32 %v1939, %v1942
    %vm1944 = vweird.f32 %v1923
    %vm1945 = vweird.f32 %v1939
    %vm1946 = vmor %vm1944, %vm1945
    %v1947 = vsel %vm1946, %v1939, %v1943
    %v1948 = vand.u32 2147483647, %v1923
    %vm1949 = vcmp.eq.f32.partialorder %v1948, 8.507059e+37
    %v1950 = vand.u32 %v1923, 2147483648
    %v1951 = vor.u32 1.1754944e-38, %v1950
    %v1952 = vsel %vm1949, %v1951, %v1947
    %v1953 = vmul.f32 1.0, %v1952
    %v1954 = vadd.f32 %v1911, %v1555
    %v1955 = vmul.f32 %v1938, %v1954
    %v1956 = vadd.f32 %v1873, %v1955
    %v1957 = vtanh.pop %v1956
    %v1958 = vsub.f32 1.0, %v1953
    %v1959 = vmul.f32 %v1958, %v1957
    %v1960 = vmul.f32 %v1953, %v1869
    %v1961 = vadd.f32 %v1959, %v1960
    %1962 = vst [vmem:[%s744] sm:$0xff] %v1961
    %v1963 = vld [vmem:[%s748] sm:$0xff]
    %v1964 = vld [vmem:[%s748 + $0x8] sm:$0xff]
    %v1965 = vld [vmem:[%s748 + $0x10] sm:$0xff]
    %v1966 = vpack.c.bf16 %v1961, %v1961
    %1967 = vmatpush.bf16.msra.mxu0 %v1664
    %1968 = vmatpush.bf16.msra.mxu0 %v1661
    %1969 = vmatpush.bf16.msra.mxu0 %v1658
    %1970 = vmatpush.bf16.msra.mxu0 %v1655
    %1971 = vmatpush.bf16.msra.mxu0 %v1652
    %1972 = vmatpush.bf16.msra.mxu0 %v1649
    %1973 = vmatpush.bf16.msra.mxu0 %v1646
    %1974 = vmatpush.bf16.msra.mxu0 %v1643
    %1975 = vmatmul.bf16.gmra.mxu0 %v1966
    %v1976 = vpop.f32.mrf.mxu0
    %v1977 = vadd.f32 0.0, %v1976
    %v1978 = vpop.f32.mrf.mxu0
    %1979 = vdwg.mxu0
    %1980 = vmatpush.bf16.msra.mxu0 %v1665
    %1981 = vmatpush.bf16.msra.mxu0 %v1662
    %1982 = vmatpush.bf16.msra.mxu0 %v1659
    %1983 = vmatpush.bf16.msra.mxu0 %v1656
    %1984 = vmatpush.bf16.msra.mxu0 %v1653
    %1985 = vmatpush.bf16.msra.mxu0 %v1650
    %1986 = vmatpush.bf16.msra.mxu0 %v1647
    %1987 = vmatpush.bf16.msra.mxu0 %v1644
    %1988 = vmatmul.bf16.gmra.mxu0 %v1966
    %v1989 = vpop.f32.mrf.mxu0
    %v1990 = vadd.f32 0.0, %v1989
    %v1991 = vpop.f32.mrf.mxu0
    %1992 = vdwg.mxu0
    %1993 = vmatpush.bf16.msra.mxu0 %v1666
    %1994 = vmatpush.bf16.msra.mxu0 %v1663
    %1995 = vmatpush.bf16.msra.mxu0 %v1660
    %1996 = vmatpush.bf16.msra.mxu0 %v1657
    %1997 = vmatpush.bf16.msra.mxu0 %v1654
    %1998 = vmatpush.bf16.msra.mxu0 %v1651
    %1999 = vmatpush.bf16.msra.mxu0 %v1648
    %2000 = vmatpush.bf16.msra.mxu0 %v1645
    %2001 = vmatmul.bf16.gmra.mxu0 %v1966
    %v2002 = vpop.f32.mrf.mxu0
    %v2003 = vadd.f32 0.0, %v2002
    %v2004 = vpop.f32.mrf.mxu0
    %2005 = vdwg.mxu0
    %v2006 = vadd.f32 %v1963, %v1977
    %v2007 = vadd.f32 %v1964, %v1990
    %v2008 = vxor.u32 %v2006, 2147483648
    %v2009 = vxor.u32 %v2007, 2147483648
    %v2010 = vmul.f32 %v2008, 1.442695
    %v2011 = vpow.pop %v2010
    %v2012 = vmul.f32 %v2009, 1.442695
    %v2013 = vpow.pop %v2012
    %v2014 = vadd.f32 %v2011, 1.0
    %v2015 = vadd.f32 %v2013, 1.0
    %v2016 = vrcp.pop %v2014
    %v2017 = vmul.f32 %v2014, %v2016
    %v2018 = vsub.f32 1.0, %v2017
    %v2019 = vmul.f32 %v2016, %v2018
    %v2020 = vadd.f32 %v2016, %v2019
    %vm2021 = vweird.f32 %v2014
    %vm2022 = vweird.f32 %v2016
    %vm2023 = vmor %vm2021, %vm2022
    %v2024 = vsel %vm2023, %v2016, %v2020
    %v2025 = vand.u32 2147483647, %v2014
    %vm2026 = vcmp.eq.f32.partialorder %v2025, 8.507059e+37
    %v2027 = vand.u32 %v2014, 2147483648
    %v2028 = vor.u32 1.1754944e-38, %v2027
    %v2029 = vsel %vm2026, %v2028, %v2024
    %v2030 = vmul.f32 1.0, %v2029
    %v2031 = vrcp.pop %v2015
    %v2032 = vmul.f32 %v2015, %v2031
    %v2033 = vsub.f32 1.0, %v2032
    %v2034 = vmul.f32 %v2031, %v2033
    %v2035 = vadd.f32 %v2031, %v2034
    %vm2036 = vweird.f32 %v2015
    %vm2037 = vweird.f32 %v2031
    %vm2038 = vmor %vm2036, %vm2037
    %v2039 = vsel %vm2038, %v2031, %v2035
    %v2040 = vand.u32 2147483647, %v2015
    %vm2041 = vcmp.eq.f32.partialorder %v2040, 8.507059e+37
    %v2042 = vand.u32 %v2015, 2147483648
    %v2043 = vor.u32 1.1754944e-38, %v2042
    %v2044 = vsel %vm2041, %v2043, %v2039
    %v2045 = vmul.f32 1.0, %v2044
    %v2046 = vadd.f32 %v2003, %v1555
    %v2047 = vmul.f32 %v2030, %v2046
    %v2048 = vadd.f32 %v1965, %v2047
    %v2049 = vtanh.pop %v2048
    %v2050 = vsub.f32 1.0, %v2045
    %v2051 = vmul.f32 %v2050, %v2049
    %v2052 = vmul.f32 %v2045, %v1961
    %v2053 = vadd.f32 %v2051, %v2052
    %2054 = vst [vmem:[%s840] sm:$0xff] %v2053
    %v2055 = vld [vmem:[%s844] sm:$0xff]
    %v2056 = vld [vmem:[%s844 + $0x8] sm:$0xff]
    %v2057 = vld [vmem:[%s844 + $0x10] sm:$0xff]
    %v2058 = vpack.c.bf16 %v2053, %v2053
    %2059 = vmatpush.bf16.msra.mxu0 %v1664
    %2060 = vmatpush.bf16.msra.mxu0 %v1661
    %2061 = vmatpush.bf16.msra.mxu0 %v1658
    %2062 = vmatpush.bf16.msra.mxu0 %v1655
    %2063 = vmatpush.bf16.msra.mxu0 %v1652
    %2064 = vmatpush.bf16.msra.mxu0 %v1649
    %2065 = vmatpush.bf16.msra.mxu0 %v1646
    %2066 = vmatpush.bf16.msra.mxu0 %v1643
    %2067 = vmatmul.bf16.gmra.mxu0 %v2058
    %v2068 = vpop.f32.mrf.mxu0
    %v2069 = vadd.f32 0.0, %v2068
    %v2070 = vpop.f32.mrf.mxu0
    %2071 = vdwg.mxu0
    %2072 = vmatpush.bf16.msra.mxu0 %v1665
    %2073 = vmatpush.bf16.msra.mxu0 %v1662
    %2074 = vmatpush.bf16.msra.mxu0 %v1659
    %2075 = vmatpush.bf16.msra.mxu0 %v1656
    %2076 = vmatpush.bf16.msra.mxu0 %v1653
    %2077 = vmatpush.bf16.msra.mxu0 %v1650
    %2078 = vmatpush.bf16.msra.mxu0 %v1647
    %2079 = vmatpush.bf16.msra.mxu0 %v1644
    %2080 = vmatmul.bf16.gmra.mxu0 %v2058
    %v2081 = vpop.f32.mrf.mxu0
    %v2082 = vadd.f32 0.0, %v2081
    %v2083 = vpop.f32.mrf.mxu0
    %2084 = vdwg.mxu0
    %2085 = vmatpush.bf16.msra.mxu0 %v1666
    %2086 = vmatpush.bf16.msra.mxu0 %v1663
    %2087 = vmatpush.bf16.msra.mxu0 %v1660
    %2088 = vmatpush.bf16.msra.mxu0 %v1657
    %2089 = vmatpush.bf16.msra.mxu0 %v1654
    %2090 = vmatpush.bf16.msra.mxu0 %v1651
    %2091 = vmatpush.bf16.msra.mxu0 %v1648
    %2092 = vmatpush.bf16.msra.mxu0 %v1645
    %2093 = vmatmul.bf16.gmra.mxu0 %v2058
    %v2094 = vpop.f32.mrf.mxu0
    %v2095 = vadd.f32 0.0, %v2094
    %v2096 = vpop.f32.mrf.mxu0
    %2097 = vdwg.mxu0
    %v2098 = vadd.f32 %v2055, %v2069
    %v2099 = vadd.f32 %v2056, %v2082
    %v2100 = vxor.u32 %v2098, 2147483648
    %v2101 = vxor.u32 %v2099, 2147483648
    %v2102 = vmul.f32 %v2100, 1.442695
    %v2103 = vpow.pop %v2102
    %v2104 = vmul.f32 %v2101, 1.442695
    %v2105 = vpow.pop %v2104
    %v2106 = vadd.f32 %v2103, 1.0
    %v2107 = vadd.f32 %v2105, 1.0
    %v2108 = vrcp.pop %v2106
    %v2109 = vmul.f32 %v2106, %v2108
    %v2110 = vsub.f32 1.0, %v2109
    %v2111 = vmul.f32 %v2108, %v2110
    %v2112 = vadd.f32 %v2108, %v2111
    %vm2113 = vweird.f32 %v2106
    %vm2114 = vweird.f32 %v2108
    %vm2115 = vmor %vm2113, %vm2114
    %v2116 = vsel %vm2115, %v2108, %v2112
    %v2117 = vand.u32 2147483647, %v2106
    %vm2118 = vcmp.eq.f32.partialorder %v2117, 8.507059e+37
    %v2119 = vand.u32 %v2106, 2147483648
    %v2120 = vor.u32 1.1754944e-38, %v2119
    %v2121 = vsel %vm2118, %v2120, %v2116
    %v2122 = vmul.f32 1.0, %v2121
    %v2123 = vrcp.pop %v2107
    %v2124 = vmul.f32 %v2107, %v2123
    %v2125 = vsub.f32 1.0, %v2124
    %v2126 = vmul.f32 %v2123, %v2125
    %v2127 = vadd.f32 %v2123, %v2126
    %vm2128 = vweird.f32 %v2107
    %vm2129 = vweird.f32 %v2123
    %vm2130 = vmor %vm2128, %vm2129
    %v2131 = vsel %vm2130, %v2123, %v2127
    %v2132 = vand.u32 2147483647, %v2107
    %vm2133 = vcmp.eq.f32.partialorder %v2132, 8.507059e+37
    %v2134 = vand.u32 %v2107, 2147483648
    %v2135 = vor.u32 1.1754944e-38, %v2134
    %v2136 = vsel %vm2133, %v2135, %v2131
    %v2137 = vmul.f32 1.0, %v2136
    %v2138 = vadd.f32 %v2095, %v1555
    %v2139 = vmul.f32 %v2122, %v2138
    %v2140 = vadd.f32 %v2057, %v2139
    %v2141 = vtanh.pop %v2140
    %v2142 = vsub.f32 1.0, %v2137
    %v2143 = vmul.f32 %v2142, %v2141
    %v2144 = vmul.f32 %v2137, %v2053
    %v2145 = vadd.f32 %v2143, %v2144
    %2146 = vst [vmem:[%s936] sm:$0xff] %v2145
    %v2147 = vld [vmem:[%s940] sm:$0xff]
    %v2148 = vld [vmem:[%s940 + $0x8] sm:$0xff]
    %v2149 = vld [vmem:[%s940 + $0x10] sm:$0xff]
    %v2150 = vpack.c.bf16 %v2145, %v2145
    %2151 = vmatpush.bf16.msra.mxu0 %v1664
    %2152 = vmatpush.bf16.msra.mxu0 %v1661
    %2153 = vmatpush.bf16.msra.mxu0 %v1658
    %2154 = vmatpush.bf16.msra.mxu0 %v1655
    %2155 = vmatpush.bf16.msra.mxu0 %v1652
    %2156 = vmatpush.bf16.msra.mxu0 %v1649
    %2157 = vmatpush.bf16.msra.mxu0 %v1646
    %2158 = vmatpush.bf16.msra.mxu0 %v1643
    %2159 = vmatmul.bf16.gmra.mxu0 %v2150
    %v2160 = vpop.f32.mrf.mxu0
    %v2161 = vadd.f32 0.0, %v2160
    %v2162 = vpop.f32.mrf.mxu0
    %2163 = vdwg.mxu0
    %2164 = vmatpush.bf16.msra.mxu0 %v1665
    %2165 = vmatpush.bf16.msra.mxu0 %v1662
    %2166 = vmatpush.bf16.msra.mxu0 %v1659
    %2167 = vmatpush.bf16.msra.mxu0 %v1656
    %2168 = vmatpush.bf16.msra.mxu0 %v1653
    %2169 = vmatpush.bf16.msra.mxu0 %v1650
    %2170 = vmatpush.bf16.msra.mxu0 %v1647
    %2171 = vmatpush.bf16.msra.mxu0 %v1644
    %2172 = vmatmul.bf16.gmra.mxu0 %v2150
    %v2173 = vpop.f32.mrf.mxu0
    %v2174 = vadd.f32 0.0, %v2173
    %v2175 = vpop.f32.mrf.mxu0
    %2176 = vdwg.mxu0
    %2177 = vmatpush.bf16.msra.mxu0 %v1666
    %2178 = vmatpush.bf16.msra.mxu0 %v1663
    %2179 = vmatpush.bf16.msra.mxu0 %v1660
    %2180 = vmatpush.bf16.msra.mxu0 %v1657
    %2181 = vmatpush.bf16.msra.mxu0 %v1654
    %2182 = vmatpush.bf16.msra.mxu0 %v1651
    %2183 = vmatpush.bf16.msra.mxu0 %v1648
    %2184 = vmatpush.bf16.msra.mxu0 %v1645
    %2185 = vmatmul.bf16.gmra.mxu0 %v2150
    %v2186 = vpop.f32.mrf.mxu0
    %v2187 = vadd.f32 0.0, %v2186
    %v2188 = vpop.f32.mrf.mxu0
    %2189 = vdwg.mxu0
    %v2190 = vadd.f32 %v2147, %v2161
    %v2191 = vadd.f32 %v2148, %v2174
    %v2192 = vxor.u32 %v2190, 2147483648
    %v2193 = vxor.u32 %v2191, 2147483648
    %v2194 = vmul.f32 %v2192, 1.442695
    %v2195 = vpow.pop %v2194
    %v2196 = vmul.f32 %v2193, 1.442695
    %v2197 = vpow.pop %v2196
    %v2198 = vadd.f32 %v2195, 1.0
    %v2199 = vadd.f32 %v2197, 1.0
    %v2200 = vrcp.pop %v2198
    %v2201 = vmul.f32 %v2198, %v2200
    %v2202 = vsub.f32 1.0, %v2201
    %v2203 = vmul.f32 %v2200, %v2202
    %v2204 = vadd.f32 %v2200, %v2203
    %vm2205 = vweird.f32 %v2198
    %vm2206 = vweird.f32 %v2200
    %vm2207 = vmor %vm2205, %vm2206
    %v2208 = vsel %vm2207, %v2200, %v2204
    %v2209 = vand.u32 2147483647, %v2198
    %vm2210 = vcmp.eq.f32.partialorder %v2209, 8.507059e+37
    %v2211 = vand.u32 %v2198, 2147483648
    %v2212 = vor.u32 1.1754944e-38, %v2211
    %v2213 = vsel %vm2210, %v2212, %v2208
    %v2214 = vmul.f32 1.0, %v2213
    %v2215 = vrcp.pop %v2199
    %v2216 = vmul.f32 %v2199, %v2215
    %v2217 = vsub.f32 1.0, %v2216
    %v2218 = vmul.f32 %v2215, %v2217
    %v2219 = vadd.f32 %v2215, %v2218
    %vm2220 = vweird.f32 %v2199
    %vm2221 = vweird.f32 %v2215
    %vm2222 = vmor %vm2220, %vm2221
    %v2223 = vsel %vm2222, %v2215, %v2219
    %v2224 = vand.u32 2147483647, %v2199
    %vm2225 = vcmp.eq.f32.partialorder %v2224, 8.507059e+37
    %v2226 = vand.u32 %v2199, 2147483648
    %v2227 = vor.u32 1.1754944e-38, %v2226
    %v2228 = vsel %vm2225, %v2227, %v2223
    %v2229 = vmul.f32 1.0, %v2228
    %v2230 = vadd.f32 %v2187, %v1555
    %v2231 = vmul.f32 %v2214, %v2230
    %v2232 = vadd.f32 %v2149, %v2231
    %v2233 = vtanh.pop %v2232
    %v2234 = vsub.f32 1.0, %v2229
    %v2235 = vmul.f32 %v2234, %v2233
    %v2236 = vmul.f32 %v2229, %v2145
    %v2237 = vadd.f32 %v2235, %v2236
    %2238 = vst [vmem:[%s1032] sm:$0xff] %v2237
    %v2239 = vld [vmem:[%s1036] sm:$0xff]
    %v2240 = vld [vmem:[%s1036 + $0x8] sm:$0xff]
    %v2241 = vld [vmem:[%s1036 + $0x10] sm:$0xff]
    %v2242 = vpack.c.bf16 %v2237, %v2237
    %2243 = vmatpush.bf16.msra.mxu0 %v1664
    %2244 = vmatpush.bf16.msra.mxu0 %v1661
    %2245 = vmatpush.bf16.msra.mxu0 %v1658
    %2246 = vmatpush.bf16.msra.mxu0 %v1655
    %2247 = vmatpush.bf16.msra.mxu0 %v1652
    %2248 = vmatpush.bf16.msra.mxu0 %v1649
    %2249 = vmatpush.bf16.msra.mxu0 %v1646
    %2250 = vmatpush.bf16.msra.mxu0 %v1643
    %2251 = vmatmul.bf16.gmra.mxu0 %v2242
    %v2252 = vpop.f32.mrf.mxu0
    %v2253 = vadd.f32 0.0, %v2252
    %v2254 = vpop.f32.mrf.mxu0
    %2255 = vdwg.mxu0
    %2256 = vmatpush.bf16.msra.mxu0 %v1665
    %2257 = vmatpush.bf16.msra.mxu0 %v1662
    %2258 = vmatpush.bf16.msra.mxu0 %v1659
    %2259 = vmatpush.bf16.msra.mxu0 %v1656
    %2260 = vmatpush.bf16.msra.mxu0 %v1653
    %2261 = vmatpush.bf16.msra.mxu0 %v1650
    %2262 = vmatpush.bf16.msra.mxu0 %v1647
    %2263 = vmatpush.bf16.msra.mxu0 %v1644
    %2264 = vmatmul.bf16.gmra.mxu0 %v2242
    %v2265 = vpop.f32.mrf.mxu0
    %v2266 = vadd.f32 0.0, %v2265
    %v2267 = vpop.f32.mrf.mxu0
    %2268 = vdwg.mxu0
    %2269 = vmatpush.bf16.msra.mxu0 %v1666
    %2270 = vmatpush.bf16.msra.mxu0 %v1663
    %2271 = vmatpush.bf16.msra.mxu0 %v1660
    %2272 = vmatpush.bf16.msra.mxu0 %v1657
    %2273 = vmatpush.bf16.msra.mxu0 %v1654
    %2274 = vmatpush.bf16.msra.mxu0 %v1651
    %2275 = vmatpush.bf16.msra.mxu0 %v1648
    %2276 = vmatpush.bf16.msra.mxu0 %v1645
    %2277 = vmatmul.bf16.gmra.mxu0 %v2242
    %v2278 = vpop.f32.mrf.mxu0
    %v2279 = vadd.f32 0.0, %v2278
    %v2280 = vpop.f32.mrf.mxu0
    %2281 = vdwg.mxu0
    %v2282 = vadd.f32 %v2239, %v2253
    %v2283 = vadd.f32 %v2240, %v2266
    %v2284 = vxor.u32 %v2282, 2147483648
    %v2285 = vxor.u32 %v2283, 2147483648
    %v2286 = vmul.f32 %v2284, 1.442695
    %v2287 = vpow.pop %v2286
    %v2288 = vmul.f32 %v2285, 1.442695
    %v2289 = vpow.pop %v2288
    %v2290 = vadd.f32 %v2287, 1.0
    %v2291 = vadd.f32 %v2289, 1.0
    %v2292 = vrcp.pop %v2290
    %v2293 = vmul.f32 %v2290, %v2292
    %v2294 = vsub.f32 1.0, %v2293
    %v2295 = vmul.f32 %v2292, %v2294
    %v2296 = vadd.f32 %v2292, %v2295
    %vm2297 = vweird.f32 %v2290
    %vm2298 = vweird.f32 %v2292
    %vm2299 = vmor %vm2297, %vm2298
    %v2300 = vsel %vm2299, %v2292, %v2296
    %v2301 = vand.u32 2147483647, %v2290
    %vm2302 = vcmp.eq.f32.partialorder %v2301, 8.507059e+37
    %v2303 = vand.u32 %v2290, 2147483648
    %v2304 = vor.u32 1.1754944e-38, %v2303
    %v2305 = vsel %vm2302, %v2304, %v2300
    %v2306 = vmul.f32 1.0, %v2305
    %v2307 = vrcp.pop %v2291
    %v2308 = vmul.f32 %v2291, %v2307
    %v2309 = vsub.f32 1.0, %v2308
    %v2310 = vmul.f32 %v2307, %v2309
    %v2311 = vadd.f32 %v2307, %v2310
    %vm2312 = vweird.f32 %v2291
    %vm2313 = vweird.f32 %v2307
    %vm2314 = vmor %vm2312, %vm2313
    %v2315 = vsel %vm2314, %v2307, %v2311
    %v2316 = vand.u32 2147483647, %v2291
    %vm2317 = vcmp.eq.f32.partialorder %v2316, 8.507059e+37
    %v2318 = vand.u32 %v2291, 2147483648
    %v2319 = vor.u32 1.1754944e-38, %v2318
    %v2320 = vsel %vm2317, %v2319, %v2315
    %v2321 = vmul.f32 1.0, %v2320
    %v2322 = vadd.f32 %v2279, %v1555
    %v2323 = vmul.f32 %v2306, %v2322
    %v2324 = vadd.f32 %v2241, %v2323
    %v2325 = vtanh.pop %v2324
    %v2326 = vsub.f32 1.0, %v2321
    %v2327 = vmul.f32 %v2326, %v2325
    %v2328 = vmul.f32 %v2321, %v2237
    %v2329 = vadd.f32 %v2327, %v2328
    %2330 = vst [vmem:[%s1128] sm:$0xff] %v2329
    %v2331 = vld [vmem:[%s1132] sm:$0xff]
    %v2332 = vld [vmem:[%s1132 + $0x8] sm:$0xff]
    %v2333 = vld [vmem:[%s1132 + $0x10] sm:$0xff]
    %v2334 = vpack.c.bf16 %v2329, %v2329
    %2335 = vmatpush.bf16.msra.mxu0 %v1664
    %2336 = vmatpush.bf16.msra.mxu0 %v1661
    %2337 = vmatpush.bf16.msra.mxu0 %v1658
    %2338 = vmatpush.bf16.msra.mxu0 %v1655
    %2339 = vmatpush.bf16.msra.mxu0 %v1652
    %2340 = vmatpush.bf16.msra.mxu0 %v1649
    %2341 = vmatpush.bf16.msra.mxu0 %v1646
    %2342 = vmatpush.bf16.msra.mxu0 %v1643
    %2343 = vmatmul.bf16.gmra.mxu0 %v2334
    %v2344 = vpop.f32.mrf.mxu0
    %v2345 = vadd.f32 0.0, %v2344
    %v2346 = vpop.f32.mrf.mxu0
    %2347 = vdwg.mxu0
    %2348 = vmatpush.bf16.msra.mxu0 %v1665
    %2349 = vmatpush.bf16.msra.mxu0 %v1662
    %2350 = vmatpush.bf16.msra.mxu0 %v1659
    %2351 = vmatpush.bf16.msra.mxu0 %v1656
    %2352 = vmatpush.bf16.msra.mxu0 %v1653
    %2353 = vmatpush.bf16.msra.mxu0 %v1650
    %2354 = vmatpush.bf16.msra.mxu0 %v1647
    %2355 = vmatpush.bf16.msra.mxu0 %v1644
    %2356 = vmatmul.bf16.gmra.mxu0 %v2334
    %v2357 = vpop.f32.mrf.mxu0
    %v2358 = vadd.f32 0.0, %v2357
    %v2359 = vpop.f32.mrf.mxu0
    %2360 = vdwg.mxu0
    %2361 = vmatpush.bf16.msra.mxu0 %v1666
    %2362 = vmatpush.bf16.msra.mxu0 %v1663
    %2363 = vmatpush.bf16.msra.mxu0 %v1660
    %2364 = vmatpush.bf16.msra.mxu0 %v1657
    %2365 = vmatpush.bf16.msra.mxu0 %v1654
    %2366 = vmatpush.bf16.msra.mxu0 %v1651
    %2367 = vmatpush.bf16.msra.mxu0 %v1648
    %2368 = vmatpush.bf16.msra.mxu0 %v1645
    %2369 = vmatmul.bf16.gmra.mxu0 %v2334
    %v2370 = vpop.f32.mrf.mxu0
    %v2371 = vadd.f32 0.0, %v2370
    %v2372 = vpop.f32.mrf.mxu0
    %2373 = vdwg.mxu0
    %v2374 = vadd.f32 %v2331, %v2345
    %v2375 = vadd.f32 %v2332, %v2358
    %v2376 = vxor.u32 %v2374, 2147483648
    %v2377 = vxor.u32 %v2375, 2147483648
    %v2378 = vmul.f32 %v2376, 1.442695
    %v2379 = vpow.pop %v2378
    %v2380 = vmul.f32 %v2377, 1.442695
    %v2381 = vpow.pop %v2380
    %v2382 = vadd.f32 %v2379, 1.0
    %v2383 = vadd.f32 %v2381, 1.0
    %v2384 = vrcp.pop %v2382
    %v2385 = vmul.f32 %v2382, %v2384
    %v2386 = vsub.f32 1.0, %v2385
    %v2387 = vmul.f32 %v2384, %v2386
    %v2388 = vadd.f32 %v2384, %v2387
    %vm2389 = vweird.f32 %v2382
    %vm2390 = vweird.f32 %v2384
    %vm2391 = vmor %vm2389, %vm2390
    %v2392 = vsel %vm2391, %v2384, %v2388
    %v2393 = vand.u32 2147483647, %v2382
    %vm2394 = vcmp.eq.f32.partialorder %v2393, 8.507059e+37
    %v2395 = vand.u32 %v2382, 2147483648
    %v2396 = vor.u32 1.1754944e-38, %v2395
    %v2397 = vsel %vm2394, %v2396, %v2392
    %v2398 = vmul.f32 1.0, %v2397
    %v2399 = vrcp.pop %v2383
    %v2400 = vmul.f32 %v2383, %v2399
    %v2401 = vsub.f32 1.0, %v2400
    %v2402 = vmul.f32 %v2399, %v2401
    %v2403 = vadd.f32 %v2399, %v2402
    %vm2404 = vweird.f32 %v2383
    %vm2405 = vweird.f32 %v2399
    %vm2406 = vmor %vm2404, %vm2405
    %v2407 = vsel %vm2406, %v2399, %v2403
    %v2408 = vand.u32 2147483647, %v2383
    %vm2409 = vcmp.eq.f32.partialorder %v2408, 8.507059e+37
    %v2410 = vand.u32 %v2383, 2147483648
    %v2411 = vor.u32 1.1754944e-38, %v2410
    %v2412 = vsel %vm2409, %v2411, %v2407
    %v2413 = vmul.f32 1.0, %v2412
    %v2414 = vadd.f32 %v2371, %v1555
    %v2415 = vmul.f32 %v2398, %v2414
    %v2416 = vadd.f32 %v2333, %v2415
    %v2417 = vtanh.pop %v2416
    %v2418 = vsub.f32 1.0, %v2413
    %v2419 = vmul.f32 %v2418, %v2417
    %v2420 = vmul.f32 %v2413, %v2329
    %v2421 = vadd.f32 %v2419, %v2420
    %2422 = vst [vmem:[%s1224] sm:$0xff] %v2421
    %2423 = vst [vmem:[%s1557] sm:$0xff] %v2421
    %v2424 = vld [vmem:[#allocation3] sm:$0xff]
    %v2425 = vld [vmem:[#allocation3 + $0x8] sm:$0xff]
    %v2426 = vld [vmem:[#allocation3 + $0x10] sm:$0xff]
    %v2427 = vld [vmem:[#allocation3 + $0x18] sm:$0xff]
    %v2428 = vld [vmem:[#allocation3 + $0x20] sm:$0xff]
    %v2429 = vld [vmem:[#allocation3 + $0x28] sm:$0xff]
    %v2430 = vld [vmem:[#allocation3 + $0x30] sm:$0xff]
    %v2431 = vld [vmem:[#allocation3 + $0x38] sm:$0xff]
    %v2432 = vpack.c.bf16 %v2425, %v2424
    %v2433 = vpack.c.bf16 %v2427, %v2426
    %v2434 = vpack.c.bf16 %v2429, %v2428
    %v2435 = vpack.c.bf16 %v2431, %v2430
    %s2436 = scalar_lea.vmem [#allocation5], 192
    %v2437 = vld [vmem:[%s2436] sm:$0xff]
    %v2438 = vld [vmem:[%s2436 + $0x8] sm:$0xf]
    %v2439 = vld [vmem:[%s2436 + $0xc] sm:$0xff]
    %v2440 = vld [vmem:[%s2436 + $0x14] sm:$0xf]
    %v2441 = vld [vmem:[%s2436 + $0x18] sm:$0xff]
    %v2442 = vld [vmem:[%s2436 + $0x20] sm:$0xf]
    %v2443 = vld [vmem:[%s2436 + $0x24] sm:$0xff]
    %v2444 = vld [vmem:[%s2436 + $0x2c] sm:$0xf]
    %v2445 = vld [vmem:[%s2436 + $0x30] sm:$0xff]
    %v2446 = vld [vmem:[%s2436 + $0x38] sm:$0xf]
    %v2447 = vld [vmem:[%s2436 + $0x3c] sm:$0xff]
    %v2448 = vld [vmem:[%s2436 + $0x44] sm:$0xf]
    %v2449 = vld [vmem:[%s2436 + $0x48] sm:$0xff]
    %v2450 = vld [vmem:[%s2436 + $0x50] sm:$0xf]
    %v2451 = vld [vmem:[%s2436 + $0x54] sm:$0xff]
    %v2452 = vld [vmem:[%s2436 + $0x5c] sm:$0xf]
    %v2453 = vld [vmem:[%s2436 + $0x60] sm:$0xff]
    %v2454 = vld [vmem:[%s2436 + $0x68] sm:$0xf]
    %v2455 = vld [vmem:[%s2436 + $0x6c] sm:$0xff]
    %v2456 = vld [vmem:[%s2436 + $0x74] sm:$0xf]
    %v2457 = vld [vmem:[%s2436 + $0x78] sm:$0xff]
    %v2458 = vld [vmem:[%s2436 + $0x80] sm:$0xf]
    %v2459 = vld [vmem:[%s2436 + $0x84] sm:$0xff]
    %v2460 = vld [vmem:[%s2436 + $0x8c] sm:$0xf]
    %v2461 = vld [vmem:[%s2436 + $0x90] sm:$0xff]
    %v2462 = vld [vmem:[%s2436 + $0x98] sm:$0xf]
    %v2463 = vld [vmem:[%s2436 + $0x9c] sm:$0xff]
    %v2464 = vld [vmem:[%s2436 + $0xa4] sm:$0xf]
    %v2465 = vld [vmem:[%s2436 + $0xa8] sm:$0xff]
    %v2466 = vld [vmem:[%s2436 + $0xb0] sm:$0xf]
    %v2467 = vld [vmem:[%s2436 + $0xb4] sm:$0xff]
    %v2468 = vld [vmem:[%s2436 + $0xbc] sm:$0xf]
    %s2469 = scalar_lea.vmem %s4, 6
    %v2470 = vld [vmem:[%s2469] sm:$0x7]
    %v2472 = vperm.slane %v2470, 0
    %v2473 = vperm.slane %v2470, 1
    %v2474 = vperm.slane %v2470, 2
    %v2510 = vunpack.c.l.b16 %v2437
    %v2511 = vunpack.c.h.b16 %v2437
    %v2512 = vunpack.c.l.b16 %v2438
    %v2513 = vunpack.c.l.b16 %v2439
    %v2514 = vunpack.c.h.b16 %v2439
    %v2515 = vunpack.c.l.b16 %v2440
    %v2516 = vunpack.c.l.b16 %v2441
    %v2517 = vunpack.c.h.b16 %v2441
    %v2518 = vunpack.c.l.b16 %v2442
    %v2519 = vunpack.c.l.b16 %v2443
    %v2520 = vunpack.c.h.b16 %v2443
    %v2521 = vunpack.c.l.b16 %v2444
    %v2522 = vunpack.c.l.b16 %v2445
    %v2523 = vunpack.c.h.b16 %v2445
    %v2524 = vunpack.c.l.b16 %v2446
    %v2525 = vunpack.c.l.b16 %v2447
    %v2526 = vunpack.c.h.b16 %v2447
    %v2527 = vunpack.c.l.b16 %v2448
    %v2528 = vunpack.c.l.b16 %v2449
    %v2529 = vunpack.c.h.b16 %v2449
    %v2530 = vunpack.c.l.b16 %v2450
    %v2531 = vunpack.c.l.b16 %v2451
    %v2532 = vunpack.c.h.b16 %v2451
    %v2533 = vunpack.c.l.b16 %v2452
    %v2534 = vunpack.c.l.b16 %v2453
    %v2535 = vunpack.c.h.b16 %v2453
    %v2536 = vunpack.c.l.b16 %v2454
    %v2537 = vunpack.c.l.b16 %v2455
    %v2538 = vunpack.c.h.b16 %v2455
    %v2539 = vunpack.c.l.b16 %v2456
    %v2540 = vunpack.c.l.b16 %v2457
    %v2541 = vunpack.c.h.b16 %v2457
    %v2542 = vunpack.c.l.b16 %v2458
    %v2543 = vunpack.c.l.b16 %v2459
    %v2544 = vunpack.c.h.b16 %v2459
    %v2545 = vunpack.c.l.b16 %v2460
    %v2546 = vunpack.c.l.b16 %v2461
    %v2547 = vunpack.c.h.b16 %v2461
    %v2548 = vunpack.c.l.b16 %v2462
    %v2549 = vunpack.c.l.b16 %v2463
    %v2550 = vunpack.c.h.b16 %v2463
    %v2551 = vunpack.c.l.b16 %v2464
    %v2552 = vunpack.c.l.b16 %v2465
    %v2553 = vunpack.c.h.b16 %v2465
    %v2554 = vunpack.c.l.b16 %v2466
    %v2555 = vunpack.c.l.b16 %v2467
    %v2556 = vunpack.c.h.b16 %v2467
    %v2557 = vunpack.c.l.b16 %v2468
    %v2558 = vpack.c.b16 %v2513, %v2510
    %v2559 = vpack.c.b16 %v2514, %v2511
    %v2560 = vpack.c.b16 %v2515, %v2512
    %v2561 = vpack.c.b16 %v2519, %v2516
    %v2562 = vpack.c.b16 %v2520, %v2517
    %v2563 = vpack.c.b16 %v2521, %v2518
    %v2564 = vpack.c.b16 %v2525, %v2522
    %v2565 = vpack.c.b16 %v2526, %v2523
    %v2566 = vpack.c.b16 %v2527, %v2524
    %v2567 = vpack.c.b16 %v2531, %v2528
    %v2568 = vpack.c.b16 %v2532, %v2529
    %v2569 = vpack.c.b16 %v2533, %v2530
    %v2570 = vpack.c.b16 %v2537, %v2534
    %v2571 = vpack.c.b16 %v2538, %v2535
    %v2572 = vpack.c.b16 %v2539, %v2536
    %v2573 = vpack.c.b16 %v2543, %v2540
    %v2574 = vpack.c.b16 %v2544, %v2541
    %v2575 = vpack.c.b16 %v2545, %v2542
    %v2576 = vpack.c.b16 %v2549, %v2546
    %v2577 = vpack.c.b16 %v2550, %v2547
    %v2578 = vpack.c.b16 %v2551, %v2548
    %v2579 = vpack.c.b16 %v2555, %v2552
    %v2580 = vpack.c.b16 %v2556, %v2553
    %v2581 = vpack.c.b16 %v2557, %v2554
    %2606 = vmatpush.bf16.msra.mxu0 %v2579
    %2607 = vmatpush.bf16.msra.mxu0 %v2576
    %2608 = vmatpush.bf16.msra.mxu0 %v2573
    %2609 = vmatpush.bf16.msra.mxu0 %v2570
    %2610 = vmatpush.bf16.msra.mxu0 %v2567
    %2611 = vmatpush.bf16.msra.mxu0 %v2564
    %2612 = vmatpush.bf16.msra.mxu0 %v2561
    %2613 = vmatpush.bf16.msra.mxu0 %v2558
    %2614 = vmatmul.bf16.gmra.mxu0 %v2432
    %v2615 = vpop.f32.mrf.mxu0
    %v2616 = vadd.f32 %v2472, %v2615
    %v2617 = vpop.f32.mrf.mxu0
    %v2618 = vadd.f32 %v2472, %v2617
    %2619 = vmatmul.bf16.gmra.mxu0 %v2433
    %v2620 = vpop.f32.mrf.mxu0
    %v2621 = vadd.f32 %v2472, %v2620
    %v2622 = vpop.f32.mrf.mxu0
    %v2623 = vadd.f32 %v2472, %v2622
    %2624 = vmatmul.bf16.gmra.mxu0 %v2434
    %v2625 = vpop.f32.mrf.mxu0
    %v2626 = vadd.f32 %v2472, %v2625
    %v2627 = vpop.f32.mrf.mxu0
    %v2628 = vadd.f32 %v2472, %v2627
    %2629 = vmatmul.bf16.gmra.mxu0 %v2435
    %v2630 = vpop.f32.mrf.mxu0
    %v2631 = vadd.f32 %v2472, %v2630
    %v2632 = vpop.f32.mrf.mxu0
    %v2633 = vadd.f32 %v2472, %v2632
    %2634 = vdwg.mxu0
    %2635 = vmatpush.bf16.msra.mxu0 %v2580
    %2636 = vmatpush.bf16.msra.mxu0 %v2577
    %2637 = vmatpush.bf16.msra.mxu0 %v2574
    %2638 = vmatpush.bf16.msra.mxu0 %v2571
    %2639 = vmatpush.bf16.msra.mxu0 %v2568
    %2640 = vmatpush.bf16.msra.mxu0 %v2565
    %2641 = vmatpush.bf16.msra.mxu0 %v2562
    %2642 = vmatpush.bf16.msra.mxu0 %v2559
    %2643 = vmatmul.bf16.gmra.mxu0 %v2432
    %v2644 = vpop.f32.mrf.mxu0
    %v2645 = vadd.f32 %v2473, %v2644
    %v2646 = vpop.f32.mrf.mxu0
    %v2647 = vadd.f32 %v2473, %v2646
    %2648 = vmatmul.bf16.gmra.mxu0 %v2433
    %v2649 = vpop.f32.mrf.mxu0
    %v2650 = vadd.f32 %v2473, %v2649
    %v2651 = vpop.f32.mrf.mxu0
    %v2652 = vadd.f32 %v2473, %v2651
    %2653 = vmatmul.bf16.gmra.mxu0 %v2434
    %v2654 = vpop.f32.mrf.mxu0
    %v2655 = vadd.f32 %v2473, %v2654
    %v2656 = vpop.f32.mrf.mxu0
    %v2657 = vadd.f32 %v2473, %v2656
    %2658 = vmatmul.bf16.gmra.mxu0 %v2435
    %v2659 = vpop.f32.mrf.mxu0
    %v2660 = vadd.f32 %v2473, %v2659
    %v2661 = vpop.f32.mrf.mxu0
    %v2662 = vadd.f32 %v2473, %v2661
    %2663 = vdwg.mxu0
    %2664 = vmatpush.bf16.msra.mxu0 %v2581
    %2665 = vmatpush.bf16.msra.mxu0 %v2578
    %2666 = vmatpush.bf16.msra.mxu0 %v2575
    %2667 = vmatpush.bf16.msra.mxu0 %v2572
    %2668 = vmatpush.bf16.msra.mxu0 %v2569
    %2669 = vmatpush.bf16.msra.mxu0 %v2566
    %2670 = vmatpush.bf16.msra.mxu0 %v2563
    %2671 = vmatpush.bf16.msra.mxu0 %v2560
    %2672 = vmatmul.bf16.gmra.mxu0 %v2432
    %v2673 = vpop.f32.mrf.mxu0
    %v2674 = vadd.f32 %v2474, %v2673
    %v2675 = vpop.f32.mrf.mxu0
    %v2676 = vadd.f32 %v2474, %v2675
    %2677 = vmatmul.bf16.gmra.mxu0 %v2433
    %v2678 = vpop.f32.mrf.mxu0
    %v2679 = vadd.f32 %v2474, %v2678
    %v2680 = vpop.f32.mrf.mxu0
    %v2681 = vadd.f32 %v2474, %v2680
    %2682 = vmatmul.bf16.gmra.mxu0 %v2434
    %v2683 = vpop.f32.mrf.mxu0
    %v2684 = vadd.f32 %v2474, %v2683
    %v2685 = vpop.f32.mrf.mxu0
    %v2686 = vadd.f32 %v2474, %v2685
    %2687 = vmatmul.bf16.gmra.mxu0 %v2435
    %v2688 = vpop.f32.mrf.mxu0
    %v2689 = vadd.f32 %v2474, %v2688
    %v2690 = vpop.f32.mrf.mxu0
    %v2691 = vadd.f32 %v2474, %v2690
    %2692 = vdwg.mxu0
    %2693 = vst [vmem:[#allocation4] sm:$0xff] %v2616
    %2694 = vst [vmem:[#allocation4 + $0x8] sm:$0xff] %v2645
    %2695 = vst [vmem:[#allocation4 + $0x10] sm:$0xff] %v2674
    %2696 = vst [vmem:[#allocation4 + $0x18] sm:$0xff] %v2618
    %2697 = vst [vmem:[#allocation4 + $0x20] sm:$0xff] %v2647
    %2698 = vst [vmem:[#allocation4 + $0x28] sm:$0xff] %v2676
    %2699 = vst [vmem:[#allocation4 + $0x30] sm:$0xff] %v2621
    %2700 = vst [vmem:[#allocation4 + $0x38] sm:$0xff] %v2650
    %2701 = vst [vmem:[#allocation4 + $0x40] sm:$0xff] %v2679
    %2702 = vst [vmem:[#allocation4 + $0x48] sm:$0xff] %v2623
    %2703 = vst [vmem:[#allocation4 + $0x50] sm:$0xff] %v2652
    %2704 = vst [vmem:[#allocation4 + $0x58] sm:$0xff] %v2681
    %2705 = vst [vmem:[#allocation4 + $0x60] sm:$0xff] %v2626
    %2706 = vst [vmem:[#allocation4 + $0x68] sm:$0xff] %v2655
    %2707 = vst [vmem:[#allocation4 + $0x70] sm:$0xff] %v2684
    %2708 = vst [vmem:[#allocation4 + $0x78] sm:$0xff] %v2628
    %2709 = vst [vmem:[#allocation4 + $0x80] sm:$0xff] %v2657
    %2710 = vst [vmem:[#allocation4 + $0x88] sm:$0xff] %v2686
    %2711 = vst [vmem:[#allocation4 + $0x90] sm:$0xff] %v2631
    %2712 = vst [vmem:[#allocation4 + $0x98] sm:$0xff] %v2660
    %2713 = vst [vmem:[#allocation4 + $0xa0] sm:$0xff] %v2689
    %2714 = vst [vmem:[#allocation4 + $0xa8] sm:$0xff] %v2633
    %2715 = vst [vmem:[#allocation4 + $0xb0] sm:$0xff] %v2662
    %2716 = vst [vmem:[#allocation4 + $0xb8] sm:$0xff] %v2691
    %s2717 = scalar_lea.vmem [#allocation7], 384
    %v2718 = vld [vmem:[%s2717] sm:$0xff]
    %v2719 = vld [vmem:[%s2717 + $0x8] sm:$0xf]
    %v2720 = vld [vmem:[%s2717 + $0xc] sm:$0xff]
    %v2721 = vld [vmem:[%s2717 + $0x14] sm:$0xf]
    %v2722 = vld [vmem:[%s2717 + $0x18] sm:$0xff]
    %v2723 = vld [vmem:[%s2717 + $0x20] sm:$0xf]
    %v2724 = vld [vmem:[%s2717 + $0x24] sm:$0xff]
    %v2725 = vld [vmem:[%s2717 + $0x2c] sm:$0xf]
    %v2726 = vld [vmem:[%s2717 + $0x30] sm:$0xff]
    %v2727 = vld [vmem:[%s2717 + $0x38] sm:$0xf]
    %v2728 = vld [vmem:[%s2717 + $0x3c] sm:$0xff]
    %v2729 = vld [vmem:[%s2717 + $0x44] sm:$0xf]
    %v2730 = vld [vmem:[%s2717 + $0x48] sm:$0xff]
    %v2731 = vld [vmem:[%s2717 + $0x50] sm:$0xf]
    %v2732 = vld [vmem:[%s2717 + $0x54] sm:$0xff]
    %v2733 = vld [vmem:[%s2717 + $0x5c] sm:$0xf]
    %v2734 = vld [vmem:[%s2717 + $0x60] sm:$0xff]
    %v2735 = vld [vmem:[%s2717 + $0x68] sm:$0xf]
    %v2736 = vld [vmem:[%s2717 + $0x6c] sm:$0xff]
    %v2737 = vld [vmem:[%s2717 + $0x74] sm:$0xf]
    %v2738 = vld [vmem:[%s2717 + $0x78] sm:$0xff]
    %v2739 = vld [vmem:[%s2717 + $0x80] sm:$0xf]
    %v2740 = vld [vmem:[%s2717 + $0x84] sm:$0xff]
    %v2741 = vld [vmem:[%s2717 + $0x8c] sm:$0xf]
    %v2742 = vld [vmem:[%s2717 + $0x90] sm:$0xff]
    %v2743 = vld [vmem:[%s2717 + $0x98] sm:$0xf]
    %v2744 = vld [vmem:[%s2717 + $0x9c] sm:$0xff]
    %v2745 = vld [vmem:[%s2717 + $0xa4] sm:$0xf]
    %v2746 = vld [vmem:[%s2717 + $0xa8] sm:$0xff]
    %v2747 = vld [vmem:[%s2717 + $0xb0] sm:$0xf]
    %v2748 = vld [vmem:[%s2717 + $0xb4] sm:$0xff]
    %v2749 = vld [vmem:[%s2717 + $0xbc] sm:$0xf]
    %s2750 = scalar_lea.vmem %s5, 2
    %v2751 = vld [vmem:[%s2750] sm:$0x1]
    %v2753 = vperm.slane %v2751, 0
    %s2755 = scalar_lea.vmem [#allocation2], 16
    %v2756 = vld [vmem:[%s2755] sm:$0xff]
    %v2757 = vld [vmem:[%s333] sm:$0xff]
    %v2758 = vld [vmem:[%s333 + $0x8] sm:$0xff]
    %v2759 = vld [vmem:[%s333 + $0x10] sm:$0xff]
    %v2760 = vpack.c.bf16 %v2756, %v2756
    %v2793 = vunpack.c.l.b16 %v2718
    %v2794 = vunpack.c.h.b16 %v2718
    %v2795 = vunpack.c.l.b16 %v2719
    %v2796 = vunpack.c.l.b16 %v2720
    %v2797 = vunpack.c.h.b16 %v2720
    %v2798 = vunpack.c.l.b16 %v2721
    %v2799 = vunpack.c.l.b16 %v2722
    %v2800 = vunpack.c.h.b16 %v2722
    %v2801 = vunpack.c.l.b16 %v2723
    %v2802 = vunpack.c.l.b16 %v2724
    %v2803 = vunpack.c.h.b16 %v2724
    %v2804 = vunpack.c.l.b16 %v2725
    %v2805 = vunpack.c.l.b16 %v2726
    %v2806 = vunpack.c.h.b16 %v2726
    %v2807 = vunpack.c.l.b16 %v2727
    %v2808 = vunpack.c.l.b16 %v2728
    %v2809 = vunpack.c.h.b16 %v2728
    %v2810 = vunpack.c.l.b16 %v2729
    %v2811 = vunpack.c.l.b16 %v2730
    %v2812 = vunpack.c.h.b16 %v2730
    %v2813 = vunpack.c.l.b16 %v2731
    %v2814 = vunpack.c.l.b16 %v2732
    %v2815 = vunpack.c.h.b16 %v2732
    %v2816 = vunpack.c.l.b16 %v2733
    %v2817 = vunpack.c.l.b16 %v2734
    %v2818 = vunpack.c.h.b16 %v2734
    %v2819 = vunpack.c.l.b16 %v2735
    %v2820 = vunpack.c.l.b16 %v2736
    %v2821 = vunpack.c.h.b16 %v2736
    %v2822 = vunpack.c.l.b16 %v2737
    %v2823 = vunpack.c.l.b16 %v2738
    %v2824 = vunpack.c.h.b16 %v2738
    %v2825 = vunpack.c.l.b16 %v2739
    %v2826 = vunpack.c.l.b16 %v2740
    %v2827 = vunpack.c.h.b16 %v2740
    %v2828 = vunpack.c.l.b16 %v2741
    %v2829 = vunpack.c.l.b16 %v2742
    %v2830 = vunpack.c.h.b16 %v2742
    %v2831 = vunpack.c.l.b16 %v2743
    %v2832 = vunpack.c.l.b16 %v2744
    %v2833 = vunpack.c.h.b16 %v2744
    %v2834 = vunpack.c.l.b16 %v2745
    %v2835 = vunpack.c.l.b16 %v2746
    %v2836 = vunpack.c.h.b16 %v2746
    %v2837 = vunpack.c.l.b16 %v2747
    %v2838 = vunpack.c.l.b16 %v2748
    %v2839 = vunpack.c.h.b16 %v2748
    %v2840 = vunpack.c.l.b16 %v2749
    %v2841 = vpack.c.b16 %v2796, %v2793
    %v2842 = vpack.c.b16 %v2797, %v2794
    %v2843 = vpack.c.b16 %v2798, %v2795
    %v2844 = vpack.c.b16 %v2802, %v2799
    %v2845 = vpack.c.b16 %v2803, %v2800
    %v2846 = vpack.c.b16 %v2804, %v2801
    %v2847 = vpack.c.b16 %v2808, %v2805
    %v2848 = vpack.c.b16 %v2809, %v2806
    %v2849 = vpack.c.b16 %v2810, %v2807
    %v2850 = vpack.c.b16 %v2814, %v2811
    %v2851 = vpack.c.b16 %v2815, %v2812
    %v2852 = vpack.c.b16 %v2816, %v2813
    %v2853 = vpack.c.b16 %v2820, %v2817
    %v2854 = vpack.c.b16 %v2821, %v2818
    %v2855 = vpack.c.b16 %v2822, %v2819
    %v2856 = vpack.c.b16 %v2826, %v2823
    %v2857 = vpack.c.b16 %v2827, %v2824
    %v2858 = vpack.c.b16 %v2828, %v2825
    %v2859 = vpack.c.b16 %v2832, %v2829
    %v2860 = vpack.c.b16 %v2833, %v2830
    %v2861 = vpack.c.b16 %v2834, %v2831
    %v2862 = vpack.c.b16 %v2838, %v2835
    %v2863 = vpack.c.b16 %v2839, %v2836
    %v2864 = vpack.c.b16 %v2840, %v2837
    %2889 = vmatpush.bf16.msra.mxu0 %v2862
    %2890 = vmatpush.bf16.msra.mxu0 %v2859
    %2891 = vmatpush.bf16.msra.mxu0 %v2856
    %2892 = vmatpush.bf16.msra.mxu0 %v2853
    %2893 = vmatpush.bf16.msra.mxu0 %v2850
    %2894 = vmatpush.bf16.msra.mxu0 %v2847
    %2895 = vmatpush.bf16.msra.mxu0 %v2844
    %2896 = vmatpush.bf16.msra.mxu0 %v2841
    %2897 = vmatmul.bf16.gmra.mxu0 %v2760
    %v2898 = vpop.f32.mrf.mxu0
    %v2899 = vadd.f32 0.0, %v2898
    %v2900 = vpop.f32.mrf.mxu0
    %2901 = vdwg.mxu0
    %2902 = vmatpush.bf16.msra.mxu0 %v2863
    %2903 = vmatpush.bf16.msra.mxu0 %v2860
    %2904 = vmatpush.bf16.msra.mxu0 %v2857
    %2905 = vmatpush.bf16.msra.mxu0 %v2854
    %2906 = vmatpush.bf16.msra.mxu0 %v2851
    %2907 = vmatpush.bf16.msra.mxu0 %v2848
    %2908 = vmatpush.bf16.msra.mxu0 %v2845
    %2909 = vmatpush.bf16.msra.mxu0 %v2842
    %2910 = vmatmul.bf16.gmra.mxu0 %v2760
    %v2911 = vpop.f32.mrf.mxu0
    %v2912 = vadd.f32 0.0, %v2911
    %v2913 = vpop.f32.mrf.mxu0
    %2914 = vdwg.mxu0
    %2915 = vmatpush.bf16.msra.mxu0 %v2864
    %2916 = vmatpush.bf16.msra.mxu0 %v2861
    %2917 = vmatpush.bf16.msra.mxu0 %v2858
    %2918 = vmatpush.bf16.msra.mxu0 %v2855
    %2919 = vmatpush.bf16.msra.mxu0 %v2852
    %2920 = vmatpush.bf16.msra.mxu0 %v2849
    %2921 = vmatpush.bf16.msra.mxu0 %v2846
    %2922 = vmatpush.bf16.msra.mxu0 %v2843
    %2923 = vmatmul.bf16.gmra.mxu0 %v2760
    %v2924 = vpop.f32.mrf.mxu0
    %v2925 = vadd.f32 0.0, %v2924
    %v2926 = vpop.f32.mrf.mxu0
    %2927 = vdwg.mxu0
    %v2928 = vadd.f32 %v2757, %v2899
    %v2929 = vadd.f32 %v2758, %v2912
    %v2930 = vxor.u32 %v2928, 2147483648
    %v2931 = vxor.u32 %v2929, 2147483648
    %v2932 = vmul.f32 %v2930, 1.442695
    %v2933 = vpow.pop %v2932
    %v2934 = vmul.f32 %v2931, 1.442695
    %v2935 = vpow.pop %v2934
    %v2936 = vadd.f32 %v2933, 1.0
    %v2937 = vadd.f32 %v2935, 1.0
    %v2938 = vrcp.pop %v2936
    %v2939 = vmul.f32 %v2936, %v2938
    %v2940 = vsub.f32 1.0, %v2939
    %v2941 = vmul.f32 %v2938, %v2940
    %v2942 = vadd.f32 %v2938, %v2941
    %vm2943 = vweird.f32 %v2936
    %vm2944 = vweird.f32 %v2938
    %vm2945 = vmor %vm2943, %vm2944
    %v2946 = vsel %vm2945, %v2938, %v2942
    %v2947 = vand.u32 2147483647, %v2936
    %vm2948 = vcmp.eq.f32.partialorder %v2947, 8.507059e+37
    %v2949 = vand.u32 %v2936, 2147483648
    %v2950 = vor.u32 1.1754944e-38, %v2949
    %v2951 = vsel %vm2948, %v2950, %v2946
    %v2952 = vmul.f32 1.0, %v2951
    %v2953 = vrcp.pop %v2937
    %v2954 = vmul.f32 %v2937, %v2953
    %v2955 = vsub.f32 1.0, %v2954
    %v2956 = vmul.f32 %v2953, %v2955
    %v2957 = vadd.f32 %v2953, %v2956
    %vm2958 = vweird.f32 %v2937
    %vm2959 = vweird.f32 %v2953
    %vm2960 = vmor %vm2958, %vm2959
    %v2961 = vsel %vm2960, %v2953, %v2957
    %v2962 = vand.u32 2147483647, %v2937
    %vm2963 = vcmp.eq.f32.partialorder %v2962, 8.507059e+37
    %v2964 = vand.u32 %v2937, 2147483648
    %v2965 = vor.u32 1.1754944e-38, %v2964
    %v2966 = vsel %vm2963, %v2965, %v2961
    %v2967 = vmul.f32 1.0, %v2966
    %v2968 = vadd.f32 %v2925, %v2753
    %v2969 = vmul.f32 %v2952, %v2968
    %v2970 = vadd.f32 %v2759, %v2969
    %v2971 = vtanh.pop %v2970
    %v2972 = vsub.f32 1.0, %v2967
    %v2973 = vmul.f32 %v2972, %v2971
    %v2974 = vmul.f32 %v2967, %v2756
    %v2975 = vadd.f32 %v2973, %v2974
    %2976 = vst [vmem:[#allocation3] sm:$0xff] %v2975
    %v2977 = vld [vmem:[%s556] sm:$0xff]
    %v2978 = vld [vmem:[%s556 + $0x8] sm:$0xff]
    %v2979 = vld [vmem:[%s556 + $0x10] sm:$0xff]
    %v2980 = vpack.c.bf16 %v2975, %v2975
    %2981 = vmatpush.bf16.msra.mxu0 %v2862
    %2982 = vmatpush.bf16.msra.mxu0 %v2859
    %2983 = vmatpush.bf16.msra.mxu0 %v2856
    %2984 = vmatpush.bf16.msra.mxu0 %v2853
    %2985 = vmatpush.bf16.msra.mxu0 %v2850
    %2986 = vmatpush.bf16.msra.mxu0 %v2847
    %2987 = vmatpush.bf16.msra.mxu0 %v2844
    %2988 = vmatpush.bf16.msra.mxu0 %v2841
    %2989 = vmatmul.bf16.gmra.mxu0 %v2980
    %v2990 = vpop.f32.mrf.mxu0
    %v2991 = vadd.f32 0.0, %v2990
    %v2992 = vpop.f32.mrf.mxu0
    %2993 = vdwg.mxu0
    %2994 = vmatpush.bf16.msra.mxu0 %v2863
    %2995 = vmatpush.bf16.msra.mxu0 %v2860
    %2996 = vmatpush.bf16.msra.mxu0 %v2857
    %2997 = vmatpush.bf16.msra.mxu0 %v2854
    %2998 = vmatpush.bf16.msra.mxu0 %v2851
    %2999 = vmatpush.bf16.msra.mxu0 %v2848
    %3000 = vmatpush.bf16.msra.mxu0 %v2845
    %3001 = vmatpush.bf16.msra.mxu0 %v2842
    %3002 = vmatmul.bf16.gmra.mxu0 %v2980
    %v3003 = vpop.f32.mrf.mxu0
    %v3004 = vadd.f32 0.0, %v3003
    %v3005 = vpop.f32.mrf.mxu0
    %3006 = vdwg.mxu0
    %3007 = vmatpush.bf16.msra.mxu0 %v2864
    %3008 = vmatpush.bf16.msra.mxu0 %v2861
    %3009 = vmatpush.bf16.msra.mxu0 %v2858
    %3010 = vmatpush.bf16.msra.mxu0 %v2855
    %3011 = vmatpush.bf16.msra.mxu0 %v2852
    %3012 = vmatpush.bf16.msra.mxu0 %v2849
    %3013 = vmatpush.bf16.msra.mxu0 %v2846
    %3014 = vmatpush.bf16.msra.mxu0 %v2843
    %3015 = vmatmul.bf16.gmra.mxu0 %v2980
    %v3016 = vpop.f32.mrf.mxu0
    %v3017 = vadd.f32 0.0, %v3016
    %v3018 = vpop.f32.mrf.mxu0
    %3019 = vdwg.mxu0
    %v3020 = vadd.f32 %v2977, %v2991
    %v3021 = vadd.f32 %v2978, %v3004
    %v3022 = vxor.u32 %v3020, 2147483648
    %v3023 = vxor.u32 %v3021, 2147483648
    %v3024 = vmul.f32 %v3022, 1.442695
    %v3025 = vpow.pop %v3024
    %v3026 = vmul.f32 %v3023, 1.442695
    %v3027 = vpow.pop %v3026
    %v3028 = vadd.f32 %v3025, 1.0
    %v3029 = vadd.f32 %v3027, 1.0
    %v3030 = vrcp.pop %v3028
    %v3031 = vmul.f32 %v3028, %v3030
    %v3032 = vsub.f32 1.0, %v3031
    %v3033 = vmul.f32 %v3030, %v3032
    %v3034 = vadd.f32 %v3030, %v3033
    %vm3035 = vweird.f32 %v3028
    %vm3036 = vweird.f32 %v3030
    %vm3037 = vmor %vm3035, %vm3036
    %v3038 = vsel %vm3037, %v3030, %v3034
    %v3039 = vand.u32 2147483647, %v3028
    %vm3040 = vcmp.eq.f32.partialorder %v3039, 8.507059e+37
    %v3041 = vand.u32 %v3028, 2147483648
    %v3042 = vor.u32 1.1754944e-38, %v3041
    %v3043 = vsel %vm3040, %v3042, %v3038
    %v3044 = vmul.f32 1.0, %v3043
    %v3045 = vrcp.pop %v3029
    %v3046 = vmul.f32 %v3029, %v3045
    %v3047 = vsub.f32 1.0, %v3046
    %v3048 = vmul.f32 %v3045, %v3047
    %v3049 = vadd.f32 %v3045, %v3048
    %vm3050 = vweird.f32 %v3029
    %vm3051 = vweird.f32 %v3045
    %vm3052 = vmor %vm3050, %vm3051
    %v3053 = vsel %vm3052, %v3045, %v3049
    %v3054 = vand.u32 2147483647, %v3029
    %vm3055 = vcmp.eq.f32.partialorder %v3054, 8.507059e+37
    %v3056 = vand.u32 %v3029, 2147483648
    %v3057 = vor.u32 1.1754944e-38, %v3056
    %v3058 = vsel %vm3055, %v3057, %v3053
    %v3059 = vmul.f32 1.0, %v3058
    %v3060 = vadd.f32 %v3017, %v2753
    %v3061 = vmul.f32 %v3044, %v3060
    %v3062 = vadd.f32 %v2979, %v3061
    %v3063 = vtanh.pop %v3062
    %v3064 = vsub.f32 1.0, %v3059
    %v3065 = vmul.f32 %v3064, %v3063
    %v3066 = vmul.f32 %v3059, %v2975
    %v3067 = vadd.f32 %v3065, %v3066
    %3068 = vst [vmem:[%s648] sm:$0xff] %v3067
    %v3069 = vld [vmem:[%s652] sm:$0xff]
    %v3070 = vld [vmem:[%s652 + $0x8] sm:$0xff]
    %v3071 = vld [vmem:[%s652 + $0x10] sm:$0xff]
    %v3072 = vpack.c.bf16 %v3067, %v3067
    %3073 = vmatpush.bf16.msra.mxu0 %v2862
    %3074 = vmatpush.bf16.msra.mxu0 %v2859
    %3075 = vmatpush.bf16.msra.mxu0 %v2856
    %3076 = vmatpush.bf16.msra.mxu0 %v2853
    %3077 = vmatpush.bf16.msra.mxu0 %v2850
    %3078 = vmatpush.bf16.msra.mxu0 %v2847
    %3079 = vmatpush.bf16.msra.mxu0 %v2844
    %3080 = vmatpush.bf16.msra.mxu0 %v2841
    %3081 = vmatmul.bf16.gmra.mxu0 %v3072
    %v3082 = vpop.f32.mrf.mxu0
    %v3083 = vadd.f32 0.0, %v3082
    %v3084 = vpop.f32.mrf.mxu0
    %3085 = vdwg.mxu0
    %3086 = vmatpush.bf16.msra.mxu0 %v2863
    %3087 = vmatpush.bf16.msra.mxu0 %v2860
    %3088 = vmatpush.bf16.msra.mxu0 %v2857
    %3089 = vmatpush.bf16.msra.mxu0 %v2854
    %3090 = vmatpush.bf16.msra.mxu0 %v2851
    %3091 = vmatpush.bf16.msra.mxu0 %v2848
    %3092 = vmatpush.bf16.msra.mxu0 %v2845
    %3093 = vmatpush.bf16.msra.mxu0 %v2842
    %3094 = vmatmul.bf16.gmra.mxu0 %v3072
    %v3095 = vpop.f32.mrf.mxu0
    %v3096 = vadd.f32 0.0, %v3095
    %v3097 = vpop.f32.mrf.mxu0
    %3098 = vdwg.mxu0
    %3099 = vmatpush.bf16.msra.mxu0 %v2864
    %3100 = vmatpush.bf16.msra.mxu0 %v2861
    %3101 = vmatpush.bf16.msra.mxu0 %v2858
    %3102 = vmatpush.bf16.msra.mxu0 %v2855
    %3103 = vmatpush.bf16.msra.mxu0 %v2852
    %3104 = vmatpush.bf16.msra.mxu0 %v2849
    %3105 = vmatpush.bf16.msra.mxu0 %v2846
    %3106 = vmatpush.bf16.msra.mxu0 %v2843
    %3107 = vmatmul.bf16.gmra.mxu0 %v3072
    %v3108 = vpop.f32.mrf.mxu0
    %v3109 = vadd.f32 0.0, %v3108
    %v3110 = vpop.f32.mrf.mxu0
    %3111 = vdwg.mxu0
    %v3112 = vadd.f32 %v3069, %v3083
    %v3113 = vadd.f32 %v3070, %v3096
    %v3114 = vxor.u32 %v3112, 2147483648
    %v3115 = vxor.u32 %v3113, 2147483648
    %v3116 = vmul.f32 %v3114, 1.442695
    %v3117 = vpow.pop %v3116
    %v3118 = vmul.f32 %v3115, 1.442695
    %v3119 = vpow.pop %v3118
    %v3120 = vadd.f32 %v3117, 1.0
    %v3121 = vadd.f32 %v3119, 1.0
    %v3122 = vrcp.pop %v3120
    %v3123 = vmul.f32 %v3120, %v3122
    %v3124 = vsub.f32 1.0, %v3123
    %v3125 = vmul.f32 %v3122, %v3124
    %v3126 = vadd.f32 %v3122, %v3125
    %vm3127 = vweird.f32 %v3120
    %vm3128 = vweird.f32 %v3122
    %vm3129 = vmor %vm3127, %vm3128
    %v3130 = vsel %vm3129, %v3122, %v3126
    %v3131 = vand.u32 2147483647, %v3120
    %vm3132 = vcmp.eq.f32.partialorder %v3131, 8.507059e+37
    %v3133 = vand.u32 %v3120, 2147483648
    %v3134 = vor.u32 1.1754944e-38, %v3133
    %v3135 = vsel %vm3132, %v3134, %v3130
    %v3136 = vmul.f32 1.0, %v3135
    %v3137 = vrcp.pop %v3121
    %v3138 = vmul.f32 %v3121, %v3137
    %v3139 = vsub.f32 1.0, %v3138
    %v3140 = vmul.f32 %v3137, %v3139
    %v3141 = vadd.f32 %v3137, %v3140
    %vm3142 = vweird.f32 %v3121
    %vm3143 = vweird.f32 %v3137
    %vm3144 = vmor %vm3142, %vm3143
    %v3145 = vsel %vm3144, %v3137, %v3141
    %v3146 = vand.u32 2147483647, %v3121
    %vm3147 = vcmp.eq.f32.partialorder %v3146, 8.507059e+37
    %v3148 = vand.u32 %v3121, 2147483648
    %v3149 = vor.u32 1.1754944e-38, %v3148
    %v3150 = vsel %vm3147, %v3149, %v3145
    %v3151 = vmul.f32 1.0, %v3150
    %v3152 = vadd.f32 %v3109, %v2753
    %v3153 = vmul.f32 %v3136, %v3152
    %v3154 = vadd.f32 %v3071, %v3153
    %v3155 = vtanh.pop %v3154
    %v3156 = vsub.f32 1.0, %v3151
    %v3157 = vmul.f32 %v3156, %v3155
    %v3158 = vmul.f32 %v3151, %v3067
    %v3159 = vadd.f32 %v3157, %v3158
    %3160 = vst [vmem:[%s744] sm:$0xff] %v3159
    %v3161 = vld [vmem:[%s748] sm:$0xff]
    %v3162 = vld [vmem:[%s748 + $0x8] sm:$0xff]
    %v3163 = vld [vmem:[%s748 + $0x10] sm:$0xff]
    %v3164 = vpack.c.bf16 %v3159, %v3159
    %3165 = vmatpush.bf16.msra.mxu0 %v2862
    %3166 = vmatpush.bf16.msra.mxu0 %v2859
    %3167 = vmatpush.bf16.msra.mxu0 %v2856
    %3168 = vmatpush.bf16.msra.mxu0 %v2853
    %3169 = vmatpush.bf16.msra.mxu0 %v2850
    %3170 = vmatpush.bf16.msra.mxu0 %v2847
    %3171 = vmatpush.bf16.msra.mxu0 %v2844
    %3172 = vmatpush.bf16.msra.mxu0 %v2841
    %3173 = vmatmul.bf16.gmra.mxu0 %v3164
    %v3174 = vpop.f32.mrf.mxu0
    %v3175 = vadd.f32 0.0, %v3174
    %v3176 = vpop.f32.mrf.mxu0
    %3177 = vdwg.mxu0
    %3178 = vmatpush.bf16.msra.mxu0 %v2863
    %3179 = vmatpush.bf16.msra.mxu0 %v2860
    %3180 = vmatpush.bf16.msra.mxu0 %v2857
    %3181 = vmatpush.bf16.msra.mxu0 %v2854
    %3182 = vmatpush.bf16.msra.mxu0 %v2851
    %3183 = vmatpush.bf16.msra.mxu0 %v2848
    %3184 = vmatpush.bf16.msra.mxu0 %v2845
    %3185 = vmatpush.bf16.msra.mxu0 %v2842
    %3186 = vmatmul.bf16.gmra.mxu0 %v3164
    %v3187 = vpop.f32.mrf.mxu0
    %v3188 = vadd.f32 0.0, %v3187
    %v3189 = vpop.f32.mrf.mxu0
    %3190 = vdwg.mxu0
    %3191 = vmatpush.bf16.msra.mxu0 %v2864
    %3192 = vmatpush.bf16.msra.mxu0 %v2861
    %3193 = vmatpush.bf16.msra.mxu0 %v2858
    %3194 = vmatpush.bf16.msra.mxu0 %v2855
    %3195 = vmatpush.bf16.msra.mxu0 %v2852
    %3196 = vmatpush.bf16.msra.mxu0 %v2849
    %3197 = vmatpush.bf16.msra.mxu0 %v2846
    %3198 = vmatpush.bf16.msra.mxu0 %v2843
    %3199 = vmatmul.bf16.gmra.mxu0 %v3164
    %v3200 = vpop.f32.mrf.mxu0
    %v3201 = vadd.f32 0.0, %v3200
    %v3202 = vpop.f32.mrf.mxu0
    %3203 = vdwg.mxu0
    %v3204 = vadd.f32 %v3161, %v3175
    %v3205 = vadd.f32 %v3162, %v3188
    %v3206 = vxor.u32 %v3204, 2147483648
    %v3207 = vxor.u32 %v3205, 2147483648
    %v3208 = vmul.f32 %v3206, 1.442695
    %v3209 = vpow.pop %v3208
    %v3210 = vmul.f32 %v3207, 1.442695
    %v3211 = vpow.pop %v3210
    %v3212 = vadd.f32 %v3209, 1.0
    %v3213 = vadd.f32 %v3211, 1.0
    %v3214 = vrcp.pop %v3212
    %v3215 = vmul.f32 %v3212, %v3214
    %v3216 = vsub.f32 1.0, %v3215
    %v3217 = vmul.f32 %v3214, %v3216
    %v3218 = vadd.f32 %v3214, %v3217
    %vm3219 = vweird.f32 %v3212
    %vm3220 = vweird.f32 %v3214
    %vm3221 = vmor %vm3219, %vm3220
    %v3222 = vsel %vm3221, %v3214, %v3218
    %v3223 = vand.u32 2147483647, %v3212
    %vm3224 = vcmp.eq.f32.partialorder %v3223, 8.507059e+37
    %v3225 = vand.u32 %v3212, 2147483648
    %v3226 = vor.u32 1.1754944e-38, %v3225
    %v3227 = vsel %vm3224, %v3226, %v3222
    %v3228 = vmul.f32 1.0, %v3227
    %v3229 = vrcp.pop %v3213
    %v3230 = vmul.f32 %v3213, %v3229
    %v3231 = vsub.f32 1.0, %v3230
    %v3232 = vmul.f32 %v3229, %v3231
    %v3233 = vadd.f32 %v3229, %v3232
    %vm3234 = vweird.f32 %v3213
    %vm3235 = vweird.f32 %v3229
    %vm3236 = vmor %vm3234, %vm3235
    %v3237 = vsel %vm3236, %v3229, %v3233
    %v3238 = vand.u32 2147483647, %v3213
    %vm3239 = vcmp.eq.f32.partialorder %v3238, 8.507059e+37
    %v3240 = vand.u32 %v3213, 2147483648
    %v3241 = vor.u32 1.1754944e-38, %v3240
    %v3242 = vsel %vm3239, %v3241, %v3237
    %v3243 = vmul.f32 1.0, %v3242
    %v3244 = vadd.f32 %v3201, %v2753
    %v3245 = vmul.f32 %v3228, %v3244
    %v3246 = vadd.f32 %v3163, %v3245
    %v3247 = vtanh.pop %v3246
    %v3248 = vsub.f32 1.0, %v3243
    %v3249 = vmul.f32 %v3248, %v3247
    %v3250 = vmul.f32 %v3243, %v3159
    %v3251 = vadd.f32 %v3249, %v3250
    %3252 = vst [vmem:[%s840] sm:$0xff] %v3251
    %v3253 = vld [vmem:[%s844] sm:$0xff]
    %v3254 = vld [vmem:[%s844 + $0x8] sm:$0xff]
    %v3255 = vld [vmem:[%s844 + $0x10] sm:$0xff]
    %v3256 = vpack.c.bf16 %v3251, %v3251
    %3257 = vmatpush.bf16.msra.mxu0 %v2862
    %3258 = vmatpush.bf16.msra.mxu0 %v2859
    %3259 = vmatpush.bf16.msra.mxu0 %v2856
    %3260 = vmatpush.bf16.msra.mxu0 %v2853
    %3261 = vmatpush.bf16.msra.mxu0 %v2850
    %3262 = vmatpush.bf16.msra.mxu0 %v2847
    %3263 = vmatpush.bf16.msra.mxu0 %v2844
    %3264 = vmatpush.bf16.msra.mxu0 %v2841
    %3265 = vmatmul.bf16.gmra.mxu0 %v3256
    %v3266 = vpop.f32.mrf.mxu0
    %v3267 = vadd.f32 0.0, %v3266
    %v3268 = vpop.f32.mrf.mxu0
    %3269 = vdwg.mxu0
    %3270 = vmatpush.bf16.msra.mxu0 %v2863
    %3271 = vmatpush.bf16.msra.mxu0 %v2860
    %3272 = vmatpush.bf16.msra.mxu0 %v2857
    %3273 = vmatpush.bf16.msra.mxu0 %v2854
    %3274 = vmatpush.bf16.msra.mxu0 %v2851
    %3275 = vmatpush.bf16.msra.mxu0 %v2848
    %3276 = vmatpush.bf16.msra.mxu0 %v2845
    %3277 = vmatpush.bf16.msra.mxu0 %v2842
    %3278 = vmatmul.bf16.gmra.mxu0 %v3256
    %v3279 = vpop.f32.mrf.mxu0
    %v3280 = vadd.f32 0.0, %v3279
    %v3281 = vpop.f32.mrf.mxu0
    %3282 = vdwg.mxu0
    %3283 = vmatpush.bf16.msra.mxu0 %v2864
    %3284 = vmatpush.bf16.msra.mxu0 %v2861
    %3285 = vmatpush.bf16.msra.mxu0 %v2858
    %3286 = vmatpush.bf16.msra.mxu0 %v2855
    %3287 = vmatpush.bf16.msra.mxu0 %v2852
    %3288 = vmatpush.bf16.msra.mxu0 %v2849
    %3289 = vmatpush.bf16.msra.mxu0 %v2846
    %3290 = vmatpush.bf16.msra.mxu0 %v2843
    %3291 = vmatmul.bf16.gmra.mxu0 %v3256
    %v3292 = vpop.f32.mrf.mxu0
    %v3293 = vadd.f32 0.0, %v3292
    %v3294 = vpop.f32.mrf.mxu0
    %3295 = vdwg.mxu0
    %v3296 = vadd.f32 %v3253, %v3267
    %v3297 = vadd.f32 %v3254, %v3280
    %v3298 = vxor.u32 %v3296, 2147483648
    %v3299 = vxor.u32 %v3297, 2147483648
    %v3300 = vmul.f32 %v3298, 1.442695
    %v3301 = vpow.pop %v3300
    %v3302 = vmul.f32 %v3299, 1.442695
    %v3303 = vpow.pop %v3302
    %v3304 = vadd.f32 %v3301, 1.0
    %v3305 = vadd.f32 %v3303, 1.0
    %v3306 = vrcp.pop %v3304
    %v3307 = vmul.f32 %v3304, %v3306
    %v3308 = vsub.f32 1.0, %v3307
    %v3309 = vmul.f32 %v3306, %v3308
    %v3310 = vadd.f32 %v3306, %v3309
    %vm3311 = vweird.f32 %v3304
    %vm3312 = vweird.f32 %v3306
    %vm3313 = vmor %vm3311, %vm3312
    %v3314 = vsel %vm3313, %v3306, %v3310
    %v3315 = vand.u32 2147483647, %v3304
    %vm3316 = vcmp.eq.f32.partialorder %v3315, 8.507059e+37
    %v3317 = vand.u32 %v3304, 2147483648
    %v3318 = vor.u32 1.1754944e-38, %v3317
    %v3319 = vsel %vm3316, %v3318, %v3314
    %v3320 = vmul.f32 1.0, %v3319
    %v3321 = vrcp.pop %v3305
    %v3322 = vmul.f32 %v3305, %v3321
    %v3323 = vsub.f32 1.0, %v3322
    %v3324 = vmul.f32 %v3321, %v3323
    %v3325 = vadd.f32 %v3321, %v3324
    %vm3326 = vweird.f32 %v3305
    %vm3327 = vweird.f32 %v3321
    %vm3328 = vmor %vm3326, %vm3327
    %v3329 = vsel %vm3328, %v3321, %v3325
    %v3330 = vand.u32 2147483647, %v3305
    %vm3331 = vcmp.eq.f32.partialorder %v3330, 8.507059e+37
    %v3332 = vand.u32 %v3305, 2147483648
    %v3333 = vor.u32 1.1754944e-38, %v3332
    %v3334 = vsel %vm3331, %v3333, %v3329
    %v3335 = vmul.f32 1.0, %v3334
    %v3336 = vadd.f32 %v3293, %v2753
    %v3337 = vmul.f32 %v3320, %v3336
    %v3338 = vadd.f32 %v3255, %v3337
    %v3339 = vtanh.pop %v3338
    %v3340 = vsub.f32 1.0, %v3335
    %v3341 = vmul.f32 %v3340, %v3339
    %v3342 = vmul.f32 %v3335, %v3251
    %v3343 = vadd.f32 %v3341, %v3342
    %3344 = vst [vmem:[%s936] sm:$0xff] %v3343
    %v3345 = vld [vmem:[%s940] sm:$0xff]
    %v3346 = vld [vmem:[%s940 + $0x8] sm:$0xff]
    %v3347 = vld [vmem:[%s940 + $0x10] sm:$0xff]
    %v3348 = vpack.c.bf16 %v3343, %v3343
    %3349 = vmatpush.bf16.msra.mxu0 %v2862
    %3350 = vmatpush.bf16.msra.mxu0 %v2859
    %3351 = vmatpush.bf16.msra.mxu0 %v2856
    %3352 = vmatpush.bf16.msra.mxu0 %v2853
    %3353 = vmatpush.bf16.msra.mxu0 %v2850
    %3354 = vmatpush.bf16.msra.mxu0 %v2847
    %3355 = vmatpush.bf16.msra.mxu0 %v2844
    %3356 = vmatpush.bf16.msra.mxu0 %v2841
    %3357 = vmatmul.bf16.gmra.mxu0 %v3348
    %v3358 = vpop.f32.mrf.mxu0
    %v3359 = vadd.f32 0.0, %v3358
    %v3360 = vpop.f32.mrf.mxu0
    %3361 = vdwg.mxu0
    %3362 = vmatpush.bf16.msra.mxu0 %v2863
    %3363 = vmatpush.bf16.msra.mxu0 %v2860
    %3364 = vmatpush.bf16.msra.mxu0 %v2857
    %3365 = vmatpush.bf16.msra.mxu0 %v2854
    %3366 = vmatpush.bf16.msra.mxu0 %v2851
    %3367 = vmatpush.bf16.msra.mxu0 %v2848
    %3368 = vmatpush.bf16.msra.mxu0 %v2845
    %3369 = vmatpush.bf16.msra.mxu0 %v2842
    %3370 = vmatmul.bf16.gmra.mxu0 %v3348
    %v3371 = vpop.f32.mrf.mxu0
    %v3372 = vadd.f32 0.0, %v3371
    %v3373 = vpop.f32.mrf.mxu0
    %3374 = vdwg.mxu0
    %3375 = vmatpush.bf16.msra.mxu0 %v2864
    %3376 = vmatpush.bf16.msra.mxu0 %v2861
    %3377 = vmatpush.bf16.msra.mxu0 %v2858
    %3378 = vmatpush.bf16.msra.mxu0 %v2855
    %3379 = vmatpush.bf16.msra.mxu0 %v2852
    %3380 = vmatpush.bf16.msra.mxu0 %v2849
    %3381 = vmatpush.bf16.msra.mxu0 %v2846
    %3382 = vmatpush.bf16.msra.mxu0 %v2843
    %3383 = vmatmul.bf16.gmra.mxu0 %v3348
    %v3384 = vpop.f32.mrf.mxu0
    %v3385 = vadd.f32 0.0, %v3384
    %v3386 = vpop.f32.mrf.mxu0
    %3387 = vdwg.mxu0
    %v3388 = vadd.f32 %v3345, %v3359
    %v3389 = vadd.f32 %v3346, %v3372
    %v3390 = vxor.u32 %v3388, 2147483648
    %v3391 = vxor.u32 %v3389, 2147483648
    %v3392 = vmul.f32 %v3390, 1.442695
    %v3393 = vpow.pop %v3392
    %v3394 = vmul.f32 %v3391, 1.442695
    %v3395 = vpow.pop %v3394
    %v3396 = vadd.f32 %v3393, 1.0
    %v3397 = vadd.f32 %v3395, 1.0
    %v3398 = vrcp.pop %v3396
    %v3399 = vmul.f32 %v3396, %v3398
    %v3400 = vsub.f32 1.0, %v3399
    %v3401 = vmul.f32 %v3398, %v3400
    %v3402 = vadd.f32 %v3398, %v3401
    %vm3403 = vweird.f32 %v3396
    %vm3404 = vweird.f32 %v3398
    %vm3405 = vmor %vm3403, %vm3404
    %v3406 = vsel %vm3405, %v3398, %v3402
    %v3407 = vand.u32 2147483647, %v3396
    %vm3408 = vcmp.eq.f32.partialorder %v3407, 8.507059e+37
    %v3409 = vand.u32 %v3396, 2147483648
    %v3410 = vor.u32 1.1754944e-38, %v3409
    %v3411 = vsel %vm3408, %v3410, %v3406
    %v3412 = vmul.f32 1.0, %v3411
    %v3413 = vrcp.pop %v3397
    %v3414 = vmul.f32 %v3397, %v3413
    %v3415 = vsub.f32 1.0, %v3414
    %v3416 = vmul.f32 %v3413, %v3415
    %v3417 = vadd.f32 %v3413, %v3416
    %vm3418 = vweird.f32 %v3397
    %vm3419 = vweird.f32 %v3413
    %vm3420 = vmor %vm3418, %vm3419
    %v3421 = vsel %vm3420, %v3413, %v3417
    %v3422 = vand.u32 2147483647, %v3397
    %vm3423 = vcmp.eq.f32.partialorder %v3422, 8.507059e+37
    %v3424 = vand.u32 %v3397, 2147483648
    %v3425 = vor.u32 1.1754944e-38, %v3424
    %v3426 = vsel %vm3423, %v3425, %v3421
    %v3427 = vmul.f32 1.0, %v3426
    %v3428 = vadd.f32 %v3385, %v2753
    %v3429 = vmul.f32 %v3412, %v3428
    %v3430 = vadd.f32 %v3347, %v3429
    %v3431 = vtanh.pop %v3430
    %v3432 = vsub.f32 1.0, %v3427
    %v3433 = vmul.f32 %v3432, %v3431
    %v3434 = vmul.f32 %v3427, %v3343
    %v3435 = vadd.f32 %v3433, %v3434
    %3436 = vst [vmem:[%s1032] sm:$0xff] %v3435
    %v3437 = vld [vmem:[%s1036] sm:$0xff]
    %v3438 = vld [vmem:[%s1036 + $0x8] sm:$0xff]
    %v3439 = vld [vmem:[%s1036 + $0x10] sm:$0xff]
    %v3440 = vpack.c.bf16 %v3435, %v3435
    %3441 = vmatpush.bf16.msra.mxu0 %v2862
    %3442 = vmatpush.bf16.msra.mxu0 %v2859
    %3443 = vmatpush.bf16.msra.mxu0 %v2856
    %3444 = vmatpush.bf16.msra.mxu0 %v2853
    %3445 = vmatpush.bf16.msra.mxu0 %v2850
    %3446 = vmatpush.bf16.msra.mxu0 %v2847
    %3447 = vmatpush.bf16.msra.mxu0 %v2844
    %3448 = vmatpush.bf16.msra.mxu0 %v2841
    %3449 = vmatmul.bf16.gmra.mxu0 %v3440
    %v3450 = vpop.f32.mrf.mxu0
    %v3451 = vadd.f32 0.0, %v3450
    %v3452 = vpop.f32.mrf.mxu0
    %3453 = vdwg.mxu0
    %3454 = vmatpush.bf16.msra.mxu0 %v2863
    %3455 = vmatpush.bf16.msra.mxu0 %v2860
    %3456 = vmatpush.bf16.msra.mxu0 %v2857
    %3457 = vmatpush.bf16.msra.mxu0 %v2854
    %3458 = vmatpush.bf16.msra.mxu0 %v2851
    %3459 = vmatpush.bf16.msra.mxu0 %v2848
    %3460 = vmatpush.bf16.msra.mxu0 %v2845
    %3461 = vmatpush.bf16.msra.mxu0 %v2842
    %3462 = vmatmul.bf16.gmra.mxu0 %v3440
    %v3463 = vpop.f32.mrf.mxu0
    %v3464 = vadd.f32 0.0, %v3463
    %v3465 = vpop.f32.mrf.mxu0
    %3466 = vdwg.mxu0
    %3467 = vmatpush.bf16.msra.mxu0 %v2864
    %3468 = vmatpush.bf16.msra.mxu0 %v2861
    %3469 = vmatpush.bf16.msra.mxu0 %v2858
    %3470 = vmatpush.bf16.msra.mxu0 %v2855
    %3471 = vmatpush.bf16.msra.mxu0 %v2852
    %3472 = vmatpush.bf16.msra.mxu0 %v2849
    %3473 = vmatpush.bf16.msra.mxu0 %v2846
    %3474 = vmatpush.bf16.msra.mxu0 %v2843
    %3475 = vmatmul.bf16.gmra.mxu0 %v3440
    %v3476 = vpop.f32.mrf.mxu0
    %v3477 = vadd.f32 0.0, %v3476
    %v3478 = vpop.f32.mrf.mxu0
    %3479 = vdwg.mxu0
    %v3480 = vadd.f32 %v3437, %v3451
    %v3481 = vadd.f32 %v3438, %v3464
    %v3482 = vxor.u32 %v3480, 2147483648
    %v3483 = vxor.u32 %v3481, 2147483648
    %v3484 = vmul.f32 %v3482, 1.442695
    %v3485 = vpow.pop %v3484
    %v3486 = vmul.f32 %v3483, 1.442695
    %v3487 = vpow.pop %v3486
    %v3488 = vadd.f32 %v3485, 1.0
    %v3489 = vadd.f32 %v3487, 1.0
    %v3490 = vrcp.pop %v3488
    %v3491 = vmul.f32 %v3488, %v3490
    %v3492 = vsub.f32 1.0, %v3491
    %v3493 = vmul.f32 %v3490, %v3492
    %v3494 = vadd.f32 %v3490, %v3493
    %vm3495 = vweird.f32 %v3488
    %vm3496 = vweird.f32 %v3490
    %vm3497 = vmor %vm3495, %vm3496
    %v3498 = vsel %vm3497, %v3490, %v3494
    %v3499 = vand.u32 2147483647, %v3488
    %vm3500 = vcmp.eq.f32.partialorder %v3499, 8.507059e+37
    %v3501 = vand.u32 %v3488, 2147483648
    %v3502 = vor.u32 1.1754944e-38, %v3501
    %v3503 = vsel %vm3500, %v3502, %v3498
    %v3504 = vmul.f32 1.0, %v3503
    %v3505 = vrcp.pop %v3489
    %v3506 = vmul.f32 %v3489, %v3505
    %v3507 = vsub.f32 1.0, %v3506
    %v3508 = vmul.f32 %v3505, %v3507
    %v3509 = vadd.f32 %v3505, %v3508
    %vm3510 = vweird.f32 %v3489
    %vm3511 = vweird.f32 %v3505
    %vm3512 = vmor %vm3510, %vm3511
    %v3513 = vsel %vm3512, %v3505, %v3509
    %v3514 = vand.u32 2147483647, %v3489
    %vm3515 = vcmp.eq.f32.partialorder %v3514, 8.507059e+37
    %v3516 = vand.u32 %v3489, 2147483648
    %v3517 = vor.u32 1.1754944e-38, %v3516
    %v3518 = vsel %vm3515, %v3517, %v3513
    %v3519 = vmul.f32 1.0, %v3518
    %v3520 = vadd.f32 %v3477, %v2753
    %v3521 = vmul.f32 %v3504, %v3520
    %v3522 = vadd.f32 %v3439, %v3521
    %v3523 = vtanh.pop %v3522
    %v3524 = vsub.f32 1.0, %v3519
    %v3525 = vmul.f32 %v3524, %v3523
    %v3526 = vmul.f32 %v3519, %v3435
    %v3527 = vadd.f32 %v3525, %v3526
    %3528 = vst [vmem:[%s1128] sm:$0xff] %v3527
    %v3529 = vld [vmem:[%s1132] sm:$0xff]
    %v3530 = vld [vmem:[%s1132 + $0x8] sm:$0xff]
    %v3531 = vld [vmem:[%s1132 + $0x10] sm:$0xff]
    %v3532 = vpack.c.bf16 %v3527, %v3527
    %3533 = vmatpush.bf16.msra.mxu0 %v2862
    %3534 = vmatpush.bf16.msra.mxu0 %v2859
    %3535 = vmatpush.bf16.msra.mxu0 %v2856
    %3536 = vmatpush.bf16.msra.mxu0 %v2853
    %3537 = vmatpush.bf16.msra.mxu0 %v2850
    %3538 = vmatpush.bf16.msra.mxu0 %v2847
    %3539 = vmatpush.bf16.msra.mxu0 %v2844
    %3540 = vmatpush.bf16.msra.mxu0 %v2841
    %3541 = vmatmul.bf16.gmra.mxu0 %v3532
    %v3542 = vpop.f32.mrf.mxu0
    %v3543 = vadd.f32 0.0, %v3542
    %v3544 = vpop.f32.mrf.mxu0
    %3545 = vdwg.mxu0
    %3546 = vmatpush.bf16.msra.mxu0 %v2863
    %3547 = vmatpush.bf16.msra.mxu0 %v2860
    %3548 = vmatpush.bf16.msra.mxu0 %v2857
    %3549 = vmatpush.bf16.msra.mxu0 %v2854
    %3550 = vmatpush.bf16.msra.mxu0 %v2851
    %3551 = vmatpush.bf16.msra.mxu0 %v2848
    %3552 = vmatpush.bf16.msra.mxu0 %v2845
    %3553 = vmatpush.bf16.msra.mxu0 %v2842
    %3554 = vmatmul.bf16.gmra.mxu0 %v3532
    %v3555 = vpop.f32.mrf.mxu0
    %v3556 = vadd.f32 0.0, %v3555
    %v3557 = vpop.f32.mrf.mxu0
    %3558 = vdwg.mxu0
    %3559 = vmatpush.bf16.msra.mxu0 %v2864
    %3560 = vmatpush.bf16.msra.mxu0 %v2861
    %3561 = vmatpush.bf16.msra.mxu0 %v2858
    %3562 = vmatpush.bf16.msra.mxu0 %v2855
    %3563 = vmatpush.bf16.msra.mxu0 %v2852
    %3564 = vmatpush.bf16.msra.mxu0 %v2849
    %3565 = vmatpush.bf16.msra.mxu0 %v2846
    %3566 = vmatpush.bf16.msra.mxu0 %v2843
    %3567 = vmatmul.bf16.gmra.mxu0 %v3532
    %v3568 = vpop.f32.mrf.mxu0
    %v3569 = vadd.f32 0.0, %v3568
    %v3570 = vpop.f32.mrf.mxu0
    %3571 = vdwg.mxu0
    %v3572 = vadd.f32 %v3529, %v3543
    %v3573 = vadd.f32 %v3530, %v3556
    %v3574 = vxor.u32 %v3572, 2147483648
    %v3575 = vxor.u32 %v3573, 2147483648
    %v3576 = vmul.f32 %v3574, 1.442695
    %v3577 = vpow.pop %v3576
    %v3578 = vmul.f32 %v3575, 1.442695
    %v3579 = vpow.pop %v3578
    %v3580 = vadd.f32 %v3577, 1.0
    %v3581 = vadd.f32 %v3579, 1.0
    %v3582 = vrcp.pop %v3580
    %v3583 = vmul.f32 %v3580, %v3582
    %v3584 = vsub.f32 1.0, %v3583
    %v3585 = vmul.f32 %v3582, %v3584
    %v3586 = vadd.f32 %v3582, %v3585
    %vm3587 = vweird.f32 %v3580
    %vm3588 = vweird.f32 %v3582
    %vm3589 = vmor %vm3587, %vm3588
    %v3590 = vsel %vm3589, %v3582, %v3586
    %v3591 = vand.u32 2147483647, %v3580
    %vm3592 = vcmp.eq.f32.partialorder %v3591, 8.507059e+37
    %v3593 = vand.u32 %v3580, 2147483648
    %v3594 = vor.u32 1.1754944e-38, %v3593
    %v3595 = vsel %vm3592, %v3594, %v3590
    %v3596 = vmul.f32 1.0, %v3595
    %v3597 = vrcp.pop %v3581
    %v3598 = vmul.f32 %v3581, %v3597
    %v3599 = vsub.f32 1.0, %v3598
    %v3600 = vmul.f32 %v3597, %v3599
    %v3601 = vadd.f32 %v3597, %v3600
    %vm3602 = vweird.f32 %v3581
    %vm3603 = vweird.f32 %v3597
    %vm3604 = vmor %vm3602, %vm3603
    %v3605 = vsel %vm3604, %v3597, %v3601
    %v3606 = vand.u32 2147483647, %v3581
    %vm3607 = vcmp.eq.f32.partialorder %v3606, 8.507059e+37
    %v3608 = vand.u32 %v3581, 2147483648
    %v3609 = vor.u32 1.1754944e-38, %v3608
    %v3610 = vsel %vm3607, %v3609, %v3605
    %v3611 = vmul.f32 1.0, %v3610
    %v3612 = vadd.f32 %v3569, %v2753
    %v3613 = vmul.f32 %v3596, %v3612
    %v3614 = vadd.f32 %v3531, %v3613
    %v3615 = vtanh.pop %v3614
    %v3616 = vsub.f32 1.0, %v3611
    %v3617 = vmul.f32 %v3616, %v3615
    %v3618 = vmul.f32 %v3611, %v3527
    %v3619 = vadd.f32 %v3617, %v3618
    %3620 = vst [vmem:[%s1224] sm:$0xff] %v3619
    %3621 = vst [vmem:[%s2755] sm:$0xff] %v3619
    %v3622 = vld [vmem:[#allocation3] sm:$0xff]
    %v3623 = vld [vmem:[#allocation3 + $0x8] sm:$0xff]
    %v3624 = vld [vmem:[#allocation3 + $0x10] sm:$0xff]
    %v3625 = vld [vmem:[#allocation3 + $0x18] sm:$0xff]
    %v3626 = vld [vmem:[#allocation3 + $0x20] sm:$0xff]
    %v3627 = vld [vmem:[#allocation3 + $0x28] sm:$0xff]
    %v3628 = vld [vmem:[#allocation3 + $0x30] sm:$0xff]
    %v3629 = vld [vmem:[#allocation3 + $0x38] sm:$0xff]
    %v3630 = vpack.c.bf16 %v3623, %v3622
    %v3631 = vpack.c.bf16 %v3625, %v3624
    %v3632 = vpack.c.bf16 %v3627, %v3626
    %v3633 = vpack.c.bf16 %v3629, %v3628
    %s3634 = scalar_lea.vmem [#allocation5], 384
    %v3635 = vld [vmem:[%s3634] sm:$0xff]
    %v3636 = vld [vmem:[%s3634 + $0x8] sm:$0xf]
    %v3637 = vld [vmem:[%s3634 + $0xc] sm:$0xff]
    %v3638 = vld [vmem:[%s3634 + $0x14] sm:$0xf]
    %v3639 = vld [vmem:[%s3634 + $0x18] sm:$0xff]
    %v3640 = vld [vmem:[%s3634 + $0x20] sm:$0xf]
    %v3641 = vld [vmem:[%s3634 + $0x24] sm:$0xff]
    %v3642 = vld [vmem:[%s3634 + $0x2c] sm:$0xf]
    %v3643 = vld [vmem:[%s3634 + $0x30] sm:$0xff]
    %v3644 = vld [vmem:[%s3634 + $0x38] sm:$0xf]
    %v3645 = vld [vmem:[%s3634 + $0x3c] sm:$0xff]
    %v3646 = vld [vmem:[%s3634 + $0x44] sm:$0xf]
    %v3647 = vld [vmem:[%s3634 + $0x48] sm:$0xff]
    %v3648 = vld [vmem:[%s3634 + $0x50] sm:$0xf]
    %v3649 = vld [vmem:[%s3634 + $0x54] sm:$0xff]
    %v3650 = vld [vmem:[%s3634 + $0x5c] sm:$0xf]
    %v3651 = vld [vmem:[%s3634 + $0x60] sm:$0xff]
    %v3652 = vld [vmem:[%s3634 + $0x68] sm:$0xf]
    %v3653 = vld [vmem:[%s3634 + $0x6c] sm:$0xff]
    %v3654 = vld [vmem:[%s3634 + $0x74] sm:$0xf]
    %v3655 = vld [vmem:[%s3634 + $0x78] sm:$0xff]
    %v3656 = vld [vmem:[%s3634 + $0x80] sm:$0xf]
    %v3657 = vld [vmem:[%s3634 + $0x84] sm:$0xff]
    %v3658 = vld [vmem:[%s3634 + $0x8c] sm:$0xf]
    %v3659 = vld [vmem:[%s3634 + $0x90] sm:$0xff]
    %v3660 = vld [vmem:[%s3634 + $0x98] sm:$0xf]
    %v3661 = vld [vmem:[%s3634 + $0x9c] sm:$0xff]
    %v3662 = vld [vmem:[%s3634 + $0xa4] sm:$0xf]
    %v3663 = vld [vmem:[%s3634 + $0xa8] sm:$0xff]
    %v3664 = vld [vmem:[%s3634 + $0xb0] sm:$0xf]
    %v3665 = vld [vmem:[%s3634 + $0xb4] sm:$0xff]
    %v3666 = vld [vmem:[%s3634 + $0xbc] sm:$0xf]
    %s3667 = scalar_lea.vmem %s4, 9
    %v3668 = vld [vmem:[%s3667] sm:$0x7]
    %v3670 = vperm.slane %v3668, 0
    %v3671 = vperm.slane %v3668, 1
    %v3672 = vperm.slane %v3668, 2
    %v3708 = vunpack.c.l.b16 %v3635
    %v3709 = vunpack.c.h.b16 %v3635
    %v3710 = vunpack.c.l.b16 %v3636
    %v3711 = vunpack.c.l.b16 %v3637
    %v3712 = vunpack.c.h.b16 %v3637
    %v3713 = vunpack.c.l.b16 %v3638
    %v3714 = vunpack.c.l.b16 %v3639
    %v3715 = vunpack.c.h.b16 %v3639
    %v3716 = vunpack.c.l.b16 %v3640
    %v3717 = vunpack.c.l.b16 %v3641
    %v3718 = vunpack.c.h.b16 %v3641
    %v3719 = vunpack.c.l.b16 %v3642
    %v3720 = vunpack.c.l.b16 %v3643
    %v3721 = vunpack.c.h.b16 %v3643
    %v3722 = vunpack.c.l.b16 %v3644
    %v3723 = vunpack.c.l.b16 %v3645
    %v3724 = vunpack.c.h.b16 %v3645
    %v3725 = vunpack.c.l.b16 %v3646
    %v3726 = vunpack.c.l.b16 %v3647
    %v3727 = vunpack.c.h.b16 %v3647
    %v3728 = vunpack.c.l.b16 %v3648
    %v3729 = vunpack.c.l.b16 %v3649
    %v3730 = vunpack.c.h.b16 %v3649
    %v3731 = vunpack.c.l.b16 %v3650
    %v3732 = vunpack.c.l.b16 %v3651
    %v3733 = vunpack.c.h.b16 %v3651
    %v3734 = vunpack.c.l.b16 %v3652
    %v3735 = vunpack.c.l.b16 %v3653
    %v3736 = vunpack.c.h.b16 %v3653
    %v3737 = vunpack.c.l.b16 %v3654
    %v3738 = vunpack.c.l.b16 %v3655
    %v3739 = vunpack.c.h.b16 %v3655
    %v3740 = vunpack.c.l.b16 %v3656
    %v3741 = vunpack.c.l.b16 %v3657
    %v3742 = vunpack.c.h.b16 %v3657
    %v3743 = vunpack.c.l.b16 %v3658
    %v3744 = vunpack.c.l.b16 %v3659
    %v3745 = vunpack.c.h.b16 %v3659
    %v3746 = vunpack.c.l.b16 %v3660
    %v3747 = vunpack.c.l.b16 %v3661
    %v3748 = vunpack.c.h.b16 %v3661
    %v3749 = vunpack.c.l.b16 %v3662
    %v3750 = vunpack.c.l.b16 %v3663
    %v3751 = vunpack.c.h.b16 %v3663
    %v3752 = vunpack.c.l.b16 %v3664
    %v3753 = vunpack.c.l.b16 %v3665
    %v3754 = vunpack.c.h.b16 %v3665
    %v3755 = vunpack.c.l.b16 %v3666
    %v3756 = vpack.c.b16 %v3711, %v3708
    %v3757 = vpack.c.b16 %v3712, %v3709
    %v3758 = vpack.c.b16 %v3713, %v3710
    %v3759 = vpack.c.b16 %v3717, %v3714
    %v3760 = vpack.c.b16 %v3718, %v3715
    %v3761 = vpack.c.b16 %v3719, %v3716
    %v3762 = vpack.c.b16 %v3723, %v3720
    %v3763 = vpack.c.b16 %v3724, %v3721
    %v3764 = vpack.c.b16 %v3725, %v3722
    %v3765 = vpack.c.b16 %v3729, %v3726
    %v3766 = vpack.c.b16 %v3730, %v3727
    %v3767 = vpack.c.b16 %v3731, %v3728
    %v3768 = vpack.c.b16 %v3735, %v3732
    %v3769 = vpack.c.b16 %v3736, %v3733
    %v3770 = vpack.c.b16 %v3737, %v3734
    %v3771 = vpack.c.b16 %v3741, %v3738
    %v3772 = vpack.c.b16 %v3742, %v3739
    %v3773 = vpack.c.b16 %v3743, %v3740
    %v3774 = vpack.c.b16 %v3747, %v3744
    %v3775 = vpack.c.b16 %v3748, %v3745
    %v3776 = vpack.c.b16 %v3749, %v3746
    %v3777 = vpack.c.b16 %v3753, %v3750
    %v3778 = vpack.c.b16 %v3754, %v3751
    %v3779 = vpack.c.b16 %v3755, %v3752
    %3804 = vmatpush.bf16.msra.mxu0 %v3777
    %3805 = vmatpush.bf16.msra.mxu0 %v3774
    %3806 = vmatpush.bf16.msra.mxu0 %v3771
    %3807 = vmatpush.bf16.msra.mxu0 %v3768
    %3808 = vmatpush.bf16.msra.mxu0 %v3765
    %3809 = vmatpush.bf16.msra.mxu0 %v3762
    %3810 = vmatpush.bf16.msra.mxu0 %v3759
    %3811 = vmatpush.bf16.msra.mxu0 %v3756
    %3812 = vmatmul.bf16.gmra.mxu0 %v3630
    %v3813 = vpop.f32.mrf.mxu0
    %v3814 = vadd.f32 %v3670, %v3813
    %v3815 = vpop.f32.mrf.mxu0
    %v3816 = vadd.f32 %v3670, %v3815
    %3817 = vmatmul.bf16.gmra.mxu0 %v3631
    %v3818 = vpop.f32.mrf.mxu0
    %v3819 = vadd.f32 %v3670, %v3818
    %v3820 = vpop.f32.mrf.mxu0
    %v3821 = vadd.f32 %v3670, %v3820
    %3822 = vmatmul.bf16.gmra.mxu0 %v3632
    %v3823 = vpop.f32.mrf.mxu0
    %v3824 = vadd.f32 %v3670, %v3823
    %v3825 = vpop.f32.mrf.mxu0
    %v3826 = vadd.f32 %v3670, %v3825
    %3827 = vmatmul.bf16.gmra.mxu0 %v3633
    %v3828 = vpop.f32.mrf.mxu0
    %v3829 = vadd.f32 %v3670, %v3828
    %v3830 = vpop.f32.mrf.mxu0
    %v3831 = vadd.f32 %v3670, %v3830
    %3832 = vdwg.mxu0
    %3833 = vmatpush.bf16.msra.mxu0 %v3778
    %3834 = vmatpush.bf16.msra.mxu0 %v3775
    %3835 = vmatpush.bf16.msra.mxu0 %v3772
    %3836 = vmatpush.bf16.msra.mxu0 %v3769
    %3837 = vmatpush.bf16.msra.mxu0 %v3766
    %3838 = vmatpush.bf16.msra.mxu0 %v3763
    %3839 = vmatpush.bf16.msra.mxu0 %v3760
    %3840 = vmatpush.bf16.msra.mxu0 %v3757
    %3841 = vmatmul.bf16.gmra.mxu0 %v3630
    %v3842 = vpop.f32.mrf.mxu0
    %v3843 = vadd.f32 %v3671, %v3842
    %v3844 = vpop.f32.mrf.mxu0
    %v3845 = vadd.f32 %v3671, %v3844
    %3846 = vmatmul.bf16.gmra.mxu0 %v3631
    %v3847 = vpop.f32.mrf.mxu0
    %v3848 = vadd.f32 %v3671, %v3847
    %v3849 = vpop.f32.mrf.mxu0
    %v3850 = vadd.f32 %v3671, %v3849
    %3851 = vmatmul.bf16.gmra.mxu0 %v3632
    %v3852 = vpop.f32.mrf.mxu0
    %v3853 = vadd.f32 %v3671, %v3852
    %v3854 = vpop.f32.mrf.mxu0
    %v3855 = vadd.f32 %v3671, %v3854
    %3856 = vmatmul.bf16.gmra.mxu0 %v3633
    %v3857 = vpop.f32.mrf.mxu0
    %v3858 = vadd.f32 %v3671, %v3857
    %v3859 = vpop.f32.mrf.mxu0
    %v3860 = vadd.f32 %v3671, %v3859
    %3861 = vdwg.mxu0
    %3862 = vmatpush.bf16.msra.mxu0 %v3779
    %3863 = vmatpush.bf16.msra.mxu0 %v3776
    %3864 = vmatpush.bf16.msra.mxu0 %v3773
    %3865 = vmatpush.bf16.msra.mxu0 %v3770
    %3866 = vmatpush.bf16.msra.mxu0 %v3767
    %3867 = vmatpush.bf16.msra.mxu0 %v3764
    %3868 = vmatpush.bf16.msra.mxu0 %v3761
    %3869 = vmatpush.bf16.msra.mxu0 %v3758
    %3870 = vmatmul.bf16.gmra.mxu0 %v3630
    %v3871 = vpop.f32.mrf.mxu0
    %v3872 = vadd.f32 %v3672, %v3871
    %v3873 = vpop.f32.mrf.mxu0
    %v3874 = vadd.f32 %v3672, %v3873
    %3875 = vmatmul.bf16.gmra.mxu0 %v3631
    %v3876 = vpop.f32.mrf.mxu0
    %v3877 = vadd.f32 %v3672, %v3876
    %v3878 = vpop.f32.mrf.mxu0
    %v3879 = vadd.f32 %v3672, %v3878
    %3880 = vmatmul.bf16.gmra.mxu0 %v3632
    %v3881 = vpop.f32.mrf.mxu0
    %v3882 = vadd.f32 %v3672, %v3881
    %v3883 = vpop.f32.mrf.mxu0
    %v3884 = vadd.f32 %v3672, %v3883
    %3885 = vmatmul.bf16.gmra.mxu0 %v3633
    %v3886 = vpop.f32.mrf.mxu0
    %v3887 = vadd.f32 %v3672, %v3886
    %v3888 = vpop.f32.mrf.mxu0
    %v3889 = vadd.f32 %v3672, %v3888
    %3890 = vdwg.mxu0
    %3891 = vst [vmem:[#allocation4] sm:$0xff] %v3814
    %3892 = vst [vmem:[#allocation4 + $0x8] sm:$0xff] %v3843
    %3893 = vst [vmem:[#allocation4 + $0x10] sm:$0xff] %v3872
    %3894 = vst [vmem:[#allocation4 + $0x18] sm:$0xff] %v3816
    %3895 = vst [vmem:[#allocation4 + $0x20] sm:$0xff] %v3845
    %3896 = vst [vmem:[#allocation4 + $0x28] sm:$0xff] %v3874
    %3897 = vst [vmem:[#allocation4 + $0x30] sm:$0xff] %v3819
    %3898 = vst [vmem:[#allocation4 + $0x38] sm:$0xff] %v3848
    %3899 = vst [vmem:[#allocation4 + $0x40] sm:$0xff] %v3877
    %3900 = vst [vmem:[#allocation4 + $0x48] sm:$0xff] %v3821
    %3901 = vst [vmem:[#allocation4 + $0x50] sm:$0xff] %v3850
    %3902 = vst [vmem:[#allocation4 + $0x58] sm:$0xff] %v3879
    %3903 = vst [vmem:[#allocation4 + $0x60] sm:$0xff] %v3824
    %3904 = vst [vmem:[#allocation4 + $0x68] sm:$0xff] %v3853
    %3905 = vst [vmem:[#allocation4 + $0x70] sm:$0xff] %v3882
    %3906 = vst [vmem:[#allocation4 + $0x78] sm:$0xff] %v3826
    %3907 = vst [vmem:[#allocation4 + $0x80] sm:$0xff] %v3855
    %3908 = vst [vmem:[#allocation4 + $0x88] sm:$0xff] %v3884
    %3909 = vst [vmem:[#allocation4 + $0x90] sm:$0xff] %v3829
    %3910 = vst [vmem:[#allocation4 + $0x98] sm:$0xff] %v3858
    %3911 = vst [vmem:[#allocation4 + $0xa0] sm:$0xff] %v3887
    %3912 = vst [vmem:[#allocation4 + $0xa8] sm:$0xff] %v3831
    %3913 = vst [vmem:[#allocation4 + $0xb0] sm:$0xff] %v3860
    %3914 = vst [vmem:[#allocation4 + $0xb8] sm:$0xff] %v3889
    %s3915 = scalar_lea.vmem [#allocation7], 576
    %v3916 = vld [vmem:[%s3915] sm:$0xff]
    %v3917 = vld [vmem:[%s3915 + $0x8] sm:$0xf]
    %v3918 = vld [vmem:[%s3915 + $0xc] sm:$0xff]
    %v3919 = vld [vmem:[%s3915 + $0x14] sm:$0xf]
    %v3920 = vld [vmem:[%s3915 + $0x18] sm:$0xff]
    %v3921 = vld [vmem:[%s3915 + $0x20] sm:$0xf]
    %v3922 = vld [vmem:[%s3915 + $0x24] sm:$0xff]
    %v3923 = vld [vmem:[%s3915 + $0x2c] sm:$0xf]
    %v3924 = vld [vmem:[%s3915 + $0x30] sm:$0xff]
    %v3925 = vld [vmem:[%s3915 + $0x38] sm:$0xf]
    %v3926 = vld [vmem:[%s3915 + $0x3c] sm:$0xff]
    %v3927 = vld [vmem:[%s3915 + $0x44] sm:$0xf]
    %v3928 = vld [vmem:[%s3915 + $0x48] sm:$0xff]
    %v3929 = vld [vmem:[%s3915 + $0x50] sm:$0xf]
    %v3930 = vld [vmem:[%s3915 + $0x54] sm:$0xff]
    %v3931 = vld [vmem:[%s3915 + $0x5c] sm:$0xf]
    %v3932 = vld [vmem:[%s3915 + $0x60] sm:$0xff]
    %v3933 = vld [vmem:[%s3915 + $0x68] sm:$0xf]
    %v3934 = vld [vmem:[%s3915 + $0x6c] sm:$0xff]
    %v3935 = vld [vmem:[%s3915 + $0x74] sm:$0xf]
    %v3936 = vld [vmem:[%s3915 + $0x78] sm:$0xff]
    %v3937 = vld [vmem:[%s3915 + $0x80] sm:$0xf]
    %v3938 = vld [vmem:[%s3915 + $0x84] sm:$0xff]
    %v3939 = vld [vmem:[%s3915 + $0x8c] sm:$0xf]
    %v3940 = vld [vmem:[%s3915 + $0x90] sm:$0xff]
    %v3941 = vld [vmem:[%s3915 + $0x98] sm:$0xf]
    %v3942 = vld [vmem:[%s3915 + $0x9c] sm:$0xff]
    %v3943 = vld [vmem:[%s3915 + $0xa4] sm:$0xf]
    %v3944 = vld [vmem:[%s3915 + $0xa8] sm:$0xff]
    %v3945 = vld [vmem:[%s3915 + $0xb0] sm:$0xf]
    %v3946 = vld [vmem:[%s3915 + $0xb4] sm:$0xff]
    %v3947 = vld [vmem:[%s3915 + $0xbc] sm:$0xf]
    %s3948 = scalar_lea.vmem %s5, 3
    %v3949 = vld [vmem:[%s3948] sm:$0x1]
    %v3951 = vperm.slane %v3949, 0
    %s3953 = scalar_lea.vmem [#allocation2], 24
    %v3954 = vld [vmem:[%s3953] sm:$0xff]
    %v3955 = vld [vmem:[%s333] sm:$0xff]
    %v3956 = vld [vmem:[%s333 + $0x8] sm:$0xff]
    %v3957 = vld [vmem:[%s333 + $0x10] sm:$0xff]
    %v3958 = vpack.c.bf16 %v3954, %v3954
    %v3991 = vunpack.c.l.b16 %v3916
    %v3992 = vunpack.c.h.b16 %v3916
    %v3993 = vunpack.c.l.b16 %v3917
    %v3994 = vunpack.c.l.b16 %v3918
    %v3995 = vunpack.c.h.b16 %v3918
    %v3996 = vunpack.c.l.b16 %v3919
    %v3997 = vunpack.c.l.b16 %v3920
    %v3998 = vunpack.c.h.b16 %v3920
    %v3999 = vunpack.c.l.b16 %v3921
    %v4000 = vunpack.c.l.b16 %v3922
    %v4001 = vunpack.c.h.b16 %v3922
    %v4002 = vunpack.c.l.b16 %v3923
    %v4003 = vunpack.c.l.b16 %v3924
    %v4004 = vunpack.c.h.b16 %v3924
    %v4005 = vunpack.c.l.b16 %v3925
    %v4006 = vunpack.c.l.b16 %v3926
    %v4007 = vunpack.c.h.b16 %v3926
    %v4008 = vunpack.c.l.b16 %v3927
    %v4009 = vunpack.c.l.b16 %v3928
    %v4010 = vunpack.c.h.b16 %v3928
    %v4011 = vunpack.c.l.b16 %v3929
    %v4012 = vunpack.c.l.b16 %v3930
    %v4013 = vunpack.c.h.b16 %v3930
    %v4014 = vunpack.c.l.b16 %v3931
    %v4015 = vunpack.c.l.b16 %v3932
    %v4016 = vunpack.c.h.b16 %v3932
    %v4017 = vunpack.c.l.b16 %v3933
    %v4018 = vunpack.c.l.b16 %v3934
    %v4019 = vunpack.c.h.b16 %v3934
    %v4020 = vunpack.c.l.b16 %v3935
    %v4021 = vunpack.c.l.b16 %v3936
    %v4022 = vunpack.c.h.b16 %v3936
    %v4023 = vunpack.c.l.b16 %v3937
    %v4024 = vunpack.c.l.b16 %v3938
    %v4025 = vunpack.c.h.b16 %v3938
    %v4026 = vunpack.c.l.b16 %v3939
    %v4027 = vunpack.c.l.b16 %v3940
    %v4028 = vunpack.c.h.b16 %v3940
    %v4029 = vunpack.c.l.b16 %v3941
    %v4030 = vunpack.c.l.b16 %v3942
    %v4031 = vunpack.c.h.b16 %v3942
    %v4032 = vunpack.c.l.b16 %v3943
    %v4033 = vunpack.c.l.b16 %v3944
    %v4034 = vunpack.c.h.b16 %v3944
    %v4035 = vunpack.c.l.b16 %v3945
    %v4036 = vunpack.c.l.b16 %v3946
    %v4037 = vunpack.c.h.b16 %v3946
    %v4038 = vunpack.c.l.b16 %v3947
    %v4039 = vpack.c.b16 %v3994, %v3991
    %v4040 = vpack.c.b16 %v3995, %v3992
    %v4041 = vpack.c.b16 %v3996, %v3993
    %v4042 = vpack.c.b16 %v4000, %v3997
    %v4043 = vpack.c.b16 %v4001, %v3998
    %v4044 = vpack.c.b16 %v4002, %v3999
    %v4045 = vpack.c.b16 %v4006, %v4003
    %v4046 = vpack.c.b16 %v4007, %v4004
    %v4047 = vpack.c.b16 %v4008, %v4005
    %v4048 = vpack.c.b16 %v4012, %v4009
    %v4049 = vpack.c.b16 %v4013, %v4010
    %v4050 = vpack.c.b16 %v4014, %v4011
    %v4051 = vpack.c.b16 %v4018, %v4015
    %v4052 = vpack.c.b16 %v4019, %v4016
    %v4053 = vpack.c.b16 %v4020, %v4017
    %v4054 = vpack.c.b16 %v4024, %v4021
    %v4055 = vpack.c.b16 %v4025, %v4022
    %v4056 = vpack.c.b16 %v4026, %v4023
    %v4057 = vpack.c.b16 %v4030, %v4027
    %v4058 = vpack.c.b16 %v4031, %v4028
    %v4059 = vpack.c.b16 %v4032, %v4029
    %v4060 = vpack.c.b16 %v4036, %v4033
    %v4061 = vpack.c.b16 %v4037, %v4034
    %v4062 = vpack.c.b16 %v4038, %v4035
    %4087 = vmatpush.bf16.msra.mxu0 %v4060
    %4088 = vmatpush.bf16.msra.mxu0 %v4057
    %4089 = vmatpush.bf16.msra.mxu0 %v4054
    %4090 = vmatpush.bf16.msra.mxu0 %v4051
    %4091 = vmatpush.bf16.msra.mxu0 %v4048
    %4092 = vmatpush.bf16.msra.mxu0 %v4045
    %4093 = vmatpush.bf16.msra.mxu0 %v4042
    %4094 = vmatpush.bf16.msra.mxu0 %v4039
    %4095 = vmatmul.bf16.gmra.mxu0 %v3958
    %v4096 = vpop.f32.mrf.mxu0
    %v4097 = vadd.f32 0.0, %v4096
    %v4098 = vpop.f32.mrf.mxu0
    %4099 = vdwg.mxu0
    %4100 = vmatpush.bf16.msra.mxu0 %v4061
    %4101 = vmatpush.bf16.msra.mxu0 %v4058
    %4102 = vmatpush.bf16.msra.mxu0 %v4055
    %4103 = vmatpush.bf16.msra.mxu0 %v4052
    %4104 = vmatpush.bf16.msra.mxu0 %v4049
    %4105 = vmatpush.bf16.msra.mxu0 %v4046
    %4106 = vmatpush.bf16.msra.mxu0 %v4043
    %4107 = vmatpush.bf16.msra.mxu0 %v4040
    %4108 = vmatmul.bf16.gmra.mxu0 %v3958
    %v4109 = vpop.f32.mrf.mxu0
    %v4110 = vadd.f32 0.0, %v4109
    %v4111 = vpop.f32.mrf.mxu0
    %4112 = vdwg.mxu0
    %4113 = vmatpush.bf16.msra.mxu0 %v4062
    %4114 = vmatpush.bf16.msra.mxu0 %v4059
    %4115 = vmatpush.bf16.msra.mxu0 %v4056
    %4116 = vmatpush.bf16.msra.mxu0 %v4053
    %4117 = vmatpush.bf16.msra.mxu0 %v4050
    %4118 = vmatpush.bf16.msra.mxu0 %v4047
    %4119 = vmatpush.bf16.msra.mxu0 %v4044
    %4120 = vmatpush.bf16.msra.mxu0 %v4041
    %4121 = vmatmul.bf16.gmra.mxu0 %v3958
    %v4122 = vpop.f32.mrf.mxu0
    %v4123 = vadd.f32 0.0, %v4122
    %v4124 = vpop.f32.mrf.mxu0
    %4125 = vdwg.mxu0
    %v4126 = vadd.f32 %v3955, %v4097
    %v4127 = vadd.f32 %v3956, %v4110
    %v4128 = vxor.u32 %v4126, 2147483648
    %v4129 = vxor.u32 %v4127, 2147483648
    %v4130 = vmul.f32 %v4128, 1.442695
    %v4131 = vpow.pop %v4130
    %v4132 = vmul.f32 %v4129, 1.442695
    %v4133 = vpow.pop %v4132
    %v4134 = vadd.f32 %v4131, 1.0
    %v4135 = vadd.f32 %v4133, 1.0
    %v4136 = vrcp.pop %v4134
    %v4137 = vmul.f32 %v4134, %v4136
    %v4138 = vsub.f32 1.0, %v4137
    %v4139 = vmul.f32 %v4136, %v4138
    %v4140 = vadd.f32 %v4136, %v4139
    %vm4141 = vweird.f32 %v4134
    %vm4142 = vweird.f32 %v4136
    %vm4143 = vmor %vm4141, %vm4142
    %v4144 = vsel %vm4143, %v4136, %v4140
    %v4145 = vand.u32 2147483647, %v4134
    %vm4146 = vcmp.eq.f32.partialorder %v4145, 8.507059e+37
    %v4147 = vand.u32 %v4134, 2147483648
    %v4148 = vor.u32 1.1754944e-38, %v4147
    %v4149 = vsel %vm4146, %v4148, %v4144
    %v4150 = vmul.f32 1.0, %v4149
    %v4151 = vrcp.pop %v4135
    %v4152 = vmul.f32 %v4135, %v4151
    %v4153 = vsub.f32 1.0, %v4152
    %v4154 = vmul.f32 %v4151, %v4153
    %v4155 = vadd.f32 %v4151, %v4154
    %vm4156 = vweird.f32 %v4135
    %vm4157 = vweird.f32 %v4151
    %vm4158 = vmor %vm4156, %vm4157
    %v4159 = vsel %vm4158, %v4151, %v4155
    %v4160 = vand.u32 2147483647, %v4135
    %vm4161 = vcmp.eq.f32.partialorder %v4160, 8.507059e+37
    %v4162 = vand.u32 %v4135, 2147483648
    %v4163 = vor.u32 1.1754944e-38, %v4162
    %v4164 = vsel %vm4161, %v4163, %v4159
    %v4165 = vmul.f32 1.0, %v4164
    %v4166 = vadd.f32 %v4123, %v3951
    %v4167 = vmul.f32 %v4150, %v4166
    %v4168 = vadd.f32 %v3957, %v4167
    %v4169 = vtanh.pop %v4168
    %v4170 = vsub.f32 1.0, %v4165
    %v4171 = vmul.f32 %v4170, %v4169
    %v4172 = vmul.f32 %v4165, %v3954
    %v4173 = vadd.f32 %v4171, %v4172
    %4174 = vst [vmem:[#allocation3] sm:$0xff] %v4173
    %v4175 = vld [vmem:[%s556] sm:$0xff]
    %v4176 = vld [vmem:[%s556 + $0x8] sm:$0xff]
    %v4177 = vld [vmem:[%s556 + $0x10] sm:$0xff]
    %v4178 = vpack.c.bf16 %v4173, %v4173
    %4179 = vmatpush.bf16.msra.mxu0 %v4060
    %4180 = vmatpush.bf16.msra.mxu0 %v4057
    %4181 = vmatpush.bf16.msra.mxu0 %v4054
    %4182 = vmatpush.bf16.msra.mxu0 %v4051
    %4183 = vmatpush.bf16.msra.mxu0 %v4048
    %4184 = vmatpush.bf16.msra.mxu0 %v4045
    %4185 = vmatpush.bf16.msra.mxu0 %v4042
    %4186 = vmatpush.bf16.msra.mxu0 %v4039
    %4187 = vmatmul.bf16.gmra.mxu0 %v4178
    %v4188 = vpop.f32.mrf.mxu0
    %v4189 = vadd.f32 0.0, %v4188
    %v4190 = vpop.f32.mrf.mxu0
    %4191 = vdwg.mxu0
    %4192 = vmatpush.bf16.msra.mxu0 %v4061
    %4193 = vmatpush.bf16.msra.mxu0 %v4058
    %4194 = vmatpush.bf16.msra.mxu0 %v4055
    %4195 = vmatpush.bf16.msra.mxu0 %v4052
    %4196 = vmatpush.bf16.msra.mxu0 %v4049
    %4197 = vmatpush.bf16.msra.mxu0 %v4046
    %4198 = vmatpush.bf16.msra.mxu0 %v4043
    %4199 = vmatpush.bf16.msra.mxu0 %v4040
    %4200 = vmatmul.bf16.gmra.mxu0 %v4178
    %v4201 = vpop.f32.mrf.mxu0
    %v4202 = vadd.f32 0.0, %v4201
    %v4203 = vpop.f32.mrf.mxu0
    %4204 = vdwg.mxu0
    %4205 = vmatpush.bf16.msra.mxu0 %v4062
    %4206 = vmatpush.bf16.msra.mxu0 %v4059
    %4207 = vmatpush.bf16.msra.mxu0 %v4056
    %4208 = vmatpush.bf16.msra.mxu0 %v4053
    %4209 = vmatpush.bf16.msra.mxu0 %v4050
    %4210 = vmatpush.bf16.msra.mxu0 %v4047
    %4211 = vmatpush.bf16.msra.mxu0 %v4044
    %4212 = vmatpush.bf16.msra.mxu0 %v4041
    %4213 = vmatmul.bf16.gmra.mxu0 %v4178
    %v4214 = vpop.f32.mrf.mxu0
    %v4215 = vadd.f32 0.0, %v4214
    %v4216 = vpop.f32.mrf.mxu0
    %4217 = vdwg.mxu0
    %v4218 = vadd.f32 %v4175, %v4189
    %v4219 = vadd.f32 %v4176, %v4202
    %v4220 = vxor.u32 %v4218, 2147483648
    %v4221 = vxor.u32 %v4219, 2147483648
    %v4222 = vmul.f32 %v4220, 1.442695
    %v4223 = vpow.pop %v4222
    %v4224 = vmul.f32 %v4221, 1.442695
    %v4225 = vpow.pop %v4224
    %v4226 = vadd.f32 %v4223, 1.0
    %v4227 = vadd.f32 %v4225, 1.0
    %v4228 = vrcp.pop %v4226
    %v4229 = vmul.f32 %v4226, %v4228
    %v4230 = vsub.f32 1.0, %v4229
    %v4231 = vmul.f32 %v4228, %v4230
    %v4232 = vadd.f32 %v4228, %v4231
    %vm4233 = vweird.f32 %v4226
    %vm4234 = vweird.f32 %v4228
    %vm4235 = vmor %vm4233, %vm4234
    %v4236 = vsel %vm4235, %v4228, %v4232
    %v4237 = vand.u32 2147483647, %v4226
    %vm4238 = vcmp.eq.f32.partialorder %v4237, 8.507059e+37
    %v4239 = vand.u32 %v4226, 2147483648
    %v4240 = vor.u32 1.1754944e-38, %v4239
    %v4241 = vsel %vm4238, %v4240, %v4236
    %v4242 = vmul.f32 1.0, %v4241
    %v4243 = vrcp.pop %v4227
    %v4244 = vmul.f32 %v4227, %v4243
    %v4245 = vsub.f32 1.0, %v4244
    %v4246 = vmul.f32 %v4243, %v4245
    %v4247 = vadd.f32 %v4243, %v4246
    %vm4248 = vweird.f32 %v4227
    %vm4249 = vweird.f32 %v4243
    %vm4250 = vmor %vm4248, %vm4249
    %v4251 = vsel %vm4250, %v4243, %v4247
    %v4252 = vand.u32 2147483647, %v4227
    %vm4253 = vcmp.eq.f32.partialorder %v4252, 8.507059e+37
    %v4254 = vand.u32 %v4227, 2147483648
    %v4255 = vor.u32 1.1754944e-38, %v4254
    %v4256 = vsel %vm4253, %v4255, %v4251
    %v4257 = vmul.f32 1.0, %v4256
    %v4258 = vadd.f32 %v4215, %v3951
    %v4259 = vmul.f32 %v4242, %v4258
    %v4260 = vadd.f32 %v4177, %v4259
    %v4261 = vtanh.pop %v4260
    %v4262 = vsub.f32 1.0, %v4257
    %v4263 = vmul.f32 %v4262, %v4261
    %v4264 = vmul.f32 %v4257, %v4173
    %v4265 = vadd.f32 %v4263, %v4264
    %4266 = vst [vmem:[%s648] sm:$0xff] %v4265
    %v4267 = vld [vmem:[%s652] sm:$0xff]
    %v4268 = vld [vmem:[%s652 + $0x8] sm:$0xff]
    %v4269 = vld [vmem:[%s652 + $0x10] sm:$0xff]
    %v4270 = vpack.c.bf16 %v4265, %v4265
    %4271 = vmatpush.bf16.msra.mxu0 %v4060
    %4272 = vmatpush.bf16.msra.mxu0 %v4057
    %4273 = vmatpush.bf16.msra.mxu0 %v4054
    %4274 = vmatpush.bf16.msra.mxu0 %v4051
    %4275 = vmatpush.bf16.msra.mxu0 %v4048
    %4276 = vmatpush.bf16.msra.mxu0 %v4045
    %4277 = vmatpush.bf16.msra.mxu0 %v4042
    %4278 = vmatpush.bf16.msra.mxu0 %v4039
    %4279 = vmatmul.bf16.gmra.mxu0 %v4270
    %v4280 = vpop.f32.mrf.mxu0
    %v4281 = vadd.f32 0.0, %v4280
    %v4282 = vpop.f32.mrf.mxu0
    %4283 = vdwg.mxu0
    %4284 = vmatpush.bf16.msra.mxu0 %v4061
    %4285 = vmatpush.bf16.msra.mxu0 %v4058
    %4286 = vmatpush.bf16.msra.mxu0 %v4055
    %4287 = vmatpush.bf16.msra.mxu0 %v4052
    %4288 = vmatpush.bf16.msra.mxu0 %v4049
    %4289 = vmatpush.bf16.msra.mxu0 %v4046
    %4290 = vmatpush.bf16.msra.mxu0 %v4043
    %4291 = vmatpush.bf16.msra.mxu0 %v4040
    %4292 = vmatmul.bf16.gmra.mxu0 %v4270
    %v4293 = vpop.f32.mrf.mxu0
    %v4294 = vadd.f32 0.0, %v4293
    %v4295 = vpop.f32.mrf.mxu0
    %4296 = vdwg.mxu0
    %4297 = vmatpush.bf16.msra.mxu0 %v4062
    %4298 = vmatpush.bf16.msra.mxu0 %v4059
    %4299 = vmatpush.bf16.msra.mxu0 %v4056
    %4300 = vmatpush.bf16.msra.mxu0 %v4053
    %4301 = vmatpush.bf16.msra.mxu0 %v4050
    %4302 = vmatpush.bf16.msra.mxu0 %v4047
    %4303 = vmatpush.bf16.msra.mxu0 %v4044
    %4304 = vmatpush.bf16.msra.mxu0 %v4041
    %4305 = vmatmul.bf16.gmra.mxu0 %v4270
    %v4306 = vpop.f32.mrf.mxu0
    %v4307 = vadd.f32 0.0, %v4306
    %v4308 = vpop.f32.mrf.mxu0
    %4309 = vdwg.mxu0
    %v4310 = vadd.f32 %v4267, %v4281
    %v4311 = vadd.f32 %v4268, %v4294
    %v4312 = vxor.u32 %v4310, 2147483648
    %v4313 = vxor.u32 %v4311, 2147483648
    %v4314 = vmul.f32 %v4312, 1.442695
    %v4315 = vpow.pop %v4314
    %v4316 = vmul.f32 %v4313, 1.442695
    %v4317 = vpow.pop %v4316
    %v4318 = vadd.f32 %v4315, 1.0
    %v4319 = vadd.f32 %v4317, 1.0
    %v4320 = vrcp.pop %v4318
    %v4321 = vmul.f32 %v4318, %v4320
    %v4322 = vsub.f32 1.0, %v4321
    %v4323 = vmul.f32 %v4320, %v4322
    %v4324 = vadd.f32 %v4320, %v4323
    %vm4325 = vweird.f32 %v4318
    %vm4326 = vweird.f32 %v4320
    %vm4327 = vmor %vm4325, %vm4326
    %v4328 = vsel %vm4327, %v4320, %v4324
    %v4329 = vand.u32 2147483647, %v4318
    %vm4330 = vcmp.eq.f32.partialorder %v4329, 8.507059e+37
    %v4331 = vand.u32 %v4318, 2147483648
    %v4332 = vor.u32 1.1754944e-38, %v4331
    %v4333 = vsel %vm4330, %v4332, %v4328
    %v4334 = vmul.f32 1.0, %v4333
    %v4335 = vrcp.pop %v4319
    %v4336 = vmul.f32 %v4319, %v4335
    %v4337 = vsub.f32 1.0, %v4336
    %v4338 = vmul.f32 %v4335, %v4337
    %v4339 = vadd.f32 %v4335, %v4338
    %vm4340 = vweird.f32 %v4319
    %vm4341 = vweird.f32 %v4335
    %vm4342 = vmor %vm4340, %vm4341
    %v4343 = vsel %vm4342, %v4335, %v4339
    %v4344 = vand.u32 2147483647, %v4319
    %vm4345 = vcmp.eq.f32.partialorder %v4344, 8.507059e+37
    %v4346 = vand.u32 %v4319, 2147483648
    %v4347 = vor.u32 1.1754944e-38, %v4346
    %v4348 = vsel %vm4345, %v4347, %v4343
    %v4349 = vmul.f32 1.0, %v4348
    %v4350 = vadd.f32 %v4307, %v3951
    %v4351 = vmul.f32 %v4334, %v4350
    %v4352 = vadd.f32 %v4269, %v4351
    %v4353 = vtanh.pop %v4352
    %v4354 = vsub.f32 1.0, %v4349
    %v4355 = vmul.f32 %v4354, %v4353
    %v4356 = vmul.f32 %v4349, %v4265
    %v4357 = vadd.f32 %v4355, %v4356
    %4358 = vst [vmem:[%s744] sm:$0xff] %v4357
    %v4359 = vld [vmem:[%s748] sm:$0xff]
    %v4360 = vld [vmem:[%s748 + $0x8] sm:$0xff]
    %v4361 = vld [vmem:[%s748 + $0x10] sm:$0xff]
    %v4362 = vpack.c.bf16 %v4357, %v4357
    %4363 = vmatpush.bf16.msra.mxu0 %v4060
    %4364 = vmatpush.bf16.msra.mxu0 %v4057
    %4365 = vmatpush.bf16.msra.mxu0 %v4054
    %4366 = vmatpush.bf16.msra.mxu0 %v4051
    %4367 = vmatpush.bf16.msra.mxu0 %v4048
    %4368 = vmatpush.bf16.msra.mxu0 %v4045
    %4369 = vmatpush.bf16.msra.mxu0 %v4042
    %4370 = vmatpush.bf16.msra.mxu0 %v4039
    %4371 = vmatmul.bf16.gmra.mxu0 %v4362
    %v4372 = vpop.f32.mrf.mxu0
    %v4373 = vadd.f32 0.0, %v4372
    %v4374 = vpop.f32.mrf.mxu0
    %4375 = vdwg.mxu0
    %4376 = vmatpush.bf16.msra.mxu0 %v4061
    %4377 = vmatpush.bf16.msra.mxu0 %v4058
    %4378 = vmatpush.bf16.msra.mxu0 %v4055
    %4379 = vmatpush.bf16.msra.mxu0 %v4052
    %4380 = vmatpush.bf16.msra.mxu0 %v4049
    %4381 = vmatpush.bf16.msra.mxu0 %v4046
    %4382 = vmatpush.bf16.msra.mxu0 %v4043
    %4383 = vmatpush.bf16.msra.mxu0 %v4040
    %4384 = vmatmul.bf16.gmra.mxu0 %v4362
    %v4385 = vpop.f32.mrf.mxu0
    %v4386 = vadd.f32 0.0, %v4385
    %v4387 = vpop.f32.mrf.mxu0
    %4388 = vdwg.mxu0
    %4389 = vmatpush.bf16.msra.mxu0 %v4062
    %4390 = vmatpush.bf16.msra.mxu0 %v4059
    %4391 = vmatpush.bf16.msra.mxu0 %v4056
    %4392 = vmatpush.bf16.msra.mxu0 %v4053
    %4393 = vmatpush.bf16.msra.mxu0 %v4050
    %4394 = vmatpush.bf16.msra.mxu0 %v4047
    %4395 = vmatpush.bf16.msra.mxu0 %v4044
    %4396 = vmatpush.bf16.msra.mxu0 %v4041
    %4397 = vmatmul.bf16.gmra.mxu0 %v4362
    %v4398 = vpop.f32.mrf.mxu0
    %v4399 = vadd.f32 0.0, %v4398
    %v4400 = vpop.f32.mrf.mxu0
    %4401 = vdwg.mxu0
    %v4402 = vadd.f32 %v4359, %v4373
    %v4403 = vadd.f32 %v4360, %v4386
    %v4404 = vxor.u32 %v4402, 2147483648
    %v4405 = vxor.u32 %v4403, 2147483648
    %v4406 = vmul.f32 %v4404, 1.442695
    %v4407 = vpow.pop %v4406
    %v4408 = vmul.f32 %v4405, 1.442695
    %v4409 = vpow.pop %v4408
    %v4410 = vadd.f32 %v4407, 1.0
    %v4411 = vadd.f32 %v4409, 1.0
    %v4412 = vrcp.pop %v4410
    %v4413 = vmul.f32 %v4410, %v4412
    %v4414 = vsub.f32 1.0, %v4413
    %v4415 = vmul.f32 %v4412, %v4414
    %v4416 = vadd.f32 %v4412, %v4415
    %vm4417 = vweird.f32 %v4410
    %vm4418 = vweird.f32 %v4412
    %vm4419 = vmor %vm4417, %vm4418
    %v4420 = vsel %vm4419, %v4412, %v4416
    %v4421 = vand.u32 2147483647, %v4410
    %vm4422 = vcmp.eq.f32.partialorder %v4421, 8.507059e+37
    %v4423 = vand.u32 %v4410, 2147483648
    %v4424 = vor.u32 1.1754944e-38, %v4423
    %v4425 = vsel %vm4422, %v4424, %v4420
    %v4426 = vmul.f32 1.0, %v4425
    %v4427 = vrcp.pop %v4411
    %v4428 = vmul.f32 %v4411, %v4427
    %v4429 = vsub.f32 1.0, %v4428
    %v4430 = vmul.f32 %v4427, %v4429
    %v4431 = vadd.f32 %v4427, %v4430
    %vm4432 = vweird.f32 %v4411
    %vm4433 = vweird.f32 %v4427
    %vm4434 = vmor %vm4432, %vm4433
    %v4435 = vsel %vm4434, %v4427, %v4431
    %v4436 = vand.u32 2147483647, %v4411
    %vm4437 = vcmp.eq.f32.partialorder %v4436, 8.507059e+37
    %v4438 = vand.u32 %v4411, 2147483648
    %v4439 = vor.u32 1.1754944e-38, %v4438
    %v4440 = vsel %vm4437, %v4439, %v4435
    %v4441 = vmul.f32 1.0, %v4440
    %v4442 = vadd.f32 %v4399, %v3951
    %v4443 = vmul.f32 %v4426, %v4442
    %v4444 = vadd.f32 %v4361, %v4443
    %v4445 = vtanh.pop %v4444
    %v4446 = vsub.f32 1.0, %v4441
    %v4447 = vmul.f32 %v4446, %v4445
    %v4448 = vmul.f32 %v4441, %v4357
    %v4449 = vadd.f32 %v4447, %v4448
    %4450 = vst [vmem:[%s840] sm:$0xff] %v4449
    %v4451 = vld [vmem:[%s844] sm:$0xff]
    %v4452 = vld [vmem:[%s844 + $0x8] sm:$0xff]
    %v4453 = vld [vmem:[%s844 + $0x10] sm:$0xff]
    %v4454 = vpack.c.bf16 %v4449, %v4449
    %4455 = vmatpush.bf16.msra.mxu0 %v4060
    %4456 = vmatpush.bf16.msra.mxu0 %v4057
    %4457 = vmatpush.bf16.msra.mxu0 %v4054
    %4458 = vmatpush.bf16.msra.mxu0 %v4051
    %4459 = vmatpush.bf16.msra.mxu0 %v4048
    %4460 = vmatpush.bf16.msra.mxu0 %v4045
    %4461 = vmatpush.bf16.msra.mxu0 %v4042
    %4462 = vmatpush.bf16.msra.mxu0 %v4039
    %4463 = vmatmul.bf16.gmra.mxu0 %v4454
    %v4464 = vpop.f32.mrf.mxu0
    %v4465 = vadd.f32 0.0, %v4464
    %v4466 = vpop.f32.mrf.mxu0
    %4467 = vdwg.mxu0
    %4468 = vmatpush.bf16.msra.mxu0 %v4061
    %4469 = vmatpush.bf16.msra.mxu0 %v4058
    %4470 = vmatpush.bf16.msra.mxu0 %v4055
    %4471 = vmatpush.bf16.msra.mxu0 %v4052
    %4472 = vmatpush.bf16.msra.mxu0 %v4049
    %4473 = vmatpush.bf16.msra.mxu0 %v4046
    %4474 = vmatpush.bf16.msra.mxu0 %v4043
    %4475 = vmatpush.bf16.msra.mxu0 %v4040
    %4476 = vmatmul.bf16.gmra.mxu0 %v4454
    %v4477 = vpop.f32.mrf.mxu0
    %v4478 = vadd.f32 0.0, %v4477
    %v4479 = vpop.f32.mrf.mxu0
    %4480 = vdwg.mxu0
    %4481 = vmatpush.bf16.msra.mxu0 %v4062
    %4482 = vmatpush.bf16.msra.mxu0 %v4059
    %4483 = vmatpush.bf16.msra.mxu0 %v4056
    %4484 = vmatpush.bf16.msra.mxu0 %v4053
    %4485 = vmatpush.bf16.msra.mxu0 %v4050
    %4486 = vmatpush.bf16.msra.mxu0 %v4047
    %4487 = vmatpush.bf16.msra.mxu0 %v4044
    %4488 = vmatpush.bf16.msra.mxu0 %v4041
    %4489 = vmatmul.bf16.gmra.mxu0 %v4454
    %v4490 = vpop.f32.mrf.mxu0
    %v4491 = vadd.f32 0.0, %v4490
    %v4492 = vpop.f32.mrf.mxu0
    %4493 = vdwg.mxu0
    %v4494 = vadd.f32 %v4451, %v4465
    %v4495 = vadd.f32 %v4452, %v4478
    %v4496 = vxor.u32 %v4494, 2147483648
    %v4497 = vxor.u32 %v4495, 2147483648
    %v4498 = vmul.f32 %v4496, 1.442695
    %v4499 = vpow.pop %v4498
    %v4500 = vmul.f32 %v4497, 1.442695
    %v4501 = vpow.pop %v4500
    %v4502 = vadd.f32 %v4499, 1.0
    %v4503 = vadd.f32 %v4501, 1.0
    %v4504 = vrcp.pop %v4502
    %v4505 = vmul.f32 %v4502, %v4504
    %v4506 = vsub.f32 1.0, %v4505
    %v4507 = vmul.f32 %v4504, %v4506
    %v4508 = vadd.f32 %v4504, %v4507
    %vm4509 = vweird.f32 %v4502
    %vm4510 = vweird.f32 %v4504
    %vm4511 = vmor %vm4509, %vm4510
    %v4512 = vsel %vm4511, %v4504, %v4508
    %v4513 = vand.u32 2147483647, %v4502
    %vm4514 = vcmp.eq.f32.partialorder %v4513, 8.507059e+37
    %v4515 = vand.u32 %v4502, 2147483648
    %v4516 = vor.u32 1.1754944e-38, %v4515
    %v4517 = vsel %vm4514, %v4516, %v4512
    %v4518 = vmul.f32 1.0, %v4517
    %v4519 = vrcp.pop %v4503
    %v4520 = vmul.f32 %v4503, %v4519
    %v4521 = vsub.f32 1.0, %v4520
    %v4522 = vmul.f32 %v4519, %v4521
    %v4523 = vadd.f32 %v4519, %v4522
    %vm4524 = vweird.f32 %v4503
    %vm4525 = vweird.f32 %v4519
    %vm4526 = vmor %vm4524, %vm4525
    %v4527 = vsel %vm4526, %v4519, %v4523
    %v4528 = vand.u32 2147483647, %v4503
    %vm4529 = vcmp.eq.f32.partialorder %v4528, 8.507059e+37
    %v4530 = vand.u32 %v4503, 2147483648
    %v4531 = vor.u32 1.1754944e-38, %v4530
    %v4532 = vsel %vm4529, %v4531, %v4527
    %v4533 = vmul.f32 1.0, %v4532
    %v4534 = vadd.f32 %v4491, %v3951
    %v4535 = vmul.f32 %v4518, %v4534
    %v4536 = vadd.f32 %v4453, %v4535
    %v4537 = vtanh.pop %v4536
    %v4538 = vsub.f32 1.0, %v4533
    %v4539 = vmul.f32 %v4538, %v4537
    %v4540 = vmul.f32 %v4533, %v4449
    %v4541 = vadd.f32 %v4539, %v4540
    %4542 = vst [vmem:[%s936] sm:$0xff] %v4541
    %v4543 = vld [vmem:[%s940] sm:$0xff]
    %v4544 = vld [vmem:[%s940 + $0x8] sm:$0xff]
    %v4545 = vld [vmem:[%s940 + $0x10] sm:$0xff]
    %v4546 = vpack.c.bf16 %v4541, %v4541
    %4547 = vmatpush.bf16.msra.mxu0 %v4060
    %4548 = vmatpush.bf16.msra.mxu0 %v4057
    %4549 = vmatpush.bf16.msra.mxu0 %v4054
    %4550 = vmatpush.bf16.msra.mxu0 %v4051
    %4551 = vmatpush.bf16.msra.mxu0 %v4048
    %4552 = vmatpush.bf16.msra.mxu0 %v4045
    %4553 = vmatpush.bf16.msra.mxu0 %v4042
    %4554 = vmatpush.bf16.msra.mxu0 %v4039
    %4555 = vmatmul.bf16.gmra.mxu0 %v4546
    %v4556 = vpop.f32.mrf.mxu0
    %v4557 = vadd.f32 0.0, %v4556
    %v4558 = vpop.f32.mrf.mxu0
    %4559 = vdwg.mxu0
    %4560 = vmatpush.bf16.msra.mxu0 %v4061
    %4561 = vmatpush.bf16.msra.mxu0 %v4058
    %4562 = vmatpush.bf16.msra.mxu0 %v4055
    %4563 = vmatpush.bf16.msra.mxu0 %v4052
    %4564 = vmatpush.bf16.msra.mxu0 %v4049
    %4565 = vmatpush.bf16.msra.mxu0 %v4046
    %4566 = vmatpush.bf16.msra.mxu0 %v4043
    %4567 = vmatpush.bf16.msra.mxu0 %v4040
    %4568 = vmatmul.bf16.gmra.mxu0 %v4546
    %v4569 = vpop.f32.mrf.mxu0
    %v4570 = vadd.f32 0.0, %v4569
    %v4571 = vpop.f32.mrf.mxu0
    %4572 = vdwg.mxu0
    %4573 = vmatpush.bf16.msra.mxu0 %v4062
    %4574 = vmatpush.bf16.msra.mxu0 %v4059
    %4575 = vmatpush.bf16.msra.mxu0 %v4056
    %4576 = vmatpush.bf16.msra.mxu0 %v4053
    %4577 = vmatpush.bf16.msra.mxu0 %v4050
    %4578 = vmatpush.bf16.msra.mxu0 %v4047
    %4579 = vmatpush.bf16.msra.mxu0 %v4044
    %4580 = vmatpush.bf16.msra.mxu0 %v4041
    %4581 = vmatmul.bf16.gmra.mxu0 %v4546
    %v4582 = vpop.f32.mrf.mxu0
    %v4583 = vadd.f32 0.0, %v4582
    %v4584 = vpop.f32.mrf.mxu0
    %4585 = vdwg.mxu0
    %v4586 = vadd.f32 %v4543, %v4557
    %v4587 = vadd.f32 %v4544, %v4570
    %v4588 = vxor.u32 %v4586, 2147483648
    %v4589 = vxor.u32 %v4587, 2147483648
    %v4590 = vmul.f32 %v4588, 1.442695
    %v4591 = vpow.pop %v4590
    %v4592 = vmul.f32 %v4589, 1.442695
    %v4593 = vpow.pop %v4592
    %v4594 = vadd.f32 %v4591, 1.0
    %v4595 = vadd.f32 %v4593, 1.0
    %v4596 = vrcp.pop %v4594
    %v4597 = vmul.f32 %v4594, %v4596
    %v4598 = vsub.f32 1.0, %v4597
    %v4599 = vmul.f32 %v4596, %v4598
    %v4600 = vadd.f32 %v4596, %v4599
    %vm4601 = vweird.f32 %v4594
    %vm4602 = vweird.f32 %v4596
    %vm4603 = vmor %vm4601, %vm4602
    %v4604 = vsel %vm4603, %v4596, %v4600
    %v4605 = vand.u32 2147483647, %v4594
    %vm4606 = vcmp.eq.f32.partialorder %v4605, 8.507059e+37
    %v4607 = vand.u32 %v4594, 2147483648
    %v4608 = vor.u32 1.1754944e-38, %v4607
    %v4609 = vsel %vm4606, %v4608, %v4604
    %v4610 = vmul.f32 1.0, %v4609
    %v4611 = vrcp.pop %v4595
    %v4612 = vmul.f32 %v4595, %v4611
    %v4613 = vsub.f32 1.0, %v4612
    %v4614 = vmul.f32 %v4611, %v4613
    %v4615 = vadd.f32 %v4611, %v4614
    %vm4616 = vweird.f32 %v4595
    %vm4617 = vweird.f32 %v4611
    %vm4618 = vmor %vm4616, %vm4617
    %v4619 = vsel %vm4618, %v4611, %v4615
    %v4620 = vand.u32 2147483647, %v4595
    %vm4621 = vcmp.eq.f32.partialorder %v4620, 8.507059e+37
    %v4622 = vand.u32 %v4595, 2147483648
    %v4623 = vor.u32 1.1754944e-38, %v4622
    %v4624 = vsel %vm4621, %v4623, %v4619
    %v4625 = vmul.f32 1.0, %v4624
    %v4626 = vadd.f32 %v4583, %v3951
    %v4627 = vmul.f32 %v4610, %v4626
    %v4628 = vadd.f32 %v4545, %v4627
    %v4629 = vtanh.pop %v4628
    %v4630 = vsub.f32 1.0, %v4625
    %v4631 = vmul.f32 %v4630, %v4629
    %v4632 = vmul.f32 %v4625, %v4541
    %v4633 = vadd.f32 %v4631, %v4632
    %4634 = vst [vmem:[%s1032] sm:$0xff] %v4633
    %v4635 = vld [vmem:[%s1036] sm:$0xff]
    %v4636 = vld [vmem:[%s1036 + $0x8] sm:$0xff]
    %v4637 = vld [vmem:[%s1036 + $0x10] sm:$0xff]
    %v4638 = vpack.c.bf16 %v4633, %v4633
    %4639 = vmatpush.bf16.msra.mxu0 %v4060
    %4640 = vmatpush.bf16.msra.mxu0 %v4057
    %4641 = vmatpush.bf16.msra.mxu0 %v4054
    %4642 = vmatpush.bf16.msra.mxu0 %v4051
    %4643 = vmatpush.bf16.msra.mxu0 %v4048
    %4644 = vmatpush.bf16.msra.mxu0 %v4045
    %4645 = vmatpush.bf16.msra.mxu0 %v4042
    %4646 = vmatpush.bf16.msra.mxu0 %v4039
    %4647 = vmatmul.bf16.gmra.mxu0 %v4638
    %v4648 = vpop.f32.mrf.mxu0
    %v4649 = vadd.f32 0.0, %v4648
    %v4650 = vpop.f32.mrf.mxu0
    %4651 = vdwg.mxu0
    %4652 = vmatpush.bf16.msra.mxu0 %v4061
    %4653 = vmatpush.bf16.msra.mxu0 %v4058
    %4654 = vmatpush.bf16.msra.mxu0 %v4055
    %4655 = vmatpush.bf16.msra.mxu0 %v4052
    %4656 = vmatpush.bf16.msra.mxu0 %v4049
    %4657 = vmatpush.bf16.msra.mxu0 %v4046
    %4658 = vmatpush.bf16.msra.mxu0 %v4043
    %4659 = vmatpush.bf16.msra.mxu0 %v4040
    %4660 = vmatmul.bf16.gmra.mxu0 %v4638
    %v4661 = vpop.f32.mrf.mxu0
    %v4662 = vadd.f32 0.0, %v4661
    %v4663 = vpop.f32.mrf.mxu0
    %4664 = vdwg.mxu0
    %4665 = vmatpush.bf16.msra.mxu0 %v4062
    %4666 = vmatpush.bf16.msra.mxu0 %v4059
    %4667 = vmatpush.bf16.msra.mxu0 %v4056
    %4668 = vmatpush.bf16.msra.mxu0 %v4053
    %4669 = vmatpush.bf16.msra.mxu0 %v4050
    %4670 = vmatpush.bf16.msra.mxu0 %v4047
    %4671 = vmatpush.bf16.msra.mxu0 %v4044
    %4672 = vmatpush.bf16.msra.mxu0 %v4041
    %4673 = vmatmul.bf16.gmra.mxu0 %v4638
    %v4674 = vpop.f32.mrf.mxu0
    %v4675 = vadd.f32 0.0, %v4674
    %v4676 = vpop.f32.mrf.mxu0
    %4677 = vdwg.mxu0
    %v4678 = vadd.f32 %v4635, %v4649
    %v4679 = vadd.f32 %v4636, %v4662
    %v4680 = vxor.u32 %v4678, 2147483648
    %v4681 = vxor.u32 %v4679, 2147483648
    %v4682 = vmul.f32 %v4680, 1.442695
    %v4683 = vpow.pop %v4682
    %v4684 = vmul.f32 %v4681, 1.442695
    %v4685 = vpow.pop %v4684
    %v4686 = vadd.f32 %v4683, 1.0
    %v4687 = vadd.f32 %v4685, 1.0
    %v4688 = vrcp.pop %v4686
    %v4689 = vmul.f32 %v4686, %v4688
    %v4690 = vsub.f32 1.0, %v4689
    %v4691 = vmul.f32 %v4688, %v4690
    %v4692 = vadd.f32 %v4688, %v4691
    %vm4693 = vweird.f32 %v4686
    %vm4694 = vweird.f32 %v4688
    %vm4695 = vmor %vm4693, %vm4694
    %v4696 = vsel %vm4695, %v4688, %v4692
    %v4697 = vand.u32 2147483647, %v4686
    %vm4698 = vcmp.eq.f32.partialorder %v4697, 8.507059e+37
    %v4699 = vand.u32 %v4686, 2147483648
    %v4700 = vor.u32 1.1754944e-38, %v4699
    %v4701 = vsel %vm4698, %v4700, %v4696
    %v4702 = vmul.f32 1.0, %v4701
    %v4703 = vrcp.pop %v4687
    %v4704 = vmul.f32 %v4687, %v4703
    %v4705 = vsub.f32 1.0, %v4704
    %v4706 = vmul.f32 %v4703, %v4705
    %v4707 = vadd.f32 %v4703, %v4706
    %vm4708 = vweird.f32 %v4687
    %vm4709 = vweird.f32 %v4703
    %vm4710 = vmor %vm4708, %vm4709
    %v4711 = vsel %vm4710, %v4703, %v4707
    %v4712 = vand.u32 2147483647, %v4687
    %vm4713 = vcmp.eq.f32.partialorder %v4712, 8.507059e+37
    %v4714 = vand.u32 %v4687, 2147483648
    %v4715 = vor.u32 1.1754944e-38, %v4714
    %v4716 = vsel %vm4713, %v4715, %v4711
    %v4717 = vmul.f32 1.0, %v4716
    %v4718 = vadd.f32 %v4675, %v3951
    %v4719 = vmul.f32 %v4702, %v4718
    %v4720 = vadd.f32 %v4637, %v4719
    %v4721 = vtanh.pop %v4720
    %v4722 = vsub.f32 1.0, %v4717
    %v4723 = vmul.f32 %v4722, %v4721
    %v4724 = vmul.f32 %v4717, %v4633
    %v4725 = vadd.f32 %v4723, %v4724
    %4726 = vst [vmem:[%s1128] sm:$0xff] %v4725
    %v4727 = vld [vmem:[%s1132] sm:$0xff]
    %v4728 = vld [vmem:[%s1132 + $0x8] sm:$0xff]
    %v4729 = vld [vmem:[%s1132 + $0x10] sm:$0xff]
    %v4730 = vpack.c.bf16 %v4725, %v4725
    %4731 = vmatpush.bf16.msra.mxu0 %v4060
    %4732 = vmatpush.bf16.msra.mxu0 %v4057
    %4733 = vmatpush.bf16.msra.mxu0 %v4054
    %4734 = vmatpush.bf16.msra.mxu0 %v4051
    %4735 = vmatpush.bf16.msra.mxu0 %v4048
    %4736 = vmatpush.bf16.msra.mxu0 %v4045
    %4737 = vmatpush.bf16.msra.mxu0 %v4042
    %4738 = vmatpush.bf16.msra.mxu0 %v4039
    %4739 = vmatmul.bf16.gmra.mxu0 %v4730
    %v4740 = vpop.f32.mrf.mxu0
    %v4741 = vadd.f32 0.0, %v4740
    %v4742 = vpop.f32.mrf.mxu0
    %4743 = vdwg.mxu0
    %4744 = vmatpush.bf16.msra.mxu0 %v4061
    %4745 = vmatpush.bf16.msra.mxu0 %v4058
    %4746 = vmatpush.bf16.msra.mxu0 %v4055
    %4747 = vmatpush.bf16.msra.mxu0 %v4052
    %4748 = vmatpush.bf16.msra.mxu0 %v4049
    %4749 = vmatpush.bf16.msra.mxu0 %v4046
    %4750 = vmatpush.bf16.msra.mxu0 %v4043
    %4751 = vmatpush.bf16.msra.mxu0 %v4040
    %4752 = vmatmul.bf16.gmra.mxu0 %v4730
    %v4753 = vpop.f32.mrf.mxu0
    %v4754 = vadd.f32 0.0, %v4753
    %v4755 = vpop.f32.mrf.mxu0
    %4756 = vdwg.mxu0
    %4757 = vmatpush.bf16.msra.mxu0 %v4062
    %4758 = vmatpush.bf16.msra.mxu0 %v4059
    %4759 = vmatpush.bf16.msra.mxu0 %v4056
    %4760 = vmatpush.bf16.msra.mxu0 %v4053
    %4761 = vmatpush.bf16.msra.mxu0 %v4050
    %4762 = vmatpush.bf16.msra.mxu0 %v4047
    %4763 = vmatpush.bf16.msra.mxu0 %v4044
    %4764 = vmatpush.bf16.msra.mxu0 %v4041
    %4765 = vmatmul.bf16.gmra.mxu0 %v4730
    %v4766 = vpop.f32.mrf.mxu0
    %v4767 = vadd.f32 0.0, %v4766
    %v4768 = vpop.f32.mrf.mxu0
    %4769 = vdwg.mxu0
    %v4770 = vadd.f32 %v4727, %v4741
    %v4771 = vadd.f32 %v4728, %v4754
    %v4772 = vxor.u32 %v4770, 2147483648
    %v4773 = vxor.u32 %v4771, 2147483648
    %v4774 = vmul.f32 %v4772, 1.442695
    %v4775 = vpow.pop %v4774
    %v4776 = vmul.f32 %v4773, 1.442695
    %v4777 = vpow.pop %v4776
    %v4778 = vadd.f32 %v4775, 1.0
    %v4779 = vadd.f32 %v4777, 1.0
    %v4780 = vrcp.pop %v4778
    %v4781 = vmul.f32 %v4778, %v4780
    %v4782 = vsub.f32 1.0, %v4781
    %v4783 = vmul.f32 %v4780, %v4782
    %v4784 = vadd.f32 %v4780, %v4783
    %vm4785 = vweird.f32 %v4778
    %vm4786 = vweird.f32 %v4780
    %vm4787 = vmor %vm4785, %vm4786
    %v4788 = vsel %vm4787, %v4780, %v4784
    %v4789 = vand.u32 2147483647, %v4778
    %vm4790 = vcmp.eq.f32.partialorder %v4789, 8.507059e+37
    %v4791 = vand.u32 %v4778, 2147483648
    %v4792 = vor.u32 1.1754944e-38, %v4791
    %v4793 = vsel %vm4790, %v4792, %v4788
    %v4794 = vmul.f32 1.0, %v4793
    %v4795 = vrcp.pop %v4779
    %v4796 = vmul.f32 %v4779, %v4795
    %v4797 = vsub.f32 1.0, %v4796
    %v4798 = vmul.f32 %v4795, %v4797
    %v4799 = vadd.f32 %v4795, %v4798
    %vm4800 = vweird.f32 %v4779
    %vm4801 = vweird.f32 %v4795
    %vm4802 = vmor %vm4800, %vm4801
    %v4803 = vsel %vm4802, %v4795, %v4799
    %v4804 = vand.u32 2147483647, %v4779
    %vm4805 = vcmp.eq.f32.partialorder %v4804, 8.507059e+37
    %v4806 = vand.u32 %v4779, 2147483648
    %v4807 = vor.u32 1.1754944e-38, %v4806
    %v4808 = vsel %vm4805, %v4807, %v4803
    %v4809 = vmul.f32 1.0, %v4808
    %v4810 = vadd.f32 %v4767, %v3951
    %v4811 = vmul.f32 %v4794, %v4810
    %v4812 = vadd.f32 %v4729, %v4811
    %v4813 = vtanh.pop %v4812
    %v4814 = vsub.f32 1.0, %v4809
    %v4815 = vmul.f32 %v4814, %v4813
    %v4816 = vmul.f32 %v4809, %v4725
    %v4817 = vadd.f32 %v4815, %v4816
    %4818 = vst [vmem:[%s1224] sm:$0xff] %v4817
    %4819 = vst [vmem:[%s3953] sm:$0xff] %v4817
    // Predicated region
    $region46: #{student_forward.1} parent=1 // pred_check
      %p4820 = pneg %p62
    $region47: #{student_forward.1} parent=1 // pred_check_branch
      %4822 = sbr.rel (%p4820) target = $region49
    $region48: #{student_forward.1} parent=1 // pred_region
      %v4823 = vld [vmem:[%s3953] sm:$0xff]
      %v4824 = vld [vmem:[%s6] sm:$0xff]
      %v4825 = vld [vmem:[%s6 + $0x8] sm:$0xff]
      %v4826 = vld [vmem:[%s6 + $0x10] sm:$0xff]
      %v4827 = vld [vmem:[%s6 + $0x18] sm:$0xff]
      %v4828 = vld [vmem:[%s6 + $0x20] sm:$0xff]
      %v4829 = vld [vmem:[%s6 + $0x28] sm:$0xff]
      %v4830 = vld [vmem:[%s6 + $0x30] sm:$0xff]
      %v4831 = vld [vmem:[%s6 + $0x38] sm:$0xff]
      %v4832 = vld [vmem:[%s6 + $0x40] sm:$0xff]
      %v4833 = vld [vmem:[%s6 + $0x48] sm:$0xff]
      %v4834 = vld [vmem:[%s6 + $0x50] sm:$0xff]
      %v4835 = vld [vmem:[%s6 + $0x58] sm:$0xff]
      %v4836 = vld [vmem:[%s6 + $0x60] sm:$0xff]
      %v4837 = vld [vmem:[%s6 + $0x68] sm:$0xff]
      %v4838 = vld [vmem:[%s6 + $0x70] sm:$0xff]
      %v4839 = vld [vmem:[%s6 + $0x78] sm:$0xff]
      %v4840 = vld [vmem:[%s7] sm:$0x1]
      %v4842 = vperm.slane %v4840, 0
      %4844 = vmatpush.msra.mxu0 %v4839
      %4845 = vmatpush.msra.mxu0 %v4838
      %4846 = vmatpush.msra.mxu0 %v4837
      %4847 = vmatpush.msra.mxu0 %v4836
      %4848 = vmatpush.msra.mxu0 %v4835
      %4849 = vmatpush.msra.mxu0 %v4834
      %4850 = vmatpush.msra.mxu0 %v4833
      %4851 = vmatpush.msra.mxu0 %v4832
      %4852 = vmatpush.msra.mxu0 %v4831
      %4853 = vmatpush.msra.mxu0 %v4830
      %4854 = vmatpush.msra.mxu0 %v4829
      %4855 = vmatpush.msra.mxu0 %v4828
      %4856 = vmatpush.msra.mxu0 %v4827
      %4857 = vmatpush.msra.mxu0 %v4826
      %4858 = vmatpush.msra.mxu0 %v4825
      %4859 = vmatpush.msra.mxu0 %v4824
      %4860 = vmatmul.f32.gmra.mxu0 %v4823
      %v4861 = vpop.f32.mrf.mxu0
      %v4862 = vadd.f32 %v4842, %v4861
      %4863 = vdwg.mxu0
      %vm4864 = vcmask 15360
      %4865 = vst.msk [vmem:[%s8] sm:$0xff] %vm4864, %v4862
    $region49: #{student_forward.1} parent=1 // pred_fallthru
      _
    // Predicated region
    $region50: #{student_forward.1} parent=1 // pred_check
      _
    $region51: #{student_forward.1} parent=1 // pred_check_branch
      %4867 = sbr.rel (0) target = $region53
    $region52: #{student_forward.1} parent=1 // pred_region
      _
    $region53: #{student_forward.1} parent=1 // pred_fallthru
      _
    // Predicated region
    $region54: #{student_forward.1} parent=1 // pred_check
      _
    $region55: #{student_forward.1} parent=1 // pred_check_branch
      %4869 = sbr.rel (0) target = $region57
    $region56: #{student_forward.1} parent=1 // pred_region
      _
    $region57: #{student_forward.1} parent=1 // pred_fallthru
      _
    %4870 = vsyncpa [#allocation6], 1
    %4871 = vsyncpa [#allocation8], 1

</llo_original>
